<compile_context>
chip_gen: v7x
topology: tpu7x:2x2x1
jax: 0.10.0
libtpu: 0.0.40
codegen_flags: <defaults>
</compile_context>

<pallas_src>
import jax
import jax.numpy as jnp
from jax.experimental import pallas as pl
from jax.experimental.pallas import tpu as pltpu

# ---------------------------------------------------------------------------
# Model / padding constants
# ---------------------------------------------------------------------------
INPUT_DIM = 32
HIDDEN_DIM = 32
OUTPUT_DIM = 32
VOCAB_SIZE = 50
B, T = 2, 8

DP = 128   # padded input_dim   (lane-dense)
HP = 128   # padded hidden_dim  (lane-dense)
OP = 128   # padded output_dim  (lane-dense)
BP = 8     # padded batch       (sublane-dense)


# ---------------------------------------------------------------------------
# Fused forward kernel: encoder GRU x2 -> attention -> decoder GRU x2 -> MLP
# All activations are time-major (T, Bp, feature) inside the kernel.
# ---------------------------------------------------------------------------
def fused_forward_kernel(
    emb_ref, h0_ref,
    e0_wih, e0_whh, e0_bg, e0_bhn,
    e1_wih, e1_whh, e1_bg, e1_bhn,
    d0_wih, d0_whh, d0_bg, d0_bhn,
    d1_wih, d1_whh, d1_bg, d1_bhn,
    wa_ref, ba_ref, w1_ref, b1_ref, w2_ref, b2_ref,
    out_ref, hT_ref,
    buf_a, buf_b, gi_scr,
):
    T_, Bp, _ = emb_ref.shape
    Hp = e0_whh.shape[0]
    Op = w2_ref.shape[1]

    def gru_layer(x_ref, h0, wih_ref, whh_ref, bg_ref, bhn_ref, y_ref):
        """One GRU layer over the full sequence (time-major refs).

        x_ref: (T, Bp, Din) VMEM ref, y_ref: (T, Bp, Hp) VMEM ref.
        Returns the final hidden state (Bp, Hp) as a value.
        PyTorch gate order (r, z, n); b_hn stays inside the r* term.
        """
        din = x_ref.shape[-1]
        whh_t = whh_ref[...]                                    # (Hp, 3Hp)

        # Hoisted input projection: one matmul for all T steps, with the
        # pre-combined (b_ir+b_hr, b_iz+b_hz, b_in) bias added once.
        x_all = x_ref[...].reshape(T_ * Bp, din)
        gi_scr[...] = (
            jnp.dot(x_all, wih_ref[...], preferred_element_type=jnp.float32)
            + bg_ref[...]
        ).reshape(T_, Bp, 3 * Hp)

        # Hoisted broadcast of the hidden-side n-gate bias (loop-invariant).
        bhn = jnp.broadcast_to(bhn_ref[...], (Bp, Hp))

        h = h0
        # T_ is a static Python int: fully unrolled straight-line recurrence.
        for t in range(T_):
            gi = gi_scr[t]                                      # (Bp, 3Hp)
            gh = jnp.dot(h, whh_t, preferred_element_type=jnp.float32)
            r = jax.nn.sigmoid(gi[:, 0:Hp] + gh[:, 0:Hp])
            z = jax.nn.sigmoid(gi[:, Hp:2 * Hp] + gh[:, Hp:2 * Hp])
            n = jnp.tanh(gi[:, 2 * Hp:] + r * (gh[:, 2 * Hp:] + bhn))
            h = (1.0 - z) * n + z * h
            y_ref[t] = h
        return h

    # ---- Encoder: 2-layer GRU --------------------------------------------
    he0 = gru_layer(emb_ref, h0_ref[0], e0_wih, e0_whh, e0_bg, e0_bhn, buf_a)
    he1 = gru_layer(buf_a, h0_ref[1], e1_wih, e1_whh, e1_bg, e1_bhn, buf_b)

    # ---- Attention: softmax over time (axis 0 in time-major layout),
    #      elementwise context (matches attn_weights * encoder_output) -------
    enc = buf_b[...]                                            # (T, Bp, Hp)
    scores = (
        jnp.dot(enc.reshape(T_ * Bp, Hp), wa_ref[...],
                preferred_element_type=jnp.float32)
        + ba_ref[...]
    ).reshape(T_, Bp, Hp)
    m = jnp.max(scores, axis=0, keepdims=True)
    e = jnp.exp(scores - m)
    attn = e * pl.reciprocal(jnp.sum(e, axis=0, keepdims=True), approx=True)
    buf_a[...] = attn * enc                                     # context

    # ---- Decoder: 2-layer GRU, seeded with the encoder's final hidden ------
    hd0 = gru_layer(buf_a, he0, d0_wih, d0_whh, d0_bg, d0_bhn, buf_b)
    hd1 = gru_layer(buf_b, he1, d1_wih, d1_whh, d1_bg, d1_bhn, buf_a)

    # ---- Dropout (eval mode): identity.  Output MLP ------------------------
    dec = buf_a[...].reshape(T_ * Bp, Hp)
    h1 = jnp.maximum(
        jnp.dot(dec, w1_ref[...], preferred_element_type=jnp.float32)
        + b1_ref[...], 0.0)
    o = (jnp.dot(h1, w2_ref[...], preferred_element_type=jnp.float32)
         + b2_ref[...])
    out_ref[...] = o.reshape(T_, Bp, Op)

    hT_ref[0] = hd0
    hT_ref[1] = hd1


def fused_forward(emb_p, h0_p, prep):
    """emb_p: (T, BP, DP), h0_p: (2, BP, HP) -> (out (T,BP,OP), hT (2,BP,HP))."""
    t, bp, _ = emb_p.shape
    hp = h0_p.shape[-1]
    op = prep["w2_t"].shape[1]

    vmem = pl.BlockSpec(memory_space=pltpu.MemorySpace.VMEM)
    weight_args = (
        *prep["enc_l0"], *prep["enc_l1"], *prep["dec_l0"], *prep["dec_l1"],
        prep["wa_t"], prep["ba"], prep["w1_t"], prep["b1"],
        prep["w2_t"], prep["b2"],
    )
    n_in = 2 + len(weight_args)

    return pl.pallas_call(
        fused_forward_kernel,
        out_shape=(jax.ShapeDtypeStruct((t, bp, op), jnp.float32),
                   jax.ShapeDtypeStruct((2, bp, hp), jnp.float32)),
        in_specs=[vmem] * n_in,
        out_specs=(vmem, vmem),
        scratch_shapes=[
            pltpu.VMEM((t, bp, hp), jnp.float32),        # ping buffer
            pltpu.VMEM((t, bp, hp), jnp.float32),        # pong buffer
            pltpu.VMEM((t, bp, 3 * hp), jnp.float32),    # hoisted gate projections
        ],
    )(emb_p, h0_p, *weight_args)


# ---------------------------------------------------------------------------
# Parameter init (PyTorch layout) + one-time prep (pad / transpose / fold bias)
# ---------------------------------------------------------------------------
def init_params(key):
    ks = iter(jax.random.split(key, 32))
    k = 1.0 / float(jnp.sqrt(HIDDEN_DIM))

    def u(shape):
        return jax.random.uniform(next(ks), shape, jnp.float32, -k, k)

    def gru_weights(in_dim):
        return (u((3 * HIDDEN_DIM, in_dim)),       # W_ih  (3H, in)
                u((3 * HIDDEN_DIM, HIDDEN_DIM)),   # W_hh  (3H, H)
                u((3 * HIDDEN_DIM,)),              # b_ih  (3H,)
                u((3 * HIDDEN_DIM,)))              # b_hh  (3H,)

    return {
        "embedding": jax.random.normal(next(ks), (VOCAB_SIZE, INPUT_DIM), jnp.float32),
        "enc_l0": gru_weights(INPUT_DIM),
        "enc_l1": gru_weights(HIDDEN_DIM),
        "dec_l0": gru_weights(HIDDEN_DIM),
        "dec_l1": gru_weights(HIDDEN_DIM),
        "Wa": u((HIDDEN_DIM, HIDDEN_DIM)),
        "ba": u((HIDDEN_DIM,)),
        "W1": u((HIDDEN_DIM, HIDDEN_DIM)),
        "b1": u((HIDDEN_DIM,)),
        "W2": u((OUTPUT_DIM, HIDDEN_DIM)),
        "b2": u((OUTPUT_DIM,)),
    }


def _pad2(w, rows, cols):
    w = jnp.asarray(w, jnp.float32)
    return jnp.zeros((rows, cols), jnp.float32).at[: w.shape[0], : w.shape[1]].set(w)


def _prep_gru_layer(wih, whh, bih, bhh, din_p):
    """PyTorch GRU params -> padded, pre-transposed kernel layout.

    Returns: wih_t (din_p, 3*HP), whh_t (HP, 3*HP),
             bg (1, 3*HP) = [b_ir+b_hr, b_iz+b_hz, b_in], bhn (1, HP) = b_hn.
    Each gate block is padded to its own 128-lane-aligned slot.
    """
    H = HIDDEN_DIM
    wih_t, whh_t = wih.T, whh.T                        # (din, 3H), (H, 3H)

    def pad_gates(w_t, rows_p):
        return jnp.concatenate(
            [_pad2(w_t[:, g * H:(g + 1) * H], rows_p, HP) for g in range(3)],
            axis=1)

    bg = jnp.concatenate([bih[0:H] + bhh[0:H],
                          bih[H:2 * H] + bhh[H:2 * H],
                          bih[2 * H:3 * H]])
    bg_p = jnp.concatenate(
        [_pad2(bg[g * H:(g + 1) * H][None, :], 1, HP) for g in range(3)], axis=1)
    bhn_p = _pad2(bhh[2 * H:3 * H][None, :], 1, HP)
    return pad_gates(wih_t, din_p), pad_gates(whh_t, HP), bg_p, bhn_p


def prepare_params(params):
    """One-time pad + transpose into the lane-dense fused-kernel layout."""
    return {
        "embedding": _pad2(params["embedding"], VOCAB_SIZE, DP),
        "enc_l0": _prep_gru_layer(*params["enc_l0"], din_p=DP),
        "enc_l1": _prep_gru_layer(*params["enc_l1"], din_p=HP),
        "dec_l0": _prep_gru_layer(*params["dec_l0"], din_p=HP),
        "dec_l1": _prep_gru_layer(*params["dec_l1"], din_p=HP),
        "wa_t": _pad2(params["Wa"].T, HP, HP),
        "ba": _pad2(params["ba"][None, :], 1, HP),
        "w1_t": _pad2(params["W1"].T, HP, HP),
        "b1": _pad2(params["b1"][None, :], 1, HP),
        "w2_t": _pad2(params["W2"].T, HP, OP),
        "b2": _pad2(params["b2"][None, :], 1, OP),
    }


# ---------------------------------------------------------------------------
# Full forward pass: embedding gather + pad (XLA glue) -> one fused kernel
# ---------------------------------------------------------------------------
@jax.jit
def forward(prep, tokens, hidden):
    """tokens: (B, T) int32, hidden: (2, B, H) -> (out (B, T, O), hidden (2, B, H))."""
    b, t = tokens.shape

    # Embedding lookup (glue), produced directly time-major: (T, B, DP).
    emb = prep["embedding"][tokens.T]

    # Zero-pad batch / feature dims to the lane/sublane-dense kernel shapes.
    emb_p = jnp.zeros((t, BP, DP), jnp.float32).at[:, :b, :].set(emb)
    h0_p = jnp.zeros((2, BP, HP), jnp.float32).at[:, :b, :HIDDEN_DIM].set(hidden)

    out_p, hT_p = fused_forward(emb_p, h0_p, prep)

    out = jnp.transpose(out_p[:, :b, :OUTPUT_DIM], (1, 0, 2))   # (B, T, O)
    hidden_out = hT_p[:, :b, :HIDDEN_DIM]                       # (2, B, H)
    return out, hidden_out


if __name__ == "__main__":
    key = jax.random.PRNGKey(0)
    pkey, tkey, hkey = jax.random.split(key, 3)

    params = init_params(pkey)
    prep = prepare_params(params)

    tokens = jax.random.randint(tkey, (B, T), 0, VOCAB_SIZE, dtype=jnp.int32)
    hidden = jax.random.normal(hkey, (2, B, HIDDEN_DIM), jnp.float32)

    out, hidden_out = forward(prep, tokens, hidden)
    jax.block_until_ready((out, hidden_out))

    assert out.shape == (B, T, OUTPUT_DIM)
    assert hidden_out.shape == (2, B, HIDDEN_DIM)
    assert bool(jnp.all(jnp.isfinite(out)))
    assert bool(jnp.all(jnp.isfinite(hidden_out)))
    print("KERNEL_OK")
</pallas_src>

<mosaic_0001>
module attributes {stable_mosaic.version = 11 : i64} {
  func.func @fused_forward_kernel(%arg0: memref<8x8x128xf32, #tpu.memory_space<vmem>>, %arg1: memref<2x8x128xf32, #tpu.memory_space<vmem>>, %arg2: memref<128x384xf32, #tpu.memory_space<vmem>>, %arg3: memref<128x384xf32, #tpu.memory_space<vmem>>, %arg4: memref<1x384xf32, #tpu.memory_space<vmem>>, %arg5: memref<1x128xf32, #tpu.memory_space<vmem>>, %arg6: memref<128x384xf32, #tpu.memory_space<vmem>>, %arg7: memref<128x384xf32, #tpu.memory_space<vmem>>, %arg8: memref<1x384xf32, #tpu.memory_space<vmem>>, %arg9: memref<1x128xf32, #tpu.memory_space<vmem>>, %arg10: memref<128x384xf32, #tpu.memory_space<vmem>>, %arg11: memref<128x384xf32, #tpu.memory_space<vmem>>, %arg12: memref<1x384xf32, #tpu.memory_space<vmem>>, %arg13: memref<1x128xf32, #tpu.memory_space<vmem>>, %arg14: memref<128x384xf32, #tpu.memory_space<vmem>>, %arg15: memref<128x384xf32, #tpu.memory_space<vmem>>, %arg16: memref<1x384xf32, #tpu.memory_space<vmem>>, %arg17: memref<1x128xf32, #tpu.memory_space<vmem>>, %arg18: memref<128x128xf32, #tpu.memory_space<vmem>>, %arg19: memref<1x128xf32, #tpu.memory_space<vmem>>, %arg20: memref<128x128xf32, #tpu.memory_space<vmem>>, %arg21: memref<1x128xf32, #tpu.memory_space<vmem>>, %arg22: memref<128x128xf32, #tpu.memory_space<vmem>>, %arg23: memref<1x128xf32, #tpu.memory_space<vmem>>, %arg24: memref<8x8x128xf32, #tpu.memory_space<vmem>>, %arg25: memref<2x8x128xf32, #tpu.memory_space<vmem>>, %arg26: memref<8x8x128xf32, #tpu.memory_space<vmem>>, %arg27: memref<8x8x128xf32, #tpu.memory_space<vmem>>, %arg28: memref<8x8x384xf32, #tpu.memory_space<vmem>>) attributes {dimension_semantics = [], scalar_prefetch = 0 : i64, scratch_operands = 3 : i64, tpu.core_type = #tpu.core_type<tc>} {
    %c0 = arith.constant 0 : index
    %c0_0 = arith.constant 0 : index
    %c0_1 = arith.constant 0 : index
    %0 = vector.load %arg1[%c0, %c0_0, %c0_1] : memref<2x8x128xf32, #tpu.memory_space<vmem>>, vector<1x8x128xf32>
    %1 = vector.shape_cast %0 : vector<1x8x128xf32> to vector<8x128xf32>
    %c0_2 = arith.constant 0 : index
    %c0_3 = arith.constant 0 : index
    %2 = vector.load %arg3[%c0_2, %c0_3] : memref<128x384xf32, #tpu.memory_space<vmem>>, vector<128x384xf32>
    %c0_4 = arith.constant 0 : index
    %c0_5 = arith.constant 0 : index
    %c0_6 = arith.constant 0 : index
    %3 = vector.load %arg0[%c0_4, %c0_5, %c0_6] : memref<8x8x128xf32, #tpu.memory_space<vmem>>, vector<8x8x128xf32>
    %4 = vector.shape_cast %3 : vector<8x8x128xf32> to vector<64x128xf32>
    %c0_7 = arith.constant 0 : index
    %c0_8 = arith.constant 0 : index
    %5 = vector.load %arg2[%c0_7, %c0_8] : memref<128x384xf32, #tpu.memory_space<vmem>>, vector<128x384xf32>
    %cst = arith.constant dense<0.000000e+00> : vector<64x384xf32>
    %6 = tpu.matmul %4, %5, %cst {dimension_numbers = #tpu.dot_dimension_numbers<[1], [0], [0], [1], [0, 0, 1, 1], [], []>} : vector<64x128xf32>, vector<128x384xf32>, vector<64x384xf32> -> vector<64x384xf32>
    %c0_9 = arith.constant 0 : index
    %c0_10 = arith.constant 0 : index
    %7 = vector.load %arg4[%c0_9, %c0_10] : memref<1x384xf32, #tpu.memory_space<vmem>>, vector<1x384xf32>
    %8 = vector.broadcast %7 : vector<1x384xf32> to vector<64x384xf32>
    %9 = arith.addf %6, %8 : vector<64x384xf32>
    %10 = vector.shape_cast %9 : vector<64x384xf32> to vector<8x8x384xf32>
    %c0_11 = arith.constant 0 : index
    %c0_12 = arith.constant 0 : index
    %c0_13 = arith.constant 0 : index
    %11 = vector.load %arg28[%c0_11, %c0_12, %c0_13] : memref<8x8x384xf32, #tpu.memory_space<vmem>>, vector<8x8x384xf32>
    tpu.vector_store %arg28[%c0_11, %c0_12, %c0_13], %10 {strides = array<i32>} : memref<8x8x384xf32, #tpu.memory_space<vmem>>, vector<8x8x384xf32>,
    %c0_14 = arith.constant 0 : index
    %c0_15 = arith.constant 0 : index
    %12 = vector.load %arg5[%c0_14, %c0_15] : memref<1x128xf32, #tpu.memory_space<vmem>>, vector<1x128xf32>
    %13 = vector.shape_cast %12 : vector<1x128xf32> to vector<1x128xf32>
    %14 = vector.broadcast %13 : vector<1x128xf32> to vector<8x128xf32>
    %c0_16 = arith.constant 0 : index
    %c0_17 = arith.constant 0 : index
    %c0_18 = arith.constant 0 : index
    %15 = vector.load %arg28[%c0_16, %c0_17, %c0_18] : memref<8x8x384xf32, #tpu.memory_space<vmem>>, vector<1x8x384xf32>
    %16 = vector.shape_cast %15 : vector<1x8x384xf32> to vector<8x384xf32>
    %cst_19 = arith.constant dense<0.000000e+00> : vector<8x384xf32>
    %17 = tpu.matmul %1, %2, %cst_19 {dimension_numbers = #tpu.dot_dimension_numbers<[1], [0], [0], [1], [0, 0, 1, 1], [], []>} : vector<8x128xf32>, vector<128x384xf32>, vector<8x384xf32> -> vector<8x384xf32>
    %18 = vector.extract_strided_slice %16 {offsets = [0, 0], sizes = [8, 128], strides = [1, 1]} : vector<8x384xf32> to vector<8x128xf32>
    %19 = vector.extract_strided_slice %17 {offsets = [0, 0], sizes = [8, 128], strides = [1, 1]} : vector<8x384xf32> to vector<8x128xf32>
    %20 = arith.addf %18, %19 : vector<8x128xf32>
    %21 = arith.negf %20 : vector<8x128xf32>
    %22 = math.exp %21 : vector<8x128xf32>
    %cst_20 = arith.constant 1.000000e+00 : f32
    %23 = vector.broadcast %cst_20 : f32 to vector<8x128xf32>
    %24 = arith.addf %23, %22 : vector<8x128xf32>
    %25 = arith.divf %23, %24 : vector<8x128xf32>
    %26 = vector.extract_strided_slice %16 {offsets = [0, 128], sizes = [8, 128], strides = [1, 1]} : vector<8x384xf32> to vector<8x128xf32>
    %27 = vector.extract_strided_slice %17 {offsets = [0, 128], sizes = [8, 128], strides = [1, 1]} : vector<8x384xf32> to vector<8x128xf32>
    %28 = arith.addf %26, %27 : vector<8x128xf32>
    %29 = arith.negf %28 : vector<8x128xf32>
    %30 = math.exp %29 : vector<8x128xf32>
    %cst_21 = arith.constant 1.000000e+00 : f32
    %31 = vector.broadcast %cst_21 : f32 to vector<8x128xf32>
    %32 = arith.addf %31, %30 : vector<8x128xf32>
    %33 = arith.divf %31, %32 : vector<8x128xf32>
    %34 = vector.extract_strided_slice %16 {offsets = [0, 256], sizes = [8, 128], strides = [1, 1]} : vector<8x384xf32> to vector<8x128xf32>
    %35 = vector.extract_strided_slice %17 {offsets = [0, 256], sizes = [8, 128], strides = [1, 1]} : vector<8x384xf32> to vector<8x128xf32>
    %36 = arith.addf %35, %14 : vector<8x128xf32>
    %37 = arith.mulf %25, %36 : vector<8x128xf32>
    %38 = arith.addf %34, %37 : vector<8x128xf32>
    %39 = math.tanh %38 : vector<8x128xf32>
    %cst_22 = arith.constant 1.000000e+00 : f32
    %40 = vector.broadcast %cst_22 : f32 to vector<8x128xf32>
    %41 = arith.subf %40, %33 : vector<8x128xf32>
    %42 = arith.mulf %41, %39 : vector<8x128xf32>
    %43 = arith.mulf %33, %1 : vector<8x128xf32>
    %44 = arith.addf %42, %43 : vector<8x128xf32>
    %c0_23 = arith.constant 0 : index
    %c0_24 = arith.constant 0 : index
    %c0_25 = arith.constant 0 : index
    %45 = vector.load %arg26[%c0_23, %c0_24, %c0_25] : memref<8x8x128xf32, #tpu.memory_space<vmem>>, vector<1x8x128xf32>
    %46 = vector.shape_cast %45 : vector<1x8x128xf32> to vector<8x128xf32>
    %47 = vector.shape_cast %44 : vector<8x128xf32> to vector<1x8x128xf32>
    tpu.vector_store %arg26[%c0_23, %c0_24, %c0_25], %47 {strides = array<i32>} : memref<8x8x128xf32, #tpu.memory_space<vmem>>, vector<1x8x128xf32>,
    %c1 = arith.constant 1 : index
    %c0_26 = arith.constant 0 : index
    %c0_27 = arith.constant 0 : index
    %48 = vector.load %arg28[%c1, %c0_26, %c0_27] : memref<8x8x384xf32, #tpu.memory_space<vmem>>, vector<1x8x384xf32>
    %49 = vector.shape_cast %48 : vector<1x8x384xf32> to vector<8x384xf32>
    %cst_28 = arith.constant dense<0.000000e+00> : vector<8x384xf32>
    %50 = tpu.matmul %44, %2, %cst_28 {dimension_numbers = #tpu.dot_dimension_numbers<[1], [0], [0], [1], [0, 0, 1, 1], [], []>} : vector<8x128xf32>, vector<128x384xf32>, vector<8x384xf32> -> vector<8x384xf32>
    %51 = vector.extract_strided_slice %49 {offsets = [0, 0], sizes = [8, 128], strides = [1, 1]} : vector<8x384xf32> to vector<8x128xf32>
    %52 = vector.extract_strided_slice %50 {offsets = [0, 0], sizes = [8, 128], strides = [1, 1]} : vector<8x384xf32> to vector<8x128xf32>
    %53 = arith.addf %51, %52 : vector<8x128xf32>
    %54 = arith.negf %53 : vector<8x128xf32>
    %55 = math.exp %54 : vector<8x128xf32>
    %cst_29 = arith.constant 1.000000e+00 : f32
    %56 = vector.broadcast %cst_29 : f32 to vector<8x128xf32>
    %57 = arith.addf %56, %55 : vector<8x128xf32>
    %58 = arith.divf %56, %57 : vector<8x128xf32>
    %59 = vector.extract_strided_slice %49 {offsets = [0, 128], sizes = [8, 128], strides = [1, 1]} : vector<8x384xf32> to vector<8x128xf32>
    %60 = vector.extract_strided_slice %50 {offsets = [0, 128], sizes = [8, 128], strides = [1, 1]} : vector<8x384xf32> to vector<8x128xf32>
    %61 = arith.addf %59, %60 : vector<8x128xf32>
    %62 = arith.negf %61 : vector<8x128xf32>
    %63 = math.exp %62 : vector<8x128xf32>
    %cst_30 = arith.constant 1.000000e+00 : f32
    %64 = vector.broadcast %cst_30 : f32 to vector<8x128xf32>
    %65 = arith.addf %64, %63 : vector<8x128xf32>
    %66 = arith.divf %64, %65 : vector<8x128xf32>
    %67 = vector.extract_strided_slice %49 {offsets = [0, 256], sizes = [8, 128], strides = [1, 1]} : vector<8x384xf32> to vector<8x128xf32>
    %68 = vector.extract_strided_slice %50 {offsets = [0, 256], sizes = [8, 128], strides = [1, 1]} : vector<8x384xf32> to vector<8x128xf32>
    %69 = arith.addf %68, %14 : vector<8x128xf32>
    %70 = arith.mulf %58, %69 : vector<8x128xf32>
    %71 = arith.addf %67, %70 : vector<8x128xf32>
    %72 = math.tanh %71 : vector<8x128xf32>
    %cst_31 = arith.constant 1.000000e+00 : f32
    %73 = vector.broadcast %cst_31 : f32 to vector<8x128xf32>
    %74 = arith.subf %73, %66 : vector<8x128xf32>
    %75 = arith.mulf %74, %72 : vector<8x128xf32>
    %76 = arith.mulf %66, %44 : vector<8x128xf32>
    %77 = arith.addf %75, %76 : vector<8x128xf32>
    %c1_32 = arith.constant 1 : index
    %c0_33 = arith.constant 0 : index
    %c0_34 = arith.constant 0 : index
    %78 = vector.load %arg26[%c1_32, %c0_33, %c0_34] : memref<8x8x128xf32, #tpu.memory_space<vmem>>, vector<1x8x128xf32>
    %79 = vector.shape_cast %78 : vector<1x8x128xf32> to vector<8x128xf32>
    %80 = vector.shape_cast %77 : vector<8x128xf32> to vector<1x8x128xf32>
    tpu.vector_store %arg26[%c1_32, %c0_33, %c0_34], %80 {strides = array<i32>} : memref<8x8x128xf32, #tpu.memory_space<vmem>>, vector<1x8x128xf32>,
    %c2 = arith.constant 2 : index
    %c0_35 = arith.constant 0 : index
    %c0_36 = arith.constant 0 : index
    %81 = vector.load %arg28[%c2, %c0_35, %c0_36] : memref<8x8x384xf32, #tpu.memory_space<vmem>>, vector<1x8x384xf32>
    %82 = vector.shape_cast %81 : vector<1x8x384xf32> to vector<8x384xf32>
    %cst_37 = arith.constant dense<0.000000e+00> : vector<8x384xf32>
    %83 = tpu.matmul %77, %2, %cst_37 {dimension_numbers = #tpu.dot_dimension_numbers<[1], [0], [0], [1], [0, 0, 1, 1], [], []>} : vector<8x128xf32>, vector<128x384xf32>, vector<8x384xf32> -> vector<8x384xf32>
    %84 = vector.extract_strided_slice %82 {offsets = [0, 0], sizes = [8, 128], strides = [1, 1]} : vector<8x384xf32> to vector<8x128xf32>
    %85 = vector.extract_strided_slice %83 {offsets = [0, 0], sizes = [8, 128], strides = [1, 1]} : vector<8x384xf32> to vector<8x128xf32>
    %86 = arith.addf %84, %85 : vector<8x128xf32>
    %87 = arith.negf %86 : vector<8x128xf32>
    %88 = math.exp %87 : vector<8x128xf32>
    %cst_38 = arith.constant 1.000000e+00 : f32
    %89 = vector.broadcast %cst_38 : f32 to vector<8x128xf32>
    %90 = arith.addf %89, %88 : vector<8x128xf32>
    %91 = arith.divf %89, %90 : vector<8x128xf32>
    %92 = vector.extract_strided_slice %82 {offsets = [0, 128], sizes = [8, 128], strides = [1, 1]} : vector<8x384xf32> to vector<8x128xf32>
    %93 = vector.extract_strided_slice %83 {offsets = [0, 128], sizes = [8, 128], strides = [1, 1]} : vector<8x384xf32> to vector<8x128xf32>
    %94 = arith.addf %92, %93 : vector<8x128xf32>
    %95 = arith.negf %94 : vector<8x128xf32>
    %96 = math.exp %95 : vector<8x128xf32>
    %cst_39 = arith.constant 1.000000e+00 : f32
    %97 = vector.broadcast %cst_39 : f32 to vector<8x128xf32>
    %98 = arith.addf %97, %96 : vector<8x128xf32>
    %99 = arith.divf %97, %98 : vector<8x128xf32>
    %100 = vector.extract_strided_slice %82 {offsets = [0, 256], sizes = [8, 128], strides = [1, 1]} : vector<8x384xf32> to vector<8x128xf32>
    %101 = vector.extract_strided_slice %83 {offsets = [0, 256], sizes = [8, 128], strides = [1, 1]} : vector<8x384xf32> to vector<8x128xf32>
    %102 = arith.addf %101, %14 : vector<8x128xf32>
    %103 = arith.mulf %91, %102 : vector<8x128xf32>
    %104 = arith.addf %100, %103 : vector<8x128xf32>
    %105 = math.tanh %104 : vector<8x128xf32>
    %cst_40 = arith.constant 1.000000e+00 : f32
    %106 = vector.broadcast %cst_40 : f32 to vector<8x128xf32>
    %107 = arith.subf %106, %99 : vector<8x128xf32>
    %108 = arith.mulf %107, %105 : vector<8x128xf32>
    %109 = arith.mulf %99, %77 : vector<8x128xf32>
    %110 = arith.addf %108, %109 : vector<8x128xf32>
    %c2_41 = arith.constant 2 : index
    %c0_42 = arith.constant 0 : index
    %c0_43 = arith.constant 0 : index
    %111 = vector.load %arg26[%c2_41, %c0_42, %c0_43] : memref<8x8x128xf32, #tpu.memory_space<vmem>>, vector<1x8x128xf32>
    %112 = vector.shape_cast %111 : vector<1x8x128xf32> to vector<8x128xf32>
    %113 = vector.shape_cast %110 : vector<8x128xf32> to vector<1x8x128xf32>
    tpu.vector_store %arg26[%c2_41, %c0_42, %c0_43], %113 {strides = array<i32>} : memref<8x8x128xf32, #tpu.memory_space<vmem>>, vector<1x8x128xf32>,
    %c3 = arith.constant 3 : index
    %c0_44 = arith.constant 0 : index
    %c0_45 = arith.constant 0 : index
    %114 = vector.load %arg28[%c3, %c0_44, %c0_45] : memref<8x8x384xf32, #tpu.memory_space<vmem>>, vector<1x8x384xf32>
    %115 = vector.shape_cast %114 : vector<1x8x384xf32> to vector<8x384xf32>
    %cst_46 = arith.constant dense<0.000000e+00> : vector<8x384xf32>
    %116 = tpu.matmul %110, %2, %cst_46 {dimension_numbers = #tpu.dot_dimension_numbers<[1], [0], [0], [1], [0, 0, 1, 1], [], []>} : vector<8x128xf32>, vector<128x384xf32>, vector<8x384xf32> -> vector<8x384xf32>
    %117 = vector.extract_strided_slice %115 {offsets = [0, 0], sizes = [8, 128], strides = [1, 1]} : vector<8x384xf32> to vector<8x128xf32>
    %118 = vector.extract_strided_slice %116 {offsets = [0, 0], sizes = [8, 128], strides = [1, 1]} : vector<8x384xf32> to vector<8x128xf32>
    %119 = arith.addf %117, %118 : vector<8x128xf32>
    %120 = arith.negf %119 : vector<8x128xf32>
    %121 = math.exp %120 : vector<8x128xf32>
    %cst_47 = arith.constant 1.000000e+00 : f32
    %122 = vector.broadcast %cst_47 : f32 to vector<8x128xf32>
    %123 = arith.addf %122, %121 : vector<8x128xf32>
    %124 = arith.divf %122, %123 : vector<8x128xf32>
    %125 = vector.extract_strided_slice %115 {offsets = [0, 128], sizes = [8, 128], strides = [1, 1]} : vector<8x384xf32> to vector<8x128xf32>
    %126 = vector.extract_strided_slice %116 {offsets = [0, 128], sizes = [8, 128], strides = [1, 1]} : vector<8x384xf32> to vector<8x128xf32>
    %127 = arith.addf %125, %126 : vector<8x128xf32>
    %128 = arith.negf %127 : vector<8x128xf32>
    %129 = math.exp %128 : vector<8x128xf32>
    %cst_48 = arith.constant 1.000000e+00 : f32
    %130 = vector.broadcast %cst_48 : f32 to vector<8x128xf32>
    %131 = arith.addf %130, %129 : vector<8x128xf32>
    %132 = arith.divf %130, %131 : vector<8x128xf32>
    %133 = vector.extract_strided_slice %115 {offsets = [0, 256], sizes = [8, 128], strides = [1, 1]} : vector<8x384xf32> to vector<8x128xf32>
    %134 = vector.extract_strided_slice %116 {offsets = [0, 256], sizes = [8, 128], strides = [1, 1]} : vector<8x384xf32> to vector<8x128xf32>
    %135 = arith.addf %134, %14 : vector<8x128xf32>
    %136 = arith.mulf %124, %135 : vector<8x128xf32>
    %137 = arith.addf %133, %136 : vector<8x128xf32>
    %138 = math.tanh %137 : vector<8x128xf32>
    %cst_49 = arith.constant 1.000000e+00 : f32
    %139 = vector.broadcast %cst_49 : f32 to vector<8x128xf32>
    %140 = arith.subf %139, %132 : vector<8x128xf32>
    %141 = arith.mulf %140, %138 : vector<8x128xf32>
    %142 = arith.mulf %132, %110 : vector<8x128xf32>
    %143 = arith.addf %141, %142 : vector<8x128xf32>
    %c3_50 = arith.constant 3 : index
    %c0_51 = arith.constant 0 : index
    %c0_52 = arith.constant 0 : index
    %144 = vector.load %arg26[%c3_50, %c0_51, %c0_52] : memref<8x8x128xf32, #tpu.memory_space<vmem>>, vector<1x8x128xf32>
    %145 = vector.shape_cast %144 : vector<1x8x128xf32> to vector<8x128xf32>
    %146 = vector.shape_cast %143 : vector<8x128xf32> to vector<1x8x128xf32>
    tpu.vector_store %arg26[%c3_50, %c0_51, %c0_52], %146 {strides = array<i32>} : memref<8x8x128xf32, #tpu.memory_space<vmem>>, vector<1x8x128xf32>,
    %c4 = arith.constant 4 : index
    %c0_53 = arith.constant 0 : index
    %c0_54 = arith.constant 0 : index
    %147 = vector.load %arg28[%c4, %c0_53, %c0_54] : memref<8x8x384xf32, #tpu.memory_space<vmem>>, vector<1x8x384xf32>
    %148 = vector.shape_cast %147 : vector<1x8x384xf32> to vector<8x384xf32>
    %cst_55 = arith.constant dense<0.000000e+00> : vector<8x384xf32>
    %149 = tpu.matmul %143, %2, %cst_55 {dimension_numbers = #tpu.dot_dimension_numbers<[1], [0], [0], [1], [0, 0, 1, 1], [], []>} : vector<8x128xf32>, vector<128x384xf32>, vector<8x384xf32> -> vector<8x384xf32>
    %150 = vector.extract_strided_slice %148 {offsets = [0, 0], sizes = [8, 128], strides = [1, 1]} : vector<8x384xf32> to vector<8x128xf32>
    %151 = vector.extract_strided_slice %149 {offsets = [0, 0], sizes = [8, 128], strides = [1, 1]} : vector<8x384xf32> to vector<8x128xf32>
    %152 = arith.addf %150, %151 : vector<8x128xf32>
    %153 = arith.negf %152 : vector<8x128xf32>
    %154 = math.exp %153 : vector<8x128xf32>
    %cst_56 = arith.constant 1.000000e+00 : f32
    %155 = vector.broadcast %cst_56 : f32 to vector<8x128xf32>
    %156 = arith.addf %155, %154 : vector<8x128xf32>
    %157 = arith.divf %155, %156 : vector<8x128xf32>
    %158 = vector.extract_strided_slice %148 {offsets = [0, 128], sizes = [8, 128], strides = [1, 1]} : vector<8x384xf32> to vector<8x128xf32>
    %159 = vector.extract_strided_slice %149 {offsets = [0, 128], sizes = [8, 128], strides = [1, 1]} : vector<8x384xf32> to vector<8x128xf32>
    %160 = arith.addf %158, %159 : vector<8x128xf32>
    %161 = arith.negf %160 : vector<8x128xf32>
    %162 = math.exp %161 : vector<8x128xf32>
    %cst_57 = arith.constant 1.000000e+00 : f32
    %163 = vector.broadcast %cst_57 : f32 to vector<8x128xf32>
    %164 = arith.addf %163, %162 : vector<8x128xf32>
    %165 = arith.divf %163, %164 : vector<8x128xf32>
    %166 = vector.extract_strided_slice %148 {offsets = [0, 256], sizes = [8, 128], strides = [1, 1]} : vector<8x384xf32> to vector<8x128xf32>
    %167 = vector.extract_strided_slice %149 {offsets = [0, 256], sizes = [8, 128], strides = [1, 1]} : vector<8x384xf32> to vector<8x128xf32>
    %168 = arith.addf %167, %14 : vector<8x128xf32>
    %169 = arith.mulf %157, %168 : vector<8x128xf32>
    %170 = arith.addf %166, %169 : vector<8x128xf32>
    %171 = math.tanh %170 : vector<8x128xf32>
    %cst_58 = arith.constant 1.000000e+00 : f32
    %172 = vector.broadcast %cst_58 : f32 to vector<8x128xf32>
    %173 = arith.subf %172, %165 : vector<8x128xf32>
    %174 = arith.mulf %173, %171 : vector<8x128xf32>
    %175 = arith.mulf %165, %143 : vector<8x128xf32>
    %176 = arith.addf %174, %175 : vector<8x128xf32>
    %c4_59 = arith.constant 4 : index
    %c0_60 = arith.constant 0 : index
    %c0_61 = arith.constant 0 : index
    %177 = vector.load %arg26[%c4_59, %c0_60, %c0_61] : memref<8x8x128xf32, #tpu.memory_space<vmem>>, vector<1x8x128xf32>
    %178 = vector.shape_cast %177 : vector<1x8x128xf32> to vector<8x128xf32>
    %179 = vector.shape_cast %176 : vector<8x128xf32> to vector<1x8x128xf32>
    tpu.vector_store %arg26[%c4_59, %c0_60, %c0_61], %179 {strides = array<i32>} : memref<8x8x128xf32, #tpu.memory_space<vmem>>, vector<1x8x128xf32>,
    %c5 = arith.constant 5 : index
    %c0_62 = arith.constant 0 : index
    %c0_63 = arith.constant 0 : index
    %180 = vector.load %arg28[%c5, %c0_62, %c0_63] : memref<8x8x384xf32, #tpu.memory_space<vmem>>, vector<1x8x384xf32>
    %181 = vector.shape_cast %180 : vector<1x8x384xf32> to vector<8x384xf32>
    %cst_64 = arith.constant dense<0.000000e+00> : vector<8x384xf32>
    %182 = tpu.matmul %176, %2, %cst_64 {dimension_numbers = #tpu.dot_dimension_numbers<[1], [0], [0], [1], [0, 0, 1, 1], [], []>} : vector<8x128xf32>, vector<128x384xf32>, vector<8x384xf32> -> vector<8x384xf32>
    %183 = vector.extract_strided_slice %181 {offsets = [0, 0], sizes = [8, 128], strides = [1, 1]} : vector<8x384xf32> to vector<8x128xf32>
    %184 = vector.extract_strided_slice %182 {offsets = [0, 0], sizes = [8, 128], strides = [1, 1]} : vector<8x384xf32> to vector<8x128xf32>
    %185 = arith.addf %183, %184 : vector<8x128xf32>
    %186 = arith.negf %185 : vector<8x128xf32>
    %187 = math.exp %186 : vector<8x128xf32>
    %cst_65 = arith.constant 1.000000e+00 : f32
    %188 = vector.broadcast %cst_65 : f32 to vector<8x128xf32>
    %189 = arith.addf %188, %187 : vector<8x128xf32>
    %190 = arith.divf %188, %189 : vector<8x128xf32>
    %191 = vector.extract_strided_slice %181 {offsets = [0, 128], sizes = [8, 128], strides = [1, 1]} : vector<8x384xf32> to vector<8x128xf32>
    %192 = vector.extract_strided_slice %182 {offsets = [0, 128], sizes = [8, 128], strides = [1, 1]} : vector<8x384xf32> to vector<8x128xf32>
    %193 = arith.addf %191, %192 : vector<8x128xf32>
    %194 = arith.negf %193 : vector<8x128xf32>
    %195 = math.exp %194 : vector<8x128xf32>
    %cst_66 = arith.constant 1.000000e+00 : f32
    %196 = vector.broadcast %cst_66 : f32 to vector<8x128xf32>
    %197 = arith.addf %196, %195 : vector<8x128xf32>
    %198 = arith.divf %196, %197 : vector<8x128xf32>
    %199 = vector.extract_strided_slice %181 {offsets = [0, 256], sizes = [8, 128], strides = [1, 1]} : vector<8x384xf32> to vector<8x128xf32>
    %200 = vector.extract_strided_slice %182 {offsets = [0, 256], sizes = [8, 128], strides = [1, 1]} : vector<8x384xf32> to vector<8x128xf32>
    %201 = arith.addf %200, %14 : vector<8x128xf32>
    %202 = arith.mulf %190, %201 : vector<8x128xf32>
    %203 = arith.addf %199, %202 : vector<8x128xf32>
    %204 = math.tanh %203 : vector<8x128xf32>
    %cst_67 = arith.constant 1.000000e+00 : f32
    %205 = vector.broadcast %cst_67 : f32 to vector<8x128xf32>
    %206 = arith.subf %205, %198 : vector<8x128xf32>
    %207 = arith.mulf %206, %204 : vector<8x128xf32>
    %208 = arith.mulf %198, %176 : vector<8x128xf32>
    %209 = arith.addf %207, %208 : vector<8x128xf32>
    %c5_68 = arith.constant 5 : index
    %c0_69 = arith.constant 0 : index
    %c0_70 = arith.constant 0 : index
    %210 = vector.load %arg26[%c5_68, %c0_69, %c0_70] : memref<8x8x128xf32, #tpu.memory_space<vmem>>, vector<1x8x128xf32>
    %211 = vector.shape_cast %210 : vector<1x8x128xf32> to vector<8x128xf32>
    %212 = vector.shape_cast %209 : vector<8x128xf32> to vector<1x8x128xf32>
    tpu.vector_store %arg26[%c5_68, %c0_69, %c0_70], %212 {strides = array<i32>} : memref<8x8x128xf32, #tpu.memory_space<vmem>>, vector<1x8x128xf32>,
    %c6 = arith.constant 6 : index
    %c0_71 = arith.constant 0 : index
    %c0_72 = arith.constant 0 : index
    %213 = vector.load %arg28[%c6, %c0_71, %c0_72] : memref<8x8x384xf32, #tpu.memory_space<vmem>>, vector<1x8x384xf32>
    %214 = vector.shape_cast %213 : vector<1x8x384xf32> to vector<8x384xf32>
    %cst_73 = arith.constant dense<0.000000e+00> : vector<8x384xf32>
    %215 = tpu.matmul %209, %2, %cst_73 {dimension_numbers = #tpu.dot_dimension_numbers<[1], [0], [0], [1], [0, 0, 1, 1], [], []>} : vector<8x128xf32>, vector<128x384xf32>, vector<8x384xf32> -> vector<8x384xf32>
    %216 = vector.extract_strided_slice %214 {offsets = [0, 0], sizes = [8, 128], strides = [1, 1]} : vector<8x384xf32> to vector<8x128xf32>
    %217 = vector.extract_strided_slice %215 {offsets = [0, 0], sizes = [8, 128], strides = [1, 1]} : vector<8x384xf32> to vector<8x128xf32>
    %218 = arith.addf %216, %217 : vector<8x128xf32>
    %219 = arith.negf %218 : vector<8x128xf32>
    %220 = math.exp %219 : vector<8x128xf32>
    %cst_74 = arith.constant 1.000000e+00 : f32
    %221 = vector.broadcast %cst_74 : f32 to vector<8x128xf32>
    %222 = arith.addf %221, %220 : vector<8x128xf32>
    %223 = arith.divf %221, %222 : vector<8x128xf32>
    %224 = vector.extract_strided_slice %214 {offsets = [0, 128], sizes = [8, 128], strides = [1, 1]} : vector<8x384xf32> to vector<8x128xf32>
    %225 = vector.extract_strided_slice %215 {offsets = [0, 128], sizes = [8, 128], strides = [1, 1]} : vector<8x384xf32> to vector<8x128xf32>
    %226 = arith.addf %224, %225 : vector<8x128xf32>
    %227 = arith.negf %226 : vector<8x128xf32>
    %228 = math.exp %227 : vector<8x128xf32>
    %cst_75 = arith.constant 1.000000e+00 : f32
    %229 = vector.broadcast %cst_75 : f32 to vector<8x128xf32>
    %230 = arith.addf %229, %228 : vector<8x128xf32>
    %231 = arith.divf %229, %230 : vector<8x128xf32>
    %232 = vector.extract_strided_slice %214 {offsets = [0, 256], sizes = [8, 128], strides = [1, 1]} : vector<8x384xf32> to vector<8x128xf32>
    %233 = vector.extract_strided_slice %215 {offsets = [0, 256], sizes = [8, 128], strides = [1, 1]} : vector<8x384xf32> to vector<8x128xf32>
    %234 = arith.addf %233, %14 : vector<8x128xf32>
    %235 = arith.mulf %223, %234 : vector<8x128xf32>
    %236 = arith.addf %232, %235 : vector<8x128xf32>
    %237 = math.tanh %236 : vector<8x128xf32>
    %cst_76 = arith.constant 1.000000e+00 : f32
    %238 = vector.broadcast %cst_76 : f32 to vector<8x128xf32>
    %239 = arith.subf %238, %231 : vector<8x128xf32>
    %240 = arith.mulf %239, %237 : vector<8x128xf32>
    %241 = arith.mulf %231, %209 : vector<8x128xf32>
    %242 = arith.addf %240, %241 : vector<8x128xf32>
    %c6_77 = arith.constant 6 : index
    %c0_78 = arith.constant 0 : index
    %c0_79 = arith.constant 0 : index
    %243 = vector.load %arg26[%c6_77, %c0_78, %c0_79] : memref<8x8x128xf32, #tpu.memory_space<vmem>>, vector<1x8x128xf32>
    %244 = vector.shape_cast %243 : vector<1x8x128xf32> to vector<8x128xf32>
    %245 = vector.shape_cast %242 : vector<8x128xf32> to vector<1x8x128xf32>
    tpu.vector_store %arg26[%c6_77, %c0_78, %c0_79], %245 {strides = array<i32>} : memref<8x8x128xf32, #tpu.memory_space<vmem>>, vector<1x8x128xf32>,
    %c7 = arith.constant 7 : index
    %c0_80 = arith.constant 0 : index
    %c0_81 = arith.constant 0 : index
    %246 = vector.load %arg28[%c7, %c0_80, %c0_81] : memref<8x8x384xf32, #tpu.memory_space<vmem>>, vector<1x8x384xf32>
    %247 = vector.shape_cast %246 : vector<1x8x384xf32> to vector<8x384xf32>
    %cst_82 = arith.constant dense<0.000000e+00> : vector<8x384xf32>
    %248 = tpu.matmul %242, %2, %cst_82 {dimension_numbers = #tpu.dot_dimension_numbers<[1], [0], [0], [1], [0, 0, 1, 1], [], []>} : vector<8x128xf32>, vector<128x384xf32>, vector<8x384xf32> -> vector<8x384xf32>
    %249 = vector.extract_strided_slice %247 {offsets = [0, 0], sizes = [8, 128], strides = [1, 1]} : vector<8x384xf32> to vector<8x128xf32>
    %250 = vector.extract_strided_slice %248 {offsets = [0, 0], sizes = [8, 128], strides = [1, 1]} : vector<8x384xf32> to vector<8x128xf32>
    %251 = arith.addf %249, %250 : vector<8x128xf32>
    %252 = arith.negf %251 : vector<8x128xf32>
    %253 = math.exp %252 : vector<8x128xf32>
    %cst_83 = arith.constant 1.000000e+00 : f32
    %254 = vector.broadcast %cst_83 : f32 to vector<8x128xf32>
    %255 = arith.addf %254, %253 : vector<8x128xf32>
    %256 = arith.divf %254, %255 : vector<8x128xf32>
    %257 = vector.extract_strided_slice %247 {offsets = [0, 128], sizes = [8, 128], strides = [1, 1]} : vector<8x384xf32> to vector<8x128xf32>
    %258 = vector.extract_strided_slice %248 {offsets = [0, 128], sizes = [8, 128], strides = [1, 1]} : vector<8x384xf32> to vector<8x128xf32>
    %259 = arith.addf %257, %258 : vector<8x128xf32>
    %260 = arith.negf %259 : vector<8x128xf32>
    %261 = math.exp %260 : vector<8x128xf32>
    %cst_84 = arith.constant 1.000000e+00 : f32
    %262 = vector.broadcast %cst_84 : f32 to vector<8x128xf32>
    %263 = arith.addf %262, %261 : vector<8x128xf32>
    %264 = arith.divf %262, %263 : vector<8x128xf32>
    %265 = vector.extract_strided_slice %247 {offsets = [0, 256], sizes = [8, 128], strides = [1, 1]} : vector<8x384xf32> to vector<8x128xf32>
    %266 = vector.extract_strided_slice %248 {offsets = [0, 256], sizes = [8, 128], strides = [1, 1]} : vector<8x384xf32> to vector<8x128xf32>
    %267 = arith.addf %266, %14 : vector<8x128xf32>
    %268 = arith.mulf %256, %267 : vector<8x128xf32>
    %269 = arith.addf %265, %268 : vector<8x128xf32>
    %270 = math.tanh %269 : vector<8x128xf32>
    %cst_85 = arith.constant 1.000000e+00 : f32
    %271 = vector.broadcast %cst_85 : f32 to vector<8x128xf32>
    %272 = arith.subf %271, %264 : vector<8x128xf32>
    %273 = arith.mulf %272, %270 : vector<8x128xf32>
    %274 = arith.mulf %264, %242 : vector<8x128xf32>
    %275 = arith.addf %273, %274 : vector<8x128xf32>
    %c7_86 = arith.constant 7 : index
    %c0_87 = arith.constant 0 : index
    %c0_88 = arith.constant 0 : index
    %276 = vector.load %arg26[%c7_86, %c0_87, %c0_88] : memref<8x8x128xf32, #tpu.memory_space<vmem>>, vector<1x8x128xf32>
    %277 = vector.shape_cast %276 : vector<1x8x128xf32> to vector<8x128xf32>
    %278 = vector.shape_cast %275 : vector<8x128xf32> to vector<1x8x128xf32>
    tpu.vector_store %arg26[%c7_86, %c0_87, %c0_88], %278 {strides = array<i32>} : memref<8x8x128xf32, #tpu.memory_space<vmem>>, vector<1x8x128xf32>,
    %c1_89 = arith.constant 1 : index
    %c0_90 = arith.constant 0 : index
    %c0_91 = arith.constant 0 : index
    %279 = vector.load %arg1[%c1_89, %c0_90, %c0_91] : memref<2x8x128xf32, #tpu.memory_space<vmem>>, vector<1x8x128xf32>
    %280 = vector.shape_cast %279 : vector<1x8x128xf32> to vector<8x128xf32>
    %c0_92 = arith.constant 0 : index
    %c0_93 = arith.constant 0 : index
    %281 = vector.load %arg7[%c0_92, %c0_93] : memref<128x384xf32, #tpu.memory_space<vmem>>, vector<128x384xf32>
    %c0_94 = arith.constant 0 : index
    %c0_95 = arith.constant 0 : index
    %c0_96 = arith.constant 0 : index
    %282 = vector.load %arg26[%c0_94, %c0_95, %c0_96] : memref<8x8x128xf32, #tpu.memory_space<vmem>>, vector<8x8x128xf32>
    %283 = vector.shape_cast %282 : vector<8x8x128xf32> to vector<64x128xf32>
    %c0_97 = arith.constant 0 : index
    %c0_98 = arith.constant 0 : index
    %284 = vector.load %arg6[%c0_97, %c0_98] : memref<128x384xf32, #tpu.memory_space<vmem>>, vector<128x384xf32>
    %cst_99 = arith.constant dense<0.000000e+00> : vector<64x384xf32>
    %285 = tpu.matmul %283, %284, %cst_99 {dimension_numbers = #tpu.dot_dimension_numbers<[1], [0], [0], [1], [0, 0, 1, 1], [], []>} : vector<64x128xf32>, vector<128x384xf32>, vector<64x384xf32> -> vector<64x384xf32>
    %c0_100 = arith.constant 0 : index
    %c0_101 = arith.constant 0 : index
    %286 = vector.load %arg8[%c0_100, %c0_101] : memref<1x384xf32, #tpu.memory_space<vmem>>, vector<1x384xf32>
    %287 = vector.broadcast %286 : vector<1x384xf32> to vector<64x384xf32>
    %288 = arith.addf %285, %287 : vector<64x384xf32>
    %289 = vector.shape_cast %288 : vector<64x384xf32> to vector<8x8x384xf32>
    %c0_102 = arith.constant 0 : index
    %c0_103 = arith.constant 0 : index
    %c0_104 = arith.constant 0 : index
    %290 = vector.load %arg28[%c0_102, %c0_103, %c0_104] : memref<8x8x384xf32, #tpu.memory_space<vmem>>, vector<8x8x384xf32>
    tpu.vector_store %arg28[%c0_102, %c0_103, %c0_104], %289 {strides = array<i32>} : memref<8x8x384xf32, #tpu.memory_space<vmem>>, vector<8x8x384xf32>,
    %c0_105 = arith.constant 0 : index
    %c0_106 = arith.constant 0 : index
    %291 = vector.load %arg9[%c0_105, %c0_106] : memref<1x128xf32, #tpu.memory_space<vmem>>, vector<1x128xf32>
    %292 = vector.shape_cast %291 : vector<1x128xf32> to vector<1x128xf32>
    %293 = vector.broadcast %292 : vector<1x128xf32> to vector<8x128xf32>
    %c0_107 = arith.constant 0 : index
    %c0_108 = arith.constant 0 : index
    %c0_109 = arith.constant 0 : index
    %294 = vector.load %arg28[%c0_107, %c0_108, %c0_109] : memref<8x8x384xf32, #tpu.memory_space<vmem>>, vector<1x8x384xf32>
    %295 = vector.shape_cast %294 : vector<1x8x384xf32> to vector<8x384xf32>
    %cst_110 = arith.constant dense<0.000000e+00> : vector<8x384xf32>
    %296 = tpu.matmul %280, %281, %cst_110 {dimension_numbers = #tpu.dot_dimension_numbers<[1], [0], [0], [1], [0, 0, 1, 1], [], []>} : vector<8x128xf32>, vector<128x384xf32>, vector<8x384xf32> -> vector<8x384xf32>
    %297 = vector.extract_strided_slice %295 {offsets = [0, 0], sizes = [8, 128], strides = [1, 1]} : vector<8x384xf32> to vector<8x128xf32>
    %298 = vector.extract_strided_slice %296 {offsets = [0, 0], sizes = [8, 128], strides = [1, 1]} : vector<8x384xf32> to vector<8x128xf32>
    %299 = arith.addf %297, %298 : vector<8x128xf32>
    %300 = arith.negf %299 : vector<8x128xf32>
    %301 = math.exp %300 : vector<8x128xf32>
    %cst_111 = arith.constant 1.000000e+00 : f32
    %302 = vector.broadcast %cst_111 : f32 to vector<8x128xf32>
    %303 = arith.addf %302, %301 : vector<8x128xf32>
    %304 = arith.divf %302, %303 : vector<8x128xf32>
    %305 = vector.extract_strided_slice %295 {offsets = [0, 128], sizes = [8, 128], strides = [1, 1]} : vector<8x384xf32> to vector<8x128xf32>
    %306 = vector.extract_strided_slice %296 {offsets = [0, 128], sizes = [8, 128], strides = [1, 1]} : vector<8x384xf32> to vector<8x128xf32>
    %307 = arith.addf %305, %306 : vector<8x128xf32>
    %308 = arith.negf %307 : vector<8x128xf32>
    %309 = math.exp %308 : vector<8x128xf32>
    %cst_112 = arith.constant 1.000000e+00 : f32
    %310 = vector.broadcast %cst_112 : f32 to vector<8x128xf32>
    %311 = arith.addf %310, %309 : vector<8x128xf32>
    %312 = arith.divf %310, %311 : vector<8x128xf32>
    %313 = vector.extract_strided_slice %295 {offsets = [0, 256], sizes = [8, 128], strides = [1, 1]} : vector<8x384xf32> to vector<8x128xf32>
    %314 = vector.extract_strided_slice %296 {offsets = [0, 256], sizes = [8, 128], strides = [1, 1]} : vector<8x384xf32> to vector<8x128xf32>
    %315 = arith.addf %314, %293 : vector<8x128xf32>
    %316 = arith.mulf %304, %315 : vector<8x128xf32>
    %317 = arith.addf %313, %316 : vector<8x128xf32>
    %318 = math.tanh %317 : vector<8x128xf32>
    %cst_113 = arith.constant 1.000000e+00 : f32
    %319 = vector.broadcast %cst_113 : f32 to vector<8x128xf32>
    %320 = arith.subf %319, %312 : vector<8x128xf32>
    %321 = arith.mulf %320, %318 : vector<8x128xf32>
    %322 = arith.mulf %312, %280 : vector<8x128xf32>
    %323 = arith.addf %321, %322 : vector<8x128xf32>
    %c0_114 = arith.constant 0 : index
    %c0_115 = arith.constant 0 : index
    %c0_116 = arith.constant 0 : index
    %324 = vector.load %arg27[%c0_114, %c0_115, %c0_116] : memref<8x8x128xf32, #tpu.memory_space<vmem>>, vector<1x8x128xf32>
    %325 = vector.shape_cast %324 : vector<1x8x128xf32> to vector<8x128xf32>
    %326 = vector.shape_cast %323 : vector<8x128xf32> to vector<1x8x128xf32>
    tpu.vector_store %arg27[%c0_114, %c0_115, %c0_116], %326 {strides = array<i32>} : memref<8x8x128xf32, #tpu.memory_space<vmem>>, vector<1x8x128xf32>,
    %c1_117 = arith.constant 1 : index
    %c0_118 = arith.constant 0 : index
    %c0_119 = arith.constant 0 : index
    %327 = vector.load %arg28[%c1_117, %c0_118, %c0_119] : memref<8x8x384xf32, #tpu.memory_space<vmem>>, vector<1x8x384xf32>
    %328 = vector.shape_cast %327 : vector<1x8x384xf32> to vector<8x384xf32>
    %cst_120 = arith.constant dense<0.000000e+00> : vector<8x384xf32>
    %329 = tpu.matmul %323, %281, %cst_120 {dimension_numbers = #tpu.dot_dimension_numbers<[1], [0], [0], [1], [0, 0, 1, 1], [], []>} : vector<8x128xf32>, vector<128x384xf32>, vector<8x384xf32> -> vector<8x384xf32>
    %330 = vector.extract_strided_slice %328 {offsets = [0, 0], sizes = [8, 128], strides = [1, 1]} : vector<8x384xf32> to vector<8x128xf32>
    %331 = vector.extract_strided_slice %329 {offsets = [0, 0], sizes = [8, 128], strides = [1, 1]} : vector<8x384xf32> to vector<8x128xf32>
    %332 = arith.addf %330, %331 : vector<8x128xf32>
    %333 = arith.negf %332 : vector<8x128xf32>
    %334 = math.exp %333 : vector<8x128xf32>
    %cst_121 = arith.constant 1.000000e+00 : f32
    %335 = vector.broadcast %cst_121 : f32 to vector<8x128xf32>
    %336 = arith.addf %335, %334 : vector<8x128xf32>
    %337 = arith.divf %335, %336 : vector<8x128xf32>
    %338 = vector.extract_strided_slice %328 {offsets = [0, 128], sizes = [8, 128], strides = [1, 1]} : vector<8x384xf32> to vector<8x128xf32>
    %339 = vector.extract_strided_slice %329 {offsets = [0, 128], sizes = [8, 128], strides = [1, 1]} : vector<8x384xf32> to vector<8x128xf32>
    %340 = arith.addf %338, %339 : vector<8x128xf32>
    %341 = arith.negf %340 : vector<8x128xf32>
    %342 = math.exp %341 : vector<8x128xf32>
    %cst_122 = arith.constant 1.000000e+00 : f32
    %343 = vector.broadcast %cst_122 : f32 to vector<8x128xf32>
    %344 = arith.addf %343, %342 : vector<8x128xf32>
    %345 = arith.divf %343, %344 : vector<8x128xf32>
    %346 = vector.extract_strided_slice %328 {offsets = [0, 256], sizes = [8, 128], strides = [1, 1]} : vector<8x384xf32> to vector<8x128xf32>
    %347 = vector.extract_strided_slice %329 {offsets = [0, 256], sizes = [8, 128], strides = [1, 1]} : vector<8x384xf32> to vector<8x128xf32>
    %348 = arith.addf %347, %293 : vector<8x128xf32>
    %349 = arith.mulf %337, %348 : vector<8x128xf32>
    %350 = arith.addf %346, %349 : vector<8x128xf32>
    %351 = math.tanh %350 : vector<8x128xf32>
    %cst_123 = arith.constant 1.000000e+00 : f32
    %352 = vector.broadcast %cst_123 : f32 to vector<8x128xf32>
    %353 = arith.subf %352, %345 : vector<8x128xf32>
    %354 = arith.mulf %353, %351 : vector<8x128xf32>
    %355 = arith.mulf %345, %323 : vector<8x128xf32>
    %356 = arith.addf %354, %355 : vector<8x128xf32>
    %c1_124 = arith.constant 1 : index
    %c0_125 = arith.constant 0 : index
    %c0_126 = arith.constant 0 : index
    %357 = vector.load %arg27[%c1_124, %c0_125, %c0_126] : memref<8x8x128xf32, #tpu.memory_space<vmem>>, vector<1x8x128xf32>
    %358 = vector.shape_cast %357 : vector<1x8x128xf32> to vector<8x128xf32>
    %359 = vector.shape_cast %356 : vector<8x128xf32> to vector<1x8x128xf32>
    tpu.vector_store %arg27[%c1_124, %c0_125, %c0_126], %359 {strides = array<i32>} : memref<8x8x128xf32, #tpu.memory_space<vmem>>, vector<1x8x128xf32>,
    %c2_127 = arith.constant 2 : index
    %c0_128 = arith.constant 0 : index
    %c0_129 = arith.constant 0 : index
    %360 = vector.load %arg28[%c2_127, %c0_128, %c0_129] : memref<8x8x384xf32, #tpu.memory_space<vmem>>, vector<1x8x384xf32>
    %361 = vector.shape_cast %360 : vector<1x8x384xf32> to vector<8x384xf32>
    %cst_130 = arith.constant dense<0.000000e+00> : vector<8x384xf32>
    %362 = tpu.matmul %356, %281, %cst_130 {dimension_numbers = #tpu.dot_dimension_numbers<[1], [0], [0], [1], [0, 0, 1, 1], [], []>} : vector<8x128xf32>, vector<128x384xf32>, vector<8x384xf32> -> vector<8x384xf32>
    %363 = vector.extract_strided_slice %361 {offsets = [0, 0], sizes = [8, 128], strides = [1, 1]} : vector<8x384xf32> to vector<8x128xf32>
    %364 = vector.extract_strided_slice %362 {offsets = [0, 0], sizes = [8, 128], strides = [1, 1]} : vector<8x384xf32> to vector<8x128xf32>
    %365 = arith.addf %363, %364 : vector<8x128xf32>
    %366 = arith.negf %365 : vector<8x128xf32>
    %367 = math.exp %366 : vector<8x128xf32>
    %cst_131 = arith.constant 1.000000e+00 : f32
    %368 = vector.broadcast %cst_131 : f32 to vector<8x128xf32>
    %369 = arith.addf %368, %367 : vector<8x128xf32>
    %370 = arith.divf %368, %369 : vector<8x128xf32>
    %371 = vector.extract_strided_slice %361 {offsets = [0, 128], sizes = [8, 128], strides = [1, 1]} : vector<8x384xf32> to vector<8x128xf32>
    %372 = vector.extract_strided_slice %362 {offsets = [0, 128], sizes = [8, 128], strides = [1, 1]} : vector<8x384xf32> to vector<8x128xf32>
    %373 = arith.addf %371, %372 : vector<8x128xf32>
    %374 = arith.negf %373 : vector<8x128xf32>
    %375 = math.exp %374 : vector<8x128xf32>
    %cst_132 = arith.constant 1.000000e+00 : f32
    %376 = vector.broadcast %cst_132 : f32 to vector<8x128xf32>
    %377 = arith.addf %376, %375 : vector<8x128xf32>
    %378 = arith.divf %376, %377 : vector<8x128xf32>
    %379 = vector.extract_strided_slice %361 {offsets = [0, 256], sizes = [8, 128], strides = [1, 1]} : vector<8x384xf32> to vector<8x128xf32>
    %380 = vector.extract_strided_slice %362 {offsets = [0, 256], sizes = [8, 128], strides = [1, 1]} : vector<8x384xf32> to vector<8x128xf32>
    %381 = arith.addf %380, %293 : vector<8x128xf32>
    %382 = arith.mulf %370, %381 : vector<8x128xf32>
    %383 = arith.addf %379, %382 : vector<8x128xf32>
    %384 = math.tanh %383 : vector<8x128xf32>
    %cst_133 = arith.constant 1.000000e+00 : f32
    %385 = vector.broadcast %cst_133 : f32 to vector<8x128xf32>
    %386 = arith.subf %385, %378 : vector<8x128xf32>
    %387 = arith.mulf %386, %384 : vector<8x128xf32>
    %388 = arith.mulf %378, %356 : vector<8x128xf32>
    %389 = arith.addf %387, %388 : vector<8x128xf32>
    %c2_134 = arith.constant 2 : index
    %c0_135 = arith.constant 0 : index
    %c0_136 = arith.constant 0 : index
    %390 = vector.load %arg27[%c2_134, %c0_135, %c0_136] : memref<8x8x128xf32, #tpu.memory_space<vmem>>, vector<1x8x128xf32>
    %391 = vector.shape_cast %390 : vector<1x8x128xf32> to vector<8x128xf32>
    %392 = vector.shape_cast %389 : vector<8x128xf32> to vector<1x8x128xf32>
    tpu.vector_store %arg27[%c2_134, %c0_135, %c0_136], %392 {strides = array<i32>} : memref<8x8x128xf32, #tpu.memory_space<vmem>>, vector<1x8x128xf32>,
    %c3_137 = arith.constant 3 : index
    %c0_138 = arith.constant 0 : index
    %c0_139 = arith.constant 0 : index
    %393 = vector.load %arg28[%c3_137, %c0_138, %c0_139] : memref<8x8x384xf32, #tpu.memory_space<vmem>>, vector<1x8x384xf32>
    %394 = vector.shape_cast %393 : vector<1x8x384xf32> to vector<8x384xf32>
    %cst_140 = arith.constant dense<0.000000e+00> : vector<8x384xf32>
    %395 = tpu.matmul %389, %281, %cst_140 {dimension_numbers = #tpu.dot_dimension_numbers<[1], [0], [0], [1], [0, 0, 1, 1], [], []>} : vector<8x128xf32>, vector<128x384xf32>, vector<8x384xf32> -> vector<8x384xf32>
    %396 = vector.extract_strided_slice %394 {offsets = [0, 0], sizes = [8, 128], strides = [1, 1]} : vector<8x384xf32> to vector<8x128xf32>
    %397 = vector.extract_strided_slice %395 {offsets = [0, 0], sizes = [8, 128], strides = [1, 1]} : vector<8x384xf32> to vector<8x128xf32>
    %398 = arith.addf %396, %397 : vector<8x128xf32>
    %399 = arith.negf %398 : vector<8x128xf32>
    %400 = math.exp %399 : vector<8x128xf32>
    %cst_141 = arith.constant 1.000000e+00 : f32
    %401 = vector.broadcast %cst_141 : f32 to vector<8x128xf32>
    %402 = arith.addf %401, %400 : vector<8x128xf32>
    %403 = arith.divf %401, %402 : vector<8x128xf32>
    %404 = vector.extract_strided_slice %394 {offsets = [0, 128], sizes = [8, 128], strides = [1, 1]} : vector<8x384xf32> to vector<8x128xf32>
    %405 = vector.extract_strided_slice %395 {offsets = [0, 128], sizes = [8, 128], strides = [1, 1]} : vector<8x384xf32> to vector<8x128xf32>
    %406 = arith.addf %404, %405 : vector<8x128xf32>
    %407 = arith.negf %406 : vector<8x128xf32>
    %408 = math.exp %407 : vector<8x128xf32>
    %cst_142 = arith.constant 1.000000e+00 : f32
    %409 = vector.broadcast %cst_142 : f32 to vector<8x128xf32>
    %410 = arith.addf %409, %408 : vector<8x128xf32>
    %411 = arith.divf %409, %410 : vector<8x128xf32>
    %412 = vector.extract_strided_slice %394 {offsets = [0, 256], sizes = [8, 128], strides = [1, 1]} : vector<8x384xf32> to vector<8x128xf32>
    %413 = vector.extract_strided_slice %395 {offsets = [0, 256], sizes = [8, 128], strides = [1, 1]} : vector<8x384xf32> to vector<8x128xf32>
    %414 = arith.addf %413, %293 : vector<8x128xf32>
    %415 = arith.mulf %403, %414 : vector<8x128xf32>
    %416 = arith.addf %412, %415 : vector<8x128xf32>
    %417 = math.tanh %416 : vector<8x128xf32>
    %cst_143 = arith.constant 1.000000e+00 : f32
    %418 = vector.broadcast %cst_143 : f32 to vector<8x128xf32>
    %419 = arith.subf %418, %411 : vector<8x128xf32>
    %420 = arith.mulf %419, %417 : vector<8x128xf32>
    %421 = arith.mulf %411, %389 : vector<8x128xf32>
    %422 = arith.addf %420, %421 : vector<8x128xf32>
    %c3_144 = arith.constant 3 : index
    %c0_145 = arith.constant 0 : index
    %c0_146 = arith.constant 0 : index
    %423 = vector.load %arg27[%c3_144, %c0_145, %c0_146] : memref<8x8x128xf32, #tpu.memory_space<vmem>>, vector<1x8x128xf32>
    %424 = vector.shape_cast %423 : vector<1x8x128xf32> to vector<8x128xf32>
    %425 = vector.shape_cast %422 : vector<8x128xf32> to vector<1x8x128xf32>
    tpu.vector_store %arg27[%c3_144, %c0_145, %c0_146], %425 {strides = array<i32>} : memref<8x8x128xf32, #tpu.memory_space<vmem>>, vector<1x8x128xf32>,
    %c4_147 = arith.constant 4 : index
    %c0_148 = arith.constant 0 : index
    %c0_149 = arith.constant 0 : index
    %426 = vector.load %arg28[%c4_147, %c0_148, %c0_149] : memref<8x8x384xf32, #tpu.memory_space<vmem>>, vector<1x8x384xf32>
    %427 = vector.shape_cast %426 : vector<1x8x384xf32> to vector<8x384xf32>
    %cst_150 = arith.constant dense<0.000000e+00> : vector<8x384xf32>
    %428 = tpu.matmul %422, %281, %cst_150 {dimension_numbers = #tpu.dot_dimension_numbers<[1], [0], [0], [1], [0, 0, 1, 1], [], []>} : vector<8x128xf32>, vector<128x384xf32>, vector<8x384xf32> -> vector<8x384xf32>
    %429 = vector.extract_strided_slice %427 {offsets = [0, 0], sizes = [8, 128], strides = [1, 1]} : vector<8x384xf32> to vector<8x128xf32>
    %430 = vector.extract_strided_slice %428 {offsets = [0, 0], sizes = [8, 128], strides = [1, 1]} : vector<8x384xf32> to vector<8x128xf32>
    %431 = arith.addf %429, %430 : vector<8x128xf32>
    %432 = arith.negf %431 : vector<8x128xf32>
    %433 = math.exp %432 : vector<8x128xf32>
    %cst_151 = arith.constant 1.000000e+00 : f32
    %434 = vector.broadcast %cst_151 : f32 to vector<8x128xf32>
    %435 = arith.addf %434, %433 : vector<8x128xf32>
    %436 = arith.divf %434, %435 : vector<8x128xf32>
    %437 = vector.extract_strided_slice %427 {offsets = [0, 128], sizes = [8, 128], strides = [1, 1]} : vector<8x384xf32> to vector<8x128xf32>
    %438 = vector.extract_strided_slice %428 {offsets = [0, 128], sizes = [8, 128], strides = [1, 1]} : vector<8x384xf32> to vector<8x128xf32>
    %439 = arith.addf %437, %438 : vector<8x128xf32>
    %440 = arith.negf %439 : vector<8x128xf32>
    %441 = math.exp %440 : vector<8x128xf32>
    %cst_152 = arith.constant 1.000000e+00 : f32
    %442 = vector.broadcast %cst_152 : f32 to vector<8x128xf32>
    %443 = arith.addf %442, %441 : vector<8x128xf32>
    %444 = arith.divf %442, %443 : vector<8x128xf32>
    %445 = vector.extract_strided_slice %427 {offsets = [0, 256], sizes = [8, 128], strides = [1, 1]} : vector<8x384xf32> to vector<8x128xf32>
    %446 = vector.extract_strided_slice %428 {offsets = [0, 256], sizes = [8, 128], strides = [1, 1]} : vector<8x384xf32> to vector<8x128xf32>
    %447 = arith.addf %446, %293 : vector<8x128xf32>
    %448 = arith.mulf %436, %447 : vector<8x128xf32>
    %449 = arith.addf %445, %448 : vector<8x128xf32>
    %450 = math.tanh %449 : vector<8x128xf32>
    %cst_153 = arith.constant 1.000000e+00 : f32
    %451 = vector.broadcast %cst_153 : f32 to vector<8x128xf32>
    %452 = arith.subf %451, %444 : vector<8x128xf32>
    %453 = arith.mulf %452, %450 : vector<8x128xf32>
    %454 = arith.mulf %444, %422 : vector<8x128xf32>
    %455 = arith.addf %453, %454 : vector<8x128xf32>
    %c4_154 = arith.constant 4 : index
    %c0_155 = arith.constant 0 : index
    %c0_156 = arith.constant 0 : index
    %456 = vector.load %arg27[%c4_154, %c0_155, %c0_156] : memref<8x8x128xf32, #tpu.memory_space<vmem>>, vector<1x8x128xf32>
    %457 = vector.shape_cast %456 : vector<1x8x128xf32> to vector<8x128xf32>
    %458 = vector.shape_cast %455 : vector<8x128xf32> to vector<1x8x128xf32>
    tpu.vector_store %arg27[%c4_154, %c0_155, %c0_156], %458 {strides = array<i32>} : memref<8x8x128xf32, #tpu.memory_space<vmem>>, vector<1x8x128xf32>,
    %c5_157 = arith.constant 5 : index
    %c0_158 = arith.constant 0 : index
    %c0_159 = arith.constant 0 : index
    %459 = vector.load %arg28[%c5_157, %c0_158, %c0_159] : memref<8x8x384xf32, #tpu.memory_space<vmem>>, vector<1x8x384xf32>
    %460 = vector.shape_cast %459 : vector<1x8x384xf32> to vector<8x384xf32>
    %cst_160 = arith.constant dense<0.000000e+00> : vector<8x384xf32>
    %461 = tpu.matmul %455, %281, %cst_160 {dimension_numbers = #tpu.dot_dimension_numbers<[1], [0], [0], [1], [0, 0, 1, 1], [], []>} : vector<8x128xf32>, vector<128x384xf32>, vector<8x384xf32> -> vector<8x384xf32>
    %462 = vector.extract_strided_slice %460 {offsets = [0, 0], sizes = [8, 128], strides = [1, 1]} : vector<8x384xf32> to vector<8x128xf32>
    %463 = vector.extract_strided_slice %461 {offsets = [0, 0], sizes = [8, 128], strides = [1, 1]} : vector<8x384xf32> to vector<8x128xf32>
    %464 = arith.addf %462, %463 : vector<8x128xf32>
    %465 = arith.negf %464 : vector<8x128xf32>
    %466 = math.exp %465 : vector<8x128xf32>
    %cst_161 = arith.constant 1.000000e+00 : f32
    %467 = vector.broadcast %cst_161 : f32 to vector<8x128xf32>
    %468 = arith.addf %467, %466 : vector<8x128xf32>
    %469 = arith.divf %467, %468 : vector<8x128xf32>
    %470 = vector.extract_strided_slice %460 {offsets = [0, 128], sizes = [8, 128], strides = [1, 1]} : vector<8x384xf32> to vector<8x128xf32>
    %471 = vector.extract_strided_slice %461 {offsets = [0, 128], sizes = [8, 128], strides = [1, 1]} : vector<8x384xf32> to vector<8x128xf32>
    %472 = arith.addf %470, %471 : vector<8x128xf32>
    %473 = arith.negf %472 : vector<8x128xf32>
    %474 = math.exp %473 : vector<8x128xf32>
    %cst_162 = arith.constant 1.000000e+00 : f32
    %475 = vector.broadcast %cst_162 : f32 to vector<8x128xf32>
    %476 = arith.addf %475, %474 : vector<8x128xf32>
    %477 = arith.divf %475, %476 : vector<8x128xf32>
    %478 = vector.extract_strided_slice %460 {offsets = [0, 256], sizes = [8, 128], strides = [1, 1]} : vector<8x384xf32> to vector<8x128xf32>
    %479 = vector.extract_strided_slice %461 {offsets = [0, 256], sizes = [8, 128], strides = [1, 1]} : vector<8x384xf32> to vector<8x128xf32>
    %480 = arith.addf %479, %293 : vector<8x128xf32>
    %481 = arith.mulf %469, %480 : vector<8x128xf32>
    %482 = arith.addf %478, %481 : vector<8x128xf32>
    %483 = math.tanh %482 : vector<8x128xf32>
    %cst_163 = arith.constant 1.000000e+00 : f32
    %484 = vector.broadcast %cst_163 : f32 to vector<8x128xf32>
    %485 = arith.subf %484, %477 : vector<8x128xf32>
    %486 = arith.mulf %485, %483 : vector<8x128xf32>
    %487 = arith.mulf %477, %455 : vector<8x128xf32>
    %488 = arith.addf %486, %487 : vector<8x128xf32>
    %c5_164 = arith.constant 5 : index
    %c0_165 = arith.constant 0 : index
    %c0_166 = arith.constant 0 : index
    %489 = vector.load %arg27[%c5_164, %c0_165, %c0_166] : memref<8x8x128xf32, #tpu.memory_space<vmem>>, vector<1x8x128xf32>
    %490 = vector.shape_cast %489 : vector<1x8x128xf32> to vector<8x128xf32>
    %491 = vector.shape_cast %488 : vector<8x128xf32> to vector<1x8x128xf32>
    tpu.vector_store %arg27[%c5_164, %c0_165, %c0_166], %491 {strides = array<i32>} : memref<8x8x128xf32, #tpu.memory_space<vmem>>, vector<1x8x128xf32>,
    %c6_167 = arith.constant 6 : index
    %c0_168 = arith.constant 0 : index
    %c0_169 = arith.constant 0 : index
    %492 = vector.load %arg28[%c6_167, %c0_168, %c0_169] : memref<8x8x384xf32, #tpu.memory_space<vmem>>, vector<1x8x384xf32>
    %493 = vector.shape_cast %492 : vector<1x8x384xf32> to vector<8x384xf32>
    %cst_170 = arith.constant dense<0.000000e+00> : vector<8x384xf32>
    %494 = tpu.matmul %488, %281, %cst_170 {dimension_numbers = #tpu.dot_dimension_numbers<[1], [0], [0], [1], [0, 0, 1, 1], [], []>} : vector<8x128xf32>, vector<128x384xf32>, vector<8x384xf32> -> vector<8x384xf32>
    %495 = vector.extract_strided_slice %493 {offsets = [0, 0], sizes = [8, 128], strides = [1, 1]} : vector<8x384xf32> to vector<8x128xf32>
    %496 = vector.extract_strided_slice %494 {offsets = [0, 0], sizes = [8, 128], strides = [1, 1]} : vector<8x384xf32> to vector<8x128xf32>
    %497 = arith.addf %495, %496 : vector<8x128xf32>
    %498 = arith.negf %497 : vector<8x128xf32>
    %499 = math.exp %498 : vector<8x128xf32>
    %cst_171 = arith.constant 1.000000e+00 : f32
    %500 = vector.broadcast %cst_171 : f32 to vector<8x128xf32>
    %501 = arith.addf %500, %499 : vector<8x128xf32>
    %502 = arith.divf %500, %501 : vector<8x128xf32>
    %503 = vector.extract_strided_slice %493 {offsets = [0, 128], sizes = [8, 128], strides = [1, 1]} : vector<8x384xf32> to vector<8x128xf32>
    %504 = vector.extract_strided_slice %494 {offsets = [0, 128], sizes = [8, 128], strides = [1, 1]} : vector<8x384xf32> to vector<8x128xf32>
    %505 = arith.addf %503, %504 : vector<8x128xf32>
    %506 = arith.negf %505 : vector<8x128xf32>
    %507 = math.exp %506 : vector<8x128xf32>
    %cst_172 = arith.constant 1.000000e+00 : f32
    %508 = vector.broadcast %cst_172 : f32 to vector<8x128xf32>
    %509 = arith.addf %508, %507 : vector<8x128xf32>
    %510 = arith.divf %508, %509 : vector<8x128xf32>
    %511 = vector.extract_strided_slice %493 {offsets = [0, 256], sizes = [8, 128], strides = [1, 1]} : vector<8x384xf32> to vector<8x128xf32>
    %512 = vector.extract_strided_slice %494 {offsets = [0, 256], sizes = [8, 128], strides = [1, 1]} : vector<8x384xf32> to vector<8x128xf32>
    %513 = arith.addf %512, %293 : vector<8x128xf32>
    %514 = arith.mulf %502, %513 : vector<8x128xf32>
    %515 = arith.addf %511, %514 : vector<8x128xf32>
    %516 = math.tanh %515 : vector<8x128xf32>
    %cst_173 = arith.constant 1.000000e+00 : f32
    %517 = vector.broadcast %cst_173 : f32 to vector<8x128xf32>
    %518 = arith.subf %517, %510 : vector<8x128xf32>
    %519 = arith.mulf %518, %516 : vector<8x128xf32>
    %520 = arith.mulf %510, %488 : vector<8x128xf32>
    %521 = arith.addf %519, %520 : vector<8x128xf32>
    %c6_174 = arith.constant 6 : index
    %c0_175 = arith.constant 0 : index
    %c0_176 = arith.constant 0 : index
    %522 = vector.load %arg27[%c6_174, %c0_175, %c0_176] : memref<8x8x128xf32, #tpu.memory_space<vmem>>, vector<1x8x128xf32>
    %523 = vector.shape_cast %522 : vector<1x8x128xf32> to vector<8x128xf32>
    %524 = vector.shape_cast %521 : vector<8x128xf32> to vector<1x8x128xf32>
    tpu.vector_store %arg27[%c6_174, %c0_175, %c0_176], %524 {strides = array<i32>} : memref<8x8x128xf32, #tpu.memory_space<vmem>>, vector<1x8x128xf32>,
    %c7_177 = arith.constant 7 : index
    %c0_178 = arith.constant 0 : index
    %c0_179 = arith.constant 0 : index
    %525 = vector.load %arg28[%c7_177, %c0_178, %c0_179] : memref<8x8x384xf32, #tpu.memory_space<vmem>>, vector<1x8x384xf32>
    %526 = vector.shape_cast %525 : vector<1x8x384xf32> to vector<8x384xf32>
    %cst_180 = arith.constant dense<0.000000e+00> : vector<8x384xf32>
    %527 = tpu.matmul %521, %281, %cst_180 {dimension_numbers = #tpu.dot_dimension_numbers<[1], [0], [0], [1], [0, 0, 1, 1], [], []>} : vector<8x128xf32>, vector<128x384xf32>, vector<8x384xf32> -> vector<8x384xf32>
    %528 = vector.extract_strided_slice %526 {offsets = [0, 0], sizes = [8, 128], strides = [1, 1]} : vector<8x384xf32> to vector<8x128xf32>
    %529 = vector.extract_strided_slice %527 {offsets = [0, 0], sizes = [8, 128], strides = [1, 1]} : vector<8x384xf32> to vector<8x128xf32>
    %530 = arith.addf %528, %529 : vector<8x128xf32>
    %531 = arith.negf %530 : vector<8x128xf32>
    %532 = math.exp %531 : vector<8x128xf32>
    %cst_181 = arith.constant 1.000000e+00 : f32
    %533 = vector.broadcast %cst_181 : f32 to vector<8x128xf32>
    %534 = arith.addf %533, %532 : vector<8x128xf32>
    %535 = arith.divf %533, %534 : vector<8x128xf32>
    %536 = vector.extract_strided_slice %526 {offsets = [0, 128], sizes = [8, 128], strides = [1, 1]} : vector<8x384xf32> to vector<8x128xf32>
    %537 = vector.extract_strided_slice %527 {offsets = [0, 128], sizes = [8, 128], strides = [1, 1]} : vector<8x384xf32> to vector<8x128xf32>
    %538 = arith.addf %536, %537 : vector<8x128xf32>
    %539 = arith.negf %538 : vector<8x128xf32>
    %540 = math.exp %539 : vector<8x128xf32>
    %cst_182 = arith.constant 1.000000e+00 : f32
    %541 = vector.broadcast %cst_182 : f32 to vector<8x128xf32>
    %542 = arith.addf %541, %540 : vector<8x128xf32>
    %543 = arith.divf %541, %542 : vector<8x128xf32>
    %544 = vector.extract_strided_slice %526 {offsets = [0, 256], sizes = [8, 128], strides = [1, 1]} : vector<8x384xf32> to vector<8x128xf32>
    %545 = vector.extract_strided_slice %527 {offsets = [0, 256], sizes = [8, 128], strides = [1, 1]} : vector<8x384xf32> to vector<8x128xf32>
    %546 = arith.addf %545, %293 : vector<8x128xf32>
    %547 = arith.mulf %535, %546 : vector<8x128xf32>
    %548 = arith.addf %544, %547 : vector<8x128xf32>
    %549 = math.tanh %548 : vector<8x128xf32>
    %cst_183 = arith.constant 1.000000e+00 : f32
    %550 = vector.broadcast %cst_183 : f32 to vector<8x128xf32>
    %551 = arith.subf %550, %543 : vector<8x128xf32>
    %552 = arith.mulf %551, %549 : vector<8x128xf32>
    %553 = arith.mulf %543, %521 : vector<8x128xf32>
    %554 = arith.addf %552, %553 : vector<8x128xf32>
    %c7_184 = arith.constant 7 : index
    %c0_185 = arith.constant 0 : index
    %c0_186 = arith.constant 0 : index
    %555 = vector.load %arg27[%c7_184, %c0_185, %c0_186] : memref<8x8x128xf32, #tpu.memory_space<vmem>>, vector<1x8x128xf32>
    %556 = vector.shape_cast %555 : vector<1x8x128xf32> to vector<8x128xf32>
    %557 = vector.shape_cast %554 : vector<8x128xf32> to vector<1x8x128xf32>
    tpu.vector_store %arg27[%c7_184, %c0_185, %c0_186], %557 {strides = array<i32>} : memref<8x8x128xf32, #tpu.memory_space<vmem>>, vector<1x8x128xf32>,
    %c0_187 = arith.constant 0 : index
    %c0_188 = arith.constant 0 : index
    %c0_189 = arith.constant 0 : index
    %558 = vector.load %arg27[%c0_187, %c0_188, %c0_189] : memref<8x8x128xf32, #tpu.memory_space<vmem>>, vector<8x8x128xf32>
    %559 = vector.shape_cast %558 : vector<8x8x128xf32> to vector<64x128xf32>
    %c0_190 = arith.constant 0 : index
    %c0_191 = arith.constant 0 : index
    %560 = vector.load %arg18[%c0_190, %c0_191] : memref<128x128xf32, #tpu.memory_space<vmem>>, vector<128x128xf32>
    %cst_192 = arith.constant dense<0.000000e+00> : vector<64x128xf32>
    %561 = tpu.matmul %559, %560, %cst_192 {dimension_numbers = #tpu.dot_dimension_numbers<[1], [0], [0], [1], [0, 0, 1, 1], [], []>} : vector<64x128xf32>, vector<128x128xf32>, vector<64x128xf32> -> vector<64x128xf32>
    %c0_193 = arith.constant 0 : index
    %c0_194 = arith.constant 0 : index
    %562 = vector.load %arg19[%c0_193, %c0_194] : memref<1x128xf32, #tpu.memory_space<vmem>>, vector<1x128xf32>
    %563 = vector.broadcast %562 : vector<1x128xf32> to vector<64x128xf32>
    %564 = arith.addf %561, %563 : vector<64x128xf32>
    %565 = vector.shape_cast %564 : vector<64x128xf32> to vector<8x8x128xf32>
    %cst_195 = arith.constant dense<0xFF800000> : vector<8x128xf32>
    %566 = vector.multi_reduction <maximumf>, %565, %cst_195 [0] : vector<8x8x128xf32> to vector<8x128xf32>
    %567 = vector.shape_cast %566 : vector<8x128xf32> to vector<1x8x128xf32>
    %568 = vector.broadcast %567 : vector<1x8x128xf32> to vector<8x8x128xf32>
    %569 = arith.subf %565, %568 : vector<8x8x128xf32>
    %570 = math.exp %569 : vector<8x8x128xf32>
    %cst_196 = arith.constant dense<0.000000e+00> : vector<8x128xf32>
    %571 = vector.multi_reduction <add>, %570, %cst_196 [0] : vector<8x8x128xf32> to vector<8x128xf32>
    %572 = vector.shape_cast %571 : vector<8x128xf32> to vector<1x8x128xf32>
    %573 = tpu.reciprocal %572 {approx = true} : vector<1x8x128xf32> -> vector<1x8x128xf32>
    %574 = vector.broadcast %573 : vector<1x8x128xf32> to vector<8x8x128xf32>
    %575 = arith.mulf %570, %574 : vector<8x8x128xf32>
    %576 = arith.mulf %575, %558 : vector<8x8x128xf32>
    %c0_197 = arith.constant 0 : index
    %c0_198 = arith.constant 0 : index
    %c0_199 = arith.constant 0 : index
    %577 = vector.load %arg26[%c0_197, %c0_198, %c0_199] : memref<8x8x128xf32, #tpu.memory_space<vmem>>, vector<8x8x128xf32>
    tpu.vector_store %arg26[%c0_197, %c0_198, %c0_199], %576 {strides = array<i32>} : memref<8x8x128xf32, #tpu.memory_space<vmem>>, vector<8x8x128xf32>,
    %c0_200 = arith.constant 0 : index
    %c0_201 = arith.constant 0 : index
    %578 = vector.load %arg11[%c0_200, %c0_201] : memref<128x384xf32, #tpu.memory_space<vmem>>, vector<128x384xf32>
    %c0_202 = arith.constant 0 : index
    %c0_203 = arith.constant 0 : index
    %c0_204 = arith.constant 0 : index
    %579 = vector.load %arg26[%c0_202, %c0_203, %c0_204] : memref<8x8x128xf32, #tpu.memory_space<vmem>>, vector<8x8x128xf32>
    %580 = vector.shape_cast %579 : vector<8x8x128xf32> to vector<64x128xf32>
    %c0_205 = arith.constant 0 : index
    %c0_206 = arith.constant 0 : index
    %581 = vector.load %arg10[%c0_205, %c0_206] : memref<128x384xf32, #tpu.memory_space<vmem>>, vector<128x384xf32>
    %cst_207 = arith.constant dense<0.000000e+00> : vector<64x384xf32>
    %582 = tpu.matmul %580, %581, %cst_207 {dimension_numbers = #tpu.dot_dimension_numbers<[1], [0], [0], [1], [0, 0, 1, 1], [], []>} : vector<64x128xf32>, vector<128x384xf32>, vector<64x384xf32> -> vector<64x384xf32>
    %c0_208 = arith.constant 0 : index
    %c0_209 = arith.constant 0 : index
    %583 = vector.load %arg12[%c0_208, %c0_209] : memref<1x384xf32, #tpu.memory_space<vmem>>, vector<1x384xf32>
    %584 = vector.broadcast %583 : vector<1x384xf32> to vector<64x384xf32>
    %585 = arith.addf %582, %584 : vector<64x384xf32>
    %586 = vector.shape_cast %585 : vector<64x384xf32> to vector<8x8x384xf32>
    %c0_210 = arith.constant 0 : index
    %c0_211 = arith.constant 0 : index
    %c0_212 = arith.constant 0 : index
    %587 = vector.load %arg28[%c0_210, %c0_211, %c0_212] : memref<8x8x384xf32, #tpu.memory_space<vmem>>, vector<8x8x384xf32>
    tpu.vector_store %arg28[%c0_210, %c0_211, %c0_212], %586 {strides = array<i32>} : memref<8x8x384xf32, #tpu.memory_space<vmem>>, vector<8x8x384xf32>,
    %c0_213 = arith.constant 0 : index
    %c0_214 = arith.constant 0 : index
    %588 = vector.load %arg13[%c0_213, %c0_214] : memref<1x128xf32, #tpu.memory_space<vmem>>, vector<1x128xf32>
    %589 = vector.shape_cast %588 : vector<1x128xf32> to vector<1x128xf32>
    %590 = vector.broadcast %589 : vector<1x128xf32> to vector<8x128xf32>
    %c0_215 = arith.constant 0 : index
    %c0_216 = arith.constant 0 : index
    %c0_217 = arith.constant 0 : index
    %591 = vector.load %arg28[%c0_215, %c0_216, %c0_217] : memref<8x8x384xf32, #tpu.memory_space<vmem>>, vector<1x8x384xf32>
    %592 = vector.shape_cast %591 : vector<1x8x384xf32> to vector<8x384xf32>
    %cst_218 = arith.constant dense<0.000000e+00> : vector<8x384xf32>
    %593 = tpu.matmul %275, %578, %cst_218 {dimension_numbers = #tpu.dot_dimension_numbers<[1], [0], [0], [1], [0, 0, 1, 1], [], []>} : vector<8x128xf32>, vector<128x384xf32>, vector<8x384xf32> -> vector<8x384xf32>
    %594 = vector.extract_strided_slice %592 {offsets = [0, 0], sizes = [8, 128], strides = [1, 1]} : vector<8x384xf32> to vector<8x128xf32>
    %595 = vector.extract_strided_slice %593 {offsets = [0, 0], sizes = [8, 128], strides = [1, 1]} : vector<8x384xf32> to vector<8x128xf32>
    %596 = arith.addf %594, %595 : vector<8x128xf32>
    %597 = arith.negf %596 : vector<8x128xf32>
    %598 = math.exp %597 : vector<8x128xf32>
    %cst_219 = arith.constant 1.000000e+00 : f32
    %599 = vector.broadcast %cst_219 : f32 to vector<8x128xf32>
    %600 = arith.addf %599, %598 : vector<8x128xf32>
    %601 = arith.divf %599, %600 : vector<8x128xf32>
    %602 = vector.extract_strided_slice %592 {offsets = [0, 128], sizes = [8, 128], strides = [1, 1]} : vector<8x384xf32> to vector<8x128xf32>
    %603 = vector.extract_strided_slice %593 {offsets = [0, 128], sizes = [8, 128], strides = [1, 1]} : vector<8x384xf32> to vector<8x128xf32>
    %604 = arith.addf %602, %603 : vector<8x128xf32>
    %605 = arith.negf %604 : vector<8x128xf32>
    %606 = math.exp %605 : vector<8x128xf32>
    %cst_220 = arith.constant 1.000000e+00 : f32
    %607 = vector.broadcast %cst_220 : f32 to vector<8x128xf32>
    %608 = arith.addf %607, %606 : vector<8x128xf32>
    %609 = arith.divf %607, %608 : vector<8x128xf32>
    %610 = vector.extract_strided_slice %592 {offsets = [0, 256], sizes = [8, 128], strides = [1, 1]} : vector<8x384xf32> to vector<8x128xf32>
    %611 = vector.extract_strided_slice %593 {offsets = [0, 256], sizes = [8, 128], strides = [1, 1]} : vector<8x384xf32> to vector<8x128xf32>
    %612 = arith.addf %611, %590 : vector<8x128xf32>
    %613 = arith.mulf %601, %612 : vector<8x128xf32>
    %614 = arith.addf %610, %613 : vector<8x128xf32>
    %615 = math.tanh %614 : vector<8x128xf32>
    %cst_221 = arith.constant 1.000000e+00 : f32
    %616 = vector.broadcast %cst_221 : f32 to vector<8x128xf32>
    %617 = arith.subf %616, %609 : vector<8x128xf32>
    %618 = arith.mulf %617, %615 : vector<8x128xf32>
    %619 = arith.mulf %609, %275 : vector<8x128xf32>
    %620 = arith.addf %618, %619 : vector<8x128xf32>
    %c0_222 = arith.constant 0 : index
    %c0_223 = arith.constant 0 : index
    %c0_224 = arith.constant 0 : index
    %621 = vector.load %arg27[%c0_222, %c0_223, %c0_224] : memref<8x8x128xf32, #tpu.memory_space<vmem>>, vector<1x8x128xf32>
    %622 = vector.shape_cast %621 : vector<1x8x128xf32> to vector<8x128xf32>
    %623 = vector.shape_cast %620 : vector<8x128xf32> to vector<1x8x128xf32>
    tpu.vector_store %arg27[%c0_222, %c0_223, %c0_224], %623 {strides = array<i32>} : memref<8x8x128xf32, #tpu.memory_space<vmem>>, vector<1x8x128xf32>,
    %c1_225 = arith.constant 1 : index
    %c0_226 = arith.constant 0 : index
    %c0_227 = arith.constant 0 : index
    %624 = vector.load %arg28[%c1_225, %c0_226, %c0_227] : memref<8x8x384xf32, #tpu.memory_space<vmem>>, vector<1x8x384xf32>
    %625 = vector.shape_cast %624 : vector<1x8x384xf32> to vector<8x384xf32>
    %cst_228 = arith.constant dense<0.000000e+00> : vector<8x384xf32>
    %626 = tpu.matmul %620, %578, %cst_228 {dimension_numbers = #tpu.dot_dimension_numbers<[1], [0], [0], [1], [0, 0, 1, 1], [], []>} : vector<8x128xf32>, vector<128x384xf32>, vector<8x384xf32> -> vector<8x384xf32>
    %627 = vector.extract_strided_slice %625 {offsets = [0, 0], sizes = [8, 128], strides = [1, 1]} : vector<8x384xf32> to vector<8x128xf32>
    %628 = vector.extract_strided_slice %626 {offsets = [0, 0], sizes = [8, 128], strides = [1, 1]} : vector<8x384xf32> to vector<8x128xf32>
    %629 = arith.addf %627, %628 : vector<8x128xf32>
    %630 = arith.negf %629 : vector<8x128xf32>
    %631 = math.exp %630 : vector<8x128xf32>
    %cst_229 = arith.constant 1.000000e+00 : f32
    %632 = vector.broadcast %cst_229 : f32 to vector<8x128xf32>
    %633 = arith.addf %632, %631 : vector<8x128xf32>
    %634 = arith.divf %632, %633 : vector<8x128xf32>
    %635 = vector.extract_strided_slice %625 {offsets = [0, 128], sizes = [8, 128], strides = [1, 1]} : vector<8x384xf32> to vector<8x128xf32>
    %636 = vector.extract_strided_slice %626 {offsets = [0, 128], sizes = [8, 128], strides = [1, 1]} : vector<8x384xf32> to vector<8x128xf32>
    %637 = arith.addf %635, %636 : vector<8x128xf32>
    %638 = arith.negf %637 : vector<8x128xf32>
    %639 = math.exp %638 : vector<8x128xf32>
    %cst_230 = arith.constant 1.000000e+00 : f32
    %640 = vector.broadcast %cst_230 : f32 to vector<8x128xf32>
    %641 = arith.addf %640, %639 : vector<8x128xf32>
    %642 = arith.divf %640, %641 : vector<8x128xf32>
    %643 = vector.extract_strided_slice %625 {offsets = [0, 256], sizes = [8, 128], strides = [1, 1]} : vector<8x384xf32> to vector<8x128xf32>
    %644 = vector.extract_strided_slice %626 {offsets = [0, 256], sizes = [8, 128], strides = [1, 1]} : vector<8x384xf32> to vector<8x128xf32>
    %645 = arith.addf %644, %590 : vector<8x128xf32>
    %646 = arith.mulf %634, %645 : vector<8x128xf32>
    %647 = arith.addf %643, %646 : vector<8x128xf32>
    %648 = math.tanh %647 : vector<8x128xf32>
    %cst_231 = arith.constant 1.000000e+00 : f32
    %649 = vector.broadcast %cst_231 : f32 to vector<8x128xf32>
    %650 = arith.subf %649, %642 : vector<8x128xf32>
    %651 = arith.mulf %650, %648 : vector<8x128xf32>
    %652 = arith.mulf %642, %620 : vector<8x128xf32>
    %653 = arith.addf %651, %652 : vector<8x128xf32>
    %c1_232 = arith.constant 1 : index
    %c0_233 = arith.constant 0 : index
    %c0_234 = arith.constant 0 : index
    %654 = vector.load %arg27[%c1_232, %c0_233, %c0_234] : memref<8x8x128xf32, #tpu.memory_space<vmem>>, vector<1x8x128xf32>
    %655 = vector.shape_cast %654 : vector<1x8x128xf32> to vector<8x128xf32>
    %656 = vector.shape_cast %653 : vector<8x128xf32> to vector<1x8x128xf32>
    tpu.vector_store %arg27[%c1_232, %c0_233, %c0_234], %656 {strides = array<i32>} : memref<8x8x128xf32, #tpu.memory_space<vmem>>, vector<1x8x128xf32>,
    %c2_235 = arith.constant 2 : index
    %c0_236 = arith.constant 0 : index
    %c0_237 = arith.constant 0 : index
    %657 = vector.load %arg28[%c2_235, %c0_236, %c0_237] : memref<8x8x384xf32, #tpu.memory_space<vmem>>, vector<1x8x384xf32>
    %658 = vector.shape_cast %657 : vector<1x8x384xf32> to vector<8x384xf32>
    %cst_238 = arith.constant dense<0.000000e+00> : vector<8x384xf32>
    %659 = tpu.matmul %653, %578, %cst_238 {dimension_numbers = #tpu.dot_dimension_numbers<[1], [0], [0], [1], [0, 0, 1, 1], [], []>} : vector<8x128xf32>, vector<128x384xf32>, vector<8x384xf32> -> vector<8x384xf32>
    %660 = vector.extract_strided_slice %658 {offsets = [0, 0], sizes = [8, 128], strides = [1, 1]} : vector<8x384xf32> to vector<8x128xf32>
    %661 = vector.extract_strided_slice %659 {offsets = [0, 0], sizes = [8, 128], strides = [1, 1]} : vector<8x384xf32> to vector<8x128xf32>
    %662 = arith.addf %660, %661 : vector<8x128xf32>
    %663 = arith.negf %662 : vector<8x128xf32>
    %664 = math.exp %663 : vector<8x128xf32>
    %cst_239 = arith.constant 1.000000e+00 : f32
    %665 = vector.broadcast %cst_239 : f32 to vector<8x128xf32>
    %666 = arith.addf %665, %664 : vector<8x128xf32>
    %667 = arith.divf %665, %666 : vector<8x128xf32>
    %668 = vector.extract_strided_slice %658 {offsets = [0, 128], sizes = [8, 128], strides = [1, 1]} : vector<8x384xf32> to vector<8x128xf32>
    %669 = vector.extract_strided_slice %659 {offsets = [0, 128], sizes = [8, 128], strides = [1, 1]} : vector<8x384xf32> to vector<8x128xf32>
    %670 = arith.addf %668, %669 : vector<8x128xf32>
    %671 = arith.negf %670 : vector<8x128xf32>
    %672 = math.exp %671 : vector<8x128xf32>
    %cst_240 = arith.constant 1.000000e+00 : f32
    %673 = vector.broadcast %cst_240 : f32 to vector<8x128xf32>
    %674 = arith.addf %673, %672 : vector<8x128xf32>
    %675 = arith.divf %673, %674 : vector<8x128xf32>
    %676 = vector.extract_strided_slice %658 {offsets = [0, 256], sizes = [8, 128], strides = [1, 1]} : vector<8x384xf32> to vector<8x128xf32>
    %677 = vector.extract_strided_slice %659 {offsets = [0, 256], sizes = [8, 128], strides = [1, 1]} : vector<8x384xf32> to vector<8x128xf32>
    %678 = arith.addf %677, %590 : vector<8x128xf32>
    %679 = arith.mulf %667, %678 : vector<8x128xf32>
    %680 = arith.addf %676, %679 : vector<8x128xf32>
    %681 = math.tanh %680 : vector<8x128xf32>
    %cst_241 = arith.constant 1.000000e+00 : f32
    %682 = vector.broadcast %cst_241 : f32 to vector<8x128xf32>
    %683 = arith.subf %682, %675 : vector<8x128xf32>
    %684 = arith.mulf %683, %681 : vector<8x128xf32>
    %685 = arith.mulf %675, %653 : vector<8x128xf32>
    %686 = arith.addf %684, %685 : vector<8x128xf32>
    %c2_242 = arith.constant 2 : index
    %c0_243 = arith.constant 0 : index
    %c0_244 = arith.constant 0 : index
    %687 = vector.load %arg27[%c2_242, %c0_243, %c0_244] : memref<8x8x128xf32, #tpu.memory_space<vmem>>, vector<1x8x128xf32>
    %688 = vector.shape_cast %687 : vector<1x8x128xf32> to vector<8x128xf32>
    %689 = vector.shape_cast %686 : vector<8x128xf32> to vector<1x8x128xf32>
    tpu.vector_store %arg27[%c2_242, %c0_243, %c0_244], %689 {strides = array<i32>} : memref<8x8x128xf32, #tpu.memory_space<vmem>>, vector<1x8x128xf32>,
    %c3_245 = arith.constant 3 : index
    %c0_246 = arith.constant 0 : index
    %c0_247 = arith.constant 0 : index
    %690 = vector.load %arg28[%c3_245, %c0_246, %c0_247] : memref<8x8x384xf32, #tpu.memory_space<vmem>>, vector<1x8x384xf32>
    %691 = vector.shape_cast %690 : vector<1x8x384xf32> to vector<8x384xf32>
    %cst_248 = arith.constant dense<0.000000e+00> : vector<8x384xf32>
    %692 = tpu.matmul %686, %578, %cst_248 {dimension_numbers = #tpu.dot_dimension_numbers<[1], [0], [0], [1], [0, 0, 1, 1], [], []>} : vector<8x128xf32>, vector<128x384xf32>, vector<8x384xf32> -> vector<8x384xf32>
    %693 = vector.extract_strided_slice %691 {offsets = [0, 0], sizes = [8, 128], strides = [1, 1]} : vector<8x384xf32> to vector<8x128xf32>
    %694 = vector.extract_strided_slice %692 {offsets = [0, 0], sizes = [8, 128], strides = [1, 1]} : vector<8x384xf32> to vector<8x128xf32>
    %695 = arith.addf %693, %694 : vector<8x128xf32>
    %696 = arith.negf %695 : vector<8x128xf32>
    %697 = math.exp %696 : vector<8x128xf32>
    %cst_249 = arith.constant 1.000000e+00 : f32
    %698 = vector.broadcast %cst_249 : f32 to vector<8x128xf32>
    %699 = arith.addf %698, %697 : vector<8x128xf32>
    %700 = arith.divf %698, %699 : vector<8x128xf32>
    %701 = vector.extract_strided_slice %691 {offsets = [0, 128], sizes = [8, 128], strides = [1, 1]} : vector<8x384xf32> to vector<8x128xf32>
    %702 = vector.extract_strided_slice %692 {offsets = [0, 128], sizes = [8, 128], strides = [1, 1]} : vector<8x384xf32> to vector<8x128xf32>
    %703 = arith.addf %701, %702 : vector<8x128xf32>
    %704 = arith.negf %703 : vector<8x128xf32>
    %705 = math.exp %704 : vector<8x128xf32>
    %cst_250 = arith.constant 1.000000e+00 : f32
    %706 = vector.broadcast %cst_250 : f32 to vector<8x128xf32>
    %707 = arith.addf %706, %705 : vector<8x128xf32>
    %708 = arith.divf %706, %707 : vector<8x128xf32>
    %709 = vector.extract_strided_slice %691 {offsets = [0, 256], sizes = [8, 128], strides = [1, 1]} : vector<8x384xf32> to vector<8x128xf32>
    %710 = vector.extract_strided_slice %692 {offsets = [0, 256], sizes = [8, 128], strides = [1, 1]} : vector<8x384xf32> to vector<8x128xf32>
    %711 = arith.addf %710, %590 : vector<8x128xf32>
    %712 = arith.mulf %700, %711 : vector<8x128xf32>
    %713 = arith.addf %709, %712 : vector<8x128xf32>
    %714 = math.tanh %713 : vector<8x128xf32>
    %cst_251 = arith.constant 1.000000e+00 : f32
    %715 = vector.broadcast %cst_251 : f32 to vector<8x128xf32>
    %716 = arith.subf %715, %708 : vector<8x128xf32>
    %717 = arith.mulf %716, %714 : vector<8x128xf32>
    %718 = arith.mulf %708, %686 : vector<8x128xf32>
    %719 = arith.addf %717, %718 : vector<8x128xf32>
    %c3_252 = arith.constant 3 : index
    %c0_253 = arith.constant 0 : index
    %c0_254 = arith.constant 0 : index
    %720 = vector.load %arg27[%c3_252, %c0_253, %c0_254] : memref<8x8x128xf32, #tpu.memory_space<vmem>>, vector<1x8x128xf32>
    %721 = vector.shape_cast %720 : vector<1x8x128xf32> to vector<8x128xf32>
    %722 = vector.shape_cast %719 : vector<8x128xf32> to vector<1x8x128xf32>
    tpu.vector_store %arg27[%c3_252, %c0_253, %c0_254], %722 {strides = array<i32>} : memref<8x8x128xf32, #tpu.memory_space<vmem>>, vector<1x8x128xf32>,
    %c4_255 = arith.constant 4 : index
    %c0_256 = arith.constant 0 : index
    %c0_257 = arith.constant 0 : index
    %723 = vector.load %arg28[%c4_255, %c0_256, %c0_257] : memref<8x8x384xf32, #tpu.memory_space<vmem>>, vector<1x8x384xf32>
    %724 = vector.shape_cast %723 : vector<1x8x384xf32> to vector<8x384xf32>
    %cst_258 = arith.constant dense<0.000000e+00> : vector<8x384xf32>
    %725 = tpu.matmul %719, %578, %cst_258 {dimension_numbers = #tpu.dot_dimension_numbers<[1], [0], [0], [1], [0, 0, 1, 1], [], []>} : vector<8x128xf32>, vector<128x384xf32>, vector<8x384xf32> -> vector<8x384xf32>
    %726 = vector.extract_strided_slice %724 {offsets = [0, 0], sizes = [8, 128], strides = [1, 1]} : vector<8x384xf32> to vector<8x128xf32>
    %727 = vector.extract_strided_slice %725 {offsets = [0, 0], sizes = [8, 128], strides = [1, 1]} : vector<8x384xf32> to vector<8x128xf32>
    %728 = arith.addf %726, %727 : vector<8x128xf32>
    %729 = arith.negf %728 : vector<8x128xf32>
    %730 = math.exp %729 : vector<8x128xf32>
    %cst_259 = arith.constant 1.000000e+00 : f32
    %731 = vector.broadcast %cst_259 : f32 to vector<8x128xf32>
    %732 = arith.addf %731, %730 : vector<8x128xf32>
    %733 = arith.divf %731, %732 : vector<8x128xf32>
    %734 = vector.extract_strided_slice %724 {offsets = [0, 128], sizes = [8, 128], strides = [1, 1]} : vector<8x384xf32> to vector<8x128xf32>
    %735 = vector.extract_strided_slice %725 {offsets = [0, 128], sizes = [8, 128], strides = [1, 1]} : vector<8x384xf32> to vector<8x128xf32>
    %736 = arith.addf %734, %735 : vector<8x128xf32>
    %737 = arith.negf %736 : vector<8x128xf32>
    %738 = math.exp %737 : vector<8x128xf32>
    %cst_260 = arith.constant 1.000000e+00 : f32
    %739 = vector.broadcast %cst_260 : f32 to vector<8x128xf32>
    %740 = arith.addf %739, %738 : vector<8x128xf32>
    %741 = arith.divf %739, %740 : vector<8x128xf32>
    %742 = vector.extract_strided_slice %724 {offsets = [0, 256], sizes = [8, 128], strides = [1, 1]} : vector<8x384xf32> to vector<8x128xf32>
    %743 = vector.extract_strided_slice %725 {offsets = [0, 256], sizes = [8, 128], strides = [1, 1]} : vector<8x384xf32> to vector<8x128xf32>
    %744 = arith.addf %743, %590 : vector<8x128xf32>
    %745 = arith.mulf %733, %744 : vector<8x128xf32>
    %746 = arith.addf %742, %745 : vector<8x128xf32>
    %747 = math.tanh %746 : vector<8x128xf32>
    %cst_261 = arith.constant 1.000000e+00 : f32
    %748 = vector.broadcast %cst_261 : f32 to vector<8x128xf32>
    %749 = arith.subf %748, %741 : vector<8x128xf32>
    %750 = arith.mulf %749, %747 : vector<8x128xf32>
    %751 = arith.mulf %741, %719 : vector<8x128xf32>
    %752 = arith.addf %750, %751 : vector<8x128xf32>
    %c4_262 = arith.constant 4 : index
    %c0_263 = arith.constant 0 : index
    %c0_264 = arith.constant 0 : index
    %753 = vector.load %arg27[%c4_262, %c0_263, %c0_264] : memref<8x8x128xf32, #tpu.memory_space<vmem>>, vector<1x8x128xf32>
    %754 = vector.shape_cast %753 : vector<1x8x128xf32> to vector<8x128xf32>
    %755 = vector.shape_cast %752 : vector<8x128xf32> to vector<1x8x128xf32>
    tpu.vector_store %arg27[%c4_262, %c0_263, %c0_264], %755 {strides = array<i32>} : memref<8x8x128xf32, #tpu.memory_space<vmem>>, vector<1x8x128xf32>,
    %c5_265 = arith.constant 5 : index
    %c0_266 = arith.constant 0 : index
    %c0_267 = arith.constant 0 : index
    %756 = vector.load %arg28[%c5_265, %c0_266, %c0_267] : memref<8x8x384xf32, #tpu.memory_space<vmem>>, vector<1x8x384xf32>
    %757 = vector.shape_cast %756 : vector<1x8x384xf32> to vector<8x384xf32>
    %cst_268 = arith.constant dense<0.000000e+00> : vector<8x384xf32>
    %758 = tpu.matmul %752, %578, %cst_268 {dimension_numbers = #tpu.dot_dimension_numbers<[1], [0], [0], [1], [0, 0, 1, 1], [], []>} : vector<8x128xf32>, vector<128x384xf32>, vector<8x384xf32> -> vector<8x384xf32>
    %759 = vector.extract_strided_slice %757 {offsets = [0, 0], sizes = [8, 128], strides = [1, 1]} : vector<8x384xf32> to vector<8x128xf32>
    %760 = vector.extract_strided_slice %758 {offsets = [0, 0], sizes = [8, 128], strides = [1, 1]} : vector<8x384xf32> to vector<8x128xf32>
    %761 = arith.addf %759, %760 : vector<8x128xf32>
    %762 = arith.negf %761 : vector<8x128xf32>
    %763 = math.exp %762 : vector<8x128xf32>
    %cst_269 = arith.constant 1.000000e+00 : f32
    %764 = vector.broadcast %cst_269 : f32 to vector<8x128xf32>
    %765 = arith.addf %764, %763 : vector<8x128xf32>
    %766 = arith.divf %764, %765 : vector<8x128xf32>
    %767 = vector.extract_strided_slice %757 {offsets = [0, 128], sizes = [8, 128], strides = [1, 1]} : vector<8x384xf32> to vector<8x128xf32>
    %768 = vector.extract_strided_slice %758 {offsets = [0, 128], sizes = [8, 128], strides = [1, 1]} : vector<8x384xf32> to vector<8x128xf32>
    %769 = arith.addf %767, %768 : vector<8x128xf32>
    %770 = arith.negf %769 : vector<8x128xf32>
    %771 = math.exp %770 : vector<8x128xf32>
    %cst_270 = arith.constant 1.000000e+00 : f32
    %772 = vector.broadcast %cst_270 : f32 to vector<8x128xf32>
    %773 = arith.addf %772, %771 : vector<8x128xf32>
    %774 = arith.divf %772, %773 : vector<8x128xf32>
    %775 = vector.extract_strided_slice %757 {offsets = [0, 256], sizes = [8, 128], strides = [1, 1]} : vector<8x384xf32> to vector<8x128xf32>
    %776 = vector.extract_strided_slice %758 {offsets = [0, 256], sizes = [8, 128], strides = [1, 1]} : vector<8x384xf32> to vector<8x128xf32>
    %777 = arith.addf %776, %590 : vector<8x128xf32>
    %778 = arith.mulf %766, %777 : vector<8x128xf32>
    %779 = arith.addf %775, %778 : vector<8x128xf32>
    %780 = math.tanh %779 : vector<8x128xf32>
    %cst_271 = arith.constant 1.000000e+00 : f32
    %781 = vector.broadcast %cst_271 : f32 to vector<8x128xf32>
    %782 = arith.subf %781, %774 : vector<8x128xf32>
    %783 = arith.mulf %782, %780 : vector<8x128xf32>
    %784 = arith.mulf %774, %752 : vector<8x128xf32>
    %785 = arith.addf %783, %784 : vector<8x128xf32>
    %c5_272 = arith.constant 5 : index
    %c0_273 = arith.constant 0 : index
    %c0_274 = arith.constant 0 : index
    %786 = vector.load %arg27[%c5_272, %c0_273, %c0_274] : memref<8x8x128xf32, #tpu.memory_space<vmem>>, vector<1x8x128xf32>
    %787 = vector.shape_cast %786 : vector<1x8x128xf32> to vector<8x128xf32>
    %788 = vector.shape_cast %785 : vector<8x128xf32> to vector<1x8x128xf32>
    tpu.vector_store %arg27[%c5_272, %c0_273, %c0_274], %788 {strides = array<i32>} : memref<8x8x128xf32, #tpu.memory_space<vmem>>, vector<1x8x128xf32>,
    %c6_275 = arith.constant 6 : index
    %c0_276 = arith.constant 0 : index
    %c0_277 = arith.constant 0 : index
    %789 = vector.load %arg28[%c6_275, %c0_276, %c0_277] : memref<8x8x384xf32, #tpu.memory_space<vmem>>, vector<1x8x384xf32>
    %790 = vector.shape_cast %789 : vector<1x8x384xf32> to vector<8x384xf32>
    %cst_278 = arith.constant dense<0.000000e+00> : vector<8x384xf32>
    %791 = tpu.matmul %785, %578, %cst_278 {dimension_numbers = #tpu.dot_dimension_numbers<[1], [0], [0], [1], [0, 0, 1, 1], [], []>} : vector<8x128xf32>, vector<128x384xf32>, vector<8x384xf32> -> vector<8x384xf32>
    %792 = vector.extract_strided_slice %790 {offsets = [0, 0], sizes = [8, 128], strides = [1, 1]} : vector<8x384xf32> to vector<8x128xf32>
    %793 = vector.extract_strided_slice %791 {offsets = [0, 0], sizes = [8, 128], strides = [1, 1]} : vector<8x384xf32> to vector<8x128xf32>
    %794 = arith.addf %792, %793 : vector<8x128xf32>
    %795 = arith.negf %794 : vector<8x128xf32>
    %796 = math.exp %795 : vector<8x128xf32>
    %cst_279 = arith.constant 1.000000e+00 : f32
    %797 = vector.broadcast %cst_279 : f32 to vector<8x128xf32>
    %798 = arith.addf %797, %796 : vector<8x128xf32>
    %799 = arith.divf %797, %798 : vector<8x128xf32>
    %800 = vector.extract_strided_slice %790 {offsets = [0, 128], sizes = [8, 128], strides = [1, 1]} : vector<8x384xf32> to vector<8x128xf32>
    %801 = vector.extract_strided_slice %791 {offsets = [0, 128], sizes = [8, 128], strides = [1, 1]} : vector<8x384xf32> to vector<8x128xf32>
    %802 = arith.addf %800, %801 : vector<8x128xf32>
    %803 = arith.negf %802 : vector<8x128xf32>
    %804 = math.exp %803 : vector<8x128xf32>
    %cst_280 = arith.constant 1.000000e+00 : f32
    %805 = vector.broadcast %cst_280 : f32 to vector<8x128xf32>
    %806 = arith.addf %805, %804 : vector<8x128xf32>
    %807 = arith.divf %805, %806 : vector<8x128xf32>
    %808 = vector.extract_strided_slice %790 {offsets = [0, 256], sizes = [8, 128], strides = [1, 1]} : vector<8x384xf32> to vector<8x128xf32>
    %809 = vector.extract_strided_slice %791 {offsets = [0, 256], sizes = [8, 128], strides = [1, 1]} : vector<8x384xf32> to vector<8x128xf32>
    %810 = arith.addf %809, %590 : vector<8x128xf32>
    %811 = arith.mulf %799, %810 : vector<8x128xf32>
    %812 = arith.addf %808, %811 : vector<8x128xf32>
    %813 = math.tanh %812 : vector<8x128xf32>
    %cst_281 = arith.constant 1.000000e+00 : f32
    %814 = vector.broadcast %cst_281 : f32 to vector<8x128xf32>
    %815 = arith.subf %814, %807 : vector<8x128xf32>
    %816 = arith.mulf %815, %813 : vector<8x128xf32>
    %817 = arith.mulf %807, %785 : vector<8x128xf32>
    %818 = arith.addf %816, %817 : vector<8x128xf32>
    %c6_282 = arith.constant 6 : index
    %c0_283 = arith.constant 0 : index
    %c0_284 = arith.constant 0 : index
    %819 = vector.load %arg27[%c6_282, %c0_283, %c0_284] : memref<8x8x128xf32, #tpu.memory_space<vmem>>, vector<1x8x128xf32>
    %820 = vector.shape_cast %819 : vector<1x8x128xf32> to vector<8x128xf32>
    %821 = vector.shape_cast %818 : vector<8x128xf32> to vector<1x8x128xf32>
    tpu.vector_store %arg27[%c6_282, %c0_283, %c0_284], %821 {strides = array<i32>} : memref<8x8x128xf32, #tpu.memory_space<vmem>>, vector<1x8x128xf32>,
    %c7_285 = arith.constant 7 : index
    %c0_286 = arith.constant 0 : index
    %c0_287 = arith.constant 0 : index
    %822 = vector.load %arg28[%c7_285, %c0_286, %c0_287] : memref<8x8x384xf32, #tpu.memory_space<vmem>>, vector<1x8x384xf32>
    %823 = vector.shape_cast %822 : vector<1x8x384xf32> to vector<8x384xf32>
    %cst_288 = arith.constant dense<0.000000e+00> : vector<8x384xf32>
    %824 = tpu.matmul %818, %578, %cst_288 {dimension_numbers = #tpu.dot_dimension_numbers<[1], [0], [0], [1], [0, 0, 1, 1], [], []>} : vector<8x128xf32>, vector<128x384xf32>, vector<8x384xf32> -> vector<8x384xf32>
    %825 = vector.extract_strided_slice %823 {offsets = [0, 0], sizes = [8, 128], strides = [1, 1]} : vector<8x384xf32> to vector<8x128xf32>
    %826 = vector.extract_strided_slice %824 {offsets = [0, 0], sizes = [8, 128], strides = [1, 1]} : vector<8x384xf32> to vector<8x128xf32>
    %827 = arith.addf %825, %826 : vector<8x128xf32>
    %828 = arith.negf %827 : vector<8x128xf32>
    %829 = math.exp %828 : vector<8x128xf32>
    %cst_289 = arith.constant 1.000000e+00 : f32
    %830 = vector.broadcast %cst_289 : f32 to vector<8x128xf32>
    %831 = arith.addf %830, %829 : vector<8x128xf32>
    %832 = arith.divf %830, %831 : vector<8x128xf32>
    %833 = vector.extract_strided_slice %823 {offsets = [0, 128], sizes = [8, 128], strides = [1, 1]} : vector<8x384xf32> to vector<8x128xf32>
    %834 = vector.extract_strided_slice %824 {offsets = [0, 128], sizes = [8, 128], strides = [1, 1]} : vector<8x384xf32> to vector<8x128xf32>
    %835 = arith.addf %833, %834 : vector<8x128xf32>
    %836 = arith.negf %835 : vector<8x128xf32>
    %837 = math.exp %836 : vector<8x128xf32>
    %cst_290 = arith.constant 1.000000e+00 : f32
    %838 = vector.broadcast %cst_290 : f32 to vector<8x128xf32>
    %839 = arith.addf %838, %837 : vector<8x128xf32>
    %840 = arith.divf %838, %839 : vector<8x128xf32>
    %841 = vector.extract_strided_slice %823 {offsets = [0, 256], sizes = [8, 128], strides = [1, 1]} : vector<8x384xf32> to vector<8x128xf32>
    %842 = vector.extract_strided_slice %824 {offsets = [0, 256], sizes = [8, 128], strides = [1, 1]} : vector<8x384xf32> to vector<8x128xf32>
    %843 = arith.addf %842, %590 : vector<8x128xf32>
    %844 = arith.mulf %832, %843 : vector<8x128xf32>
    %845 = arith.addf %841, %844 : vector<8x128xf32>
    %846 = math.tanh %845 : vector<8x128xf32>
    %cst_291 = arith.constant 1.000000e+00 : f32
    %847 = vector.broadcast %cst_291 : f32 to vector<8x128xf32>
    %848 = arith.subf %847, %840 : vector<8x128xf32>
    %849 = arith.mulf %848, %846 : vector<8x128xf32>
    %850 = arith.mulf %840, %818 : vector<8x128xf32>
    %851 = arith.addf %849, %850 : vector<8x128xf32>
    %c7_292 = arith.constant 7 : index
    %c0_293 = arith.constant 0 : index
    %c0_294 = arith.constant 0 : index
    %852 = vector.load %arg27[%c7_292, %c0_293, %c0_294] : memref<8x8x128xf32, #tpu.memory_space<vmem>>, vector<1x8x128xf32>
    %853 = vector.shape_cast %852 : vector<1x8x128xf32> to vector<8x128xf32>
    %854 = vector.shape_cast %851 : vector<8x128xf32> to vector<1x8x128xf32>
    tpu.vector_store %arg27[%c7_292, %c0_293, %c0_294], %854 {strides = array<i32>} : memref<8x8x128xf32, #tpu.memory_space<vmem>>, vector<1x8x128xf32>,
    %c0_295 = arith.constant 0 : index
    %c0_296 = arith.constant 0 : index
    %855 = vector.load %arg15[%c0_295, %c0_296] : memref<128x384xf32, #tpu.memory_space<vmem>>, vector<128x384xf32>
    %c0_297 = arith.constant 0 : index
    %c0_298 = arith.constant 0 : index
    %c0_299 = arith.constant 0 : index
    %856 = vector.load %arg27[%c0_297, %c0_298, %c0_299] : memref<8x8x128xf32, #tpu.memory_space<vmem>>, vector<8x8x128xf32>
    %857 = vector.shape_cast %856 : vector<8x8x128xf32> to vector<64x128xf32>
    %c0_300 = arith.constant 0 : index
    %c0_301 = arith.constant 0 : index
    %858 = vector.load %arg14[%c0_300, %c0_301] : memref<128x384xf32, #tpu.memory_space<vmem>>, vector<128x384xf32>
    %cst_302 = arith.constant dense<0.000000e+00> : vector<64x384xf32>
    %859 = tpu.matmul %857, %858, %cst_302 {dimension_numbers = #tpu.dot_dimension_numbers<[1], [0], [0], [1], [0, 0, 1, 1], [], []>} : vector<64x128xf32>, vector<128x384xf32>, vector<64x384xf32> -> vector<64x384xf32>
    %c0_303 = arith.constant 0 : index
    %c0_304 = arith.constant 0 : index
    %860 = vector.load %arg16[%c0_303, %c0_304] : memref<1x384xf32, #tpu.memory_space<vmem>>, vector<1x384xf32>
    %861 = vector.broadcast %860 : vector<1x384xf32> to vector<64x384xf32>
    %862 = arith.addf %859, %861 : vector<64x384xf32>
    %863 = vector.shape_cast %862 : vector<64x384xf32> to vector<8x8x384xf32>
    %c0_305 = arith.constant 0 : index
    %c0_306 = arith.constant 0 : index
    %c0_307 = arith.constant 0 : index
    %864 = vector.load %arg28[%c0_305, %c0_306, %c0_307] : memref<8x8x384xf32, #tpu.memory_space<vmem>>, vector<8x8x384xf32>
    tpu.vector_store %arg28[%c0_305, %c0_306, %c0_307], %863 {strides = array<i32>} : memref<8x8x384xf32, #tpu.memory_space<vmem>>, vector<8x8x384xf32>,
    %c0_308 = arith.constant 0 : index
    %c0_309 = arith.constant 0 : index
    %865 = vector.load %arg17[%c0_308, %c0_309] : memref<1x128xf32, #tpu.memory_space<vmem>>, vector<1x128xf32>
    %866 = vector.shape_cast %865 : vector<1x128xf32> to vector<1x128xf32>
    %867 = vector.broadcast %866 : vector<1x128xf32> to vector<8x128xf32>
    %c0_310 = arith.constant 0 : index
    %c0_311 = arith.constant 0 : index
    %c0_312 = arith.constant 0 : index
    %868 = vector.load %arg28[%c0_310, %c0_311, %c0_312] : memref<8x8x384xf32, #tpu.memory_space<vmem>>, vector<1x8x384xf32>
    %869 = vector.shape_cast %868 : vector<1x8x384xf32> to vector<8x384xf32>
    %cst_313 = arith.constant dense<0.000000e+00> : vector<8x384xf32>
    %870 = tpu.matmul %554, %855, %cst_313 {dimension_numbers = #tpu.dot_dimension_numbers<[1], [0], [0], [1], [0, 0, 1, 1], [], []>} : vector<8x128xf32>, vector<128x384xf32>, vector<8x384xf32> -> vector<8x384xf32>
    %871 = vector.extract_strided_slice %869 {offsets = [0, 0], sizes = [8, 128], strides = [1, 1]} : vector<8x384xf32> to vector<8x128xf32>
    %872 = vector.extract_strided_slice %870 {offsets = [0, 0], sizes = [8, 128], strides = [1, 1]} : vector<8x384xf32> to vector<8x128xf32>
    %873 = arith.addf %871, %872 : vector<8x128xf32>
    %874 = arith.negf %873 : vector<8x128xf32>
    %875 = math.exp %874 : vector<8x128xf32>
    %cst_314 = arith.constant 1.000000e+00 : f32
    %876 = vector.broadcast %cst_314 : f32 to vector<8x128xf32>
    %877 = arith.addf %876, %875 : vector<8x128xf32>
    %878 = arith.divf %876, %877 : vector<8x128xf32>
    %879 = vector.extract_strided_slice %869 {offsets = [0, 128], sizes = [8, 128], strides = [1, 1]} : vector<8x384xf32> to vector<8x128xf32>
    %880 = vector.extract_strided_slice %870 {offsets = [0, 128], sizes = [8, 128], strides = [1, 1]} : vector<8x384xf32> to vector<8x128xf32>
    %881 = arith.addf %879, %880 : vector<8x128xf32>
    %882 = arith.negf %881 : vector<8x128xf32>
    %883 = math.exp %882 : vector<8x128xf32>
    %cst_315 = arith.constant 1.000000e+00 : f32
    %884 = vector.broadcast %cst_315 : f32 to vector<8x128xf32>
    %885 = arith.addf %884, %883 : vector<8x128xf32>
    %886 = arith.divf %884, %885 : vector<8x128xf32>
    %887 = vector.extract_strided_slice %869 {offsets = [0, 256], sizes = [8, 128], strides = [1, 1]} : vector<8x384xf32> to vector<8x128xf32>
    %888 = vector.extract_strided_slice %870 {offsets = [0, 256], sizes = [8, 128], strides = [1, 1]} : vector<8x384xf32> to vector<8x128xf32>
    %889 = arith.addf %888, %867 : vector<8x128xf32>
    %890 = arith.mulf %878, %889 : vector<8x128xf32>
    %891 = arith.addf %887, %890 : vector<8x128xf32>
    %892 = math.tanh %891 : vector<8x128xf32>
    %cst_316 = arith.constant 1.000000e+00 : f32
    %893 = vector.broadcast %cst_316 : f32 to vector<8x128xf32>
    %894 = arith.subf %893, %886 : vector<8x128xf32>
    %895 = arith.mulf %894, %892 : vector<8x128xf32>
    %896 = arith.mulf %886, %554 : vector<8x128xf32>
    %897 = arith.addf %895, %896 : vector<8x128xf32>
    %c0_317 = arith.constant 0 : index
    %c0_318 = arith.constant 0 : index
    %c0_319 = arith.constant 0 : index
    %898 = vector.load %arg26[%c0_317, %c0_318, %c0_319] : memref<8x8x128xf32, #tpu.memory_space<vmem>>, vector<1x8x128xf32>
    %899 = vector.shape_cast %898 : vector<1x8x128xf32> to vector<8x128xf32>
    %900 = vector.shape_cast %897 : vector<8x128xf32> to vector<1x8x128xf32>
    tpu.vector_store %arg26[%c0_317, %c0_318, %c0_319], %900 {strides = array<i32>} : memref<8x8x128xf32, #tpu.memory_space<vmem>>, vector<1x8x128xf32>,
    %c1_320 = arith.constant 1 : index
    %c0_321 = arith.constant 0 : index
    %c0_322 = arith.constant 0 : index
    %901 = vector.load %arg28[%c1_320, %c0_321, %c0_322] : memref<8x8x384xf32, #tpu.memory_space<vmem>>, vector<1x8x384xf32>
    %902 = vector.shape_cast %901 : vector<1x8x384xf32> to vector<8x384xf32>
    %cst_323 = arith.constant dense<0.000000e+00> : vector<8x384xf32>
    %903 = tpu.matmul %897, %855, %cst_323 {dimension_numbers = #tpu.dot_dimension_numbers<[1], [0], [0], [1], [0, 0, 1, 1], [], []>} : vector<8x128xf32>, vector<128x384xf32>, vector<8x384xf32> -> vector<8x384xf32>
    %904 = vector.extract_strided_slice %902 {offsets = [0, 0], sizes = [8, 128], strides = [1, 1]} : vector<8x384xf32> to vector<8x128xf32>
    %905 = vector.extract_strided_slice %903 {offsets = [0, 0], sizes = [8, 128], strides = [1, 1]} : vector<8x384xf32> to vector<8x128xf32>
    %906 = arith.addf %904, %905 : vector<8x128xf32>
    %907 = arith.negf %906 : vector<8x128xf32>
    %908 = math.exp %907 : vector<8x128xf32>
    %cst_324 = arith.constant 1.000000e+00 : f32
    %909 = vector.broadcast %cst_324 : f32 to vector<8x128xf32>
    %910 = arith.addf %909, %908 : vector<8x128xf32>
    %911 = arith.divf %909, %910 : vector<8x128xf32>
    %912 = vector.extract_strided_slice %902 {offsets = [0, 128], sizes = [8, 128], strides = [1, 1]} : vector<8x384xf32> to vector<8x128xf32>
    %913 = vector.extract_strided_slice %903 {offsets = [0, 128], sizes = [8, 128], strides = [1, 1]} : vector<8x384xf32> to vector<8x128xf32>
    %914 = arith.addf %912, %913 : vector<8x128xf32>
    %915 = arith.negf %914 : vector<8x128xf32>
    %916 = math.exp %915 : vector<8x128xf32>
    %cst_325 = arith.constant 1.000000e+00 : f32
    %917 = vector.broadcast %cst_325 : f32 to vector<8x128xf32>
    %918 = arith.addf %917, %916 : vector<8x128xf32>
    %919 = arith.divf %917, %918 : vector<8x128xf32>
    %920 = vector.extract_strided_slice %902 {offsets = [0, 256], sizes = [8, 128], strides = [1, 1]} : vector<8x384xf32> to vector<8x128xf32>
    %921 = vector.extract_strided_slice %903 {offsets = [0, 256], sizes = [8, 128], strides = [1, 1]} : vector<8x384xf32> to vector<8x128xf32>
    %922 = arith.addf %921, %867 : vector<8x128xf32>
    %923 = arith.mulf %911, %922 : vector<8x128xf32>
    %924 = arith.addf %920, %923 : vector<8x128xf32>
    %925 = math.tanh %924 : vector<8x128xf32>
    %cst_326 = arith.constant 1.000000e+00 : f32
    %926 = vector.broadcast %cst_326 : f32 to vector<8x128xf32>
    %927 = arith.subf %926, %919 : vector<8x128xf32>
    %928 = arith.mulf %927, %925 : vector<8x128xf32>
    %929 = arith.mulf %919, %897 : vector<8x128xf32>
    %930 = arith.addf %928, %929 : vector<8x128xf32>
    %c1_327 = arith.constant 1 : index
    %c0_328 = arith.constant 0 : index
    %c0_329 = arith.constant 0 : index
    %931 = vector.load %arg26[%c1_327, %c0_328, %c0_329] : memref<8x8x128xf32, #tpu.memory_space<vmem>>, vector<1x8x128xf32>
    %932 = vector.shape_cast %931 : vector<1x8x128xf32> to vector<8x128xf32>
    %933 = vector.shape_cast %930 : vector<8x128xf32> to vector<1x8x128xf32>
    tpu.vector_store %arg26[%c1_327, %c0_328, %c0_329], %933 {strides = array<i32>} : memref<8x8x128xf32, #tpu.memory_space<vmem>>, vector<1x8x128xf32>,
    %c2_330 = arith.constant 2 : index
    %c0_331 = arith.constant 0 : index
    %c0_332 = arith.constant 0 : index
    %934 = vector.load %arg28[%c2_330, %c0_331, %c0_332] : memref<8x8x384xf32, #tpu.memory_space<vmem>>, vector<1x8x384xf32>
    %935 = vector.shape_cast %934 : vector<1x8x384xf32> to vector<8x384xf32>
    %cst_333 = arith.constant dense<0.000000e+00> : vector<8x384xf32>
    %936 = tpu.matmul %930, %855, %cst_333 {dimension_numbers = #tpu.dot_dimension_numbers<[1], [0], [0], [1], [0, 0, 1, 1], [], []>} : vector<8x128xf32>, vector<128x384xf32>, vector<8x384xf32> -> vector<8x384xf32>
    %937 = vector.extract_strided_slice %935 {offsets = [0, 0], sizes = [8, 128], strides = [1, 1]} : vector<8x384xf32> to vector<8x128xf32>
    %938 = vector.extract_strided_slice %936 {offsets = [0, 0], sizes = [8, 128], strides = [1, 1]} : vector<8x384xf32> to vector<8x128xf32>
    %939 = arith.addf %937, %938 : vector<8x128xf32>
    %940 = arith.negf %939 : vector<8x128xf32>
    %941 = math.exp %940 : vector<8x128xf32>
    %cst_334 = arith.constant 1.000000e+00 : f32
    %942 = vector.broadcast %cst_334 : f32 to vector<8x128xf32>
    %943 = arith.addf %942, %941 : vector<8x128xf32>
    %944 = arith.divf %942, %943 : vector<8x128xf32>
    %945 = vector.extract_strided_slice %935 {offsets = [0, 128], sizes = [8, 128], strides = [1, 1]} : vector<8x384xf32> to vector<8x128xf32>
    %946 = vector.extract_strided_slice %936 {offsets = [0, 128], sizes = [8, 128], strides = [1, 1]} : vector<8x384xf32> to vector<8x128xf32>
    %947 = arith.addf %945, %946 : vector<8x128xf32>
    %948 = arith.negf %947 : vector<8x128xf32>
    %949 = math.exp %948 : vector<8x128xf32>
    %cst_335 = arith.constant 1.000000e+00 : f32
    %950 = vector.broadcast %cst_335 : f32 to vector<8x128xf32>
    %951 = arith.addf %950, %949 : vector<8x128xf32>
    %952 = arith.divf %950, %951 : vector<8x128xf32>
    %953 = vector.extract_strided_slice %935 {offsets = [0, 256], sizes = [8, 128], strides = [1, 1]} : vector<8x384xf32> to vector<8x128xf32>
    %954 = vector.extract_strided_slice %936 {offsets = [0, 256], sizes = [8, 128], strides = [1, 1]} : vector<8x384xf32> to vector<8x128xf32>
    %955 = arith.addf %954, %867 : vector<8x128xf32>
    %956 = arith.mulf %944, %955 : vector<8x128xf32>
    %957 = arith.addf %953, %956 : vector<8x128xf32>
    %958 = math.tanh %957 : vector<8x128xf32>
    %cst_336 = arith.constant 1.000000e+00 : f32
    %959 = vector.broadcast %cst_336 : f32 to vector<8x128xf32>
    %960 = arith.subf %959, %952 : vector<8x128xf32>
    %961 = arith.mulf %960, %958 : vector<8x128xf32>
    %962 = arith.mulf %952, %930 : vector<8x128xf32>
    %963 = arith.addf %961, %962 : vector<8x128xf32>
    %c2_337 = arith.constant 2 : index
    %c0_338 = arith.constant 0 : index
    %c0_339 = arith.constant 0 : index
    %964 = vector.load %arg26[%c2_337, %c0_338, %c0_339] : memref<8x8x128xf32, #tpu.memory_space<vmem>>, vector<1x8x128xf32>
    %965 = vector.shape_cast %964 : vector<1x8x128xf32> to vector<8x128xf32>
    %966 = vector.shape_cast %963 : vector<8x128xf32> to vector<1x8x128xf32>
    tpu.vector_store %arg26[%c2_337, %c0_338, %c0_339], %966 {strides = array<i32>} : memref<8x8x128xf32, #tpu.memory_space<vmem>>, vector<1x8x128xf32>,
    %c3_340 = arith.constant 3 : index
    %c0_341 = arith.constant 0 : index
    %c0_342 = arith.constant 0 : index
    %967 = vector.load %arg28[%c3_340, %c0_341, %c0_342] : memref<8x8x384xf32, #tpu.memory_space<vmem>>, vector<1x8x384xf32>
    %968 = vector.shape_cast %967 : vector<1x8x384xf32> to vector<8x384xf32>
    %cst_343 = arith.constant dense<0.000000e+00> : vector<8x384xf32>
    %969 = tpu.matmul %963, %855, %cst_343 {dimension_numbers = #tpu.dot_dimension_numbers<[1], [0], [0], [1], [0, 0, 1, 1], [], []>} : vector<8x128xf32>, vector<128x384xf32>, vector<8x384xf32> -> vector<8x384xf32>
    %970 = vector.extract_strided_slice %968 {offsets = [0, 0], sizes = [8, 128], strides = [1, 1]} : vector<8x384xf32> to vector<8x128xf32>
    %971 = vector.extract_strided_slice %969 {offsets = [0, 0], sizes = [8, 128], strides = [1, 1]} : vector<8x384xf32> to vector<8x128xf32>
    %972 = arith.addf %970, %971 : vector<8x128xf32>
    %973 = arith.negf %972 : vector<8x128xf32>
    %974 = math.exp %973 : vector<8x128xf32>
    %cst_344 = arith.constant 1.000000e+00 : f32
    %975 = vector.broadcast %cst_344 : f32 to vector<8x128xf32>
    %976 = arith.addf %975, %974 : vector<8x128xf32>
    %977 = arith.divf %975, %976 : vector<8x128xf32>
    %978 = vector.extract_strided_slice %968 {offsets = [0, 128], sizes = [8, 128], strides = [1, 1]} : vector<8x384xf32> to vector<8x128xf32>
    %979 = vector.extract_strided_slice %969 {offsets = [0, 128], sizes = [8, 128], strides = [1, 1]} : vector<8x384xf32> to vector<8x128xf32>
    %980 = arith.addf %978, %979 : vector<8x128xf32>
    %981 = arith.negf %980 : vector<8x128xf32>
    %982 = math.exp %981 : vector<8x128xf32>
    %cst_345 = arith.constant 1.000000e+00 : f32
    %983 = vector.broadcast %cst_345 : f32 to vector<8x128xf32>
    %984 = arith.addf %983, %982 : vector<8x128xf32>
    %985 = arith.divf %983, %984 : vector<8x128xf32>
    %986 = vector.extract_strided_slice %968 {offsets = [0, 256], sizes = [8, 128], strides = [1, 1]} : vector<8x384xf32> to vector<8x128xf32>
    %987 = vector.extract_strided_slice %969 {offsets = [0, 256], sizes = [8, 128], strides = [1, 1]} : vector<8x384xf32> to vector<8x128xf32>
    %988 = arith.addf %987, %867 : vector<8x128xf32>
    %989 = arith.mulf %977, %988 : vector<8x128xf32>
    %990 = arith.addf %986, %989 : vector<8x128xf32>
    %991 = math.tanh %990 : vector<8x128xf32>
    %cst_346 = arith.constant 1.000000e+00 : f32
    %992 = vector.broadcast %cst_346 : f32 to vector<8x128xf32>
    %993 = arith.subf %992, %985 : vector<8x128xf32>
    %994 = arith.mulf %993, %991 : vector<8x128xf32>
    %995 = arith.mulf %985, %963 : vector<8x128xf32>
    %996 = arith.addf %994, %995 : vector<8x128xf32>
    %c3_347 = arith.constant 3 : index
    %c0_348 = arith.constant 0 : index
    %c0_349 = arith.constant 0 : index
    %997 = vector.load %arg26[%c3_347, %c0_348, %c0_349] : memref<8x8x128xf32, #tpu.memory_space<vmem>>, vector<1x8x128xf32>
    %998 = vector.shape_cast %997 : vector<1x8x128xf32> to vector<8x128xf32>
    %999 = vector.shape_cast %996 : vector<8x128xf32> to vector<1x8x128xf32>
    tpu.vector_store %arg26[%c3_347, %c0_348, %c0_349], %999 {strides = array<i32>} : memref<8x8x128xf32, #tpu.memory_space<vmem>>, vector<1x8x128xf32>,
    %c4_350 = arith.constant 4 : index
    %c0_351 = arith.constant 0 : index
    %c0_352 = arith.constant 0 : index
    %1000 = vector.load %arg28[%c4_350, %c0_351, %c0_352] : memref<8x8x384xf32, #tpu.memory_space<vmem>>, vector<1x8x384xf32>
    %1001 = vector.shape_cast %1000 : vector<1x8x384xf32> to vector<8x384xf32>
    %cst_353 = arith.constant dense<0.000000e+00> : vector<8x384xf32>
    %1002 = tpu.matmul %996, %855, %cst_353 {dimension_numbers = #tpu.dot_dimension_numbers<[1], [0], [0], [1], [0, 0, 1, 1], [], []>} : vector<8x128xf32>, vector<128x384xf32>, vector<8x384xf32> -> vector<8x384xf32>
    %1003 = vector.extract_strided_slice %1001 {offsets = [0, 0], sizes = [8, 128], strides = [1, 1]} : vector<8x384xf32> to vector<8x128xf32>
    %1004 = vector.extract_strided_slice %1002 {offsets = [0, 0], sizes = [8, 128], strides = [1, 1]} : vector<8x384xf32> to vector<8x128xf32>
    %1005 = arith.addf %1003, %1004 : vector<8x128xf32>
    %1006 = arith.negf %1005 : vector<8x128xf32>
    %1007 = math.exp %1006 : vector<8x128xf32>
    %cst_354 = arith.constant 1.000000e+00 : f32
    %1008 = vector.broadcast %cst_354 : f32 to vector<8x128xf32>
    %1009 = arith.addf %1008, %1007 : vector<8x128xf32>
    %1010 = arith.divf %1008, %1009 : vector<8x128xf32>
    %1011 = vector.extract_strided_slice %1001 {offsets = [0, 128], sizes = [8, 128], strides = [1, 1]} : vector<8x384xf32> to vector<8x128xf32>
    %1012 = vector.extract_strided_slice %1002 {offsets = [0, 128], sizes = [8, 128], strides = [1, 1]} : vector<8x384xf32> to vector<8x128xf32>
    %1013 = arith.addf %1011, %1012 : vector<8x128xf32>
    %1014 = arith.negf %1013 : vector<8x128xf32>
    %1015 = math.exp %1014 : vector<8x128xf32>
    %cst_355 = arith.constant 1.000000e+00 : f32
    %1016 = vector.broadcast %cst_355 : f32 to vector<8x128xf32>
    %1017 = arith.addf %1016, %1015 : vector<8x128xf32>
    %1018 = arith.divf %1016, %1017 : vector<8x128xf32>
    %1019 = vector.extract_strided_slice %1001 {offsets = [0, 256], sizes = [8, 128], strides = [1, 1]} : vector<8x384xf32> to vector<8x128xf32>
    %1020 = vector.extract_strided_slice %1002 {offsets = [0, 256], sizes = [8, 128], strides = [1, 1]} : vector<8x384xf32> to vector<8x128xf32>
    %1021 = arith.addf %1020, %867 : vector<8x128xf32>
    %1022 = arith.mulf %1010, %1021 : vector<8x128xf32>
    %1023 = arith.addf %1019, %1022 : vector<8x128xf32>
    %1024 = math.tanh %1023 : vector<8x128xf32>
    %cst_356 = arith.constant 1.000000e+00 : f32
    %1025 = vector.broadcast %cst_356 : f32 to vector<8x128xf32>
    %1026 = arith.subf %1025, %1018 : vector<8x128xf32>
    %1027 = arith.mulf %1026, %1024 : vector<8x128xf32>
    %1028 = arith.mulf %1018, %996 : vector<8x128xf32>
    %1029 = arith.addf %1027, %1028 : vector<8x128xf32>
    %c4_357 = arith.constant 4 : index
    %c0_358 = arith.constant 0 : index
    %c0_359 = arith.constant 0 : index
    %1030 = vector.load %arg26[%c4_357, %c0_358, %c0_359] : memref<8x8x128xf32, #tpu.memory_space<vmem>>, vector<1x8x128xf32>
    %1031 = vector.shape_cast %1030 : vector<1x8x128xf32> to vector<8x128xf32>
    %1032 = vector.shape_cast %1029 : vector<8x128xf32> to vector<1x8x128xf32>
    tpu.vector_store %arg26[%c4_357, %c0_358, %c0_359], %1032 {strides = array<i32>} : memref<8x8x128xf32, #tpu.memory_space<vmem>>, vector<1x8x128xf32>,
    %c5_360 = arith.constant 5 : index
    %c0_361 = arith.constant 0 : index
    %c0_362 = arith.constant 0 : index
    %1033 = vector.load %arg28[%c5_360, %c0_361, %c0_362] : memref<8x8x384xf32, #tpu.memory_space<vmem>>, vector<1x8x384xf32>
    %1034 = vector.shape_cast %1033 : vector<1x8x384xf32> to vector<8x384xf32>
    %cst_363 = arith.constant dense<0.000000e+00> : vector<8x384xf32>
    %1035 = tpu.matmul %1029, %855, %cst_363 {dimension_numbers = #tpu.dot_dimension_numbers<[1], [0], [0], [1], [0, 0, 1, 1], [], []>} : vector<8x128xf32>, vector<128x384xf32>, vector<8x384xf32> -> vector<8x384xf32>
    %1036 = vector.extract_strided_slice %1034 {offsets = [0, 0], sizes = [8, 128], strides = [1, 1]} : vector<8x384xf32> to vector<8x128xf32>
    %1037 = vector.extract_strided_slice %1035 {offsets = [0, 0], sizes = [8, 128], strides = [1, 1]} : vector<8x384xf32> to vector<8x128xf32>
    %1038 = arith.addf %1036, %1037 : vector<8x128xf32>
    %1039 = arith.negf %1038 : vector<8x128xf32>
    %1040 = math.exp %1039 : vector<8x128xf32>
    %cst_364 = arith.constant 1.000000e+00 : f32
    %1041 = vector.broadcast %cst_364 : f32 to vector<8x128xf32>
    %1042 = arith.addf %1041, %1040 : vector<8x128xf32>
    %1043 = arith.divf %1041, %1042 : vector<8x128xf32>
    %1044 = vector.extract_strided_slice %1034 {offsets = [0, 128], sizes = [8, 128], strides = [1, 1]} : vector<8x384xf32> to vector<8x128xf32>
    %1045 = vector.extract_strided_slice %1035 {offsets = [0, 128], sizes = [8, 128], strides = [1, 1]} : vector<8x384xf32> to vector<8x128xf32>
    %1046 = arith.addf %1044, %1045 : vector<8x128xf32>
    %1047 = arith.negf %1046 : vector<8x128xf32>
    %1048 = math.exp %1047 : vector<8x128xf32>
    %cst_365 = arith.constant 1.000000e+00 : f32
    %1049 = vector.broadcast %cst_365 : f32 to vector<8x128xf32>
    %1050 = arith.addf %1049, %1048 : vector<8x128xf32>
    %1051 = arith.divf %1049, %1050 : vector<8x128xf32>
    %1052 = vector.extract_strided_slice %1034 {offsets = [0, 256], sizes = [8, 128], strides = [1, 1]} : vector<8x384xf32> to vector<8x128xf32>
    %1053 = vector.extract_strided_slice %1035 {offsets = [0, 256], sizes = [8, 128], strides = [1, 1]} : vector<8x384xf32> to vector<8x128xf32>
    %1054 = arith.addf %1053, %867 : vector<8x128xf32>
    %1055 = arith.mulf %1043, %1054 : vector<8x128xf32>
    %1056 = arith.addf %1052, %1055 : vector<8x128xf32>
    %1057 = math.tanh %1056 : vector<8x128xf32>
    %cst_366 = arith.constant 1.000000e+00 : f32
    %1058 = vector.broadcast %cst_366 : f32 to vector<8x128xf32>
    %1059 = arith.subf %1058, %1051 : vector<8x128xf32>
    %1060 = arith.mulf %1059, %1057 : vector<8x128xf32>
    %1061 = arith.mulf %1051, %1029 : vector<8x128xf32>
    %1062 = arith.addf %1060, %1061 : vector<8x128xf32>
    %c5_367 = arith.constant 5 : index
    %c0_368 = arith.constant 0 : index
    %c0_369 = arith.constant 0 : index
    %1063 = vector.load %arg26[%c5_367, %c0_368, %c0_369] : memref<8x8x128xf32, #tpu.memory_space<vmem>>, vector<1x8x128xf32>
    %1064 = vector.shape_cast %1063 : vector<1x8x128xf32> to vector<8x128xf32>
    %1065 = vector.shape_cast %1062 : vector<8x128xf32> to vector<1x8x128xf32>
    tpu.vector_store %arg26[%c5_367, %c0_368, %c0_369], %1065 {strides = array<i32>} : memref<8x8x128xf32, #tpu.memory_space<vmem>>, vector<1x8x128xf32>,
    %c6_370 = arith.constant 6 : index
    %c0_371 = arith.constant 0 : index
    %c0_372 = arith.constant 0 : index
    %1066 = vector.load %arg28[%c6_370, %c0_371, %c0_372] : memref<8x8x384xf32, #tpu.memory_space<vmem>>, vector<1x8x384xf32>
    %1067 = vector.shape_cast %1066 : vector<1x8x384xf32> to vector<8x384xf32>
    %cst_373 = arith.constant dense<0.000000e+00> : vector<8x384xf32>
    %1068 = tpu.matmul %1062, %855, %cst_373 {dimension_numbers = #tpu.dot_dimension_numbers<[1], [0], [0], [1], [0, 0, 1, 1], [], []>} : vector<8x128xf32>, vector<128x384xf32>, vector<8x384xf32> -> vector<8x384xf32>
    %1069 = vector.extract_strided_slice %1067 {offsets = [0, 0], sizes = [8, 128], strides = [1, 1]} : vector<8x384xf32> to vector<8x128xf32>
    %1070 = vector.extract_strided_slice %1068 {offsets = [0, 0], sizes = [8, 128], strides = [1, 1]} : vector<8x384xf32> to vector<8x128xf32>
    %1071 = arith.addf %1069, %1070 : vector<8x128xf32>
    %1072 = arith.negf %1071 : vector<8x128xf32>
    %1073 = math.exp %1072 : vector<8x128xf32>
    %cst_374 = arith.constant 1.000000e+00 : f32
    %1074 = vector.broadcast %cst_374 : f32 to vector<8x128xf32>
    %1075 = arith.addf %1074, %1073 : vector<8x128xf32>
    %1076 = arith.divf %1074, %1075 : vector<8x128xf32>
    %1077 = vector.extract_strided_slice %1067 {offsets = [0, 128], sizes = [8, 128], strides = [1, 1]} : vector<8x384xf32> to vector<8x128xf32>
    %1078 = vector.extract_strided_slice %1068 {offsets = [0, 128], sizes = [8, 128], strides = [1, 1]} : vector<8x384xf32> to vector<8x128xf32>
    %1079 = arith.addf %1077, %1078 : vector<8x128xf32>
    %1080 = arith.negf %1079 : vector<8x128xf32>
    %1081 = math.exp %1080 : vector<8x128xf32>
    %cst_375 = arith.constant 1.000000e+00 : f32
    %1082 = vector.broadcast %cst_375 : f32 to vector<8x128xf32>
    %1083 = arith.addf %1082, %1081 : vector<8x128xf32>
    %1084 = arith.divf %1082, %1083 : vector<8x128xf32>
    %1085 = vector.extract_strided_slice %1067 {offsets = [0, 256], sizes = [8, 128], strides = [1, 1]} : vector<8x384xf32> to vector<8x128xf32>
    %1086 = vector.extract_strided_slice %1068 {offsets = [0, 256], sizes = [8, 128], strides = [1, 1]} : vector<8x384xf32> to vector<8x128xf32>
    %1087 = arith.addf %1086, %867 : vector<8x128xf32>
    %1088 = arith.mulf %1076, %1087 : vector<8x128xf32>
    %1089 = arith.addf %1085, %1088 : vector<8x128xf32>
    %1090 = math.tanh %1089 : vector<8x128xf32>
    %cst_376 = arith.constant 1.000000e+00 : f32
    %1091 = vector.broadcast %cst_376 : f32 to vector<8x128xf32>
    %1092 = arith.subf %1091, %1084 : vector<8x128xf32>
    %1093 = arith.mulf %1092, %1090 : vector<8x128xf32>
    %1094 = arith.mulf %1084, %1062 : vector<8x128xf32>
    %1095 = arith.addf %1093, %1094 : vector<8x128xf32>
    %c6_377 = arith.constant 6 : index
    %c0_378 = arith.constant 0 : index
    %c0_379 = arith.constant 0 : index
    %1096 = vector.load %arg26[%c6_377, %c0_378, %c0_379] : memref<8x8x128xf32, #tpu.memory_space<vmem>>, vector<1x8x128xf32>
    %1097 = vector.shape_cast %1096 : vector<1x8x128xf32> to vector<8x128xf32>
    %1098 = vector.shape_cast %1095 : vector<8x128xf32> to vector<1x8x128xf32>
    tpu.vector_store %arg26[%c6_377, %c0_378, %c0_379], %1098 {strides = array<i32>} : memref<8x8x128xf32, #tpu.memory_space<vmem>>, vector<1x8x128xf32>,
    %c7_380 = arith.constant 7 : index
    %c0_381 = arith.constant 0 : index
    %c0_382 = arith.constant 0 : index
    %1099 = vector.load %arg28[%c7_380, %c0_381, %c0_382] : memref<8x8x384xf32, #tpu.memory_space<vmem>>, vector<1x8x384xf32>
    %1100 = vector.shape_cast %1099 : vector<1x8x384xf32> to vector<8x384xf32>
    %cst_383 = arith.constant dense<0.000000e+00> : vector<8x384xf32>
    %1101 = tpu.matmul %1095, %855, %cst_383 {dimension_numbers = #tpu.dot_dimension_numbers<[1], [0], [0], [1], [0, 0, 1, 1], [], []>} : vector<8x128xf32>, vector<128x384xf32>, vector<8x384xf32> -> vector<8x384xf32>
    %1102 = vector.extract_strided_slice %1100 {offsets = [0, 0], sizes = [8, 128], strides = [1, 1]} : vector<8x384xf32> to vector<8x128xf32>
    %1103 = vector.extract_strided_slice %1101 {offsets = [0, 0], sizes = [8, 128], strides = [1, 1]} : vector<8x384xf32> to vector<8x128xf32>
    %1104 = arith.addf %1102, %1103 : vector<8x128xf32>
    %1105 = arith.negf %1104 : vector<8x128xf32>
    %1106 = math.exp %1105 : vector<8x128xf32>
    %cst_384 = arith.constant 1.000000e+00 : f32
    %1107 = vector.broadcast %cst_384 : f32 to vector<8x128xf32>
    %1108 = arith.addf %1107, %1106 : vector<8x128xf32>
    %1109 = arith.divf %1107, %1108 : vector<8x128xf32>
    %1110 = vector.extract_strided_slice %1100 {offsets = [0, 128], sizes = [8, 128], strides = [1, 1]} : vector<8x384xf32> to vector<8x128xf32>
    %1111 = vector.extract_strided_slice %1101 {offsets = [0, 128], sizes = [8, 128], strides = [1, 1]} : vector<8x384xf32> to vector<8x128xf32>
    %1112 = arith.addf %1110, %1111 : vector<8x128xf32>
    %1113 = arith.negf %1112 : vector<8x128xf32>
    %1114 = math.exp %1113 : vector<8x128xf32>
    %cst_385 = arith.constant 1.000000e+00 : f32
    %1115 = vector.broadcast %cst_385 : f32 to vector<8x128xf32>
    %1116 = arith.addf %1115, %1114 : vector<8x128xf32>
    %1117 = arith.divf %1115, %1116 : vector<8x128xf32>
    %1118 = vector.extract_strided_slice %1100 {offsets = [0, 256], sizes = [8, 128], strides = [1, 1]} : vector<8x384xf32> to vector<8x128xf32>
    %1119 = vector.extract_strided_slice %1101 {offsets = [0, 256], sizes = [8, 128], strides = [1, 1]} : vector<8x384xf32> to vector<8x128xf32>
    %1120 = arith.addf %1119, %867 : vector<8x128xf32>
    %1121 = arith.mulf %1109, %1120 : vector<8x128xf32>
    %1122 = arith.addf %1118, %1121 : vector<8x128xf32>
    %1123 = math.tanh %1122 : vector<8x128xf32>
    %cst_386 = arith.constant 1.000000e+00 : f32
    %1124 = vector.broadcast %cst_386 : f32 to vector<8x128xf32>
    %1125 = arith.subf %1124, %1117 : vector<8x128xf32>
    %1126 = arith.mulf %1125, %1123 : vector<8x128xf32>
    %1127 = arith.mulf %1117, %1095 : vector<8x128xf32>
    %1128 = arith.addf %1126, %1127 : vector<8x128xf32>
    %c7_387 = arith.constant 7 : index
    %c0_388 = arith.constant 0 : index
    %c0_389 = arith.constant 0 : index
    %1129 = vector.load %arg26[%c7_387, %c0_388, %c0_389] : memref<8x8x128xf32, #tpu.memory_space<vmem>>, vector<1x8x128xf32>
    %1130 = vector.shape_cast %1129 : vector<1x8x128xf32> to vector<8x128xf32>
    %1131 = vector.shape_cast %1128 : vector<8x128xf32> to vector<1x8x128xf32>
    tpu.vector_store %arg26[%c7_387, %c0_388, %c0_389], %1131 {strides = array<i32>} : memref<8x8x128xf32, #tpu.memory_space<vmem>>, vector<1x8x128xf32>,
    %c0_390 = arith.constant 0 : index
    %c0_391 = arith.constant 0 : index
    %c0_392 = arith.constant 0 : index
    %1132 = vector.load %arg26[%c0_390, %c0_391, %c0_392] : memref<8x8x128xf32, #tpu.memory_space<vmem>>, vector<8x8x128xf32>
    %1133 = vector.shape_cast %1132 : vector<8x8x128xf32> to vector<64x128xf32>
    %c0_393 = arith.constant 0 : index
    %c0_394 = arith.constant 0 : index
    %1134 = vector.load %arg20[%c0_393, %c0_394] : memref<128x128xf32, #tpu.memory_space<vmem>>, vector<128x128xf32>
    %cst_395 = arith.constant dense<0.000000e+00> : vector<64x128xf32>
    %1135 = tpu.matmul %1133, %1134, %cst_395 {dimension_numbers = #tpu.dot_dimension_numbers<[1], [0], [0], [1], [0, 0, 1, 1], [], []>} : vector<64x128xf32>, vector<128x128xf32>, vector<64x128xf32> -> vector<64x128xf32>
    %c0_396 = arith.constant 0 : index
    %c0_397 = arith.constant 0 : index
    %1136 = vector.load %arg21[%c0_396, %c0_397] : memref<1x128xf32, #tpu.memory_space<vmem>>, vector<1x128xf32>
    %1137 = vector.broadcast %1136 : vector<1x128xf32> to vector<64x128xf32>
    %1138 = arith.addf %1135, %1137 : vector<64x128xf32>
    %cst_398 = arith.constant 0.000000e+00 : f32
    %1139 = vector.broadcast %cst_398 : f32 to vector<64x128xf32>
    %1140 = arith.maximumf %1138, %1139 : vector<64x128xf32>
    %c0_399 = arith.constant 0 : index
    %c0_400 = arith.constant 0 : index
    %1141 = vector.load %arg22[%c0_399, %c0_400] : memref<128x128xf32, #tpu.memory_space<vmem>>, vector<128x128xf32>
    %cst_401 = arith.constant dense<0.000000e+00> : vector<64x128xf32>
    %1142 = tpu.matmul %1140, %1141, %cst_401 {dimension_numbers = #tpu.dot_dimension_numbers<[1], [0], [0], [1], [0, 0, 1, 1], [], []>} : vector<64x128xf32>, vector<128x128xf32>, vector<64x128xf32> -> vector<64x128xf32>
    %c0_402 = arith.constant 0 : index
    %c0_403 = arith.constant 0 : index
    %1143 = vector.load %arg23[%c0_402, %c0_403] : memref<1x128xf32, #tpu.memory_space<vmem>>, vector<1x128xf32>
    %1144 = vector.broadcast %1143 : vector<1x128xf32> to vector<64x128xf32>
    %1145 = arith.addf %1142, %1144 : vector<64x128xf32>
    %1146 = vector.shape_cast %1145 : vector<64x128xf32> to vector<8x8x128xf32>
    %c0_404 = arith.constant 0 : index
    %c0_405 = arith.constant 0 : index
    %c0_406 = arith.constant 0 : index
    %1147 = vector.load %arg24[%c0_404, %c0_405, %c0_406] : memref<8x8x128xf32, #tpu.memory_space<vmem>>, vector<8x8x128xf32>
    tpu.vector_store %arg24[%c0_404, %c0_405, %c0_406], %1146 {strides = array<i32>} : memref<8x8x128xf32, #tpu.memory_space<vmem>>, vector<8x8x128xf32>,
    %c0_407 = arith.constant 0 : index
    %c0_408 = arith.constant 0 : index
    %c0_409 = arith.constant 0 : index
    %1148 = vector.load %arg25[%c0_407, %c0_408, %c0_409] : memref<2x8x128xf32, #tpu.memory_space<vmem>>, vector<1x8x128xf32>
    %1149 = vector.shape_cast %1148 : vector<1x8x128xf32> to vector<8x128xf32>
    %1150 = vector.shape_cast %851 : vector<8x128xf32> to vector<1x8x128xf32>
    tpu.vector_store %arg25[%c0_407, %c0_408, %c0_409], %1150 {strides = array<i32>} : memref<2x8x128xf32, #tpu.memory_space<vmem>>, vector<1x8x128xf32>,
    %c1_410 = arith.constant 1 : index
    %c0_411 = arith.constant 0 : index
    %c0_412 = arith.constant 0 : index
    %1151 = vector.load %arg25[%c1_410, %c0_411, %c0_412] : memref<2x8x128xf32, #tpu.memory_space<vmem>>, vector<1x8x128xf32>
    %1152 = vector.shape_cast %1151 : vector<1x8x128xf32> to vector<8x128xf32>
    %1153 = vector.shape_cast %1128 : vector<8x128xf32> to vector<1x8x128xf32>
    tpu.vector_store %arg25[%c1_410, %c0_411, %c0_412], %1153 {strides = array<i32>} : memref<2x8x128xf32, #tpu.memory_space<vmem>>, vector<1x8x128xf32>,
    return
  }
}

</mosaic_0001>

<llo_original>
// kernel: forward.1
$region0: #{forward.1}
  #allocation0 [shape = 'u32[]', space=smem, size = 0x4, offset = 0x4, fixed_abs, tag = 'smem constant byte address 0x4 - core index']
  #allocation1 [shape = 'u32[144,128]{1,0:T(1,128)}', space=vmem, size = 0x12000, scoped, tag = 'internal scratch']
  #allocation2 [shape = 'f32[8,8,128]{2,1,0:T(8,128)}', space=vmem, size = 0x8000, scoped, tag = 'scratch operand']
  #allocation3 [shape = 'f32[8,8,128]{2,1,0:T(8,128)}', space=vmem, size = 0x8000, scoped, tag = 'scratch operand']
  #allocation4 [shape = 'f32[8,8,384]{2,1,0:T(8,128)}', space=vmem, size = 0x18000, scoped, tag = 'scratch operand']
  %s0 = inlined_call_operand.vmem [shape: f32[8,8,128], index: 0, kind: input, shape index: {}]
  %s1 = inlined_call_operand.vmem [shape: f32[2,8,128], index: 1, kind: input, shape index: {}]
  %s2 = inlined_call_operand.hbm [shape: f32[128,384], index: 2, kind: input, shape index: {}]
  %s3 = inlined_call_operand.hbm [shape: f32[128,384], index: 3, kind: input, shape index: {}]
  %s4 = inlined_call_operand.vmem [shape: f32[1,384], index: 4, kind: input, shape index: {}]
  %s5 = inlined_call_operand.vmem [shape: f32[1,128], index: 5, kind: input, shape index: {}]
  %s6 = inlined_call_operand.hbm [shape: f32[128,384], index: 6, kind: input, shape index: {}]
  %s7 = inlined_call_operand.hbm [shape: f32[128,384], index: 7, kind: input, shape index: {}]
  %s8 = inlined_call_operand.vmem [shape: f32[1,384], index: 8, kind: input, shape index: {}]
  %s9 = inlined_call_operand.vmem [shape: f32[1,128], index: 9, kind: input, shape index: {}]
  %s10 = inlined_call_operand.hbm [shape: f32[128,384], index: 10, kind: input, shape index: {}]
  %s11 = inlined_call_operand.hbm [shape: f32[128,384], index: 11, kind: input, shape index: {}]
  %s12 = inlined_call_operand.vmem [shape: f32[1,384], index: 12, kind: input, shape index: {}]
  %s13 = inlined_call_operand.vmem [shape: f32[1,128], index: 13, kind: input, shape index: {}]
  %s14 = inlined_call_operand.hbm [shape: f32[128,384], index: 14, kind: input, shape index: {}]
  %s15 = inlined_call_operand.hbm [shape: f32[128,384], index: 15, kind: input, shape index: {}]
  %s16 = inlined_call_operand.vmem [shape: f32[1,384], index: 16, kind: input, shape index: {}]
  %s17 = inlined_call_operand.vmem [shape: f32[1,128], index: 17, kind: input, shape index: {}]
  %s18 = inlined_call_operand.vmem [shape: f32[128,128], index: 18, kind: input, shape index: {}]
  %s19 = inlined_call_operand.vmem [shape: f32[1,128], index: 19, kind: input, shape index: {}]
  %s20 = inlined_call_operand.vmem [shape: f32[128,128], index: 20, kind: input, shape index: {}]
  %s21 = inlined_call_operand.vmem [shape: f32[1,128], index: 21, kind: input, shape index: {}]
  %s22 = inlined_call_operand.hbm [shape: f32[128,128], index: 22, kind: input, shape index: {}]
  %s23 = inlined_call_operand.vmem [shape: f32[1,128], index: 23, kind: input, shape index: {}]
  %s24 = inlined_call_operand.vmem [shape: f32[8,8,128], index: 24, kind: output, shape index: {0}]
  %s25 = inlined_call_operand.vmem [shape: f32[2,8,128], index: 25, kind: output, shape index: {1}]
  %26 = xla_tuple %s24, %s25
  %s27 = sld [smem:[#allocation0]]
  $region150: #{forward.1} parent=0
    _
  %s29 = ssub.s32 1, %s27
  %s30 = scalar_select 0, %s29, %s27
  $region1: #{forward.1} parent=0
    #allocation5 [shape = 'u8[196608]{0}', space=vmem, size = 0x30000, scoped, tag = 'input window, operand 2, single buffered']
    #allocation6 [shape = 's32[1]{0}', space=sflag, size = 0x4, scoped, tag = 'scoped memory for forward.1']
    #allocation7 [shape = 'u8[196608]{0}', space=vmem, size = 0x30000, scoped, tag = 'input window, operand 3, single buffered']
    #allocation8 [shape = 's32[1]{0}', space=sflag, size = 0x4, scoped, tag = 'scoped memory for forward.1']
    #allocation9 [shape = 'u8[196608]{0}', space=vmem, size = 0x30000, scoped, tag = 'input window, operand 6, single buffered']
    #allocation10 [shape = 'u8[196608]{0}', space=vmem, size = 0x30000, scoped, tag = 'input window, operand 7, single buffered']
    #allocation11 [shape = 's32[1]{0}', space=sflag, size = 0x4, scoped, tag = 'scoped memory for forward.1']
    #allocation12 [shape = 'u8[196608]{0}', space=vmem, size = 0x30000, scoped, tag = 'input window, operand 10, single buffered']
    #allocation13 [shape = 'u8[196608]{0}', space=vmem, size = 0x30000, scoped, tag = 'input window, operand 11, single buffered']
    #allocation14 [shape = 's32[1]{0}', space=sflag, size = 0x4, scoped, tag = 'scoped memory for forward.1']
    #allocation15 [shape = 'u8[196608]{0}', space=vmem, size = 0x30000, scoped, tag = 'input window, operand 14, single buffered']
    #allocation16 [shape = 'u8[196608]{0}', space=vmem, size = 0x30000, scoped, tag = 'input window, operand 15, single buffered']
    #allocation17 [shape = 's32[1]{0}', space=sflag, size = 0x4, scoped, tag = 'scoped memory for forward.1']
    #allocation18 [shape = 'u8[65536]{0}', space=vmem, size = 0x10000, scoped, tag = 'input window, operand 22, single buffered']
    %31 = vsyncpa [#allocation6], 0
    %32 = vsyncpa [#allocation8], 0
    %33 = vsyncpa [#allocation11], 0
    %34 = vsyncpa [#allocation14], 0
    %35 = vsyncpa [#allocation17], 0
    // Predicated region
    $region2: #{forward.1} parent=1 // pred_check
      _
    $region3: #{forward.1} parent=1 // pred_check_branch
      %37 = sbr.rel (0) target = $region5
    $region4: #{forward.1} parent=1 // pred_region
      _
    $region5: #{forward.1} parent=1 // pred_fallthru
      _
    // Predicated region
    $region6: #{forward.1} parent=1 // pred_check
      _
    $region7: #{forward.1} parent=1 // pred_check_branch
      %39 = sbr.rel (0) target = $region9
    $region8: #{forward.1} parent=1 // pred_region
      _
    $region9: #{forward.1} parent=1 // pred_fallthru
      _
    // Predicated region
    $region10: #{forward.1} parent=1 // pred_check
      _
    $region11: #{forward.1} parent=1 // pred_check_branch
      %41 = sbr.rel (0) target = $region13
    $region12: #{forward.1} parent=1 // pred_region
      %s43 = ssub.s32 6144, 6144
      %44 = vsyncadd [#allocation6], %s43
      %s45 = sshll.u32 [#allocation5], 4
      %s46 = int_to_ptr.vmem [resolvable:$true] %s45
      %51 = dma.hbm_to_vmem [thread:$0]  %s2, 6144, %s46, [#allocation6], 384, 384, 24
    $region13: #{forward.1} parent=1 // pred_fallthru
      _
    // Predicated region
    $region14: #{forward.1} parent=1 // pred_check
      _
    $region15: #{forward.1} parent=1 // pred_check_branch
      %53 = sbr.rel (0) target = $region17
    $region16: #{forward.1} parent=1 // pred_region
      %s55 = ssub.s32 6144, 6144
      %56 = vsyncadd [#allocation8], %s55
      %s57 = sshll.u32 [#allocation7], 4
      %s58 = int_to_ptr.vmem [resolvable:$true] %s57
      %63 = dma.hbm_to_vmem [thread:$0]  %s3, 6144, %s58, [#allocation8], 384, 384, 24
    $region17: #{forward.1} parent=1 // pred_fallthru
      _
    // Predicated region
    $region18: #{forward.1} parent=1 // pred_check
      _
    $region19: #{forward.1} parent=1 // pred_check_branch
      %65 = sbr.rel (0) target = $region21
    $region20: #{forward.1} parent=1 // pred_region
      _
    $region21: #{forward.1} parent=1 // pred_fallthru
      _
    // Predicated region
    $region22: #{forward.1} parent=1 // pred_check
      _
    $region23: #{forward.1} parent=1 // pred_check_branch
      %67 = sbr.rel (0) target = $region25
    $region24: #{forward.1} parent=1 // pred_region
      _
    $region25: #{forward.1} parent=1 // pred_fallthru
      _
    // Predicated region
    $region26: #{forward.1} parent=1 // pred_check
      _
    $region27: #{forward.1} parent=1 // pred_check_branch
      %69 = sbr.rel (0) target = $region29
    $region28: #{forward.1} parent=1 // pred_region
      %s71 = ssub.s32 6144, 6144
      %72 = vsyncadd [#allocation8], %s71
      %s73 = sshll.u32 [#allocation9], 4
      %s74 = int_to_ptr.vmem [resolvable:$true] %s73
      %79 = dma.hbm_to_vmem [thread:$0]  %s6, 6144, %s74, [#allocation8], 384, 384, 24
    $region29: #{forward.1} parent=1 // pred_fallthru
      _
    // Predicated region
    $region30: #{forward.1} parent=1 // pred_check
      _
    $region31: #{forward.1} parent=1 // pred_check_branch
      %81 = sbr.rel (0) target = $region33
    $region32: #{forward.1} parent=1 // pred_region
      %s83 = ssub.s32 6144, 6144
      %84 = vsyncadd [#allocation11], %s83
      %s85 = sshll.u32 [#allocation10], 4
      %s86 = int_to_ptr.vmem [resolvable:$true] %s85
      %91 = dma.hbm_to_vmem [thread:$0]  %s7, 6144, %s86, [#allocation11], 384, 384, 24
    $region33: #{forward.1} parent=1 // pred_fallthru
      _
    // Predicated region
    $region34: #{forward.1} parent=1 // pred_check
      _
    $region35: #{forward.1} parent=1 // pred_check_branch
      %93 = sbr.rel (0) target = $region37
    $region36: #{forward.1} parent=1 // pred_region
      _
    $region37: #{forward.1} parent=1 // pred_fallthru
      _
    // Predicated region
    $region38: #{forward.1} parent=1 // pred_check
      _
    $region39: #{forward.1} parent=1 // pred_check_branch
      %95 = sbr.rel (0) target = $region41
    $region40: #{forward.1} parent=1 // pred_region
      _
    $region41: #{forward.1} parent=1 // pred_fallthru
      _
    // Predicated region
    $region42: #{forward.1} parent=1 // pred_check
      _
    $region43: #{forward.1} parent=1 // pred_check_branch
      %97 = sbr.rel (0) target = $region45
    $region44: #{forward.1} parent=1 // pred_region
      %s99 = ssub.s32 6144, 6144
      %100 = vsyncadd [#allocation11], %s99
      %s101 = sshll.u32 [#allocation12], 4
      %s102 = int_to_ptr.vmem [resolvable:$true] %s101
      %107 = dma.hbm_to_vmem [thread:$0]  %s10, 6144, %s102, [#allocation11], 384, 384, 24
    $region45: #{forward.1} parent=1 // pred_fallthru
      _
    // Predicated region
    $region46: #{forward.1} parent=1 // pred_check
      _
    $region47: #{forward.1} parent=1 // pred_check_branch
      %109 = sbr.rel (0) target = $region49
    $region48: #{forward.1} parent=1 // pred_region
      %s111 = ssub.s32 6144, 6144
      %112 = vsyncadd [#allocation14], %s111
      %s113 = sshll.u32 [#allocation13], 4
      %s114 = int_to_ptr.vmem [resolvable:$true] %s113
      %119 = dma.hbm_to_vmem [thread:$0]  %s11, 6144, %s114, [#allocation14], 384, 384, 24
    $region49: #{forward.1} parent=1 // pred_fallthru
      _
    // Predicated region
    $region50: #{forward.1} parent=1 // pred_check
      _
    $region51: #{forward.1} parent=1 // pred_check_branch
      %121 = sbr.rel (0) target = $region53
    $region52: #{forward.1} parent=1 // pred_region
      _
    $region53: #{forward.1} parent=1 // pred_fallthru
      _
    // Predicated region
    $region54: #{forward.1} parent=1 // pred_check
      _
    $region55: #{forward.1} parent=1 // pred_check_branch
      %123 = sbr.rel (0) target = $region57
    $region56: #{forward.1} parent=1 // pred_region
      _
    $region57: #{forward.1} parent=1 // pred_fallthru
      _
    // Predicated region
    $region58: #{forward.1} parent=1 // pred_check
      _
    $region59: #{forward.1} parent=1 // pred_check_branch
      %125 = sbr.rel (0) target = $region61
    $region60: #{forward.1} parent=1 // pred_region
      %s127 = ssub.s32 6144, 6144
      %128 = vsyncadd [#allocation14], %s127
      %s129 = sshll.u32 [#allocation15], 4
      %s130 = int_to_ptr.vmem [resolvable:$true] %s129
      %135 = dma.hbm_to_vmem [thread:$0]  %s14, 6144, %s130, [#allocation14], 384, 384, 24
    $region61: #{forward.1} parent=1 // pred_fallthru
      _
    // Predicated region
    $region62: #{forward.1} parent=1 // pred_check
      _
    $region63: #{forward.1} parent=1 // pred_check_branch
      %137 = sbr.rel (0) target = $region65
    $region64: #{forward.1} parent=1 // pred_region
      %s139 = ssub.s32 6144, 6144
      %140 = vsyncadd [#allocation17], %s139
      %s141 = sshll.u32 [#allocation16], 4
      %s142 = int_to_ptr.vmem [resolvable:$true] %s141
      %147 = dma.hbm_to_vmem [thread:$0]  %s15, 6144, %s142, [#allocation17], 384, 384, 24
    $region65: #{forward.1} parent=1 // pred_fallthru
      _
    // Predicated region
    $region66: #{forward.1} parent=1 // pred_check
      _
    $region67: #{forward.1} parent=1 // pred_check_branch
      %149 = sbr.rel (0) target = $region69
    $region68: #{forward.1} parent=1 // pred_region
      _
    $region69: #{forward.1} parent=1 // pred_fallthru
      _
    // Predicated region
    $region70: #{forward.1} parent=1 // pred_check
      _
    $region71: #{forward.1} parent=1 // pred_check_branch
      %151 = sbr.rel (0) target = $region73
    $region72: #{forward.1} parent=1 // pred_region
      _
    $region73: #{forward.1} parent=1 // pred_fallthru
      _
    // Predicated region
    $region74: #{forward.1} parent=1 // pred_check
      _
    $region75: #{forward.1} parent=1 // pred_check_branch
      %153 = sbr.rel (0) target = $region77
    $region76: #{forward.1} parent=1 // pred_region
      _
    $region77: #{forward.1} parent=1 // pred_fallthru
      _
    // Predicated region
    $region78: #{forward.1} parent=1 // pred_check
      _
    $region79: #{forward.1} parent=1 // pred_check_branch
      %155 = sbr.rel (0) target = $region81
    $region80: #{forward.1} parent=1 // pred_region
      _
    $region81: #{forward.1} parent=1 // pred_fallthru
      _
    // Predicated region
    $region82: #{forward.1} parent=1 // pred_check
      _
    $region83: #{forward.1} parent=1 // pred_check_branch
      %157 = sbr.rel (0) target = $region85
    $region84: #{forward.1} parent=1 // pred_region
      _
    $region85: #{forward.1} parent=1 // pred_fallthru
      _
    // Predicated region
    $region86: #{forward.1} parent=1 // pred_check
      _
    $region87: #{forward.1} parent=1 // pred_check_branch
      %159 = sbr.rel (0) target = $region89
    $region88: #{forward.1} parent=1 // pred_region
      _
    $region89: #{forward.1} parent=1 // pred_fallthru
      _
    // Predicated region
    $region90: #{forward.1} parent=1 // pred_check
      _
    $region91: #{forward.1} parent=1 // pred_check_branch
      %161 = sbr.rel (0) target = $region93
    $region92: #{forward.1} parent=1 // pred_region
      %s163 = ssub.s32 2048, 2048
      %164 = vsyncadd [#allocation17], %s163
      %s165 = sshll.u32 [#allocation18], 4
      %s166 = int_to_ptr.vmem [resolvable:$true] %s165
      %171 = dma.hbm_to_vmem [thread:$0]  %s22, 2048, %s166, [#allocation17], 128, 128, 8
    $region93: #{forward.1} parent=1 // pred_fallthru
      _
    // Predicated region
    $region94: #{forward.1} parent=1 // pred_check
      _
    $region95: #{forward.1} parent=1 // pred_check_branch
      %173 = sbr.rel (0) target = $region97
    $region96: #{forward.1} parent=1 // pred_region
      _
    $region97: #{forward.1} parent=1 // pred_fallthru
      _
    // Predicated region
    $region98: #{forward.1} parent=1 // pred_check
      _
    $region99: #{forward.1} parent=1 // pred_check_branch
      %175 = sbr.rel (0) target = $region101
    $region100: #{forward.1} parent=1 // pred_region
      %176 = dma.done [#allocation6], 6144
    $region101: #{forward.1} parent=1 // pred_fallthru
      _
    // Predicated region
    $region102: #{forward.1} parent=1 // pred_check
      _
    $region103: #{forward.1} parent=1 // pred_check_branch
      %178 = sbr.rel (0) target = $region105
    $region104: #{forward.1} parent=1 // pred_region
      %179 = dma.done [#allocation8], 6144
    $region105: #{forward.1} parent=1 // pred_fallthru
      _
    // Predicated region
    $region106: #{forward.1} parent=1 // pred_check
      _
    $region107: #{forward.1} parent=1 // pred_check_branch
      %181 = sbr.rel (0) target = $region109
    $region108: #{forward.1} parent=1 // pred_region
      %182 = dma.done [#allocation8], 6144
    $region109: #{forward.1} parent=1 // pred_fallthru
      _
    // Predicated region
    $region110: #{forward.1} parent=1 // pred_check
      _
    $region111: #{forward.1} parent=1 // pred_check_branch
      %184 = sbr.rel (0) target = $region113
    $region112: #{forward.1} parent=1 // pred_region
      %185 = dma.done [#allocation11], 6144
    $region113: #{forward.1} parent=1 // pred_fallthru
      _
    // Predicated region
    $region114: #{forward.1} parent=1 // pred_check
      _
    $region115: #{forward.1} parent=1 // pred_check_branch
      %187 = sbr.rel (0) target = $region117
    $region116: #{forward.1} parent=1 // pred_region
      %188 = dma.done [#allocation11], 6144
    $region117: #{forward.1} parent=1 // pred_fallthru
      _
    // Predicated region
    $region118: #{forward.1} parent=1 // pred_check
      _
    $region119: #{forward.1} parent=1 // pred_check_branch
      %190 = sbr.rel (0) target = $region121
    $region120: #{forward.1} parent=1 // pred_region
      %191 = dma.done [#allocation14], 6144
    $region121: #{forward.1} parent=1 // pred_fallthru
      _
    // Predicated region
    $region122: #{forward.1} parent=1 // pred_check
      _
    $region123: #{forward.1} parent=1 // pred_check_branch
      %193 = sbr.rel (0) target = $region125
    $region124: #{forward.1} parent=1 // pred_region
      %194 = dma.done [#allocation14], 6144
    $region125: #{forward.1} parent=1 // pred_fallthru
      _
    // Predicated region
    $region126: #{forward.1} parent=1 // pred_check
      _
    $region127: #{forward.1} parent=1 // pred_check_branch
      %196 = sbr.rel (0) target = $region129
    $region128: #{forward.1} parent=1 // pred_region
      %197 = dma.done [#allocation17], 6144
    $region129: #{forward.1} parent=1 // pred_fallthru
      _
    // Predicated region
    $region130: #{forward.1} parent=1 // pred_check
      _
    $region131: #{forward.1} parent=1 // pred_check_branch
      %199 = sbr.rel (0) target = $region133
    $region132: #{forward.1} parent=1 // pred_region
      %200 = dma.done [#allocation17], 2048
    $region133: #{forward.1} parent=1 // pred_fallthru
      _
    %v201 = vld [vmem:[%s1] sm:$0xff]
    %v202 = vld [vmem:[#allocation7] sm:$0xff]
    %v203 = vld [vmem:[#allocation7 + $0x8] sm:$0xff]
    %v204 = vld [vmem:[#allocation7 + $0x10] sm:$0xff]
    %v205 = vld [vmem:[#allocation7 + $0x18] sm:$0xff]
    %v206 = vld [vmem:[#allocation7 + $0x20] sm:$0xff]
    %v207 = vld [vmem:[#allocation7 + $0x28] sm:$0xff]
    %v208 = vld [vmem:[#allocation7 + $0x30] sm:$0xff]
    %v209 = vld [vmem:[#allocation7 + $0x38] sm:$0xff]
    %v210 = vld [vmem:[#allocation7 + $0x40] sm:$0xff]
    %v211 = vld [vmem:[#allocation7 + $0x48] sm:$0xff]
    %v212 = vld [vmem:[#allocation7 + $0x50] sm:$0xff]
    %v213 = vld [vmem:[#allocation7 + $0x58] sm:$0xff]
    %v214 = vld [vmem:[#allocation7 + $0x60] sm:$0xff]
    %v215 = vld [vmem:[#allocation7 + $0x68] sm:$0xff]
    %v216 = vld [vmem:[#allocation7 + $0x70] sm:$0xff]
    %v217 = vld [vmem:[#allocation7 + $0x78] sm:$0xff]
    %v218 = vld [vmem:[#allocation7 + $0x80] sm:$0xff]
    %v219 = vld [vmem:[#allocation7 + $0x88] sm:$0xff]
    %v220 = vld [vmem:[#allocation7 + $0x90] sm:$0xff]
    %v221 = vld [vmem:[#allocation7 + $0x98] sm:$0xff]
    %v222 = vld [vmem:[#allocation7 + $0xa0] sm:$0xff]
    %v223 = vld [vmem:[#allocation7 + $0xa8] sm:$0xff]
    %v224 = vld [vmem:[#allocation7 + $0xb0] sm:$0xff]
    %v225 = vld [vmem:[#allocation7 + $0xb8] sm:$0xff]
    %v226 = vld [vmem:[#allocation7 + $0xc0] sm:$0xff]
    %v227 = vld [vmem:[#allocation7 + $0xc8] sm:$0xff]
    %v228 = vld [vmem:[#allocation7 + $0xd0] sm:$0xff]
    %v229 = vld [vmem:[#allocation7 + $0xd8] sm:$0xff]
    %v230 = vld [vmem:[#allocation7 + $0xe0] sm:$0xff]
    %v231 = vld [vmem:[#allocation7 + $0xe8] sm:$0xff]
    %v232 = vld [vmem:[#allocation7 + $0xf0] sm:$0xff]
    %v233 = vld [vmem:[#allocation7 + $0xf8] sm:$0xff]
    %v234 = vld [vmem:[#allocation7 + $0x100] sm:$0xff]
    %v235 = vld [vmem:[#allocation7 + $0x108] sm:$0xff]
    %v236 = vld [vmem:[#allocation7 + $0x110] sm:$0xff]
    %v237 = vld [vmem:[#allocation7 + $0x118] sm:$0xff]
    %v238 = vld [vmem:[#allocation7 + $0x120] sm:$0xff]
    %v239 = vld [vmem:[#allocation7 + $0x128] sm:$0xff]
    %v240 = vld [vmem:[#allocation7 + $0x130] sm:$0xff]
    %v241 = vld [vmem:[#allocation7 + $0x138] sm:$0xff]
    %v242 = vld [vmem:[#allocation7 + $0x140] sm:$0xff]
    %v243 = vld [vmem:[#allocation7 + $0x148] sm:$0xff]
    %v244 = vld [vmem:[#allocation7 + $0x150] sm:$0xff]
    %v245 = vld [vmem:[#allocation7 + $0x158] sm:$0xff]
    %v246 = vld [vmem:[#allocation7 + $0x160] sm:$0xff]
    %v247 = vld [vmem:[#allocation7 + $0x168] sm:$0xff]
    %v248 = vld [vmem:[#allocation7 + $0x170] sm:$0xff]
    %v249 = vld [vmem:[#allocation7 + $0x178] sm:$0xff]
    %v250 = vld [vmem:[%s0] sm:$0xff]
    %v251 = vld [vmem:[%s0 + $0x8] sm:$0xff]
    %v252 = vld [vmem:[%s0 + $0x10] sm:$0xff]
    %v253 = vld [vmem:[%s0 + $0x18] sm:$0xff]
    %v254 = vld [vmem:[%s0 + $0x20] sm:$0xff]
    %v255 = vld [vmem:[%s0 + $0x28] sm:$0xff]
    %v256 = vld [vmem:[%s0 + $0x30] sm:$0xff]
    %v257 = vld [vmem:[%s0 + $0x38] sm:$0xff]
    %v258 = vld [vmem:[#allocation5] sm:$0xff]
    %v259 = vld [vmem:[#allocation5 + $0x8] sm:$0xff]
    %v260 = vld [vmem:[#allocation5 + $0x10] sm:$0xff]
    %v261 = vld [vmem:[#allocation5 + $0x18] sm:$0xff]
    %v262 = vld [vmem:[#allocation5 + $0x20] sm:$0xff]
    %v263 = vld [vmem:[#allocation5 + $0x28] sm:$0xff]
    %v264 = vld [vmem:[#allocation5 + $0x30] sm:$0xff]
    %v265 = vld [vmem:[#allocation5 + $0x38] sm:$0xff]
    %v266 = vld [vmem:[#allocation5 + $0x40] sm:$0xff]
    %v267 = vld [vmem:[#allocation5 + $0x48] sm:$0xff]
    %v268 = vld [vmem:[#allocation5 + $0x50] sm:$0xff]
    %v269 = vld [vmem:[#allocation5 + $0x58] sm:$0xff]
    %v270 = vld [vmem:[#allocation5 + $0x60] sm:$0xff]
    %v271 = vld [vmem:[#allocation5 + $0x68] sm:$0xff]
    %v272 = vld [vmem:[#allocation5 + $0x70] sm:$0xff]
    %v273 = vld [vmem:[#allocation5 + $0x78] sm:$0xff]
    %v274 = vld [vmem:[#allocation5 + $0x80] sm:$0xff]
    %v275 = vld [vmem:[#allocation5 + $0x88] sm:$0xff]
    %v276 = vld [vmem:[#allocation5 + $0x90] sm:$0xff]
    %v277 = vld [vmem:[#allocation5 + $0x98] sm:$0xff]
    %v278 = vld [vmem:[#allocation5 + $0xa0] sm:$0xff]
    %v279 = vld [vmem:[#allocation5 + $0xa8] sm:$0xff]
    %v280 = vld [vmem:[#allocation5 + $0xb0] sm:$0xff]
    %v281 = vld [vmem:[#allocation5 + $0xb8] sm:$0xff]
    %v282 = vld [vmem:[#allocation5 + $0xc0] sm:$0xff]
    %v283 = vld [vmem:[#allocation5 + $0xc8] sm:$0xff]
    %v284 = vld [vmem:[#allocation5 + $0xd0] sm:$0xff]
    %v285 = vld [vmem:[#allocation5 + $0xd8] sm:$0xff]
    %v286 = vld [vmem:[#allocation5 + $0xe0] sm:$0xff]
    %v287 = vld [vmem:[#allocation5 + $0xe8] sm:$0xff]
    %v288 = vld [vmem:[#allocation5 + $0xf0] sm:$0xff]
    %v289 = vld [vmem:[#allocation5 + $0xf8] sm:$0xff]
    %v290 = vld [vmem:[#allocation5 + $0x100] sm:$0xff]
    %v291 = vld [vmem:[#allocation5 + $0x108] sm:$0xff]
    %v292 = vld [vmem:[#allocation5 + $0x110] sm:$0xff]
    %v293 = vld [vmem:[#allocation5 + $0x118] sm:$0xff]
    %v294 = vld [vmem:[#allocation5 + $0x120] sm:$0xff]
    %v295 = vld [vmem:[#allocation5 + $0x128] sm:$0xff]
    %v296 = vld [vmem:[#allocation5 + $0x130] sm:$0xff]
    %v297 = vld [vmem:[#allocation5 + $0x138] sm:$0xff]
    %v298 = vld [vmem:[#allocation5 + $0x140] sm:$0xff]
    %v299 = vld [vmem:[#allocation5 + $0x148] sm:$0xff]
    %v300 = vld [vmem:[#allocation5 + $0x150] sm:$0xff]
    %v301 = vld [vmem:[#allocation5 + $0x158] sm:$0xff]
    %v302 = vld [vmem:[#allocation5 + $0x160] sm:$0xff]
    %v303 = vld [vmem:[#allocation5 + $0x168] sm:$0xff]
    %v304 = vld [vmem:[#allocation5 + $0x170] sm:$0xff]
    %v305 = vld [vmem:[#allocation5 + $0x178] sm:$0xff]
    %v306 = vld [vmem:[%s4] sm:$0x7]
    %v308 = vlaneseq
    %v309 = vshrl.u32 %v308, 7
    %v310 = vsub.s32 0, %v309
    %v311 = vrot.slane %v306, %v310
    %v312 = vlaneseq
    %v313 = vshrl.u32 %v312, 7
    %v314 = vsub.s32 1, %v313
    %v315 = vrot.slane %v306, %v314
    %v316 = vlaneseq
    %v317 = vshrl.u32 %v316, 7
    %v318 = vsub.s32 2, %v317
    %v319 = vrot.slane %v306, %v318
    %323 = vmatprep.subr.mxu0 %v259
    %324 = vmatpush1.msra.mxu0 %v258
    %325 = vmatprep.subr.mxu0 %v262
    %326 = vmatpush1.msra.mxu0 %v261
    %327 = vmatprep.subr.mxu0 %v265
    %328 = vmatpush1.msra.mxu0 %v264
    %329 = vmatprep.subr.mxu0 %v268
    %330 = vmatpush1.msra.mxu0 %v267
    %331 = vmatprep.subr.mxu0 %v271
    %332 = vmatpush1.msra.mxu0 %v270
    %333 = vmatprep.subr.mxu0 %v274
    %334 = vmatpush1.msra.mxu0 %v273
    %335 = vmatprep.subr.mxu0 %v277
    %336 = vmatpush1.msra.mxu0 %v276
    %337 = vmatprep.subr.mxu0 %v280
    %338 = vmatpush1.msra.mxu0 %v279
    %339 = vmatprep.subr.mxu0 %v283
    %340 = vmatpush1.msra.mxu0 %v282
    %341 = vmatprep.subr.mxu0 %v286
    %342 = vmatpush1.msra.mxu0 %v285
    %343 = vmatprep.subr.mxu0 %v289
    %344 = vmatpush1.msra.mxu0 %v288
    %345 = vmatprep.subr.mxu0 %v292
    %346 = vmatpush1.msra.mxu0 %v291
    %347 = vmatprep.subr.mxu0 %v295
    %348 = vmatpush1.msra.mxu0 %v294
    %349 = vmatprep.subr.mxu0 %v298
    %350 = vmatpush1.msra.mxu0 %v297
    %351 = vmatprep.subr.mxu0 %v301
    %352 = vmatpush1.msra.mxu0 %v300
    %353 = vmatprep.subr.mxu0 %v304
    %354 = vmatpush1.msra.mxu0 %v303
    %355 = vmatprep.subr.mxu0 0.0
    %356 = vmatpush1.msra.mxu0 0.0
    %357 = vmatprep.subr.mxu0 0.0
    %358 = vmatpush1.msra.mxu0 0.0
    %359 = vmatprep.subr.mxu0 0.0
    %360 = vmatpush1.msra.mxu0 0.0
    %361 = vmatprep.subr.mxu0 0.0
    %362 = vmatpush1.msra.mxu0 0.0
    %363 = vmatprep.subr.mxu0 0.0
    %364 = vmatpush1.msra.mxu0 0.0
    %365 = vmatprep.subr.mxu0 0.0
    %366 = vmatpush1.msra.mxu0 0.0
    %367 = vmatprep.subr.mxu0 0.0
    %368 = vmatpush1.msra.mxu0 0.0
    %369 = vmatprep.subr.mxu0 0.0
    %370 = vmatpush1.msra.mxu0 0.0
    %371 = vmatprep.subr.mxu0 0.0
    %372 = vmatpush1.msra.mxu0 0.0
    %373 = vmatprep.subr.mxu0 0.0
    %374 = vmatpush1.msra.mxu0 0.0
    %375 = vmatprep.subr.mxu0 0.0
    %376 = vmatpush1.msra.mxu0 0.0
    %377 = vmatprep.subr.mxu0 0.0
    %378 = vmatpush1.msra.mxu0 0.0
    %379 = vmatprep.subr.mxu0 0.0
    %380 = vmatpush1.msra.mxu0 0.0
    %381 = vmatprep.subr.mxu0 0.0
    %382 = vmatpush1.msra.mxu0 0.0
    %383 = vmatprep.subr.mxu0 0.0
    %384 = vmatpush1.msra.mxu0 0.0
    %385 = vmatprep.subr.mxu0 0.0
    %386 = vmatpush1.msra.mxu0 0.0
    %387 = vmatprep.mubr.f32.mxu0 0.0
    %388 = vmatmul.mubr.f32.gmra.mrb[0].mxu0 %v250
    %v389 = vpop.f32.mrb[0].mxu0
    %v390 = vadd.f32 %v311, %v389
    %v391 = vpop.f32.mrb[0].mxu0
    %v392 = vadd.f32 %v315, %v391
    %393 = vmatprep.mubr.f32.mxu0 0.0
    %394 = vmatmul.mubr.f32.gmra.mrb[0].mxu0 %v251
    %v395 = vpop.f32.mrb[0].mxu0
    %v396 = vadd.f32 %v311, %v395
    %v397 = vpop.f32.mrb[0].mxu0
    %v398 = vadd.f32 %v315, %v397
    %399 = vmatprep.mubr.f32.mxu0 0.0
    %400 = vmatmul.mubr.f32.gmra.mrb[0].mxu0 %v252
    %v401 = vpop.f32.mrb[0].mxu0
    %v402 = vadd.f32 %v311, %v401
    %v403 = vpop.f32.mrb[0].mxu0
    %v404 = vadd.f32 %v315, %v403
    %405 = vmatprep.mubr.f32.mxu0 0.0
    %406 = vmatmul.mubr.f32.gmra.mrb[0].mxu0 %v253
    %v407 = vpop.f32.mrb[0].mxu0
    %v408 = vadd.f32 %v311, %v407
    %v409 = vpop.f32.mrb[0].mxu0
    %v410 = vadd.f32 %v315, %v409
    %411 = vmatprep.mubr.f32.mxu0 0.0
    %412 = vmatmul.mubr.f32.gmra.mrb[0].mxu0 %v254
    %v413 = vpop.f32.mrb[0].mxu0
    %v414 = vadd.f32 %v311, %v413
    %v415 = vpop.f32.mrb[0].mxu0
    %v416 = vadd.f32 %v315, %v415
    %417 = vmatprep.mubr.f32.mxu0 0.0
    %418 = vmatmul.mubr.f32.gmra.mrb[0].mxu0 %v255
    %v419 = vpop.f32.mrb[0].mxu0
    %v420 = vadd.f32 %v311, %v419
    %v421 = vpop.f32.mrb[0].mxu0
    %v422 = vadd.f32 %v315, %v421
    %423 = vmatprep.mubr.f32.mxu0 0.0
    %424 = vmatmul.mubr.f32.gmra.mrb[0].mxu0 %v256
    %v425 = vpop.f32.mrb[0].mxu0
    %v426 = vadd.f32 %v311, %v425
    %v427 = vpop.f32.mrb[0].mxu0
    %v428 = vadd.f32 %v315, %v427
    %429 = vmatprep.mubr.f32.mxu0 0.0
    %430 = vmatmul.mubr.f32.gmra.mrb[0].mxu0 %v257
    %v431 = vpop.f32.mrb[0].mxu0
    %v432 = vadd.f32 %v311, %v431
    %v433 = vpop.f32.mrb[0].mxu0
    %v434 = vadd.f32 %v315, %v433
    %435 = vdwg.mxu0
    %436 = vmatprep.subr.mxu0 0.0
    %437 = vmatpush1.msra.mxu0 %v260
    %438 = vmatprep.subr.mxu0 0.0
    %439 = vmatpush1.msra.mxu0 %v263
    %440 = vmatprep.subr.mxu0 0.0
    %441 = vmatpush1.msra.mxu0 %v266
    %442 = vmatprep.subr.mxu0 0.0
    %443 = vmatpush1.msra.mxu0 %v269
    %444 = vmatprep.subr.mxu0 0.0
    %445 = vmatpush1.msra.mxu0 %v272
    %446 = vmatprep.subr.mxu0 0.0
    %447 = vmatpush1.msra.mxu0 %v275
    %448 = vmatprep.subr.mxu0 0.0
    %449 = vmatpush1.msra.mxu0 %v278
    %450 = vmatprep.subr.mxu0 0.0
    %451 = vmatpush1.msra.mxu0 %v281
    %452 = vmatprep.subr.mxu0 0.0
    %453 = vmatpush1.msra.mxu0 %v284
    %454 = vmatprep.subr.mxu0 0.0
    %455 = vmatpush1.msra.mxu0 %v287
    %456 = vmatprep.subr.mxu0 0.0
    %457 = vmatpush1.msra.mxu0 %v290
    %458 = vmatprep.subr.mxu0 0.0
    %459 = vmatpush1.msra.mxu0 %v293
    %460 = vmatprep.subr.mxu0 0.0
    %461 = vmatpush1.msra.mxu0 %v296
    %462 = vmatprep.subr.mxu0 0.0
    %463 = vmatpush1.msra.mxu0 %v299
    %464 = vmatprep.subr.mxu0 0.0
    %465 = vmatpush1.msra.mxu0 %v302
    %466 = vmatprep.subr.mxu0 0.0
    %467 = vmatpush1.msra.mxu0 %v305
    %468 = vmatprep.subr.mxu0 0.0
    %469 = vmatpush1.msra.mxu0 0.0
    %470 = vmatprep.subr.mxu0 0.0
    %471 = vmatpush1.msra.mxu0 0.0
    %472 = vmatprep.subr.mxu0 0.0
    %473 = vmatpush1.msra.mxu0 0.0
    %474 = vmatprep.subr.mxu0 0.0
    %475 = vmatpush1.msra.mxu0 0.0
    %476 = vmatprep.subr.mxu0 0.0
    %477 = vmatpush1.msra.mxu0 0.0
    %478 = vmatprep.subr.mxu0 0.0
    %479 = vmatpush1.msra.mxu0 0.0
    %480 = vmatprep.subr.mxu0 0.0
    %481 = vmatpush1.msra.mxu0 0.0
    %482 = vmatprep.subr.mxu0 0.0
    %483 = vmatpush1.msra.mxu0 0.0
    %484 = vmatprep.subr.mxu0 0.0
    %485 = vmatpush1.msra.mxu0 0.0
    %486 = vmatprep.subr.mxu0 0.0
    %487 = vmatpush1.msra.mxu0 0.0
    %488 = vmatprep.subr.mxu0 0.0
    %489 = vmatpush1.msra.mxu0 0.0
    %490 = vmatprep.subr.mxu0 0.0
    %491 = vmatpush1.msra.mxu0 0.0
    %492 = vmatprep.subr.mxu0 0.0
    %493 = vmatpush1.msra.mxu0 0.0
    %494 = vmatprep.subr.mxu0 0.0
    %495 = vmatpush1.msra.mxu0 0.0
    %496 = vmatprep.subr.mxu0 0.0
    %497 = vmatpush1.msra.mxu0 0.0
    %498 = vmatprep.subr.mxu0 0.0
    %499 = vmatpush1.msra.mxu0 0.0
    %500 = vmatprep.mubr.f32.mxu0 0.0
    %501 = vmatmul.mubr.f32.gmra.mrb[0].mxu0 %v250
    %v502 = vpop.f32.mrb[0].mxu0
    %v503 = vadd.f32 %v319, %v502
    %v504 = vpop.f32.mrb[0].mxu0
    %505 = vmatprep.mubr.f32.mxu0 0.0
    %506 = vmatmul.mubr.f32.gmra.mrb[0].mxu0 %v251
    %v507 = vpop.f32.mrb[0].mxu0
    %v508 = vadd.f32 %v319, %v507
    %v509 = vpop.f32.mrb[0].mxu0
    %510 = vmatprep.mubr.f32.mxu0 0.0
    %511 = vmatmul.mubr.f32.gmra.mrb[0].mxu0 %v252
    %v512 = vpop.f32.mrb[0].mxu0
    %v513 = vadd.f32 %v319, %v512
    %v514 = vpop.f32.mrb[0].mxu0
    %515 = vmatprep.mubr.f32.mxu0 0.0
    %516 = vmatmul.mubr.f32.gmra.mrb[0].mxu0 %v253
    %v517 = vpop.f32.mrb[0].mxu0
    %v518 = vadd.f32 %v319, %v517
    %v519 = vpop.f32.mrb[0].mxu0
    %520 = vmatprep.mubr.f32.mxu0 0.0
    %521 = vmatmul.mubr.f32.gmra.mrb[0].mxu0 %v254
    %v522 = vpop.f32.mrb[0].mxu0
    %v523 = vadd.f32 %v319, %v522
    %v524 = vpop.f32.mrb[0].mxu0
    %525 = vmatprep.mubr.f32.mxu0 0.0
    %526 = vmatmul.mubr.f32.gmra.mrb[0].mxu0 %v255
    %v527 = vpop.f32.mrb[0].mxu0
    %v528 = vadd.f32 %v319, %v527
    %v529 = vpop.f32.mrb[0].mxu0
    %530 = vmatprep.mubr.f32.mxu0 0.0
    %531 = vmatmul.mubr.f32.gmra.mrb[0].mxu0 %v256
    %v532 = vpop.f32.mrb[0].mxu0
    %v533 = vadd.f32 %v319, %v532
    %v534 = vpop.f32.mrb[0].mxu0
    %535 = vmatprep.mubr.f32.mxu0 0.0
    %536 = vmatmul.mubr.f32.gmra.mrb[0].mxu0 %v257
    %v537 = vpop.f32.mrb[0].mxu0
    %v538 = vadd.f32 %v319, %v537
    %v539 = vpop.f32.mrb[0].mxu0
    %540 = vdwg.mxu0
    %541 = vst [vmem:[#allocation4] sm:$0xff] %v390
    %542 = vst [vmem:[#allocation4 + $0x8] sm:$0xff] %v392
    %543 = vst [vmem:[#allocation4 + $0x10] sm:$0xff] %v503
    %544 = vst [vmem:[#allocation4 + $0x18] sm:$0xff] %v396
    %545 = vst [vmem:[#allocation4 + $0x20] sm:$0xff] %v398
    %546 = vst [vmem:[#allocation4 + $0x28] sm:$0xff] %v508
    %547 = vst [vmem:[#allocation4 + $0x30] sm:$0xff] %v402
    %548 = vst [vmem:[#allocation4 + $0x38] sm:$0xff] %v404
    %549 = vst [vmem:[#allocation4 + $0x40] sm:$0xff] %v513
    %550 = vst [vmem:[#allocation4 + $0x48] sm:$0xff] %v408
    %551 = vst [vmem:[#allocation4 + $0x50] sm:$0xff] %v410
    %552 = vst [vmem:[#allocation4 + $0x58] sm:$0xff] %v518
    %553 = vst [vmem:[#allocation4 + $0x60] sm:$0xff] %v414
    %554 = vst [vmem:[#allocation4 + $0x68] sm:$0xff] %v416
    %555 = vst [vmem:[#allocation4 + $0x70] sm:$0xff] %v523
    %556 = vst [vmem:[#allocation4 + $0x78] sm:$0xff] %v420
    %557 = vst [vmem:[#allocation4 + $0x80] sm:$0xff] %v422
    %558 = vst [vmem:[#allocation4 + $0x88] sm:$0xff] %v528
    %559 = vst [vmem:[#allocation4 + $0x90] sm:$0xff] %v426
    %560 = vst [vmem:[#allocation4 + $0x98] sm:$0xff] %v428
    %561 = vst [vmem:[#allocation4 + $0xa0] sm:$0xff] %v533
    %562 = vst [vmem:[#allocation4 + $0xa8] sm:$0xff] %v432
    %563 = vst [vmem:[#allocation4 + $0xb0] sm:$0xff] %v434
    %564 = vst [vmem:[#allocation4 + $0xb8] sm:$0xff] %v538
    %v565 = vld [vmem:[%s5] sm:$0x1]
    %v567 = vlaneseq
    %v568 = vshrl.u32 %v567, 7
    %v569 = vsub.s32 0, %v568
    %v570 = vrot.slane %v565, %v569
    %v572 = vld [vmem:[#allocation4] sm:$0xff]
    %v573 = vld [vmem:[#allocation4 + $0x8] sm:$0xff]
    %v574 = vld [vmem:[#allocation4 + $0x10] sm:$0xff]
    %575 = vmatprep.subr.mxu0 %v203
    %576 = vmatpush1.msra.mxu0 %v202
    %577 = vmatprep.subr.mxu0 %v206
    %578 = vmatpush1.msra.mxu0 %v205
    %579 = vmatprep.subr.mxu0 %v209
    %580 = vmatpush1.msra.mxu0 %v208
    %581 = vmatprep.subr.mxu0 %v212
    %582 = vmatpush1.msra.mxu0 %v211
    %583 = vmatprep.subr.mxu0 %v215
    %584 = vmatpush1.msra.mxu0 %v214
    %585 = vmatprep.subr.mxu0 %v218
    %586 = vmatpush1.msra.mxu0 %v217
    %587 = vmatprep.subr.mxu0 %v221
    %588 = vmatpush1.msra.mxu0 %v220
    %589 = vmatprep.subr.mxu0 %v224
    %590 = vmatpush1.msra.mxu0 %v223
    %591 = vmatprep.subr.mxu0 %v227
    %592 = vmatpush1.msra.mxu0 %v226
    %593 = vmatprep.subr.mxu0 %v230
    %594 = vmatpush1.msra.mxu0 %v229
    %595 = vmatprep.subr.mxu0 %v233
    %596 = vmatpush1.msra.mxu0 %v232
    %597 = vmatprep.subr.mxu0 %v236
    %598 = vmatpush1.msra.mxu0 %v235
    %599 = vmatprep.subr.mxu0 %v239
    %600 = vmatpush1.msra.mxu0 %v238
    %601 = vmatprep.subr.mxu0 %v242
    %602 = vmatpush1.msra.mxu0 %v241
    %603 = vmatprep.subr.mxu0 %v245
    %604 = vmatpush1.msra.mxu0 %v244
    %605 = vmatprep.subr.mxu0 %v248
    %606 = vmatpush1.msra.mxu0 %v247
    %607 = vmatprep.subr.mxu0 0.0
    %608 = vmatpush1.msra.mxu0 0.0
    %609 = vmatprep.subr.mxu0 0.0
    %610 = vmatpush1.msra.mxu0 0.0
    %611 = vmatprep.subr.mxu0 0.0
    %612 = vmatpush1.msra.mxu0 0.0
    %613 = vmatprep.subr.mxu0 0.0
    %614 = vmatpush1.msra.mxu0 0.0
    %615 = vmatprep.subr.mxu0 0.0
    %616 = vmatpush1.msra.mxu0 0.0
    %617 = vmatprep.subr.mxu0 0.0
    %618 = vmatpush1.msra.mxu0 0.0
    %619 = vmatprep.subr.mxu0 0.0
    %620 = vmatpush1.msra.mxu0 0.0
    %621 = vmatprep.subr.mxu0 0.0
    %622 = vmatpush1.msra.mxu0 0.0
    %623 = vmatprep.subr.mxu0 0.0
    %624 = vmatpush1.msra.mxu0 0.0
    %625 = vmatprep.subr.mxu0 0.0
    %626 = vmatpush1.msra.mxu0 0.0
    %627 = vmatprep.subr.mxu0 0.0
    %628 = vmatpush1.msra.mxu0 0.0
    %629 = vmatprep.subr.mxu0 0.0
    %630 = vmatpush1.msra.mxu0 0.0
    %631 = vmatprep.subr.mxu0 0.0
    %632 = vmatpush1.msra.mxu0 0.0
    %633 = vmatprep.subr.mxu0 0.0
    %634 = vmatpush1.msra.mxu0 0.0
    %635 = vmatprep.subr.mxu0 0.0
    %636 = vmatpush1.msra.mxu0 0.0
    %637 = vmatprep.subr.mxu0 0.0
    %638 = vmatpush1.msra.mxu0 0.0
    %639 = vmatprep.mubr.f32.mxu0 0.0
    %640 = vmatmul.mubr.f32.gmra.mrb[0].mxu0 %v201
    %v641 = vpop.f32.mrb[0].mxu0
    %v642 = vadd.f32 0.0, %v641
    %v643 = vpop.f32.mrb[0].mxu0
    %v644 = vadd.f32 0.0, %v643
    %645 = vdwg.mxu0
    %646 = vmatprep.subr.mxu0 0.0
    %647 = vmatpush1.msra.mxu0 %v204
    %648 = vmatprep.subr.mxu0 0.0
    %649 = vmatpush1.msra.mxu0 %v207
    %650 = vmatprep.subr.mxu0 0.0
    %651 = vmatpush1.msra.mxu0 %v210
    %652 = vmatprep.subr.mxu0 0.0
    %653 = vmatpush1.msra.mxu0 %v213
    %654 = vmatprep.subr.mxu0 0.0
    %655 = vmatpush1.msra.mxu0 %v216
    %656 = vmatprep.subr.mxu0 0.0
    %657 = vmatpush1.msra.mxu0 %v219
    %658 = vmatprep.subr.mxu0 0.0
    %659 = vmatpush1.msra.mxu0 %v222
    %660 = vmatprep.subr.mxu0 0.0
    %661 = vmatpush1.msra.mxu0 %v225
    %662 = vmatprep.subr.mxu0 0.0
    %663 = vmatpush1.msra.mxu0 %v228
    %664 = vmatprep.subr.mxu0 0.0
    %665 = vmatpush1.msra.mxu0 %v231
    %666 = vmatprep.subr.mxu0 0.0
    %667 = vmatpush1.msra.mxu0 %v234
    %668 = vmatprep.subr.mxu0 0.0
    %669 = vmatpush1.msra.mxu0 %v237
    %670 = vmatprep.subr.mxu0 0.0
    %671 = vmatpush1.msra.mxu0 %v240
    %672 = vmatprep.subr.mxu0 0.0
    %673 = vmatpush1.msra.mxu0 %v243
    %674 = vmatprep.subr.mxu0 0.0
    %675 = vmatpush1.msra.mxu0 %v246
    %676 = vmatprep.subr.mxu0 0.0
    %677 = vmatpush1.msra.mxu0 %v249
    %678 = vmatprep.subr.mxu0 0.0
    %679 = vmatpush1.msra.mxu0 0.0
    %680 = vmatprep.subr.mxu0 0.0
    %681 = vmatpush1.msra.mxu0 0.0
    %682 = vmatprep.subr.mxu0 0.0
    %683 = vmatpush1.msra.mxu0 0.0
    %684 = vmatprep.subr.mxu0 0.0
    %685 = vmatpush1.msra.mxu0 0.0
    %686 = vmatprep.subr.mxu0 0.0
    %687 = vmatpush1.msra.mxu0 0.0
    %688 = vmatprep.subr.mxu0 0.0
    %689 = vmatpush1.msra.mxu0 0.0
    %690 = vmatprep.subr.mxu0 0.0
    %691 = vmatpush1.msra.mxu0 0.0
    %692 = vmatprep.subr.mxu0 0.0
    %693 = vmatpush1.msra.mxu0 0.0
    %694 = vmatprep.subr.mxu0 0.0
    %695 = vmatpush1.msra.mxu0 0.0
    %696 = vmatprep.subr.mxu0 0.0
    %697 = vmatpush1.msra.mxu0 0.0
    %698 = vmatprep.subr.mxu0 0.0
    %699 = vmatpush1.msra.mxu0 0.0
    %700 = vmatprep.subr.mxu0 0.0
    %701 = vmatpush1.msra.mxu0 0.0
    %702 = vmatprep.subr.mxu0 0.0
    %703 = vmatpush1.msra.mxu0 0.0
    %704 = vmatprep.subr.mxu0 0.0
    %705 = vmatpush1.msra.mxu0 0.0
    %706 = vmatprep.subr.mxu0 0.0
    %707 = vmatpush1.msra.mxu0 0.0
    %708 = vmatprep.subr.mxu0 0.0
    %709 = vmatpush1.msra.mxu0 0.0
    %710 = vmatprep.mubr.f32.mxu0 0.0
    %711 = vmatmul.mubr.f32.gmra.mrb[0].mxu0 %v201
    %v712 = vpop.f32.mrb[0].mxu0
    %v713 = vadd.f32 0.0, %v712
    %v714 = vpop.f32.mrb[0].mxu0
    %715 = vdwg.mxu0
    %v716 = vadd.f32 %v572, %v642
    %v717 = vxor.u32 %v716, 2147483648
    %v718 = vmul.f32 %v717, 1.442695
    %v719 = vpow.pop %v718
    %v720 = vadd.f32 %v719, 1.0
    %v721 = vrcp.pop %v720
    %v722 = vmul.f32 1.0, %v721
    %v723 = vadd.f32 %v573, %v644
    %v724 = vxor.u32 %v723, 2147483648
    %v725 = vmul.f32 %v724, 1.442695
    %v726 = vpow.pop %v725
    %v727 = vadd.f32 %v726, 1.0
    %v728 = vrcp.pop %v727
    %v729 = vmul.f32 1.0, %v728
    %v730 = vadd.f32 %v713, %v570
    %v731 = vmul.f32 %v722, %v730
    %v732 = vadd.f32 %v574, %v731
    %v733 = vtanh.pop %v732
    %v734 = vsub.f32 1.0, %v729
    %v735 = vmul.f32 %v734, %v733
    %v736 = vmul.f32 %v729, %v201
    %v737 = vadd.f32 %v735, %v736
    %738 = vst [vmem:[#allocation2] sm:$0xff] %v737
    %s739 = scalar_lea.vmem [#allocation4], 24
    %v740 = vld [vmem:[%s739] sm:$0xff]
    %v741 = vld [vmem:[%s739 + $0x8] sm:$0xff]
    %v742 = vld [vmem:[%s739 + $0x10] sm:$0xff]
    %743 = vmatprep.subr.mxu0 %v203
    %744 = vmatpush1.msra.mxu0 %v202
    %745 = vmatprep.subr.mxu0 %v206
    %746 = vmatpush1.msra.mxu0 %v205
    %747 = vmatprep.subr.mxu0 %v209
    %748 = vmatpush1.msra.mxu0 %v208
    %749 = vmatprep.subr.mxu0 %v212
    %750 = vmatpush1.msra.mxu0 %v211
    %751 = vmatprep.subr.mxu0 %v215
    %752 = vmatpush1.msra.mxu0 %v214
    %753 = vmatprep.subr.mxu0 %v218
    %754 = vmatpush1.msra.mxu0 %v217
    %755 = vmatprep.subr.mxu0 %v221
    %756 = vmatpush1.msra.mxu0 %v220
    %757 = vmatprep.subr.mxu0 %v224
    %758 = vmatpush1.msra.mxu0 %v223
    %759 = vmatprep.subr.mxu0 %v227
    %760 = vmatpush1.msra.mxu0 %v226
    %761 = vmatprep.subr.mxu0 %v230
    %762 = vmatpush1.msra.mxu0 %v229
    %763 = vmatprep.subr.mxu0 %v233
    %764 = vmatpush1.msra.mxu0 %v232
    %765 = vmatprep.subr.mxu0 %v236
    %766 = vmatpush1.msra.mxu0 %v235
    %767 = vmatprep.subr.mxu0 %v239
    %768 = vmatpush1.msra.mxu0 %v238
    %769 = vmatprep.subr.mxu0 %v242
    %770 = vmatpush1.msra.mxu0 %v241
    %771 = vmatprep.subr.mxu0 %v245
    %772 = vmatpush1.msra.mxu0 %v244
    %773 = vmatprep.subr.mxu0 %v248
    %774 = vmatpush1.msra.mxu0 %v247
    %775 = vmatprep.subr.mxu0 0.0
    %776 = vmatpush1.msra.mxu0 0.0
    %777 = vmatprep.subr.mxu0 0.0
    %778 = vmatpush1.msra.mxu0 0.0
    %779 = vmatprep.subr.mxu0 0.0
    %780 = vmatpush1.msra.mxu0 0.0
    %781 = vmatprep.subr.mxu0 0.0
    %782 = vmatpush1.msra.mxu0 0.0
    %783 = vmatprep.subr.mxu0 0.0
    %784 = vmatpush1.msra.mxu0 0.0
    %785 = vmatprep.subr.mxu0 0.0
    %786 = vmatpush1.msra.mxu0 0.0
    %787 = vmatprep.subr.mxu0 0.0
    %788 = vmatpush1.msra.mxu0 0.0
    %789 = vmatprep.subr.mxu0 0.0
    %790 = vmatpush1.msra.mxu0 0.0
    %791 = vmatprep.subr.mxu0 0.0
    %792 = vmatpush1.msra.mxu0 0.0
    %793 = vmatprep.subr.mxu0 0.0
    %794 = vmatpush1.msra.mxu0 0.0
    %795 = vmatprep.subr.mxu0 0.0
    %796 = vmatpush1.msra.mxu0 0.0
    %797 = vmatprep.subr.mxu0 0.0
    %798 = vmatpush1.msra.mxu0 0.0
    %799 = vmatprep.subr.mxu0 0.0
    %800 = vmatpush1.msra.mxu0 0.0
    %801 = vmatprep.subr.mxu0 0.0
    %802 = vmatpush1.msra.mxu0 0.0
    %803 = vmatprep.subr.mxu0 0.0
    %804 = vmatpush1.msra.mxu0 0.0
    %805 = vmatprep.subr.mxu0 0.0
    %806 = vmatpush1.msra.mxu0 0.0
    %807 = vmatprep.mubr.f32.mxu0 0.0
    %808 = vmatmul.mubr.f32.gmra.mrb[0].mxu0 %v737
    %v809 = vpop.f32.mrb[0].mxu0
    %v810 = vadd.f32 0.0, %v809
    %v811 = vpop.f32.mrb[0].mxu0
    %v812 = vadd.f32 0.0, %v811
    %813 = vdwg.mxu0
    %814 = vmatprep.subr.mxu0 0.0
    %815 = vmatpush1.msra.mxu0 %v204
    %816 = vmatprep.subr.mxu0 0.0
    %817 = vmatpush1.msra.mxu0 %v207
    %818 = vmatprep.subr.mxu0 0.0
    %819 = vmatpush1.msra.mxu0 %v210
    %820 = vmatprep.subr.mxu0 0.0
    %821 = vmatpush1.msra.mxu0 %v213
    %822 = vmatprep.subr.mxu0 0.0
    %823 = vmatpush1.msra.mxu0 %v216
    %824 = vmatprep.subr.mxu0 0.0
    %825 = vmatpush1.msra.mxu0 %v219
    %826 = vmatprep.subr.mxu0 0.0
    %827 = vmatpush1.msra.mxu0 %v222
    %828 = vmatprep.subr.mxu0 0.0
    %829 = vmatpush1.msra.mxu0 %v225
    %830 = vmatprep.subr.mxu0 0.0
    %831 = vmatpush1.msra.mxu0 %v228
    %832 = vmatprep.subr.mxu0 0.0
    %833 = vmatpush1.msra.mxu0 %v231
    %834 = vmatprep.subr.mxu0 0.0
    %835 = vmatpush1.msra.mxu0 %v234
    %836 = vmatprep.subr.mxu0 0.0
    %837 = vmatpush1.msra.mxu0 %v237
    %838 = vmatprep.subr.mxu0 0.0
    %839 = vmatpush1.msra.mxu0 %v240
    %840 = vmatprep.subr.mxu0 0.0
    %841 = vmatpush1.msra.mxu0 %v243
    %842 = vmatprep.subr.mxu0 0.0
    %843 = vmatpush1.msra.mxu0 %v246
    %844 = vmatprep.subr.mxu0 0.0
    %845 = vmatpush1.msra.mxu0 %v249
    %846 = vmatprep.subr.mxu0 0.0
    %847 = vmatpush1.msra.mxu0 0.0
    %848 = vmatprep.subr.mxu0 0.0
    %849 = vmatpush1.msra.mxu0 0.0
    %850 = vmatprep.subr.mxu0 0.0
    %851 = vmatpush1.msra.mxu0 0.0
    %852 = vmatprep.subr.mxu0 0.0
    %853 = vmatpush1.msra.mxu0 0.0
    %854 = vmatprep.subr.mxu0 0.0
    %855 = vmatpush1.msra.mxu0 0.0
    %856 = vmatprep.subr.mxu0 0.0
    %857 = vmatpush1.msra.mxu0 0.0
    %858 = vmatprep.subr.mxu0 0.0
    %859 = vmatpush1.msra.mxu0 0.0
    %860 = vmatprep.subr.mxu0 0.0
    %861 = vmatpush1.msra.mxu0 0.0
    %862 = vmatprep.subr.mxu0 0.0
    %863 = vmatpush1.msra.mxu0 0.0
    %864 = vmatprep.subr.mxu0 0.0
    %865 = vmatpush1.msra.mxu0 0.0
    %866 = vmatprep.subr.mxu0 0.0
    %867 = vmatpush1.msra.mxu0 0.0
    %868 = vmatprep.subr.mxu0 0.0
    %869 = vmatpush1.msra.mxu0 0.0
    %870 = vmatprep.subr.mxu0 0.0
    %871 = vmatpush1.msra.mxu0 0.0
    %872 = vmatprep.subr.mxu0 0.0
    %873 = vmatpush1.msra.mxu0 0.0
    %874 = vmatprep.subr.mxu0 0.0
    %875 = vmatpush1.msra.mxu0 0.0
    %876 = vmatprep.subr.mxu0 0.0
    %877 = vmatpush1.msra.mxu0 0.0
    %878 = vmatprep.mubr.f32.mxu0 0.0
    %879 = vmatmul.mubr.f32.gmra.mrb[0].mxu0 %v737
    %v880 = vpop.f32.mrb[0].mxu0
    %v881 = vadd.f32 0.0, %v880
    %v882 = vpop.f32.mrb[0].mxu0
    %883 = vdwg.mxu0
    %v884 = vadd.f32 %v740, %v810
    %v885 = vxor.u32 %v884, 2147483648
    %v886 = vmul.f32 %v885, 1.442695
    %v887 = vpow.pop %v886
    %v888 = vadd.f32 %v887, 1.0
    %v889 = vrcp.pop %v888
    %v890 = vmul.f32 1.0, %v889
    %v891 = vadd.f32 %v741, %v812
    %v892 = vxor.u32 %v891, 2147483648
    %v893 = vmul.f32 %v892, 1.442695
    %v894 = vpow.pop %v893
    %v895 = vadd.f32 %v894, 1.0
    %v896 = vrcp.pop %v895
    %v897 = vmul.f32 1.0, %v896
    %v898 = vadd.f32 %v881, %v570
    %v899 = vmul.f32 %v890, %v898
    %v900 = vadd.f32 %v742, %v899
    %v901 = vtanh.pop %v900
    %v902 = vsub.f32 1.0, %v897
    %v903 = vmul.f32 %v902, %v901
    %v904 = vmul.f32 %v897, %v737
    %v905 = vadd.f32 %v903, %v904
    %s906 = scalar_lea.vmem [#allocation2], 8
    %907 = vst [vmem:[%s906] sm:$0xff] %v905
    %s908 = scalar_lea.vmem [#allocation4], 48
    %v909 = vld [vmem:[%s908] sm:$0xff]
    %v910 = vld [vmem:[%s908 + $0x8] sm:$0xff]
    %v911 = vld [vmem:[%s908 + $0x10] sm:$0xff]
    %912 = vmatprep.subr.mxu0 %v203
    %913 = vmatpush1.msra.mxu0 %v202
    %914 = vmatprep.subr.mxu0 %v206
    %915 = vmatpush1.msra.mxu0 %v205
    %916 = vmatprep.subr.mxu0 %v209
    %917 = vmatpush1.msra.mxu0 %v208
    %918 = vmatprep.subr.mxu0 %v212
    %919 = vmatpush1.msra.mxu0 %v211
    %920 = vmatprep.subr.mxu0 %v215
    %921 = vmatpush1.msra.mxu0 %v214
    %922 = vmatprep.subr.mxu0 %v218
    %923 = vmatpush1.msra.mxu0 %v217
    %924 = vmatprep.subr.mxu0 %v221
    %925 = vmatpush1.msra.mxu0 %v220
    %926 = vmatprep.subr.mxu0 %v224
    %927 = vmatpush1.msra.mxu0 %v223
    %928 = vmatprep.subr.mxu0 %v227
    %929 = vmatpush1.msra.mxu0 %v226
    %930 = vmatprep.subr.mxu0 %v230
    %931 = vmatpush1.msra.mxu0 %v229
    %932 = vmatprep.subr.mxu0 %v233
    %933 = vmatpush1.msra.mxu0 %v232
    %934 = vmatprep.subr.mxu0 %v236
    %935 = vmatpush1.msra.mxu0 %v235
    %936 = vmatprep.subr.mxu0 %v239
    %937 = vmatpush1.msra.mxu0 %v238
    %938 = vmatprep.subr.mxu0 %v242
    %939 = vmatpush1.msra.mxu0 %v241
    %940 = vmatprep.subr.mxu0 %v245
    %941 = vmatpush1.msra.mxu0 %v244
    %942 = vmatprep.subr.mxu0 %v248
    %943 = vmatpush1.msra.mxu0 %v247
    %944 = vmatprep.subr.mxu0 0.0
    %945 = vmatpush1.msra.mxu0 0.0
    %946 = vmatprep.subr.mxu0 0.0
    %947 = vmatpush1.msra.mxu0 0.0
    %948 = vmatprep.subr.mxu0 0.0
    %949 = vmatpush1.msra.mxu0 0.0
    %950 = vmatprep.subr.mxu0 0.0
    %951 = vmatpush1.msra.mxu0 0.0
    %952 = vmatprep.subr.mxu0 0.0
    %953 = vmatpush1.msra.mxu0 0.0
    %954 = vmatprep.subr.mxu0 0.0
    %955 = vmatpush1.msra.mxu0 0.0
    %956 = vmatprep.subr.mxu0 0.0
    %957 = vmatpush1.msra.mxu0 0.0
    %958 = vmatprep.subr.mxu0 0.0
    %959 = vmatpush1.msra.mxu0 0.0
    %960 = vmatprep.subr.mxu0 0.0
    %961 = vmatpush1.msra.mxu0 0.0
    %962 = vmatprep.subr.mxu0 0.0
    %963 = vmatpush1.msra.mxu0 0.0
    %964 = vmatprep.subr.mxu0 0.0
    %965 = vmatpush1.msra.mxu0 0.0
    %966 = vmatprep.subr.mxu0 0.0
    %967 = vmatpush1.msra.mxu0 0.0
    %968 = vmatprep.subr.mxu0 0.0
    %969 = vmatpush1.msra.mxu0 0.0
    %970 = vmatprep.subr.mxu0 0.0
    %971 = vmatpush1.msra.mxu0 0.0
    %972 = vmatprep.subr.mxu0 0.0
    %973 = vmatpush1.msra.mxu0 0.0
    %974 = vmatprep.subr.mxu0 0.0
    %975 = vmatpush1.msra.mxu0 0.0
    %976 = vmatprep.mubr.f32.mxu0 0.0
    %977 = vmatmul.mubr.f32.gmra.mrb[0].mxu0 %v905
    %v978 = vpop.f32.mrb[0].mxu0
    %v979 = vadd.f32 0.0, %v978
    %v980 = vpop.f32.mrb[0].mxu0
    %v981 = vadd.f32 0.0, %v980
    %982 = vdwg.mxu0
    %983 = vmatprep.subr.mxu0 0.0
    %984 = vmatpush1.msra.mxu0 %v204
    %985 = vmatprep.subr.mxu0 0.0
    %986 = vmatpush1.msra.mxu0 %v207
    %987 = vmatprep.subr.mxu0 0.0
    %988 = vmatpush1.msra.mxu0 %v210
    %989 = vmatprep.subr.mxu0 0.0
    %990 = vmatpush1.msra.mxu0 %v213
    %991 = vmatprep.subr.mxu0 0.0
    %992 = vmatpush1.msra.mxu0 %v216
    %993 = vmatprep.subr.mxu0 0.0
    %994 = vmatpush1.msra.mxu0 %v219
    %995 = vmatprep.subr.mxu0 0.0
    %996 = vmatpush1.msra.mxu0 %v222
    %997 = vmatprep.subr.mxu0 0.0
    %998 = vmatpush1.msra.mxu0 %v225
    %999 = vmatprep.subr.mxu0 0.0
    %1000 = vmatpush1.msra.mxu0 %v228
    %1001 = vmatprep.subr.mxu0 0.0
    %1002 = vmatpush1.msra.mxu0 %v231
    %1003 = vmatprep.subr.mxu0 0.0
    %1004 = vmatpush1.msra.mxu0 %v234
    %1005 = vmatprep.subr.mxu0 0.0
    %1006 = vmatpush1.msra.mxu0 %v237
    %1007 = vmatprep.subr.mxu0 0.0
    %1008 = vmatpush1.msra.mxu0 %v240
    %1009 = vmatprep.subr.mxu0 0.0
    %1010 = vmatpush1.msra.mxu0 %v243
    %1011 = vmatprep.subr.mxu0 0.0
    %1012 = vmatpush1.msra.mxu0 %v246
    %1013 = vmatprep.subr.mxu0 0.0
    %1014 = vmatpush1.msra.mxu0 %v249
    %1015 = vmatprep.subr.mxu0 0.0
    %1016 = vmatpush1.msra.mxu0 0.0
    %1017 = vmatprep.subr.mxu0 0.0
    %1018 = vmatpush1.msra.mxu0 0.0
    %1019 = vmatprep.subr.mxu0 0.0
    %1020 = vmatpush1.msra.mxu0 0.0
    %1021 = vmatprep.subr.mxu0 0.0
    %1022 = vmatpush1.msra.mxu0 0.0
    %1023 = vmatprep.subr.mxu0 0.0
    %1024 = vmatpush1.msra.mxu0 0.0
    %1025 = vmatprep.subr.mxu0 0.0
    %1026 = vmatpush1.msra.mxu0 0.0
    %1027 = vmatprep.subr.mxu0 0.0
    %1028 = vmatpush1.msra.mxu0 0.0
    %1029 = vmatprep.subr.mxu0 0.0
    %1030 = vmatpush1.msra.mxu0 0.0
    %1031 = vmatprep.subr.mxu0 0.0
    %1032 = vmatpush1.msra.mxu0 0.0
    %1033 = vmatprep.subr.mxu0 0.0
    %1034 = vmatpush1.msra.mxu0 0.0
    %1035 = vmatprep.subr.mxu0 0.0
    %1036 = vmatpush1.msra.mxu0 0.0
    %1037 = vmatprep.subr.mxu0 0.0
    %1038 = vmatpush1.msra.mxu0 0.0
    %1039 = vmatprep.subr.mxu0 0.0
    %1040 = vmatpush1.msra.mxu0 0.0
    %1041 = vmatprep.subr.mxu0 0.0
    %1042 = vmatpush1.msra.mxu0 0.0
    %1043 = vmatprep.subr.mxu0 0.0
    %1044 = vmatpush1.msra.mxu0 0.0
    %1045 = vmatprep.subr.mxu0 0.0
    %1046 = vmatpush1.msra.mxu0 0.0
    %1047 = vmatprep.mubr.f32.mxu0 0.0
    %1048 = vmatmul.mubr.f32.gmra.mrb[0].mxu0 %v905
    %v1049 = vpop.f32.mrb[0].mxu0
    %v1050 = vadd.f32 0.0, %v1049
    %v1051 = vpop.f32.mrb[0].mxu0
    %1052 = vdwg.mxu0
    %v1053 = vadd.f32 %v909, %v979
    %v1054 = vxor.u32 %v1053, 2147483648
    %v1055 = vmul.f32 %v1054, 1.442695
    %v1056 = vpow.pop %v1055
    %v1057 = vadd.f32 %v1056, 1.0
    %v1058 = vrcp.pop %v1057
    %v1059 = vmul.f32 1.0, %v1058
    %v1060 = vadd.f32 %v910, %v981
    %v1061 = vxor.u32 %v1060, 2147483648
    %v1062 = vmul.f32 %v1061, 1.442695
    %v1063 = vpow.pop %v1062
    %v1064 = vadd.f32 %v1063, 1.0
    %v1065 = vrcp.pop %v1064
    %v1066 = vmul.f32 1.0, %v1065
    %v1067 = vadd.f32 %v1050, %v570
    %v1068 = vmul.f32 %v1059, %v1067
    %v1069 = vadd.f32 %v911, %v1068
    %v1070 = vtanh.pop %v1069
    %v1071 = vsub.f32 1.0, %v1066
    %v1072 = vmul.f32 %v1071, %v1070
    %v1073 = vmul.f32 %v1066, %v905
    %v1074 = vadd.f32 %v1072, %v1073
    %s1075 = scalar_lea.vmem [#allocation2], 16
    %1076 = vst [vmem:[%s1075] sm:$0xff] %v1074
    %s1077 = scalar_lea.vmem [#allocation4], 72
    %v1078 = vld [vmem:[%s1077] sm:$0xff]
    %v1079 = vld [vmem:[%s1077 + $0x8] sm:$0xff]
    %v1080 = vld [vmem:[%s1077 + $0x10] sm:$0xff]
    %1081 = vmatprep.subr.mxu0 %v203
    %1082 = vmatpush1.msra.mxu0 %v202
    %1083 = vmatprep.subr.mxu0 %v206
    %1084 = vmatpush1.msra.mxu0 %v205
    %1085 = vmatprep.subr.mxu0 %v209
    %1086 = vmatpush1.msra.mxu0 %v208
    %1087 = vmatprep.subr.mxu0 %v212
    %1088 = vmatpush1.msra.mxu0 %v211
    %1089 = vmatprep.subr.mxu0 %v215
    %1090 = vmatpush1.msra.mxu0 %v214
    %1091 = vmatprep.subr.mxu0 %v218
    %1092 = vmatpush1.msra.mxu0 %v217
    %1093 = vmatprep.subr.mxu0 %v221
    %1094 = vmatpush1.msra.mxu0 %v220
    %1095 = vmatprep.subr.mxu0 %v224
    %1096 = vmatpush1.msra.mxu0 %v223
    %1097 = vmatprep.subr.mxu0 %v227
    %1098 = vmatpush1.msra.mxu0 %v226
    %1099 = vmatprep.subr.mxu0 %v230
    %1100 = vmatpush1.msra.mxu0 %v229
    %1101 = vmatprep.subr.mxu0 %v233
    %1102 = vmatpush1.msra.mxu0 %v232
    %1103 = vmatprep.subr.mxu0 %v236
    %1104 = vmatpush1.msra.mxu0 %v235
    %1105 = vmatprep.subr.mxu0 %v239
    %1106 = vmatpush1.msra.mxu0 %v238
    %1107 = vmatprep.subr.mxu0 %v242
    %1108 = vmatpush1.msra.mxu0 %v241
    %1109 = vmatprep.subr.mxu0 %v245
    %1110 = vmatpush1.msra.mxu0 %v244
    %1111 = vmatprep.subr.mxu0 %v248
    %1112 = vmatpush1.msra.mxu0 %v247
    %1113 = vmatprep.subr.mxu0 0.0
    %1114 = vmatpush1.msra.mxu0 0.0
    %1115 = vmatprep.subr.mxu0 0.0
    %1116 = vmatpush1.msra.mxu0 0.0
    %1117 = vmatprep.subr.mxu0 0.0
    %1118 = vmatpush1.msra.mxu0 0.0
    %1119 = vmatprep.subr.mxu0 0.0
    %1120 = vmatpush1.msra.mxu0 0.0
    %1121 = vmatprep.subr.mxu0 0.0
    %1122 = vmatpush1.msra.mxu0 0.0
    %1123 = vmatprep.subr.mxu0 0.0
    %1124 = vmatpush1.msra.mxu0 0.0
    %1125 = vmatprep.subr.mxu0 0.0
    %1126 = vmatpush1.msra.mxu0 0.0
    %1127 = vmatprep.subr.mxu0 0.0
    %1128 = vmatpush1.msra.mxu0 0.0
    %1129 = vmatprep.subr.mxu0 0.0
    %1130 = vmatpush1.msra.mxu0 0.0
    %1131 = vmatprep.subr.mxu0 0.0
    %1132 = vmatpush1.msra.mxu0 0.0
    %1133 = vmatprep.subr.mxu0 0.0
    %1134 = vmatpush1.msra.mxu0 0.0
    %1135 = vmatprep.subr.mxu0 0.0
    %1136 = vmatpush1.msra.mxu0 0.0
    %1137 = vmatprep.subr.mxu0 0.0
    %1138 = vmatpush1.msra.mxu0 0.0
    %1139 = vmatprep.subr.mxu0 0.0
    %1140 = vmatpush1.msra.mxu0 0.0
    %1141 = vmatprep.subr.mxu0 0.0
    %1142 = vmatpush1.msra.mxu0 0.0
    %1143 = vmatprep.subr.mxu0 0.0
    %1144 = vmatpush1.msra.mxu0 0.0
    %1145 = vmatprep.mubr.f32.mxu0 0.0
    %1146 = vmatmul.mubr.f32.gmra.mrb[0].mxu0 %v1074
    %v1147 = vpop.f32.mrb[0].mxu0
    %v1148 = vadd.f32 0.0, %v1147
    %v1149 = vpop.f32.mrb[0].mxu0
    %v1150 = vadd.f32 0.0, %v1149
    %1151 = vdwg.mxu0
    %1152 = vmatprep.subr.mxu0 0.0
    %1153 = vmatpush1.msra.mxu0 %v204
    %1154 = vmatprep.subr.mxu0 0.0
    %1155 = vmatpush1.msra.mxu0 %v207
    %1156 = vmatprep.subr.mxu0 0.0
    %1157 = vmatpush1.msra.mxu0 %v210
    %1158 = vmatprep.subr.mxu0 0.0
    %1159 = vmatpush1.msra.mxu0 %v213
    %1160 = vmatprep.subr.mxu0 0.0
    %1161 = vmatpush1.msra.mxu0 %v216
    %1162 = vmatprep.subr.mxu0 0.0
    %1163 = vmatpush1.msra.mxu0 %v219
    %1164 = vmatprep.subr.mxu0 0.0
    %1165 = vmatpush1.msra.mxu0 %v222
    %1166 = vmatprep.subr.mxu0 0.0
    %1167 = vmatpush1.msra.mxu0 %v225
    %1168 = vmatprep.subr.mxu0 0.0
    %1169 = vmatpush1.msra.mxu0 %v228
    %1170 = vmatprep.subr.mxu0 0.0
    %1171 = vmatpush1.msra.mxu0 %v231
    %1172 = vmatprep.subr.mxu0 0.0
    %1173 = vmatpush1.msra.mxu0 %v234
    %1174 = vmatprep.subr.mxu0 0.0
    %1175 = vmatpush1.msra.mxu0 %v237
    %1176 = vmatprep.subr.mxu0 0.0
    %1177 = vmatpush1.msra.mxu0 %v240
    %1178 = vmatprep.subr.mxu0 0.0
    %1179 = vmatpush1.msra.mxu0 %v243
    %1180 = vmatprep.subr.mxu0 0.0
    %1181 = vmatpush1.msra.mxu0 %v246
    %1182 = vmatprep.subr.mxu0 0.0
    %1183 = vmatpush1.msra.mxu0 %v249
    %1184 = vmatprep.subr.mxu0 0.0
    %1185 = vmatpush1.msra.mxu0 0.0
    %1186 = vmatprep.subr.mxu0 0.0
    %1187 = vmatpush1.msra.mxu0 0.0
    %1188 = vmatprep.subr.mxu0 0.0
    %1189 = vmatpush1.msra.mxu0 0.0
    %1190 = vmatprep.subr.mxu0 0.0
    %1191 = vmatpush1.msra.mxu0 0.0
    %1192 = vmatprep.subr.mxu0 0.0
    %1193 = vmatpush1.msra.mxu0 0.0
    %1194 = vmatprep.subr.mxu0 0.0
    %1195 = vmatpush1.msra.mxu0 0.0
    %1196 = vmatprep.subr.mxu0 0.0
    %1197 = vmatpush1.msra.mxu0 0.0
    %1198 = vmatprep.subr.mxu0 0.0
    %1199 = vmatpush1.msra.mxu0 0.0
    %1200 = vmatprep.subr.mxu0 0.0
    %1201 = vmatpush1.msra.mxu0 0.0
    %1202 = vmatprep.subr.mxu0 0.0
    %1203 = vmatpush1.msra.mxu0 0.0
    %1204 = vmatprep.subr.mxu0 0.0
    %1205 = vmatpush1.msra.mxu0 0.0
    %1206 = vmatprep.subr.mxu0 0.0
    %1207 = vmatpush1.msra.mxu0 0.0
    %1208 = vmatprep.subr.mxu0 0.0
    %1209 = vmatpush1.msra.mxu0 0.0
    %1210 = vmatprep.subr.mxu0 0.0
    %1211 = vmatpush1.msra.mxu0 0.0
    %1212 = vmatprep.subr.mxu0 0.0
    %1213 = vmatpush1.msra.mxu0 0.0
    %1214 = vmatprep.subr.mxu0 0.0
    %1215 = vmatpush1.msra.mxu0 0.0
    %1216 = vmatprep.mubr.f32.mxu0 0.0
    %1217 = vmatmul.mubr.f32.gmra.mrb[0].mxu0 %v1074
    %v1218 = vpop.f32.mrb[0].mxu0
    %v1219 = vadd.f32 0.0, %v1218
    %v1220 = vpop.f32.mrb[0].mxu0
    %1221 = vdwg.mxu0
    %v1222 = vadd.f32 %v1078, %v1148
    %v1223 = vxor.u32 %v1222, 2147483648
    %v1224 = vmul.f32 %v1223, 1.442695
    %v1225 = vpow.pop %v1224
    %v1226 = vadd.f32 %v1225, 1.0
    %v1227 = vrcp.pop %v1226
    %v1228 = vmul.f32 1.0, %v1227
    %v1229 = vadd.f32 %v1079, %v1150
    %v1230 = vxor.u32 %v1229, 2147483648
    %v1231 = vmul.f32 %v1230, 1.442695
    %v1232 = vpow.pop %v1231
    %v1233 = vadd.f32 %v1232, 1.0
    %v1234 = vrcp.pop %v1233
    %v1235 = vmul.f32 1.0, %v1234
    %v1236 = vadd.f32 %v1219, %v570
    %v1237 = vmul.f32 %v1228, %v1236
    %v1238 = vadd.f32 %v1080, %v1237
    %v1239 = vtanh.pop %v1238
    %v1240 = vsub.f32 1.0, %v1235
    %v1241 = vmul.f32 %v1240, %v1239
    %v1242 = vmul.f32 %v1235, %v1074
    %v1243 = vadd.f32 %v1241, %v1242
    %s1244 = scalar_lea.vmem [#allocation2], 24
    %1245 = vst [vmem:[%s1244] sm:$0xff] %v1243
    %s1246 = scalar_lea.vmem [#allocation4], 96
    %v1247 = vld [vmem:[%s1246] sm:$0xff]
    %v1248 = vld [vmem:[%s1246 + $0x8] sm:$0xff]
    %v1249 = vld [vmem:[%s1246 + $0x10] sm:$0xff]
    %1250 = vmatprep.subr.mxu0 %v203
    %1251 = vmatpush1.msra.mxu0 %v202
    %1252 = vmatprep.subr.mxu0 %v206
    %1253 = vmatpush1.msra.mxu0 %v205
    %1254 = vmatprep.subr.mxu0 %v209
    %1255 = vmatpush1.msra.mxu0 %v208
    %1256 = vmatprep.subr.mxu0 %v212
    %1257 = vmatpush1.msra.mxu0 %v211
    %1258 = vmatprep.subr.mxu0 %v215
    %1259 = vmatpush1.msra.mxu0 %v214
    %1260 = vmatprep.subr.mxu0 %v218
    %1261 = vmatpush1.msra.mxu0 %v217
    %1262 = vmatprep.subr.mxu0 %v221
    %1263 = vmatpush1.msra.mxu0 %v220
    %1264 = vmatprep.subr.mxu0 %v224
    %1265 = vmatpush1.msra.mxu0 %v223
    %1266 = vmatprep.subr.mxu0 %v227
    %1267 = vmatpush1.msra.mxu0 %v226
    %1268 = vmatprep.subr.mxu0 %v230
    %1269 = vmatpush1.msra.mxu0 %v229
    %1270 = vmatprep.subr.mxu0 %v233
    %1271 = vmatpush1.msra.mxu0 %v232
    %1272 = vmatprep.subr.mxu0 %v236
    %1273 = vmatpush1.msra.mxu0 %v235
    %1274 = vmatprep.subr.mxu0 %v239
    %1275 = vmatpush1.msra.mxu0 %v238
    %1276 = vmatprep.subr.mxu0 %v242
    %1277 = vmatpush1.msra.mxu0 %v241
    %1278 = vmatprep.subr.mxu0 %v245
    %1279 = vmatpush1.msra.mxu0 %v244
    %1280 = vmatprep.subr.mxu0 %v248
    %1281 = vmatpush1.msra.mxu0 %v247
    %1282 = vmatprep.subr.mxu0 0.0
    %1283 = vmatpush1.msra.mxu0 0.0
    %1284 = vmatprep.subr.mxu0 0.0
    %1285 = vmatpush1.msra.mxu0 0.0
    %1286 = vmatprep.subr.mxu0 0.0
    %1287 = vmatpush1.msra.mxu0 0.0
    %1288 = vmatprep.subr.mxu0 0.0
    %1289 = vmatpush1.msra.mxu0 0.0
    %1290 = vmatprep.subr.mxu0 0.0
    %1291 = vmatpush1.msra.mxu0 0.0
    %1292 = vmatprep.subr.mxu0 0.0
    %1293 = vmatpush1.msra.mxu0 0.0
    %1294 = vmatprep.subr.mxu0 0.0
    %1295 = vmatpush1.msra.mxu0 0.0
    %1296 = vmatprep.subr.mxu0 0.0
    %1297 = vmatpush1.msra.mxu0 0.0
    %1298 = vmatprep.subr.mxu0 0.0
    %1299 = vmatpush1.msra.mxu0 0.0
    %1300 = vmatprep.subr.mxu0 0.0
    %1301 = vmatpush1.msra.mxu0 0.0
    %1302 = vmatprep.subr.mxu0 0.0
    %1303 = vmatpush1.msra.mxu0 0.0
    %1304 = vmatprep.subr.mxu0 0.0
    %1305 = vmatpush1.msra.mxu0 0.0
    %1306 = vmatprep.subr.mxu0 0.0
    %1307 = vmatpush1.msra.mxu0 0.0
    %1308 = vmatprep.subr.mxu0 0.0
    %1309 = vmatpush1.msra.mxu0 0.0
    %1310 = vmatprep.subr.mxu0 0.0
    %1311 = vmatpush1.msra.mxu0 0.0
    %1312 = vmatprep.subr.mxu0 0.0
    %1313 = vmatpush1.msra.mxu0 0.0
    %1314 = vmatprep.mubr.f32.mxu0 0.0
    %1315 = vmatmul.mubr.f32.gmra.mrb[0].mxu0 %v1243
    %v1316 = vpop.f32.mrb[0].mxu0
    %v1317 = vadd.f32 0.0, %v1316
    %v1318 = vpop.f32.mrb[0].mxu0
    %v1319 = vadd.f32 0.0, %v1318
    %1320 = vdwg.mxu0
    %1321 = vmatprep.subr.mxu0 0.0
    %1322 = vmatpush1.msra.mxu0 %v204
    %1323 = vmatprep.subr.mxu0 0.0
    %1324 = vmatpush1.msra.mxu0 %v207
    %1325 = vmatprep.subr.mxu0 0.0
    %1326 = vmatpush1.msra.mxu0 %v210
    %1327 = vmatprep.subr.mxu0 0.0
    %1328 = vmatpush1.msra.mxu0 %v213
    %1329 = vmatprep.subr.mxu0 0.0
    %1330 = vmatpush1.msra.mxu0 %v216
    %1331 = vmatprep.subr.mxu0 0.0
    %1332 = vmatpush1.msra.mxu0 %v219
    %1333 = vmatprep.subr.mxu0 0.0
    %1334 = vmatpush1.msra.mxu0 %v222
    %1335 = vmatprep.subr.mxu0 0.0
    %1336 = vmatpush1.msra.mxu0 %v225
    %1337 = vmatprep.subr.mxu0 0.0
    %1338 = vmatpush1.msra.mxu0 %v228
    %1339 = vmatprep.subr.mxu0 0.0
    %1340 = vmatpush1.msra.mxu0 %v231
    %1341 = vmatprep.subr.mxu0 0.0
    %1342 = vmatpush1.msra.mxu0 %v234
    %1343 = vmatprep.subr.mxu0 0.0
    %1344 = vmatpush1.msra.mxu0 %v237
    %1345 = vmatprep.subr.mxu0 0.0
    %1346 = vmatpush1.msra.mxu0 %v240
    %1347 = vmatprep.subr.mxu0 0.0
    %1348 = vmatpush1.msra.mxu0 %v243
    %1349 = vmatprep.subr.mxu0 0.0
    %1350 = vmatpush1.msra.mxu0 %v246
    %1351 = vmatprep.subr.mxu0 0.0
    %1352 = vmatpush1.msra.mxu0 %v249
    %1353 = vmatprep.subr.mxu0 0.0
    %1354 = vmatpush1.msra.mxu0 0.0
    %1355 = vmatprep.subr.mxu0 0.0
    %1356 = vmatpush1.msra.mxu0 0.0
    %1357 = vmatprep.subr.mxu0 0.0
    %1358 = vmatpush1.msra.mxu0 0.0
    %1359 = vmatprep.subr.mxu0 0.0
    %1360 = vmatpush1.msra.mxu0 0.0
    %1361 = vmatprep.subr.mxu0 0.0
    %1362 = vmatpush1.msra.mxu0 0.0
    %1363 = vmatprep.subr.mxu0 0.0
    %1364 = vmatpush1.msra.mxu0 0.0
    %1365 = vmatprep.subr.mxu0 0.0
    %1366 = vmatpush1.msra.mxu0 0.0
    %1367 = vmatprep.subr.mxu0 0.0
    %1368 = vmatpush1.msra.mxu0 0.0
    %1369 = vmatprep.subr.mxu0 0.0
    %1370 = vmatpush1.msra.mxu0 0.0
    %1371 = vmatprep.subr.mxu0 0.0
    %1372 = vmatpush1.msra.mxu0 0.0
    %1373 = vmatprep.subr.mxu0 0.0
    %1374 = vmatpush1.msra.mxu0 0.0
    %1375 = vmatprep.subr.mxu0 0.0
    %1376 = vmatpush1.msra.mxu0 0.0
    %1377 = vmatprep.subr.mxu0 0.0
    %1378 = vmatpush1.msra.mxu0 0.0
    %1379 = vmatprep.subr.mxu0 0.0
    %1380 = vmatpush1.msra.mxu0 0.0
    %1381 = vmatprep.subr.mxu0 0.0
    %1382 = vmatpush1.msra.mxu0 0.0
    %1383 = vmatprep.subr.mxu0 0.0
    %1384 = vmatpush1.msra.mxu0 0.0
    %1385 = vmatprep.mubr.f32.mxu0 0.0
    %1386 = vmatmul.mubr.f32.gmra.mrb[0].mxu0 %v1243
    %v1387 = vpop.f32.mrb[0].mxu0
    %v1388 = vadd.f32 0.0, %v1387
    %v1389 = vpop.f32.mrb[0].mxu0
    %1390 = vdwg.mxu0
    %v1391 = vadd.f32 %v1247, %v1317
    %v1392 = vxor.u32 %v1391, 2147483648
    %v1393 = vmul.f32 %v1392, 1.442695
    %v1394 = vpow.pop %v1393
    %v1395 = vadd.f32 %v1394, 1.0
    %v1396 = vrcp.pop %v1395
    %v1397 = vmul.f32 1.0, %v1396
    %v1398 = vadd.f32 %v1248, %v1319
    %v1399 = vxor.u32 %v1398, 2147483648
    %v1400 = vmul.f32 %v1399, 1.442695
    %v1401 = vpow.pop %v1400
    %v1402 = vadd.f32 %v1401, 1.0
    %v1403 = vrcp.pop %v1402
    %v1404 = vmul.f32 1.0, %v1403
    %v1405 = vadd.f32 %v1388, %v570
    %v1406 = vmul.f32 %v1397, %v1405
    %v1407 = vadd.f32 %v1249, %v1406
    %v1408 = vtanh.pop %v1407
    %v1409 = vsub.f32 1.0, %v1404
    %v1410 = vmul.f32 %v1409, %v1408
    %v1411 = vmul.f32 %v1404, %v1243
    %v1412 = vadd.f32 %v1410, %v1411
    %s1413 = scalar_lea.vmem [#allocation2], 32
    %1414 = vst [vmem:[%s1413] sm:$0xff] %v1412
    %s1415 = scalar_lea.vmem [#allocation4], 120
    %v1416 = vld [vmem:[%s1415] sm:$0xff]
    %v1417 = vld [vmem:[%s1415 + $0x8] sm:$0xff]
    %v1418 = vld [vmem:[%s1415 + $0x10] sm:$0xff]
    %1419 = vmatprep.subr.mxu0 %v203
    %1420 = vmatpush1.msra.mxu0 %v202
    %1421 = vmatprep.subr.mxu0 %v206
    %1422 = vmatpush1.msra.mxu0 %v205
    %1423 = vmatprep.subr.mxu0 %v209
    %1424 = vmatpush1.msra.mxu0 %v208
    %1425 = vmatprep.subr.mxu0 %v212
    %1426 = vmatpush1.msra.mxu0 %v211
    %1427 = vmatprep.subr.mxu0 %v215
    %1428 = vmatpush1.msra.mxu0 %v214
    %1429 = vmatprep.subr.mxu0 %v218
    %1430 = vmatpush1.msra.mxu0 %v217
    %1431 = vmatprep.subr.mxu0 %v221
    %1432 = vmatpush1.msra.mxu0 %v220
    %1433 = vmatprep.subr.mxu0 %v224
    %1434 = vmatpush1.msra.mxu0 %v223
    %1435 = vmatprep.subr.mxu0 %v227
    %1436 = vmatpush1.msra.mxu0 %v226
    %1437 = vmatprep.subr.mxu0 %v230
    %1438 = vmatpush1.msra.mxu0 %v229
    %1439 = vmatprep.subr.mxu0 %v233
    %1440 = vmatpush1.msra.mxu0 %v232
    %1441 = vmatprep.subr.mxu0 %v236
    %1442 = vmatpush1.msra.mxu0 %v235
    %1443 = vmatprep.subr.mxu0 %v239
    %1444 = vmatpush1.msra.mxu0 %v238
    %1445 = vmatprep.subr.mxu0 %v242
    %1446 = vmatpush1.msra.mxu0 %v241
    %1447 = vmatprep.subr.mxu0 %v245
    %1448 = vmatpush1.msra.mxu0 %v244
    %1449 = vmatprep.subr.mxu0 %v248
    %1450 = vmatpush1.msra.mxu0 %v247
    %1451 = vmatprep.subr.mxu0 0.0
    %1452 = vmatpush1.msra.mxu0 0.0
    %1453 = vmatprep.subr.mxu0 0.0
    %1454 = vmatpush1.msra.mxu0 0.0
    %1455 = vmatprep.subr.mxu0 0.0
    %1456 = vmatpush1.msra.mxu0 0.0
    %1457 = vmatprep.subr.mxu0 0.0
    %1458 = vmatpush1.msra.mxu0 0.0
    %1459 = vmatprep.subr.mxu0 0.0
    %1460 = vmatpush1.msra.mxu0 0.0
    %1461 = vmatprep.subr.mxu0 0.0
    %1462 = vmatpush1.msra.mxu0 0.0
    %1463 = vmatprep.subr.mxu0 0.0
    %1464 = vmatpush1.msra.mxu0 0.0
    %1465 = vmatprep.subr.mxu0 0.0
    %1466 = vmatpush1.msra.mxu0 0.0
    %1467 = vmatprep.subr.mxu0 0.0
    %1468 = vmatpush1.msra.mxu0 0.0
    %1469 = vmatprep.subr.mxu0 0.0
    %1470 = vmatpush1.msra.mxu0 0.0
    %1471 = vmatprep.subr.mxu0 0.0
    %1472 = vmatpush1.msra.mxu0 0.0
    %1473 = vmatprep.subr.mxu0 0.0
    %1474 = vmatpush1.msra.mxu0 0.0
    %1475 = vmatprep.subr.mxu0 0.0
    %1476 = vmatpush1.msra.mxu0 0.0
    %1477 = vmatprep.subr.mxu0 0.0
    %1478 = vmatpush1.msra.mxu0 0.0
    %1479 = vmatprep.subr.mxu0 0.0
    %1480 = vmatpush1.msra.mxu0 0.0
    %1481 = vmatprep.subr.mxu0 0.0
    %1482 = vmatpush1.msra.mxu0 0.0
    %1483 = vmatprep.mubr.f32.mxu0 0.0
    %1484 = vmatmul.mubr.f32.gmra.mrb[0].mxu0 %v1412
    %v1485 = vpop.f32.mrb[0].mxu0
    %v1486 = vadd.f32 0.0, %v1485
    %v1487 = vpop.f32.mrb[0].mxu0
    %v1488 = vadd.f32 0.0, %v1487
    %1489 = vdwg.mxu0
    %1490 = vmatprep.subr.mxu0 0.0
    %1491 = vmatpush1.msra.mxu0 %v204
    %1492 = vmatprep.subr.mxu0 0.0
    %1493 = vmatpush1.msra.mxu0 %v207
    %1494 = vmatprep.subr.mxu0 0.0
    %1495 = vmatpush1.msra.mxu0 %v210
    %1496 = vmatprep.subr.mxu0 0.0
    %1497 = vmatpush1.msra.mxu0 %v213
    %1498 = vmatprep.subr.mxu0 0.0
    %1499 = vmatpush1.msra.mxu0 %v216
    %1500 = vmatprep.subr.mxu0 0.0
    %1501 = vmatpush1.msra.mxu0 %v219
    %1502 = vmatprep.subr.mxu0 0.0
    %1503 = vmatpush1.msra.mxu0 %v222
    %1504 = vmatprep.subr.mxu0 0.0
    %1505 = vmatpush1.msra.mxu0 %v225
    %1506 = vmatprep.subr.mxu0 0.0
    %1507 = vmatpush1.msra.mxu0 %v228
    %1508 = vmatprep.subr.mxu0 0.0
    %1509 = vmatpush1.msra.mxu0 %v231
    %1510 = vmatprep.subr.mxu0 0.0
    %1511 = vmatpush1.msra.mxu0 %v234
    %1512 = vmatprep.subr.mxu0 0.0
    %1513 = vmatpush1.msra.mxu0 %v237
    %1514 = vmatprep.subr.mxu0 0.0
    %1515 = vmatpush1.msra.mxu0 %v240
    %1516 = vmatprep.subr.mxu0 0.0
    %1517 = vmatpush1.msra.mxu0 %v243
    %1518 = vmatprep.subr.mxu0 0.0
    %1519 = vmatpush1.msra.mxu0 %v246
    %1520 = vmatprep.subr.mxu0 0.0
    %1521 = vmatpush1.msra.mxu0 %v249
    %1522 = vmatprep.subr.mxu0 0.0
    %1523 = vmatpush1.msra.mxu0 0.0
    %1524 = vmatprep.subr.mxu0 0.0
    %1525 = vmatpush1.msra.mxu0 0.0
    %1526 = vmatprep.subr.mxu0 0.0
    %1527 = vmatpush1.msra.mxu0 0.0
    %1528 = vmatprep.subr.mxu0 0.0
    %1529 = vmatpush1.msra.mxu0 0.0
    %1530 = vmatprep.subr.mxu0 0.0
    %1531 = vmatpush1.msra.mxu0 0.0
    %1532 = vmatprep.subr.mxu0 0.0
    %1533 = vmatpush1.msra.mxu0 0.0
    %1534 = vmatprep.subr.mxu0 0.0
    %1535 = vmatpush1.msra.mxu0 0.0
    %1536 = vmatprep.subr.mxu0 0.0
    %1537 = vmatpush1.msra.mxu0 0.0
    %1538 = vmatprep.subr.mxu0 0.0
    %1539 = vmatpush1.msra.mxu0 0.0
    %1540 = vmatprep.subr.mxu0 0.0
    %1541 = vmatpush1.msra.mxu0 0.0
    %1542 = vmatprep.subr.mxu0 0.0
    %1543 = vmatpush1.msra.mxu0 0.0
    %1544 = vmatprep.subr.mxu0 0.0
    %1545 = vmatpush1.msra.mxu0 0.0
    %1546 = vmatprep.subr.mxu0 0.0
    %1547 = vmatpush1.msra.mxu0 0.0
    %1548 = vmatprep.subr.mxu0 0.0
    %1549 = vmatpush1.msra.mxu0 0.0
    %1550 = vmatprep.subr.mxu0 0.0
    %1551 = vmatpush1.msra.mxu0 0.0
    %1552 = vmatprep.subr.mxu0 0.0
    %1553 = vmatpush1.msra.mxu0 0.0
    %1554 = vmatprep.mubr.f32.mxu0 0.0
    %1555 = vmatmul.mubr.f32.gmra.mrb[0].mxu0 %v1412
    %v1556 = vpop.f32.mrb[0].mxu0
    %v1557 = vadd.f32 0.0, %v1556
    %v1558 = vpop.f32.mrb[0].mxu0
    %1559 = vdwg.mxu0
    %v1560 = vadd.f32 %v1416, %v1486
    %v1561 = vxor.u32 %v1560, 2147483648
    %v1562 = vmul.f32 %v1561, 1.442695
    %v1563 = vpow.pop %v1562
    %v1564 = vadd.f32 %v1563, 1.0
    %v1565 = vrcp.pop %v1564
    %v1566 = vmul.f32 1.0, %v1565
    %v1567 = vadd.f32 %v1417, %v1488
    %v1568 = vxor.u32 %v1567, 2147483648
    %v1569 = vmul.f32 %v1568, 1.442695
    %v1570 = vpow.pop %v1569
    %v1571 = vadd.f32 %v1570, 1.0
    %v1572 = vrcp.pop %v1571
    %v1573 = vmul.f32 1.0, %v1572
    %v1574 = vadd.f32 %v1557, %v570
    %v1575 = vmul.f32 %v1566, %v1574
    %v1576 = vadd.f32 %v1418, %v1575
    %v1577 = vtanh.pop %v1576
    %v1578 = vsub.f32 1.0, %v1573
    %v1579 = vmul.f32 %v1578, %v1577
    %v1580 = vmul.f32 %v1573, %v1412
    %v1581 = vadd.f32 %v1579, %v1580
    %s1582 = scalar_lea.vmem [#allocation2], 40
    %1583 = vst [vmem:[%s1582] sm:$0xff] %v1581
    %s1584 = scalar_lea.vmem [#allocation4], 144
    %v1585 = vld [vmem:[%s1584] sm:$0xff]
    %v1586 = vld [vmem:[%s1584 + $0x8] sm:$0xff]
    %v1587 = vld [vmem:[%s1584 + $0x10] sm:$0xff]
    %1588 = vmatprep.subr.mxu0 %v203
    %1589 = vmatpush1.msra.mxu0 %v202
    %1590 = vmatprep.subr.mxu0 %v206
    %1591 = vmatpush1.msra.mxu0 %v205
    %1592 = vmatprep.subr.mxu0 %v209
    %1593 = vmatpush1.msra.mxu0 %v208
    %1594 = vmatprep.subr.mxu0 %v212
    %1595 = vmatpush1.msra.mxu0 %v211
    %1596 = vmatprep.subr.mxu0 %v215
    %1597 = vmatpush1.msra.mxu0 %v214
    %1598 = vmatprep.subr.mxu0 %v218
    %1599 = vmatpush1.msra.mxu0 %v217
    %1600 = vmatprep.subr.mxu0 %v221
    %1601 = vmatpush1.msra.mxu0 %v220
    %1602 = vmatprep.subr.mxu0 %v224
    %1603 = vmatpush1.msra.mxu0 %v223
    %1604 = vmatprep.subr.mxu0 %v227
    %1605 = vmatpush1.msra.mxu0 %v226
    %1606 = vmatprep.subr.mxu0 %v230
    %1607 = vmatpush1.msra.mxu0 %v229
    %1608 = vmatprep.subr.mxu0 %v233
    %1609 = vmatpush1.msra.mxu0 %v232
    %1610 = vmatprep.subr.mxu0 %v236
    %1611 = vmatpush1.msra.mxu0 %v235
    %1612 = vmatprep.subr.mxu0 %v239
    %1613 = vmatpush1.msra.mxu0 %v238
    %1614 = vmatprep.subr.mxu0 %v242
    %1615 = vmatpush1.msra.mxu0 %v241
    %1616 = vmatprep.subr.mxu0 %v245
    %1617 = vmatpush1.msra.mxu0 %v244
    %1618 = vmatprep.subr.mxu0 %v248
    %1619 = vmatpush1.msra.mxu0 %v247
    %1620 = vmatprep.subr.mxu0 0.0
    %1621 = vmatpush1.msra.mxu0 0.0
    %1622 = vmatprep.subr.mxu0 0.0
    %1623 = vmatpush1.msra.mxu0 0.0
    %1624 = vmatprep.subr.mxu0 0.0
    %1625 = vmatpush1.msra.mxu0 0.0
    %1626 = vmatprep.subr.mxu0 0.0
    %1627 = vmatpush1.msra.mxu0 0.0
    %1628 = vmatprep.subr.mxu0 0.0
    %1629 = vmatpush1.msra.mxu0 0.0
    %1630 = vmatprep.subr.mxu0 0.0
    %1631 = vmatpush1.msra.mxu0 0.0
    %1632 = vmatprep.subr.mxu0 0.0
    %1633 = vmatpush1.msra.mxu0 0.0
    %1634 = vmatprep.subr.mxu0 0.0
    %1635 = vmatpush1.msra.mxu0 0.0
    %1636 = vmatprep.subr.mxu0 0.0
    %1637 = vmatpush1.msra.mxu0 0.0
    %1638 = vmatprep.subr.mxu0 0.0
    %1639 = vmatpush1.msra.mxu0 0.0
    %1640 = vmatprep.subr.mxu0 0.0
    %1641 = vmatpush1.msra.mxu0 0.0
    %1642 = vmatprep.subr.mxu0 0.0
    %1643 = vmatpush1.msra.mxu0 0.0
    %1644 = vmatprep.subr.mxu0 0.0
    %1645 = vmatpush1.msra.mxu0 0.0
    %1646 = vmatprep.subr.mxu0 0.0
    %1647 = vmatpush1.msra.mxu0 0.0
    %1648 = vmatprep.subr.mxu0 0.0
    %1649 = vmatpush1.msra.mxu0 0.0
    %1650 = vmatprep.subr.mxu0 0.0
    %1651 = vmatpush1.msra.mxu0 0.0
    %1652 = vmatprep.mubr.f32.mxu0 0.0
    %1653 = vmatmul.mubr.f32.gmra.mrb[0].mxu0 %v1581
    %v1654 = vpop.f32.mrb[0].mxu0
    %v1655 = vadd.f32 0.0, %v1654
    %v1656 = vpop.f32.mrb[0].mxu0
    %v1657 = vadd.f32 0.0, %v1656
    %1658 = vdwg.mxu0
    %1659 = vmatprep.subr.mxu0 0.0
    %1660 = vmatpush1.msra.mxu0 %v204
    %1661 = vmatprep.subr.mxu0 0.0
    %1662 = vmatpush1.msra.mxu0 %v207
    %1663 = vmatprep.subr.mxu0 0.0
    %1664 = vmatpush1.msra.mxu0 %v210
    %1665 = vmatprep.subr.mxu0 0.0
    %1666 = vmatpush1.msra.mxu0 %v213
    %1667 = vmatprep.subr.mxu0 0.0
    %1668 = vmatpush1.msra.mxu0 %v216
    %1669 = vmatprep.subr.mxu0 0.0
    %1670 = vmatpush1.msra.mxu0 %v219
    %1671 = vmatprep.subr.mxu0 0.0
    %1672 = vmatpush1.msra.mxu0 %v222
    %1673 = vmatprep.subr.mxu0 0.0
    %1674 = vmatpush1.msra.mxu0 %v225
    %1675 = vmatprep.subr.mxu0 0.0
    %1676 = vmatpush1.msra.mxu0 %v228
    %1677 = vmatprep.subr.mxu0 0.0
    %1678 = vmatpush1.msra.mxu0 %v231
    %1679 = vmatprep.subr.mxu0 0.0
    %1680 = vmatpush1.msra.mxu0 %v234
    %1681 = vmatprep.subr.mxu0 0.0
    %1682 = vmatpush1.msra.mxu0 %v237
    %1683 = vmatprep.subr.mxu0 0.0
    %1684 = vmatpush1.msra.mxu0 %v240
    %1685 = vmatprep.subr.mxu0 0.0
    %1686 = vmatpush1.msra.mxu0 %v243
    %1687 = vmatprep.subr.mxu0 0.0
    %1688 = vmatpush1.msra.mxu0 %v246
    %1689 = vmatprep.subr.mxu0 0.0
    %1690 = vmatpush1.msra.mxu0 %v249
    %1691 = vmatprep.subr.mxu0 0.0
    %1692 = vmatpush1.msra.mxu0 0.0
    %1693 = vmatprep.subr.mxu0 0.0
    %1694 = vmatpush1.msra.mxu0 0.0
    %1695 = vmatprep.subr.mxu0 0.0
    %1696 = vmatpush1.msra.mxu0 0.0
    %1697 = vmatprep.subr.mxu0 0.0
    %1698 = vmatpush1.msra.mxu0 0.0
    %1699 = vmatprep.subr.mxu0 0.0
    %1700 = vmatpush1.msra.mxu0 0.0
    %1701 = vmatprep.subr.mxu0 0.0
    %1702 = vmatpush1.msra.mxu0 0.0
    %1703 = vmatprep.subr.mxu0 0.0
    %1704 = vmatpush1.msra.mxu0 0.0
    %1705 = vmatprep.subr.mxu0 0.0
    %1706 = vmatpush1.msra.mxu0 0.0
    %1707 = vmatprep.subr.mxu0 0.0
    %1708 = vmatpush1.msra.mxu0 0.0
    %1709 = vmatprep.subr.mxu0 0.0
    %1710 = vmatpush1.msra.mxu0 0.0
    %1711 = vmatprep.subr.mxu0 0.0
    %1712 = vmatpush1.msra.mxu0 0.0
    %1713 = vmatprep.subr.mxu0 0.0
    %1714 = vmatpush1.msra.mxu0 0.0
    %1715 = vmatprep.subr.mxu0 0.0
    %1716 = vmatpush1.msra.mxu0 0.0
    %1717 = vmatprep.subr.mxu0 0.0
    %1718 = vmatpush1.msra.mxu0 0.0
    %1719 = vmatprep.subr.mxu0 0.0
    %1720 = vmatpush1.msra.mxu0 0.0
    %1721 = vmatprep.subr.mxu0 0.0
    %1722 = vmatpush1.msra.mxu0 0.0
    %1723 = vmatprep.mubr.f32.mxu0 0.0
    %1724 = vmatmul.mubr.f32.gmra.mrb[0].mxu0 %v1581
    %v1725 = vpop.f32.mrb[0].mxu0
    %v1726 = vadd.f32 0.0, %v1725
    %v1727 = vpop.f32.mrb[0].mxu0
    %1728 = vdwg.mxu0
    %v1729 = vadd.f32 %v1585, %v1655
    %v1730 = vxor.u32 %v1729, 2147483648
    %v1731 = vmul.f32 %v1730, 1.442695
    %v1732 = vpow.pop %v1731
    %v1733 = vadd.f32 %v1732, 1.0
    %v1734 = vrcp.pop %v1733
    %v1735 = vmul.f32 1.0, %v1734
    %v1736 = vadd.f32 %v1586, %v1657
    %v1737 = vxor.u32 %v1736, 2147483648
    %v1738 = vmul.f32 %v1737, 1.442695
    %v1739 = vpow.pop %v1738
    %v1740 = vadd.f32 %v1739, 1.0
    %v1741 = vrcp.pop %v1740
    %v1742 = vmul.f32 1.0, %v1741
    %v1743 = vadd.f32 %v1726, %v570
    %v1744 = vmul.f32 %v1735, %v1743
    %v1745 = vadd.f32 %v1587, %v1744
    %v1746 = vtanh.pop %v1745
    %v1747 = vsub.f32 1.0, %v1742
    %v1748 = vmul.f32 %v1747, %v1746
    %v1749 = vmul.f32 %v1742, %v1581
    %v1750 = vadd.f32 %v1748, %v1749
    %s1751 = scalar_lea.vmem [#allocation2], 48
    %1752 = vst [vmem:[%s1751] sm:$0xff] %v1750
    %s1753 = scalar_lea.vmem [#allocation4], 168
    %v1754 = vld [vmem:[%s1753] sm:$0xff]
    %v1755 = vld [vmem:[%s1753 + $0x8] sm:$0xff]
    %v1756 = vld [vmem:[%s1753 + $0x10] sm:$0xff]
    %1757 = vmatprep.subr.mxu0 %v203
    %1758 = vmatpush1.msra.mxu0 %v202
    %1759 = vmatprep.subr.mxu0 %v206
    %1760 = vmatpush1.msra.mxu0 %v205
    %1761 = vmatprep.subr.mxu0 %v209
    %1762 = vmatpush1.msra.mxu0 %v208
    %1763 = vmatprep.subr.mxu0 %v212
    %1764 = vmatpush1.msra.mxu0 %v211
    %1765 = vmatprep.subr.mxu0 %v215
    %1766 = vmatpush1.msra.mxu0 %v214
    %1767 = vmatprep.subr.mxu0 %v218
    %1768 = vmatpush1.msra.mxu0 %v217
    %1769 = vmatprep.subr.mxu0 %v221
    %1770 = vmatpush1.msra.mxu0 %v220
    %1771 = vmatprep.subr.mxu0 %v224
    %1772 = vmatpush1.msra.mxu0 %v223
    %1773 = vmatprep.subr.mxu0 %v227
    %1774 = vmatpush1.msra.mxu0 %v226
    %1775 = vmatprep.subr.mxu0 %v230
    %1776 = vmatpush1.msra.mxu0 %v229
    %1777 = vmatprep.subr.mxu0 %v233
    %1778 = vmatpush1.msra.mxu0 %v232
    %1779 = vmatprep.subr.mxu0 %v236
    %1780 = vmatpush1.msra.mxu0 %v235
    %1781 = vmatprep.subr.mxu0 %v239
    %1782 = vmatpush1.msra.mxu0 %v238
    %1783 = vmatprep.subr.mxu0 %v242
    %1784 = vmatpush1.msra.mxu0 %v241
    %1785 = vmatprep.subr.mxu0 %v245
    %1786 = vmatpush1.msra.mxu0 %v244
    %1787 = vmatprep.subr.mxu0 %v248
    %1788 = vmatpush1.msra.mxu0 %v247
    %1789 = vmatprep.subr.mxu0 0.0
    %1790 = vmatpush1.msra.mxu0 0.0
    %1791 = vmatprep.subr.mxu0 0.0
    %1792 = vmatpush1.msra.mxu0 0.0
    %1793 = vmatprep.subr.mxu0 0.0
    %1794 = vmatpush1.msra.mxu0 0.0
    %1795 = vmatprep.subr.mxu0 0.0
    %1796 = vmatpush1.msra.mxu0 0.0
    %1797 = vmatprep.subr.mxu0 0.0
    %1798 = vmatpush1.msra.mxu0 0.0
    %1799 = vmatprep.subr.mxu0 0.0
    %1800 = vmatpush1.msra.mxu0 0.0
    %1801 = vmatprep.subr.mxu0 0.0
    %1802 = vmatpush1.msra.mxu0 0.0
    %1803 = vmatprep.subr.mxu0 0.0
    %1804 = vmatpush1.msra.mxu0 0.0
    %1805 = vmatprep.subr.mxu0 0.0
    %1806 = vmatpush1.msra.mxu0 0.0
    %1807 = vmatprep.subr.mxu0 0.0
    %1808 = vmatpush1.msra.mxu0 0.0
    %1809 = vmatprep.subr.mxu0 0.0
    %1810 = vmatpush1.msra.mxu0 0.0
    %1811 = vmatprep.subr.mxu0 0.0
    %1812 = vmatpush1.msra.mxu0 0.0
    %1813 = vmatprep.subr.mxu0 0.0
    %1814 = vmatpush1.msra.mxu0 0.0
    %1815 = vmatprep.subr.mxu0 0.0
    %1816 = vmatpush1.msra.mxu0 0.0
    %1817 = vmatprep.subr.mxu0 0.0
    %1818 = vmatpush1.msra.mxu0 0.0
    %1819 = vmatprep.subr.mxu0 0.0
    %1820 = vmatpush1.msra.mxu0 0.0
    %1821 = vmatprep.mubr.f32.mxu0 0.0
    %1822 = vmatmul.mubr.f32.gmra.mrb[0].mxu0 %v1750
    %v1823 = vpop.f32.mrb[0].mxu0
    %v1824 = vadd.f32 0.0, %v1823
    %v1825 = vpop.f32.mrb[0].mxu0
    %v1826 = vadd.f32 0.0, %v1825
    %1827 = vdwg.mxu0
    %1828 = vmatprep.subr.mxu0 0.0
    %1829 = vmatpush1.msra.mxu0 %v204
    %1830 = vmatprep.subr.mxu0 0.0
    %1831 = vmatpush1.msra.mxu0 %v207
    %1832 = vmatprep.subr.mxu0 0.0
    %1833 = vmatpush1.msra.mxu0 %v210
    %1834 = vmatprep.subr.mxu0 0.0
    %1835 = vmatpush1.msra.mxu0 %v213
    %1836 = vmatprep.subr.mxu0 0.0
    %1837 = vmatpush1.msra.mxu0 %v216
    %1838 = vmatprep.subr.mxu0 0.0
    %1839 = vmatpush1.msra.mxu0 %v219
    %1840 = vmatprep.subr.mxu0 0.0
    %1841 = vmatpush1.msra.mxu0 %v222
    %1842 = vmatprep.subr.mxu0 0.0
    %1843 = vmatpush1.msra.mxu0 %v225
    %1844 = vmatprep.subr.mxu0 0.0
    %1845 = vmatpush1.msra.mxu0 %v228
    %1846 = vmatprep.subr.mxu0 0.0
    %1847 = vmatpush1.msra.mxu0 %v231
    %1848 = vmatprep.subr.mxu0 0.0
    %1849 = vmatpush1.msra.mxu0 %v234
    %1850 = vmatprep.subr.mxu0 0.0
    %1851 = vmatpush1.msra.mxu0 %v237
    %1852 = vmatprep.subr.mxu0 0.0
    %1853 = vmatpush1.msra.mxu0 %v240
    %1854 = vmatprep.subr.mxu0 0.0
    %1855 = vmatpush1.msra.mxu0 %v243
    %1856 = vmatprep.subr.mxu0 0.0
    %1857 = vmatpush1.msra.mxu0 %v246
    %1858 = vmatprep.subr.mxu0 0.0
    %1859 = vmatpush1.msra.mxu0 %v249
    %1860 = vmatprep.subr.mxu0 0.0
    %1861 = vmatpush1.msra.mxu0 0.0
    %1862 = vmatprep.subr.mxu0 0.0
    %1863 = vmatpush1.msra.mxu0 0.0
    %1864 = vmatprep.subr.mxu0 0.0
    %1865 = vmatpush1.msra.mxu0 0.0
    %1866 = vmatprep.subr.mxu0 0.0
    %1867 = vmatpush1.msra.mxu0 0.0
    %1868 = vmatprep.subr.mxu0 0.0
    %1869 = vmatpush1.msra.mxu0 0.0
    %1870 = vmatprep.subr.mxu0 0.0
    %1871 = vmatpush1.msra.mxu0 0.0
    %1872 = vmatprep.subr.mxu0 0.0
    %1873 = vmatpush1.msra.mxu0 0.0
    %1874 = vmatprep.subr.mxu0 0.0
    %1875 = vmatpush1.msra.mxu0 0.0
    %1876 = vmatprep.subr.mxu0 0.0
    %1877 = vmatpush1.msra.mxu0 0.0
    %1878 = vmatprep.subr.mxu0 0.0
    %1879 = vmatpush1.msra.mxu0 0.0
    %1880 = vmatprep.subr.mxu0 0.0
    %1881 = vmatpush1.msra.mxu0 0.0
    %1882 = vmatprep.subr.mxu0 0.0
    %1883 = vmatpush1.msra.mxu0 0.0
    %1884 = vmatprep.subr.mxu0 0.0
    %1885 = vmatpush1.msra.mxu0 0.0
    %1886 = vmatprep.subr.mxu0 0.0
    %1887 = vmatpush1.msra.mxu0 0.0
    %1888 = vmatprep.subr.mxu0 0.0
    %1889 = vmatpush1.msra.mxu0 0.0
    %1890 = vmatprep.subr.mxu0 0.0
    %1891 = vmatpush1.msra.mxu0 0.0
    %1892 = vmatprep.mubr.f32.mxu0 0.0
    %1893 = vmatmul.mubr.f32.gmra.mrb[0].mxu0 %v1750
    %v1894 = vpop.f32.mrb[0].mxu0
    %v1895 = vadd.f32 0.0, %v1894
    %v1896 = vpop.f32.mrb[0].mxu0
    %1897 = vdwg.mxu0
    %v1898 = vadd.f32 %v1754, %v1824
    %v1899 = vxor.u32 %v1898, 2147483648
    %v1900 = vmul.f32 %v1899, 1.442695
    %v1901 = vpow.pop %v1900
    %v1902 = vadd.f32 %v1901, 1.0
    %v1903 = vrcp.pop %v1902
    %v1904 = vmul.f32 1.0, %v1903
    %v1905 = vadd.f32 %v1755, %v1826
    %v1906 = vxor.u32 %v1905, 2147483648
    %v1907 = vmul.f32 %v1906, 1.442695
    %v1908 = vpow.pop %v1907
    %v1909 = vadd.f32 %v1908, 1.0
    %v1910 = vrcp.pop %v1909
    %v1911 = vmul.f32 1.0, %v1910
    %v1912 = vadd.f32 %v1895, %v570
    %v1913 = vmul.f32 %v1904, %v1912
    %v1914 = vadd.f32 %v1756, %v1913
    %v1915 = vtanh.pop %v1914
    %v1916 = vsub.f32 1.0, %v1911
    %v1917 = vmul.f32 %v1916, %v1915
    %v1918 = vmul.f32 %v1911, %v1750
    %v1919 = vadd.f32 %v1917, %v1918
    %s1920 = scalar_lea.vmem [#allocation2], 56
    %1921 = vst [vmem:[%s1920] sm:$0xff] %v1919
    %s1922 = scalar_lea.vmem %s1, 8
    %v1923 = vld [vmem:[%s1922] sm:$0xff]
    %v1924 = vld [vmem:[#allocation10] sm:$0xff]
    %v1925 = vld [vmem:[#allocation10 + $0x8] sm:$0xff]
    %v1926 = vld [vmem:[#allocation10 + $0x10] sm:$0xff]
    %v1927 = vld [vmem:[#allocation10 + $0x18] sm:$0xff]
    %v1928 = vld [vmem:[#allocation10 + $0x20] sm:$0xff]
    %v1929 = vld [vmem:[#allocation10 + $0x28] sm:$0xff]
    %v1930 = vld [vmem:[#allocation10 + $0x30] sm:$0xff]
    %v1931 = vld [vmem:[#allocation10 + $0x38] sm:$0xff]
    %v1932 = vld [vmem:[#allocation10 + $0x40] sm:$0xff]
    %v1933 = vld [vmem:[#allocation10 + $0x48] sm:$0xff]
    %v1934 = vld [vmem:[#allocation10 + $0x50] sm:$0xff]
    %v1935 = vld [vmem:[#allocation10 + $0x58] sm:$0xff]
    %v1936 = vld [vmem:[#allocation10 + $0x60] sm:$0xff]
    %v1937 = vld [vmem:[#allocation10 + $0x68] sm:$0xff]
    %v1938 = vld [vmem:[#allocation10 + $0x70] sm:$0xff]
    %v1939 = vld [vmem:[#allocation10 + $0x78] sm:$0xff]
    %v1940 = vld [vmem:[#allocation10 + $0x80] sm:$0xff]
    %v1941 = vld [vmem:[#allocation10 + $0x88] sm:$0xff]
    %v1942 = vld [vmem:[#allocation10 + $0x90] sm:$0xff]
    %v1943 = vld [vmem:[#allocation10 + $0x98] sm:$0xff]
    %v1944 = vld [vmem:[#allocation10 + $0xa0] sm:$0xff]
    %v1945 = vld [vmem:[#allocation10 + $0xa8] sm:$0xff]
    %v1946 = vld [vmem:[#allocation10 + $0xb0] sm:$0xff]
    %v1947 = vld [vmem:[#allocation10 + $0xb8] sm:$0xff]
    %v1948 = vld [vmem:[#allocation10 + $0xc0] sm:$0xff]
    %v1949 = vld [vmem:[#allocation10 + $0xc8] sm:$0xff]
    %v1950 = vld [vmem:[#allocation10 + $0xd0] sm:$0xff]
    %v1951 = vld [vmem:[#allocation10 + $0xd8] sm:$0xff]
    %v1952 = vld [vmem:[#allocation10 + $0xe0] sm:$0xff]
    %v1953 = vld [vmem:[#allocation10 + $0xe8] sm:$0xff]
    %v1954 = vld [vmem:[#allocation10 + $0xf0] sm:$0xff]
    %v1955 = vld [vmem:[#allocation10 + $0xf8] sm:$0xff]
    %v1956 = vld [vmem:[#allocation10 + $0x100] sm:$0xff]
    %v1957 = vld [vmem:[#allocation10 + $0x108] sm:$0xff]
    %v1958 = vld [vmem:[#allocation10 + $0x110] sm:$0xff]
    %v1959 = vld [vmem:[#allocation10 + $0x118] sm:$0xff]
    %v1960 = vld [vmem:[#allocation10 + $0x120] sm:$0xff]
    %v1961 = vld [vmem:[#allocation10 + $0x128] sm:$0xff]
    %v1962 = vld [vmem:[#allocation10 + $0x130] sm:$0xff]
    %v1963 = vld [vmem:[#allocation10 + $0x138] sm:$0xff]
    %v1964 = vld [vmem:[#allocation10 + $0x140] sm:$0xff]
    %v1965 = vld [vmem:[#allocation10 + $0x148] sm:$0xff]
    %v1966 = vld [vmem:[#allocation10 + $0x150] sm:$0xff]
    %v1967 = vld [vmem:[#allocation10 + $0x158] sm:$0xff]
    %v1968 = vld [vmem:[#allocation10 + $0x160] sm:$0xff]
    %v1969 = vld [vmem:[#allocation10 + $0x168] sm:$0xff]
    %v1970 = vld [vmem:[#allocation10 + $0x170] sm:$0xff]
    %v1971 = vld [vmem:[#allocation10 + $0x178] sm:$0xff]
    %v1972 = vld [vmem:[#allocation2] sm:$0xff]
    %v1973 = vld [vmem:[#allocation2 + $0x8] sm:$0xff]
    %v1974 = vld [vmem:[#allocation2 + $0x10] sm:$0xff]
    %v1975 = vld [vmem:[#allocation2 + $0x18] sm:$0xff]
    %v1976 = vld [vmem:[#allocation2 + $0x20] sm:$0xff]
    %v1977 = vld [vmem:[#allocation2 + $0x28] sm:$0xff]
    %v1978 = vld [vmem:[#allocation2 + $0x30] sm:$0xff]
    %v1979 = vld [vmem:[#allocation2 + $0x38] sm:$0xff]
    %v1980 = vld [vmem:[#allocation9] sm:$0xff]
    %v1981 = vld [vmem:[#allocation9 + $0x8] sm:$0xff]
    %v1982 = vld [vmem:[#allocation9 + $0x10] sm:$0xff]
    %v1983 = vld [vmem:[#allocation9 + $0x18] sm:$0xff]
    %v1984 = vld [vmem:[#allocation9 + $0x20] sm:$0xff]
    %v1985 = vld [vmem:[#allocation9 + $0x28] sm:$0xff]
    %v1986 = vld [vmem:[#allocation9 + $0x30] sm:$0xff]
    %v1987 = vld [vmem:[#allocation9 + $0x38] sm:$0xff]
    %v1988 = vld [vmem:[#allocation9 + $0x40] sm:$0xff]
    %v1989 = vld [vmem:[#allocation9 + $0x48] sm:$0xff]
    %v1990 = vld [vmem:[#allocation9 + $0x50] sm:$0xff]
    %v1991 = vld [vmem:[#allocation9 + $0x58] sm:$0xff]
    %v1992 = vld [vmem:[#allocation9 + $0x60] sm:$0xff]
    %v1993 = vld [vmem:[#allocation9 + $0x68] sm:$0xff]
    %v1994 = vld [vmem:[#allocation9 + $0x70] sm:$0xff]
    %v1995 = vld [vmem:[#allocation9 + $0x78] sm:$0xff]
    %v1996 = vld [vmem:[#allocation9 + $0x80] sm:$0xff]
    %v1997 = vld [vmem:[#allocation9 + $0x88] sm:$0xff]
    %v1998 = vld [vmem:[#allocation9 + $0x90] sm:$0xff]
    %v1999 = vld [vmem:[#allocation9 + $0x98] sm:$0xff]
    %v2000 = vld [vmem:[#allocation9 + $0xa0] sm:$0xff]
    %v2001 = vld [vmem:[#allocation9 + $0xa8] sm:$0xff]
    %v2002 = vld [vmem:[#allocation9 + $0xb0] sm:$0xff]
    %v2003 = vld [vmem:[#allocation9 + $0xb8] sm:$0xff]
    %v2004 = vld [vmem:[#allocation9 + $0xc0] sm:$0xff]
    %v2005 = vld [vmem:[#allocation9 + $0xc8] sm:$0xff]
    %v2006 = vld [vmem:[#allocation9 + $0xd0] sm:$0xff]
    %v2007 = vld [vmem:[#allocation9 + $0xd8] sm:$0xff]
    %v2008 = vld [vmem:[#allocation9 + $0xe0] sm:$0xff]
    %v2009 = vld [vmem:[#allocation9 + $0xe8] sm:$0xff]
    %v2010 = vld [vmem:[#allocation9 + $0xf0] sm:$0xff]
    %v2011 = vld [vmem:[#allocation9 + $0xf8] sm:$0xff]
    %v2012 = vld [vmem:[#allocation9 + $0x100] sm:$0xff]
    %v2013 = vld [vmem:[#allocation9 + $0x108] sm:$0xff]
    %v2014 = vld [vmem:[#allocation9 + $0x110] sm:$0xff]
    %v2015 = vld [vmem:[#allocation9 + $0x118] sm:$0xff]
    %v2016 = vld [vmem:[#allocation9 + $0x120] sm:$0xff]
    %v2017 = vld [vmem:[#allocation9 + $0x128] sm:$0xff]
    %v2018 = vld [vmem:[#allocation9 + $0x130] sm:$0xff]
    %v2019 = vld [vmem:[#allocation9 + $0x138] sm:$0xff]
    %v2020 = vld [vmem:[#allocation9 + $0x140] sm:$0xff]
    %v2021 = vld [vmem:[#allocation9 + $0x148] sm:$0xff]
    %v2022 = vld [vmem:[#allocation9 + $0x150] sm:$0xff]
    %v2023 = vld [vmem:[#allocation9 + $0x158] sm:$0xff]
    %v2024 = vld [vmem:[#allocation9 + $0x160] sm:$0xff]
    %v2025 = vld [vmem:[#allocation9 + $0x168] sm:$0xff]
    %v2026 = vld [vmem:[#allocation9 + $0x170] sm:$0xff]
    %v2027 = vld [vmem:[#allocation9 + $0x178] sm:$0xff]
    %v2028 = vld [vmem:[%s8] sm:$0x7]
    %v2030 = vlaneseq
    %v2031 = vshrl.u32 %v2030, 7
    %v2032 = vsub.s32 0, %v2031
    %v2033 = vrot.slane %v2028, %v2032
    %v2034 = vlaneseq
    %v2035 = vshrl.u32 %v2034, 7
    %v2036 = vsub.s32 1, %v2035
    %v2037 = vrot.slane %v2028, %v2036
    %v2038 = vlaneseq
    %v2039 = vshrl.u32 %v2038, 7
    %v2040 = vsub.s32 2, %v2039
    %v2041 = vrot.slane %v2028, %v2040
    %2045 = vmatprep.subr.mxu0 %v1981
    %2046 = vmatpush1.msra.mxu0 %v1980
    %2047 = vmatprep.subr.mxu0 %v1984
    %2048 = vmatpush1.msra.mxu0 %v1983
    %2049 = vmatprep.subr.mxu0 %v1987
    %2050 = vmatpush1.msra.mxu0 %v1986
    %2051 = vmatprep.subr.mxu0 %v1990
    %2052 = vmatpush1.msra.mxu0 %v1989
    %2053 = vmatprep.subr.mxu0 %v1993
    %2054 = vmatpush1.msra.mxu0 %v1992
    %2055 = vmatprep.subr.mxu0 %v1996
    %2056 = vmatpush1.msra.mxu0 %v1995
    %2057 = vmatprep.subr.mxu0 %v1999
    %2058 = vmatpush1.msra.mxu0 %v1998
    %2059 = vmatprep.subr.mxu0 %v2002
    %2060 = vmatpush1.msra.mxu0 %v2001
    %2061 = vmatprep.subr.mxu0 %v2005
    %2062 = vmatpush1.msra.mxu0 %v2004
    %2063 = vmatprep.subr.mxu0 %v2008
    %2064 = vmatpush1.msra.mxu0 %v2007
    %2065 = vmatprep.subr.mxu0 %v2011
    %2066 = vmatpush1.msra.mxu0 %v2010
    %2067 = vmatprep.subr.mxu0 %v2014
    %2068 = vmatpush1.msra.mxu0 %v2013
    %2069 = vmatprep.subr.mxu0 %v2017
    %2070 = vmatpush1.msra.mxu0 %v2016
    %2071 = vmatprep.subr.mxu0 %v2020
    %2072 = vmatpush1.msra.mxu0 %v2019
    %2073 = vmatprep.subr.mxu0 %v2023
    %2074 = vmatpush1.msra.mxu0 %v2022
    %2075 = vmatprep.subr.mxu0 %v2026
    %2076 = vmatpush1.msra.mxu0 %v2025
    %2077 = vmatprep.subr.mxu0 0.0
    %2078 = vmatpush1.msra.mxu0 0.0
    %2079 = vmatprep.subr.mxu0 0.0
    %2080 = vmatpush1.msra.mxu0 0.0
    %2081 = vmatprep.subr.mxu0 0.0
    %2082 = vmatpush1.msra.mxu0 0.0
    %2083 = vmatprep.subr.mxu0 0.0
    %2084 = vmatpush1.msra.mxu0 0.0
    %2085 = vmatprep.subr.mxu0 0.0
    %2086 = vmatpush1.msra.mxu0 0.0
    %2087 = vmatprep.subr.mxu0 0.0
    %2088 = vmatpush1.msra.mxu0 0.0
    %2089 = vmatprep.subr.mxu0 0.0
    %2090 = vmatpush1.msra.mxu0 0.0
    %2091 = vmatprep.subr.mxu0 0.0
    %2092 = vmatpush1.msra.mxu0 0.0
    %2093 = vmatprep.subr.mxu0 0.0
    %2094 = vmatpush1.msra.mxu0 0.0
    %2095 = vmatprep.subr.mxu0 0.0
    %2096 = vmatpush1.msra.mxu0 0.0
    %2097 = vmatprep.subr.mxu0 0.0
    %2098 = vmatpush1.msra.mxu0 0.0
    %2099 = vmatprep.subr.mxu0 0.0
    %2100 = vmatpush1.msra.mxu0 0.0
    %2101 = vmatprep.subr.mxu0 0.0
    %2102 = vmatpush1.msra.mxu0 0.0
    %2103 = vmatprep.subr.mxu0 0.0
    %2104 = vmatpush1.msra.mxu0 0.0
    %2105 = vmatprep.subr.mxu0 0.0
    %2106 = vmatpush1.msra.mxu0 0.0
    %2107 = vmatprep.subr.mxu0 0.0
    %2108 = vmatpush1.msra.mxu0 0.0
    %2109 = vmatprep.mubr.f32.mxu0 0.0
    %2110 = vmatmul.mubr.f32.gmra.mrb[0].mxu0 %v1972
    %v2111 = vpop.f32.mrb[0].mxu0
    %v2112 = vadd.f32 %v2033, %v2111
    %v2113 = vpop.f32.mrb[0].mxu0
    %v2114 = vadd.f32 %v2037, %v2113
    %2115 = vmatprep.mubr.f32.mxu0 0.0
    %2116 = vmatmul.mubr.f32.gmra.mrb[0].mxu0 %v1973
    %v2117 = vpop.f32.mrb[0].mxu0
    %v2118 = vadd.f32 %v2033, %v2117
    %v2119 = vpop.f32.mrb[0].mxu0
    %v2120 = vadd.f32 %v2037, %v2119
    %2121 = vmatprep.mubr.f32.mxu0 0.0
    %2122 = vmatmul.mubr.f32.gmra.mrb[0].mxu0 %v1974
    %v2123 = vpop.f32.mrb[0].mxu0
    %v2124 = vadd.f32 %v2033, %v2123
    %v2125 = vpop.f32.mrb[0].mxu0
    %v2126 = vadd.f32 %v2037, %v2125
    %2127 = vmatprep.mubr.f32.mxu0 0.0
    %2128 = vmatmul.mubr.f32.gmra.mrb[0].mxu0 %v1975
    %v2129 = vpop.f32.mrb[0].mxu0
    %v2130 = vadd.f32 %v2033, %v2129
    %v2131 = vpop.f32.mrb[0].mxu0
    %v2132 = vadd.f32 %v2037, %v2131
    %2133 = vmatprep.mubr.f32.mxu0 0.0
    %2134 = vmatmul.mubr.f32.gmra.mrb[0].mxu0 %v1976
    %v2135 = vpop.f32.mrb[0].mxu0
    %v2136 = vadd.f32 %v2033, %v2135
    %v2137 = vpop.f32.mrb[0].mxu0
    %v2138 = vadd.f32 %v2037, %v2137
    %2139 = vmatprep.mubr.f32.mxu0 0.0
    %2140 = vmatmul.mubr.f32.gmra.mrb[0].mxu0 %v1977
    %v2141 = vpop.f32.mrb[0].mxu0
    %v2142 = vadd.f32 %v2033, %v2141
    %v2143 = vpop.f32.mrb[0].mxu0
    %v2144 = vadd.f32 %v2037, %v2143
    %2145 = vmatprep.mubr.f32.mxu0 0.0
    %2146 = vmatmul.mubr.f32.gmra.mrb[0].mxu0 %v1978
    %v2147 = vpop.f32.mrb[0].mxu0
    %v2148 = vadd.f32 %v2033, %v2147
    %v2149 = vpop.f32.mrb[0].mxu0
    %v2150 = vadd.f32 %v2037, %v2149
    %2151 = vmatprep.mubr.f32.mxu0 0.0
    %2152 = vmatmul.mubr.f32.gmra.mrb[0].mxu0 %v1979
    %v2153 = vpop.f32.mrb[0].mxu0
    %v2154 = vadd.f32 %v2033, %v2153
    %v2155 = vpop.f32.mrb[0].mxu0
    %v2156 = vadd.f32 %v2037, %v2155
    %2157 = vdwg.mxu0
    %2158 = vmatprep.subr.mxu0 0.0
    %2159 = vmatpush1.msra.mxu0 %v1982
    %2160 = vmatprep.subr.mxu0 0.0
    %2161 = vmatpush1.msra.mxu0 %v1985
    %2162 = vmatprep.subr.mxu0 0.0
    %2163 = vmatpush1.msra.mxu0 %v1988
    %2164 = vmatprep.subr.mxu0 0.0
    %2165 = vmatpush1.msra.mxu0 %v1991
    %2166 = vmatprep.subr.mxu0 0.0
    %2167 = vmatpush1.msra.mxu0 %v1994
    %2168 = vmatprep.subr.mxu0 0.0
    %2169 = vmatpush1.msra.mxu0 %v1997
    %2170 = vmatprep.subr.mxu0 0.0
    %2171 = vmatpush1.msra.mxu0 %v2000
    %2172 = vmatprep.subr.mxu0 0.0
    %2173 = vmatpush1.msra.mxu0 %v2003
    %2174 = vmatprep.subr.mxu0 0.0
    %2175 = vmatpush1.msra.mxu0 %v2006
    %2176 = vmatprep.subr.mxu0 0.0
    %2177 = vmatpush1.msra.mxu0 %v2009
    %2178 = vmatprep.subr.mxu0 0.0
    %2179 = vmatpush1.msra.mxu0 %v2012
    %2180 = vmatprep.subr.mxu0 0.0
    %2181 = vmatpush1.msra.mxu0 %v2015
    %2182 = vmatprep.subr.mxu0 0.0
    %2183 = vmatpush1.msra.mxu0 %v2018
    %2184 = vmatprep.subr.mxu0 0.0
    %2185 = vmatpush1.msra.mxu0 %v2021
    %2186 = vmatprep.subr.mxu0 0.0
    %2187 = vmatpush1.msra.mxu0 %v2024
    %2188 = vmatprep.subr.mxu0 0.0
    %2189 = vmatpush1.msra.mxu0 %v2027
    %2190 = vmatprep.subr.mxu0 0.0
    %2191 = vmatpush1.msra.mxu0 0.0
    %2192 = vmatprep.subr.mxu0 0.0
    %2193 = vmatpush1.msra.mxu0 0.0
    %2194 = vmatprep.subr.mxu0 0.0
    %2195 = vmatpush1.msra.mxu0 0.0
    %2196 = vmatprep.subr.mxu0 0.0
    %2197 = vmatpush1.msra.mxu0 0.0
    %2198 = vmatprep.subr.mxu0 0.0
    %2199 = vmatpush1.msra.mxu0 0.0
    %2200 = vmatprep.subr.mxu0 0.0
    %2201 = vmatpush1.msra.mxu0 0.0
    %2202 = vmatprep.subr.mxu0 0.0
    %2203 = vmatpush1.msra.mxu0 0.0
    %2204 = vmatprep.subr.mxu0 0.0
    %2205 = vmatpush1.msra.mxu0 0.0
    %2206 = vmatprep.subr.mxu0 0.0
    %2207 = vmatpush1.msra.mxu0 0.0
    %2208 = vmatprep.subr.mxu0 0.0
    %2209 = vmatpush1.msra.mxu0 0.0
    %2210 = vmatprep.subr.mxu0 0.0
    %2211 = vmatpush1.msra.mxu0 0.0
    %2212 = vmatprep.subr.mxu0 0.0
    %2213 = vmatpush1.msra.mxu0 0.0
    %2214 = vmatprep.subr.mxu0 0.0
    %2215 = vmatpush1.msra.mxu0 0.0
    %2216 = vmatprep.subr.mxu0 0.0
    %2217 = vmatpush1.msra.mxu0 0.0
    %2218 = vmatprep.subr.mxu0 0.0
    %2219 = vmatpush1.msra.mxu0 0.0
    %2220 = vmatprep.subr.mxu0 0.0
    %2221 = vmatpush1.msra.mxu0 0.0
    %2222 = vmatprep.mubr.f32.mxu0 0.0
    %2223 = vmatmul.mubr.f32.gmra.mrb[0].mxu0 %v1972
    %v2224 = vpop.f32.mrb[0].mxu0
    %v2225 = vadd.f32 %v2041, %v2224
    %v2226 = vpop.f32.mrb[0].mxu0
    %2227 = vmatprep.mubr.f32.mxu0 0.0
    %2228 = vmatmul.mubr.f32.gmra.mrb[0].mxu0 %v1973
    %v2229 = vpop.f32.mrb[0].mxu0
    %v2230 = vadd.f32 %v2041, %v2229
    %v2231 = vpop.f32.mrb[0].mxu0
    %2232 = vmatprep.mubr.f32.mxu0 0.0
    %2233 = vmatmul.mubr.f32.gmra.mrb[0].mxu0 %v1974
    %v2234 = vpop.f32.mrb[0].mxu0
    %v2235 = vadd.f32 %v2041, %v2234
    %v2236 = vpop.f32.mrb[0].mxu0
    %2237 = vmatprep.mubr.f32.mxu0 0.0
    %2238 = vmatmul.mubr.f32.gmra.mrb[0].mxu0 %v1975
    %v2239 = vpop.f32.mrb[0].mxu0
    %v2240 = vadd.f32 %v2041, %v2239
    %v2241 = vpop.f32.mrb[0].mxu0
    %2242 = vmatprep.mubr.f32.mxu0 0.0
    %2243 = vmatmul.mubr.f32.gmra.mrb[0].mxu0 %v1976
    %v2244 = vpop.f32.mrb[0].mxu0
    %v2245 = vadd.f32 %v2041, %v2244
    %v2246 = vpop.f32.mrb[0].mxu0
    %2247 = vmatprep.mubr.f32.mxu0 0.0
    %2248 = vmatmul.mubr.f32.gmra.mrb[0].mxu0 %v1977
    %v2249 = vpop.f32.mrb[0].mxu0
    %v2250 = vadd.f32 %v2041, %v2249
    %v2251 = vpop.f32.mrb[0].mxu0
    %2252 = vmatprep.mubr.f32.mxu0 0.0
    %2253 = vmatmul.mubr.f32.gmra.mrb[0].mxu0 %v1978
    %v2254 = vpop.f32.mrb[0].mxu0
    %v2255 = vadd.f32 %v2041, %v2254
    %v2256 = vpop.f32.mrb[0].mxu0
    %2257 = vmatprep.mubr.f32.mxu0 0.0
    %2258 = vmatmul.mubr.f32.gmra.mrb[0].mxu0 %v1979
    %v2259 = vpop.f32.mrb[0].mxu0
    %v2260 = vadd.f32 %v2041, %v2259
    %v2261 = vpop.f32.mrb[0].mxu0
    %2262 = vdwg.mxu0
    %2263 = vst [vmem:[#allocation4] sm:$0xff] %v2112
    %2264 = vst [vmem:[#allocation4 + $0x8] sm:$0xff] %v2114
    %2265 = vst [vmem:[#allocation4 + $0x10] sm:$0xff] %v2225
    %2266 = vst [vmem:[#allocation4 + $0x18] sm:$0xff] %v2118
    %2267 = vst [vmem:[#allocation4 + $0x20] sm:$0xff] %v2120
    %2268 = vst [vmem:[#allocation4 + $0x28] sm:$0xff] %v2230
    %2269 = vst [vmem:[#allocation4 + $0x30] sm:$0xff] %v2124
    %2270 = vst [vmem:[#allocation4 + $0x38] sm:$0xff] %v2126
    %2271 = vst [vmem:[#allocation4 + $0x40] sm:$0xff] %v2235
    %2272 = vst [vmem:[#allocation4 + $0x48] sm:$0xff] %v2130
    %2273 = vst [vmem:[#allocation4 + $0x50] sm:$0xff] %v2132
    %2274 = vst [vmem:[#allocation4 + $0x58] sm:$0xff] %v2240
    %2275 = vst [vmem:[#allocation4 + $0x60] sm:$0xff] %v2136
    %2276 = vst [vmem:[#allocation4 + $0x68] sm:$0xff] %v2138
    %2277 = vst [vmem:[#allocation4 + $0x70] sm:$0xff] %v2245
    %2278 = vst [vmem:[#allocation4 + $0x78] sm:$0xff] %v2142
    %2279 = vst [vmem:[#allocation4 + $0x80] sm:$0xff] %v2144
    %2280 = vst [vmem:[#allocation4 + $0x88] sm:$0xff] %v2250
    %2281 = vst [vmem:[#allocation4 + $0x90] sm:$0xff] %v2148
    %2282 = vst [vmem:[#allocation4 + $0x98] sm:$0xff] %v2150
    %2283 = vst [vmem:[#allocation4 + $0xa0] sm:$0xff] %v2255
    %2284 = vst [vmem:[#allocation4 + $0xa8] sm:$0xff] %v2154
    %2285 = vst [vmem:[#allocation4 + $0xb0] sm:$0xff] %v2156
    %2286 = vst [vmem:[#allocation4 + $0xb8] sm:$0xff] %v2260
    %v2287 = vld [vmem:[%s9] sm:$0x1]
    %v2289 = vlaneseq
    %v2290 = vshrl.u32 %v2289, 7
    %v2291 = vsub.s32 0, %v2290
    %v2292 = vrot.slane %v2287, %v2291
    %v2294 = vld [vmem:[#allocation4] sm:$0xff]
    %v2295 = vld [vmem:[#allocation4 + $0x8] sm:$0xff]
    %v2296 = vld [vmem:[#allocation4 + $0x10] sm:$0xff]
    %2297 = vmatprep.subr.mxu0 %v1925
    %2298 = vmatpush1.msra.mxu0 %v1924
    %2299 = vmatprep.subr.mxu0 %v1928
    %2300 = vmatpush1.msra.mxu0 %v1927
    %2301 = vmatprep.subr.mxu0 %v1931
    %2302 = vmatpush1.msra.mxu0 %v1930
    %2303 = vmatprep.subr.mxu0 %v1934
    %2304 = vmatpush1.msra.mxu0 %v1933
    %2305 = vmatprep.subr.mxu0 %v1937
    %2306 = vmatpush1.msra.mxu0 %v1936
    %2307 = vmatprep.subr.mxu0 %v1940
    %2308 = vmatpush1.msra.mxu0 %v1939
    %2309 = vmatprep.subr.mxu0 %v1943
    %2310 = vmatpush1.msra.mxu0 %v1942
    %2311 = vmatprep.subr.mxu0 %v1946
    %2312 = vmatpush1.msra.mxu0 %v1945
    %2313 = vmatprep.subr.mxu0 %v1949
    %2314 = vmatpush1.msra.mxu0 %v1948
    %2315 = vmatprep.subr.mxu0 %v1952
    %2316 = vmatpush1.msra.mxu0 %v1951
    %2317 = vmatprep.subr.mxu0 %v1955
    %2318 = vmatpush1.msra.mxu0 %v1954
    %2319 = vmatprep.subr.mxu0 %v1958
    %2320 = vmatpush1.msra.mxu0 %v1957
    %2321 = vmatprep.subr.mxu0 %v1961
    %2322 = vmatpush1.msra.mxu0 %v1960
    %2323 = vmatprep.subr.mxu0 %v1964
    %2324 = vmatpush1.msra.mxu0 %v1963
    %2325 = vmatprep.subr.mxu0 %v1967
    %2326 = vmatpush1.msra.mxu0 %v1966
    %2327 = vmatprep.subr.mxu0 %v1970
    %2328 = vmatpush1.msra.mxu0 %v1969
    %2329 = vmatprep.subr.mxu0 0.0
    %2330 = vmatpush1.msra.mxu0 0.0
    %2331 = vmatprep.subr.mxu0 0.0
    %2332 = vmatpush1.msra.mxu0 0.0
    %2333 = vmatprep.subr.mxu0 0.0
    %2334 = vmatpush1.msra.mxu0 0.0
    %2335 = vmatprep.subr.mxu0 0.0
    %2336 = vmatpush1.msra.mxu0 0.0
    %2337 = vmatprep.subr.mxu0 0.0
    %2338 = vmatpush1.msra.mxu0 0.0
    %2339 = vmatprep.subr.mxu0 0.0
    %2340 = vmatpush1.msra.mxu0 0.0
    %2341 = vmatprep.subr.mxu0 0.0
    %2342 = vmatpush1.msra.mxu0 0.0
    %2343 = vmatprep.subr.mxu0 0.0
    %2344 = vmatpush1.msra.mxu0 0.0
    %2345 = vmatprep.subr.mxu0 0.0
    %2346 = vmatpush1.msra.mxu0 0.0
    %2347 = vmatprep.subr.mxu0 0.0
    %2348 = vmatpush1.msra.mxu0 0.0
    %2349 = vmatprep.subr.mxu0 0.0
    %2350 = vmatpush1.msra.mxu0 0.0
    %2351 = vmatprep.subr.mxu0 0.0
    %2352 = vmatpush1.msra.mxu0 0.0
    %2353 = vmatprep.subr.mxu0 0.0
    %2354 = vmatpush1.msra.mxu0 0.0
    %2355 = vmatprep.subr.mxu0 0.0
    %2356 = vmatpush1.msra.mxu0 0.0
    %2357 = vmatprep.subr.mxu0 0.0
    %2358 = vmatpush1.msra.mxu0 0.0
    %2359 = vmatprep.subr.mxu0 0.0
    %2360 = vmatpush1.msra.mxu0 0.0
    %2361 = vmatprep.mubr.f32.mxu0 0.0
    %2362 = vmatmul.mubr.f32.gmra.mrb[0].mxu0 %v1923
    %v2363 = vpop.f32.mrb[0].mxu0
    %v2364 = vadd.f32 0.0, %v2363
    %v2365 = vpop.f32.mrb[0].mxu0
    %v2366 = vadd.f32 0.0, %v2365
    %2367 = vdwg.mxu0
    %2368 = vmatprep.subr.mxu0 0.0
    %2369 = vmatpush1.msra.mxu0 %v1926
    %2370 = vmatprep.subr.mxu0 0.0
    %2371 = vmatpush1.msra.mxu0 %v1929
    %2372 = vmatprep.subr.mxu0 0.0
    %2373 = vmatpush1.msra.mxu0 %v1932
    %2374 = vmatprep.subr.mxu0 0.0
    %2375 = vmatpush1.msra.mxu0 %v1935
    %2376 = vmatprep.subr.mxu0 0.0
    %2377 = vmatpush1.msra.mxu0 %v1938
    %2378 = vmatprep.subr.mxu0 0.0
    %2379 = vmatpush1.msra.mxu0 %v1941
    %2380 = vmatprep.subr.mxu0 0.0
    %2381 = vmatpush1.msra.mxu0 %v1944
    %2382 = vmatprep.subr.mxu0 0.0
    %2383 = vmatpush1.msra.mxu0 %v1947
    %2384 = vmatprep.subr.mxu0 0.0
    %2385 = vmatpush1.msra.mxu0 %v1950
    %2386 = vmatprep.subr.mxu0 0.0
    %2387 = vmatpush1.msra.mxu0 %v1953
    %2388 = vmatprep.subr.mxu0 0.0
    %2389 = vmatpush1.msra.mxu0 %v1956
    %2390 = vmatprep.subr.mxu0 0.0
    %2391 = vmatpush1.msra.mxu0 %v1959
    %2392 = vmatprep.subr.mxu0 0.0
    %2393 = vmatpush1.msra.mxu0 %v1962
    %2394 = vmatprep.subr.mxu0 0.0
    %2395 = vmatpush1.msra.mxu0 %v1965
    %2396 = vmatprep.subr.mxu0 0.0
    %2397 = vmatpush1.msra.mxu0 %v1968
    %2398 = vmatprep.subr.mxu0 0.0
    %2399 = vmatpush1.msra.mxu0 %v1971
    %2400 = vmatprep.subr.mxu0 0.0
    %2401 = vmatpush1.msra.mxu0 0.0
    %2402 = vmatprep.subr.mxu0 0.0
    %2403 = vmatpush1.msra.mxu0 0.0
    %2404 = vmatprep.subr.mxu0 0.0
    %2405 = vmatpush1.msra.mxu0 0.0
    %2406 = vmatprep.subr.mxu0 0.0
    %2407 = vmatpush1.msra.mxu0 0.0
    %2408 = vmatprep.subr.mxu0 0.0
    %2409 = vmatpush1.msra.mxu0 0.0
    %2410 = vmatprep.subr.mxu0 0.0
    %2411 = vmatpush1.msra.mxu0 0.0
    %2412 = vmatprep.subr.mxu0 0.0
    %2413 = vmatpush1.msra.mxu0 0.0
    %2414 = vmatprep.subr.mxu0 0.0
    %2415 = vmatpush1.msra.mxu0 0.0
    %2416 = vmatprep.subr.mxu0 0.0
    %2417 = vmatpush1.msra.mxu0 0.0
    %2418 = vmatprep.subr.mxu0 0.0
    %2419 = vmatpush1.msra.mxu0 0.0
    %2420 = vmatprep.subr.mxu0 0.0
    %2421 = vmatpush1.msra.mxu0 0.0
    %2422 = vmatprep.subr.mxu0 0.0
    %2423 = vmatpush1.msra.mxu0 0.0
    %2424 = vmatprep.subr.mxu0 0.0
    %2425 = vmatpush1.msra.mxu0 0.0
    %2426 = vmatprep.subr.mxu0 0.0
    %2427 = vmatpush1.msra.mxu0 0.0
    %2428 = vmatprep.subr.mxu0 0.0
    %2429 = vmatpush1.msra.mxu0 0.0
    %2430 = vmatprep.subr.mxu0 0.0
    %2431 = vmatpush1.msra.mxu0 0.0
    %2432 = vmatprep.mubr.f32.mxu0 0.0
    %2433 = vmatmul.mubr.f32.gmra.mrb[0].mxu0 %v1923
    %v2434 = vpop.f32.mrb[0].mxu0
    %v2435 = vadd.f32 0.0, %v2434
    %v2436 = vpop.f32.mrb[0].mxu0
    %2437 = vdwg.mxu0
    %v2438 = vadd.f32 %v2294, %v2364
    %v2439 = vxor.u32 %v2438, 2147483648
    %v2440 = vmul.f32 %v2439, 1.442695
    %v2441 = vpow.pop %v2440
    %v2442 = vadd.f32 %v2441, 1.0
    %v2443 = vrcp.pop %v2442
    %v2444 = vmul.f32 1.0, %v2443
    %v2445 = vadd.f32 %v2295, %v2366
    %v2446 = vxor.u32 %v2445, 2147483648
    %v2447 = vmul.f32 %v2446, 1.442695
    %v2448 = vpow.pop %v2447
    %v2449 = vadd.f32 %v2448, 1.0
    %v2450 = vrcp.pop %v2449
    %v2451 = vmul.f32 1.0, %v2450
    %v2452 = vadd.f32 %v2435, %v2292
    %v2453 = vmul.f32 %v2444, %v2452
    %v2454 = vadd.f32 %v2296, %v2453
    %v2455 = vtanh.pop %v2454
    %v2456 = vsub.f32 1.0, %v2451
    %v2457 = vmul.f32 %v2456, %v2455
    %v2458 = vmul.f32 %v2451, %v1923
    %v2459 = vadd.f32 %v2457, %v2458
    %2460 = vst [vmem:[#allocation3] sm:$0xff] %v2459
    %v2461 = vld [vmem:[%s739] sm:$0xff]
    %v2462 = vld [vmem:[%s739 + $0x8] sm:$0xff]
    %v2463 = vld [vmem:[%s739 + $0x10] sm:$0xff]
    %2464 = vmatprep.subr.mxu0 %v1925
    %2465 = vmatpush1.msra.mxu0 %v1924
    %2466 = vmatprep.subr.mxu0 %v1928
    %2467 = vmatpush1.msra.mxu0 %v1927
    %2468 = vmatprep.subr.mxu0 %v1931
    %2469 = vmatpush1.msra.mxu0 %v1930
    %2470 = vmatprep.subr.mxu0 %v1934
    %2471 = vmatpush1.msra.mxu0 %v1933
    %2472 = vmatprep.subr.mxu0 %v1937
    %2473 = vmatpush1.msra.mxu0 %v1936
    %2474 = vmatprep.subr.mxu0 %v1940
    %2475 = vmatpush1.msra.mxu0 %v1939
    %2476 = vmatprep.subr.mxu0 %v1943
    %2477 = vmatpush1.msra.mxu0 %v1942
    %2478 = vmatprep.subr.mxu0 %v1946
    %2479 = vmatpush1.msra.mxu0 %v1945
    %2480 = vmatprep.subr.mxu0 %v1949
    %2481 = vmatpush1.msra.mxu0 %v1948
    %2482 = vmatprep.subr.mxu0 %v1952
    %2483 = vmatpush1.msra.mxu0 %v1951
    %2484 = vmatprep.subr.mxu0 %v1955
    %2485 = vmatpush1.msra.mxu0 %v1954
    %2486 = vmatprep.subr.mxu0 %v1958
    %2487 = vmatpush1.msra.mxu0 %v1957
    %2488 = vmatprep.subr.mxu0 %v1961
    %2489 = vmatpush1.msra.mxu0 %v1960
    %2490 = vmatprep.subr.mxu0 %v1964
    %2491 = vmatpush1.msra.mxu0 %v1963
    %2492 = vmatprep.subr.mxu0 %v1967
    %2493 = vmatpush1.msra.mxu0 %v1966
    %2494 = vmatprep.subr.mxu0 %v1970
    %2495 = vmatpush1.msra.mxu0 %v1969
    %2496 = vmatprep.subr.mxu0 0.0
    %2497 = vmatpush1.msra.mxu0 0.0
    %2498 = vmatprep.subr.mxu0 0.0
    %2499 = vmatpush1.msra.mxu0 0.0
    %2500 = vmatprep.subr.mxu0 0.0
    %2501 = vmatpush1.msra.mxu0 0.0
    %2502 = vmatprep.subr.mxu0 0.0
    %2503 = vmatpush1.msra.mxu0 0.0
    %2504 = vmatprep.subr.mxu0 0.0
    %2505 = vmatpush1.msra.mxu0 0.0
    %2506 = vmatprep.subr.mxu0 0.0
    %2507 = vmatpush1.msra.mxu0 0.0
    %2508 = vmatprep.subr.mxu0 0.0
    %2509 = vmatpush1.msra.mxu0 0.0
    %2510 = vmatprep.subr.mxu0 0.0
    %2511 = vmatpush1.msra.mxu0 0.0
    %2512 = vmatprep.subr.mxu0 0.0
    %2513 = vmatpush1.msra.mxu0 0.0
    %2514 = vmatprep.subr.mxu0 0.0
    %2515 = vmatpush1.msra.mxu0 0.0
    %2516 = vmatprep.subr.mxu0 0.0
    %2517 = vmatpush1.msra.mxu0 0.0
    %2518 = vmatprep.subr.mxu0 0.0
    %2519 = vmatpush1.msra.mxu0 0.0
    %2520 = vmatprep.subr.mxu0 0.0
    %2521 = vmatpush1.msra.mxu0 0.0
    %2522 = vmatprep.subr.mxu0 0.0
    %2523 = vmatpush1.msra.mxu0 0.0
    %2524 = vmatprep.subr.mxu0 0.0
    %2525 = vmatpush1.msra.mxu0 0.0
    %2526 = vmatprep.subr.mxu0 0.0
    %2527 = vmatpush1.msra.mxu0 0.0
    %2528 = vmatprep.mubr.f32.mxu0 0.0
    %2529 = vmatmul.mubr.f32.gmra.mrb[0].mxu0 %v2459
    %v2530 = vpop.f32.mrb[0].mxu0
    %v2531 = vadd.f32 0.0, %v2530
    %v2532 = vpop.f32.mrb[0].mxu0
    %v2533 = vadd.f32 0.0, %v2532
    %2534 = vdwg.mxu0
    %2535 = vmatprep.subr.mxu0 0.0
    %2536 = vmatpush1.msra.mxu0 %v1926
    %2537 = vmatprep.subr.mxu0 0.0
    %2538 = vmatpush1.msra.mxu0 %v1929
    %2539 = vmatprep.subr.mxu0 0.0
    %2540 = vmatpush1.msra.mxu0 %v1932
    %2541 = vmatprep.subr.mxu0 0.0
    %2542 = vmatpush1.msra.mxu0 %v1935
    %2543 = vmatprep.subr.mxu0 0.0
    %2544 = vmatpush1.msra.mxu0 %v1938
    %2545 = vmatprep.subr.mxu0 0.0
    %2546 = vmatpush1.msra.mxu0 %v1941
    %2547 = vmatprep.subr.mxu0 0.0
    %2548 = vmatpush1.msra.mxu0 %v1944
    %2549 = vmatprep.subr.mxu0 0.0
    %2550 = vmatpush1.msra.mxu0 %v1947
    %2551 = vmatprep.subr.mxu0 0.0
    %2552 = vmatpush1.msra.mxu0 %v1950
    %2553 = vmatprep.subr.mxu0 0.0
    %2554 = vmatpush1.msra.mxu0 %v1953
    %2555 = vmatprep.subr.mxu0 0.0
    %2556 = vmatpush1.msra.mxu0 %v1956
    %2557 = vmatprep.subr.mxu0 0.0
    %2558 = vmatpush1.msra.mxu0 %v1959
    %2559 = vmatprep.subr.mxu0 0.0
    %2560 = vmatpush1.msra.mxu0 %v1962
    %2561 = vmatprep.subr.mxu0 0.0
    %2562 = vmatpush1.msra.mxu0 %v1965
    %2563 = vmatprep.subr.mxu0 0.0
    %2564 = vmatpush1.msra.mxu0 %v1968
    %2565 = vmatprep.subr.mxu0 0.0
    %2566 = vmatpush1.msra.mxu0 %v1971
    %2567 = vmatprep.subr.mxu0 0.0
    %2568 = vmatpush1.msra.mxu0 0.0
    %2569 = vmatprep.subr.mxu0 0.0
    %2570 = vmatpush1.msra.mxu0 0.0
    %2571 = vmatprep.subr.mxu0 0.0
    %2572 = vmatpush1.msra.mxu0 0.0
    %2573 = vmatprep.subr.mxu0 0.0
    %2574 = vmatpush1.msra.mxu0 0.0
    %2575 = vmatprep.subr.mxu0 0.0
    %2576 = vmatpush1.msra.mxu0 0.0
    %2577 = vmatprep.subr.mxu0 0.0
    %2578 = vmatpush1.msra.mxu0 0.0
    %2579 = vmatprep.subr.mxu0 0.0
    %2580 = vmatpush1.msra.mxu0 0.0
    %2581 = vmatprep.subr.mxu0 0.0
    %2582 = vmatpush1.msra.mxu0 0.0
    %2583 = vmatprep.subr.mxu0 0.0
    %2584 = vmatpush1.msra.mxu0 0.0
    %2585 = vmatprep.subr.mxu0 0.0
    %2586 = vmatpush1.msra.mxu0 0.0
    %2587 = vmatprep.subr.mxu0 0.0
    %2588 = vmatpush1.msra.mxu0 0.0
    %2589 = vmatprep.subr.mxu0 0.0
    %2590 = vmatpush1.msra.mxu0 0.0
    %2591 = vmatprep.subr.mxu0 0.0
    %2592 = vmatpush1.msra.mxu0 0.0
    %2593 = vmatprep.subr.mxu0 0.0
    %2594 = vmatpush1.msra.mxu0 0.0
    %2595 = vmatprep.subr.mxu0 0.0
    %2596 = vmatpush1.msra.mxu0 0.0
    %2597 = vmatprep.subr.mxu0 0.0
    %2598 = vmatpush1.msra.mxu0 0.0
    %2599 = vmatprep.mubr.f32.mxu0 0.0
    %2600 = vmatmul.mubr.f32.gmra.mrb[0].mxu0 %v2459
    %v2601 = vpop.f32.mrb[0].mxu0
    %v2602 = vadd.f32 0.0, %v2601
    %v2603 = vpop.f32.mrb[0].mxu0
    %2604 = vdwg.mxu0
    %v2605 = vadd.f32 %v2461, %v2531
    %v2606 = vxor.u32 %v2605, 2147483648
    %v2607 = vmul.f32 %v2606, 1.442695
    %v2608 = vpow.pop %v2607
    %v2609 = vadd.f32 %v2608, 1.0
    %v2610 = vrcp.pop %v2609
    %v2611 = vmul.f32 1.0, %v2610
    %v2612 = vadd.f32 %v2462, %v2533
    %v2613 = vxor.u32 %v2612, 2147483648
    %v2614 = vmul.f32 %v2613, 1.442695
    %v2615 = vpow.pop %v2614
    %v2616 = vadd.f32 %v2615, 1.0
    %v2617 = vrcp.pop %v2616
    %v2618 = vmul.f32 1.0, %v2617
    %v2619 = vadd.f32 %v2602, %v2292
    %v2620 = vmul.f32 %v2611, %v2619
    %v2621 = vadd.f32 %v2463, %v2620
    %v2622 = vtanh.pop %v2621
    %v2623 = vsub.f32 1.0, %v2618
    %v2624 = vmul.f32 %v2623, %v2622
    %v2625 = vmul.f32 %v2618, %v2459
    %v2626 = vadd.f32 %v2624, %v2625
    %s2627 = scalar_lea.vmem [#allocation3], 8
    %2628 = vst [vmem:[%s2627] sm:$0xff] %v2626
    %v2629 = vld [vmem:[%s908] sm:$0xff]
    %v2630 = vld [vmem:[%s908 + $0x8] sm:$0xff]
    %v2631 = vld [vmem:[%s908 + $0x10] sm:$0xff]
    %2632 = vmatprep.subr.mxu0 %v1925
    %2633 = vmatpush1.msra.mxu0 %v1924
    %2634 = vmatprep.subr.mxu0 %v1928
    %2635 = vmatpush1.msra.mxu0 %v1927
    %2636 = vmatprep.subr.mxu0 %v1931
    %2637 = vmatpush1.msra.mxu0 %v1930
    %2638 = vmatprep.subr.mxu0 %v1934
    %2639 = vmatpush1.msra.mxu0 %v1933
    %2640 = vmatprep.subr.mxu0 %v1937
    %2641 = vmatpush1.msra.mxu0 %v1936
    %2642 = vmatprep.subr.mxu0 %v1940
    %2643 = vmatpush1.msra.mxu0 %v1939
    %2644 = vmatprep.subr.mxu0 %v1943
    %2645 = vmatpush1.msra.mxu0 %v1942
    %2646 = vmatprep.subr.mxu0 %v1946
    %2647 = vmatpush1.msra.mxu0 %v1945
    %2648 = vmatprep.subr.mxu0 %v1949
    %2649 = vmatpush1.msra.mxu0 %v1948
    %2650 = vmatprep.subr.mxu0 %v1952
    %2651 = vmatpush1.msra.mxu0 %v1951
    %2652 = vmatprep.subr.mxu0 %v1955
    %2653 = vmatpush1.msra.mxu0 %v1954
    %2654 = vmatprep.subr.mxu0 %v1958
    %2655 = vmatpush1.msra.mxu0 %v1957
    %2656 = vmatprep.subr.mxu0 %v1961
    %2657 = vmatpush1.msra.mxu0 %v1960
    %2658 = vmatprep.subr.mxu0 %v1964
    %2659 = vmatpush1.msra.mxu0 %v1963
    %2660 = vmatprep.subr.mxu0 %v1967
    %2661 = vmatpush1.msra.mxu0 %v1966
    %2662 = vmatprep.subr.mxu0 %v1970
    %2663 = vmatpush1.msra.mxu0 %v1969
    %2664 = vmatprep.subr.mxu0 0.0
    %2665 = vmatpush1.msra.mxu0 0.0
    %2666 = vmatprep.subr.mxu0 0.0
    %2667 = vmatpush1.msra.mxu0 0.0
    %2668 = vmatprep.subr.mxu0 0.0
    %2669 = vmatpush1.msra.mxu0 0.0
    %2670 = vmatprep.subr.mxu0 0.0
    %2671 = vmatpush1.msra.mxu0 0.0
    %2672 = vmatprep.subr.mxu0 0.0
    %2673 = vmatpush1.msra.mxu0 0.0
    %2674 = vmatprep.subr.mxu0 0.0
    %2675 = vmatpush1.msra.mxu0 0.0
    %2676 = vmatprep.subr.mxu0 0.0
    %2677 = vmatpush1.msra.mxu0 0.0
    %2678 = vmatprep.subr.mxu0 0.0
    %2679 = vmatpush1.msra.mxu0 0.0
    %2680 = vmatprep.subr.mxu0 0.0
    %2681 = vmatpush1.msra.mxu0 0.0
    %2682 = vmatprep.subr.mxu0 0.0
    %2683 = vmatpush1.msra.mxu0 0.0
    %2684 = vmatprep.subr.mxu0 0.0
    %2685 = vmatpush1.msra.mxu0 0.0
    %2686 = vmatprep.subr.mxu0 0.0
    %2687 = vmatpush1.msra.mxu0 0.0
    %2688 = vmatprep.subr.mxu0 0.0
    %2689 = vmatpush1.msra.mxu0 0.0
    %2690 = vmatprep.subr.mxu0 0.0
    %2691 = vmatpush1.msra.mxu0 0.0
    %2692 = vmatprep.subr.mxu0 0.0
    %2693 = vmatpush1.msra.mxu0 0.0
    %2694 = vmatprep.subr.mxu0 0.0
    %2695 = vmatpush1.msra.mxu0 0.0
    %2696 = vmatprep.mubr.f32.mxu0 0.0
    %2697 = vmatmul.mubr.f32.gmra.mrb[0].mxu0 %v2626
    %v2698 = vpop.f32.mrb[0].mxu0
    %v2699 = vadd.f32 0.0, %v2698
    %v2700 = vpop.f32.mrb[0].mxu0
    %v2701 = vadd.f32 0.0, %v2700
    %2702 = vdwg.mxu0
    %2703 = vmatprep.subr.mxu0 0.0
    %2704 = vmatpush1.msra.mxu0 %v1926
    %2705 = vmatprep.subr.mxu0 0.0
    %2706 = vmatpush1.msra.mxu0 %v1929
    %2707 = vmatprep.subr.mxu0 0.0
    %2708 = vmatpush1.msra.mxu0 %v1932
    %2709 = vmatprep.subr.mxu0 0.0
    %2710 = vmatpush1.msra.mxu0 %v1935
    %2711 = vmatprep.subr.mxu0 0.0
    %2712 = vmatpush1.msra.mxu0 %v1938
    %2713 = vmatprep.subr.mxu0 0.0
    %2714 = vmatpush1.msra.mxu0 %v1941
    %2715 = vmatprep.subr.mxu0 0.0
    %2716 = vmatpush1.msra.mxu0 %v1944
    %2717 = vmatprep.subr.mxu0 0.0
    %2718 = vmatpush1.msra.mxu0 %v1947
    %2719 = vmatprep.subr.mxu0 0.0
    %2720 = vmatpush1.msra.mxu0 %v1950
    %2721 = vmatprep.subr.mxu0 0.0
    %2722 = vmatpush1.msra.mxu0 %v1953
    %2723 = vmatprep.subr.mxu0 0.0
    %2724 = vmatpush1.msra.mxu0 %v1956
    %2725 = vmatprep.subr.mxu0 0.0
    %2726 = vmatpush1.msra.mxu0 %v1959
    %2727 = vmatprep.subr.mxu0 0.0
    %2728 = vmatpush1.msra.mxu0 %v1962
    %2729 = vmatprep.subr.mxu0 0.0
    %2730 = vmatpush1.msra.mxu0 %v1965
    %2731 = vmatprep.subr.mxu0 0.0
    %2732 = vmatpush1.msra.mxu0 %v1968
    %2733 = vmatprep.subr.mxu0 0.0
    %2734 = vmatpush1.msra.mxu0 %v1971
    %2735 = vmatprep.subr.mxu0 0.0
    %2736 = vmatpush1.msra.mxu0 0.0
    %2737 = vmatprep.subr.mxu0 0.0
    %2738 = vmatpush1.msra.mxu0 0.0
    %2739 = vmatprep.subr.mxu0 0.0
    %2740 = vmatpush1.msra.mxu0 0.0
    %2741 = vmatprep.subr.mxu0 0.0
    %2742 = vmatpush1.msra.mxu0 0.0
    %2743 = vmatprep.subr.mxu0 0.0
    %2744 = vmatpush1.msra.mxu0 0.0
    %2745 = vmatprep.subr.mxu0 0.0
    %2746 = vmatpush1.msra.mxu0 0.0
    %2747 = vmatprep.subr.mxu0 0.0
    %2748 = vmatpush1.msra.mxu0 0.0
    %2749 = vmatprep.subr.mxu0 0.0
    %2750 = vmatpush1.msra.mxu0 0.0
    %2751 = vmatprep.subr.mxu0 0.0
    %2752 = vmatpush1.msra.mxu0 0.0
    %2753 = vmatprep.subr.mxu0 0.0
    %2754 = vmatpush1.msra.mxu0 0.0
    %2755 = vmatprep.subr.mxu0 0.0
    %2756 = vmatpush1.msra.mxu0 0.0
    %2757 = vmatprep.subr.mxu0 0.0
    %2758 = vmatpush1.msra.mxu0 0.0
    %2759 = vmatprep.subr.mxu0 0.0
    %2760 = vmatpush1.msra.mxu0 0.0
    %2761 = vmatprep.subr.mxu0 0.0
    %2762 = vmatpush1.msra.mxu0 0.0
    %2763 = vmatprep.subr.mxu0 0.0
    %2764 = vmatpush1.msra.mxu0 0.0
    %2765 = vmatprep.subr.mxu0 0.0
    %2766 = vmatpush1.msra.mxu0 0.0
    %2767 = vmatprep.mubr.f32.mxu0 0.0
    %2768 = vmatmul.mubr.f32.gmra.mrb[0].mxu0 %v2626
    %v2769 = vpop.f32.mrb[0].mxu0
    %v2770 = vadd.f32 0.0, %v2769
    %v2771 = vpop.f32.mrb[0].mxu0
    %2772 = vdwg.mxu0
    %v2773 = vadd.f32 %v2629, %v2699
    %v2774 = vxor.u32 %v2773, 2147483648
    %v2775 = vmul.f32 %v2774, 1.442695
    %v2776 = vpow.pop %v2775
    %v2777 = vadd.f32 %v2776, 1.0
    %v2778 = vrcp.pop %v2777
    %v2779 = vmul.f32 1.0, %v2778
    %v2780 = vadd.f32 %v2630, %v2701
    %v2781 = vxor.u32 %v2780, 2147483648
    %v2782 = vmul.f32 %v2781, 1.442695
    %v2783 = vpow.pop %v2782
    %v2784 = vadd.f32 %v2783, 1.0
    %v2785 = vrcp.pop %v2784
    %v2786 = vmul.f32 1.0, %v2785
    %v2787 = vadd.f32 %v2770, %v2292
    %v2788 = vmul.f32 %v2779, %v2787
    %v2789 = vadd.f32 %v2631, %v2788
    %v2790 = vtanh.pop %v2789
    %v2791 = vsub.f32 1.0, %v2786
    %v2792 = vmul.f32 %v2791, %v2790
    %v2793 = vmul.f32 %v2786, %v2626
    %v2794 = vadd.f32 %v2792, %v2793
    %s2795 = scalar_lea.vmem [#allocation3], 16
    %2796 = vst [vmem:[%s2795] sm:$0xff] %v2794
    %v2797 = vld [vmem:[%s1077] sm:$0xff]
    %v2798 = vld [vmem:[%s1077 + $0x8] sm:$0xff]
    %v2799 = vld [vmem:[%s1077 + $0x10] sm:$0xff]
    %2800 = vmatprep.subr.mxu0 %v1925
    %2801 = vmatpush1.msra.mxu0 %v1924
    %2802 = vmatprep.subr.mxu0 %v1928
    %2803 = vmatpush1.msra.mxu0 %v1927
    %2804 = vmatprep.subr.mxu0 %v1931
    %2805 = vmatpush1.msra.mxu0 %v1930
    %2806 = vmatprep.subr.mxu0 %v1934
    %2807 = vmatpush1.msra.mxu0 %v1933
    %2808 = vmatprep.subr.mxu0 %v1937
    %2809 = vmatpush1.msra.mxu0 %v1936
    %2810 = vmatprep.subr.mxu0 %v1940
    %2811 = vmatpush1.msra.mxu0 %v1939
    %2812 = vmatprep.subr.mxu0 %v1943
    %2813 = vmatpush1.msra.mxu0 %v1942
    %2814 = vmatprep.subr.mxu0 %v1946
    %2815 = vmatpush1.msra.mxu0 %v1945
    %2816 = vmatprep.subr.mxu0 %v1949
    %2817 = vmatpush1.msra.mxu0 %v1948
    %2818 = vmatprep.subr.mxu0 %v1952
    %2819 = vmatpush1.msra.mxu0 %v1951
    %2820 = vmatprep.subr.mxu0 %v1955
    %2821 = vmatpush1.msra.mxu0 %v1954
    %2822 = vmatprep.subr.mxu0 %v1958
    %2823 = vmatpush1.msra.mxu0 %v1957
    %2824 = vmatprep.subr.mxu0 %v1961
    %2825 = vmatpush1.msra.mxu0 %v1960
    %2826 = vmatprep.subr.mxu0 %v1964
    %2827 = vmatpush1.msra.mxu0 %v1963
    %2828 = vmatprep.subr.mxu0 %v1967
    %2829 = vmatpush1.msra.mxu0 %v1966
    %2830 = vmatprep.subr.mxu0 %v1970
    %2831 = vmatpush1.msra.mxu0 %v1969
    %2832 = vmatprep.subr.mxu0 0.0
    %2833 = vmatpush1.msra.mxu0 0.0
    %2834 = vmatprep.subr.mxu0 0.0
    %2835 = vmatpush1.msra.mxu0 0.0
    %2836 = vmatprep.subr.mxu0 0.0
    %2837 = vmatpush1.msra.mxu0 0.0
    %2838 = vmatprep.subr.mxu0 0.0
    %2839 = vmatpush1.msra.mxu0 0.0
    %2840 = vmatprep.subr.mxu0 0.0
    %2841 = vmatpush1.msra.mxu0 0.0
    %2842 = vmatprep.subr.mxu0 0.0
    %2843 = vmatpush1.msra.mxu0 0.0
    %2844 = vmatprep.subr.mxu0 0.0
    %2845 = vmatpush1.msra.mxu0 0.0
    %2846 = vmatprep.subr.mxu0 0.0
    %2847 = vmatpush1.msra.mxu0 0.0
    %2848 = vmatprep.subr.mxu0 0.0
    %2849 = vmatpush1.msra.mxu0 0.0
    %2850 = vmatprep.subr.mxu0 0.0
    %2851 = vmatpush1.msra.mxu0 0.0
    %2852 = vmatprep.subr.mxu0 0.0
    %2853 = vmatpush1.msra.mxu0 0.0
    %2854 = vmatprep.subr.mxu0 0.0
    %2855 = vmatpush1.msra.mxu0 0.0
    %2856 = vmatprep.subr.mxu0 0.0
    %2857 = vmatpush1.msra.mxu0 0.0
    %2858 = vmatprep.subr.mxu0 0.0
    %2859 = vmatpush1.msra.mxu0 0.0
    %2860 = vmatprep.subr.mxu0 0.0
    %2861 = vmatpush1.msra.mxu0 0.0
    %2862 = vmatprep.subr.mxu0 0.0
    %2863 = vmatpush1.msra.mxu0 0.0
    %2864 = vmatprep.mubr.f32.mxu0 0.0
    %2865 = vmatmul.mubr.f32.gmra.mrb[0].mxu0 %v2794
    %v2866 = vpop.f32.mrb[0].mxu0
    %v2867 = vadd.f32 0.0, %v2866
    %v2868 = vpop.f32.mrb[0].mxu0
    %v2869 = vadd.f32 0.0, %v2868
    %2870 = vdwg.mxu0
    %2871 = vmatprep.subr.mxu0 0.0
    %2872 = vmatpush1.msra.mxu0 %v1926
    %2873 = vmatprep.subr.mxu0 0.0
    %2874 = vmatpush1.msra.mxu0 %v1929
    %2875 = vmatprep.subr.mxu0 0.0
    %2876 = vmatpush1.msra.mxu0 %v1932
    %2877 = vmatprep.subr.mxu0 0.0
    %2878 = vmatpush1.msra.mxu0 %v1935
    %2879 = vmatprep.subr.mxu0 0.0
    %2880 = vmatpush1.msra.mxu0 %v1938
    %2881 = vmatprep.subr.mxu0 0.0
    %2882 = vmatpush1.msra.mxu0 %v1941
    %2883 = vmatprep.subr.mxu0 0.0
    %2884 = vmatpush1.msra.mxu0 %v1944
    %2885 = vmatprep.subr.mxu0 0.0
    %2886 = vmatpush1.msra.mxu0 %v1947
    %2887 = vmatprep.subr.mxu0 0.0
    %2888 = vmatpush1.msra.mxu0 %v1950
    %2889 = vmatprep.subr.mxu0 0.0
    %2890 = vmatpush1.msra.mxu0 %v1953
    %2891 = vmatprep.subr.mxu0 0.0
    %2892 = vmatpush1.msra.mxu0 %v1956
    %2893 = vmatprep.subr.mxu0 0.0
    %2894 = vmatpush1.msra.mxu0 %v1959
    %2895 = vmatprep.subr.mxu0 0.0
    %2896 = vmatpush1.msra.mxu0 %v1962
    %2897 = vmatprep.subr.mxu0 0.0
    %2898 = vmatpush1.msra.mxu0 %v1965
    %2899 = vmatprep.subr.mxu0 0.0
    %2900 = vmatpush1.msra.mxu0 %v1968
    %2901 = vmatprep.subr.mxu0 0.0
    %2902 = vmatpush1.msra.mxu0 %v1971
    %2903 = vmatprep.subr.mxu0 0.0
    %2904 = vmatpush1.msra.mxu0 0.0
    %2905 = vmatprep.subr.mxu0 0.0
    %2906 = vmatpush1.msra.mxu0 0.0
    %2907 = vmatprep.subr.mxu0 0.0
    %2908 = vmatpush1.msra.mxu0 0.0
    %2909 = vmatprep.subr.mxu0 0.0
    %2910 = vmatpush1.msra.mxu0 0.0
    %2911 = vmatprep.subr.mxu0 0.0
    %2912 = vmatpush1.msra.mxu0 0.0
    %2913 = vmatprep.subr.mxu0 0.0
    %2914 = vmatpush1.msra.mxu0 0.0
    %2915 = vmatprep.subr.mxu0 0.0
    %2916 = vmatpush1.msra.mxu0 0.0
    %2917 = vmatprep.subr.mxu0 0.0
    %2918 = vmatpush1.msra.mxu0 0.0
    %2919 = vmatprep.subr.mxu0 0.0
    %2920 = vmatpush1.msra.mxu0 0.0
    %2921 = vmatprep.subr.mxu0 0.0
    %2922 = vmatpush1.msra.mxu0 0.0
    %2923 = vmatprep.subr.mxu0 0.0
    %2924 = vmatpush1.msra.mxu0 0.0
    %2925 = vmatprep.subr.mxu0 0.0
    %2926 = vmatpush1.msra.mxu0 0.0
    %2927 = vmatprep.subr.mxu0 0.0
    %2928 = vmatpush1.msra.mxu0 0.0
    %2929 = vmatprep.subr.mxu0 0.0
    %2930 = vmatpush1.msra.mxu0 0.0
    %2931 = vmatprep.subr.mxu0 0.0
    %2932 = vmatpush1.msra.mxu0 0.0
    %2933 = vmatprep.subr.mxu0 0.0
    %2934 = vmatpush1.msra.mxu0 0.0
    %2935 = vmatprep.mubr.f32.mxu0 0.0
    %2936 = vmatmul.mubr.f32.gmra.mrb[0].mxu0 %v2794
    %v2937 = vpop.f32.mrb[0].mxu0
    %v2938 = vadd.f32 0.0, %v2937
    %v2939 = vpop.f32.mrb[0].mxu0
    %2940 = vdwg.mxu0
    %v2941 = vadd.f32 %v2797, %v2867
    %v2942 = vxor.u32 %v2941, 2147483648
    %v2943 = vmul.f32 %v2942, 1.442695
    %v2944 = vpow.pop %v2943
    %v2945 = vadd.f32 %v2944, 1.0
    %v2946 = vrcp.pop %v2945
    %v2947 = vmul.f32 1.0, %v2946
    %v2948 = vadd.f32 %v2798, %v2869
    %v2949 = vxor.u32 %v2948, 2147483648
    %v2950 = vmul.f32 %v2949, 1.442695
    %v2951 = vpow.pop %v2950
    %v2952 = vadd.f32 %v2951, 1.0
    %v2953 = vrcp.pop %v2952
    %v2954 = vmul.f32 1.0, %v2953
    %v2955 = vadd.f32 %v2938, %v2292
    %v2956 = vmul.f32 %v2947, %v2955
    %v2957 = vadd.f32 %v2799, %v2956
    %v2958 = vtanh.pop %v2957
    %v2959 = vsub.f32 1.0, %v2954
    %v2960 = vmul.f32 %v2959, %v2958
    %v2961 = vmul.f32 %v2954, %v2794
    %v2962 = vadd.f32 %v2960, %v2961
    %s2963 = scalar_lea.vmem [#allocation3], 24
    %2964 = vst [vmem:[%s2963] sm:$0xff] %v2962
    %v2965 = vld [vmem:[%s1246] sm:$0xff]
    %v2966 = vld [vmem:[%s1246 + $0x8] sm:$0xff]
    %v2967 = vld [vmem:[%s1246 + $0x10] sm:$0xff]
    %2968 = vmatprep.subr.mxu0 %v1925
    %2969 = vmatpush1.msra.mxu0 %v1924
    %2970 = vmatprep.subr.mxu0 %v1928
    %2971 = vmatpush1.msra.mxu0 %v1927
    %2972 = vmatprep.subr.mxu0 %v1931
    %2973 = vmatpush1.msra.mxu0 %v1930
    %2974 = vmatprep.subr.mxu0 %v1934
    %2975 = vmatpush1.msra.mxu0 %v1933
    %2976 = vmatprep.subr.mxu0 %v1937
    %2977 = vmatpush1.msra.mxu0 %v1936
    %2978 = vmatprep.subr.mxu0 %v1940
    %2979 = vmatpush1.msra.mxu0 %v1939
    %2980 = vmatprep.subr.mxu0 %v1943
    %2981 = vmatpush1.msra.mxu0 %v1942
    %2982 = vmatprep.subr.mxu0 %v1946
    %2983 = vmatpush1.msra.mxu0 %v1945
    %2984 = vmatprep.subr.mxu0 %v1949
    %2985 = vmatpush1.msra.mxu0 %v1948
    %2986 = vmatprep.subr.mxu0 %v1952
    %2987 = vmatpush1.msra.mxu0 %v1951
    %2988 = vmatprep.subr.mxu0 %v1955
    %2989 = vmatpush1.msra.mxu0 %v1954
    %2990 = vmatprep.subr.mxu0 %v1958
    %2991 = vmatpush1.msra.mxu0 %v1957
    %2992 = vmatprep.subr.mxu0 %v1961
    %2993 = vmatpush1.msra.mxu0 %v1960
    %2994 = vmatprep.subr.mxu0 %v1964
    %2995 = vmatpush1.msra.mxu0 %v1963
    %2996 = vmatprep.subr.mxu0 %v1967
    %2997 = vmatpush1.msra.mxu0 %v1966
    %2998 = vmatprep.subr.mxu0 %v1970
    %2999 = vmatpush1.msra.mxu0 %v1969
    %3000 = vmatprep.subr.mxu0 0.0
    %3001 = vmatpush1.msra.mxu0 0.0
    %3002 = vmatprep.subr.mxu0 0.0
    %3003 = vmatpush1.msra.mxu0 0.0
    %3004 = vmatprep.subr.mxu0 0.0
    %3005 = vmatpush1.msra.mxu0 0.0
    %3006 = vmatprep.subr.mxu0 0.0
    %3007 = vmatpush1.msra.mxu0 0.0
    %3008 = vmatprep.subr.mxu0 0.0
    %3009 = vmatpush1.msra.mxu0 0.0
    %3010 = vmatprep.subr.mxu0 0.0
    %3011 = vmatpush1.msra.mxu0 0.0
    %3012 = vmatprep.subr.mxu0 0.0
    %3013 = vmatpush1.msra.mxu0 0.0
    %3014 = vmatprep.subr.mxu0 0.0
    %3015 = vmatpush1.msra.mxu0 0.0
    %3016 = vmatprep.subr.mxu0 0.0
    %3017 = vmatpush1.msra.mxu0 0.0
    %3018 = vmatprep.subr.mxu0 0.0
    %3019 = vmatpush1.msra.mxu0 0.0
    %3020 = vmatprep.subr.mxu0 0.0
    %3021 = vmatpush1.msra.mxu0 0.0
    %3022 = vmatprep.subr.mxu0 0.0
    %3023 = vmatpush1.msra.mxu0 0.0
    %3024 = vmatprep.subr.mxu0 0.0
    %3025 = vmatpush1.msra.mxu0 0.0
    %3026 = vmatprep.subr.mxu0 0.0
    %3027 = vmatpush1.msra.mxu0 0.0
    %3028 = vmatprep.subr.mxu0 0.0
    %3029 = vmatpush1.msra.mxu0 0.0
    %3030 = vmatprep.subr.mxu0 0.0
    %3031 = vmatpush1.msra.mxu0 0.0
    %3032 = vmatprep.mubr.f32.mxu0 0.0
    %3033 = vmatmul.mubr.f32.gmra.mrb[0].mxu0 %v2962
    %v3034 = vpop.f32.mrb[0].mxu0
    %v3035 = vadd.f32 0.0, %v3034
    %v3036 = vpop.f32.mrb[0].mxu0
    %v3037 = vadd.f32 0.0, %v3036
    %3038 = vdwg.mxu0
    %3039 = vmatprep.subr.mxu0 0.0
    %3040 = vmatpush1.msra.mxu0 %v1926
    %3041 = vmatprep.subr.mxu0 0.0
    %3042 = vmatpush1.msra.mxu0 %v1929
    %3043 = vmatprep.subr.mxu0 0.0
    %3044 = vmatpush1.msra.mxu0 %v1932
    %3045 = vmatprep.subr.mxu0 0.0
    %3046 = vmatpush1.msra.mxu0 %v1935
    %3047 = vmatprep.subr.mxu0 0.0
    %3048 = vmatpush1.msra.mxu0 %v1938
    %3049 = vmatprep.subr.mxu0 0.0
    %3050 = vmatpush1.msra.mxu0 %v1941
    %3051 = vmatprep.subr.mxu0 0.0
    %3052 = vmatpush1.msra.mxu0 %v1944
    %3053 = vmatprep.subr.mxu0 0.0
    %3054 = vmatpush1.msra.mxu0 %v1947
    %3055 = vmatprep.subr.mxu0 0.0
    %3056 = vmatpush1.msra.mxu0 %v1950
    %3057 = vmatprep.subr.mxu0 0.0
    %3058 = vmatpush1.msra.mxu0 %v1953
    %3059 = vmatprep.subr.mxu0 0.0
    %3060 = vmatpush1.msra.mxu0 %v1956
    %3061 = vmatprep.subr.mxu0 0.0
    %3062 = vmatpush1.msra.mxu0 %v1959
    %3063 = vmatprep.subr.mxu0 0.0
    %3064 = vmatpush1.msra.mxu0 %v1962
    %3065 = vmatprep.subr.mxu0 0.0
    %3066 = vmatpush1.msra.mxu0 %v1965
    %3067 = vmatprep.subr.mxu0 0.0
    %3068 = vmatpush1.msra.mxu0 %v1968
    %3069 = vmatprep.subr.mxu0 0.0
    %3070 = vmatpush1.msra.mxu0 %v1971
    %3071 = vmatprep.subr.mxu0 0.0
    %3072 = vmatpush1.msra.mxu0 0.0
    %3073 = vmatprep.subr.mxu0 0.0
    %3074 = vmatpush1.msra.mxu0 0.0
    %3075 = vmatprep.subr.mxu0 0.0
    %3076 = vmatpush1.msra.mxu0 0.0
    %3077 = vmatprep.subr.mxu0 0.0
    %3078 = vmatpush1.msra.mxu0 0.0
    %3079 = vmatprep.subr.mxu0 0.0
    %3080 = vmatpush1.msra.mxu0 0.0
    %3081 = vmatprep.subr.mxu0 0.0
    %3082 = vmatpush1.msra.mxu0 0.0
    %3083 = vmatprep.subr.mxu0 0.0
    %3084 = vmatpush1.msra.mxu0 0.0
    %3085 = vmatprep.subr.mxu0 0.0
    %3086 = vmatpush1.msra.mxu0 0.0
    %3087 = vmatprep.subr.mxu0 0.0
    %3088 = vmatpush1.msra.mxu0 0.0
    %3089 = vmatprep.subr.mxu0 0.0
    %3090 = vmatpush1.msra.mxu0 0.0
    %3091 = vmatprep.subr.mxu0 0.0
    %3092 = vmatpush1.msra.mxu0 0.0
    %3093 = vmatprep.subr.mxu0 0.0
    %3094 = vmatpush1.msra.mxu0 0.0
    %3095 = vmatprep.subr.mxu0 0.0
    %3096 = vmatpush1.msra.mxu0 0.0
    %3097 = vmatprep.subr.mxu0 0.0
    %3098 = vmatpush1.msra.mxu0 0.0
    %3099 = vmatprep.subr.mxu0 0.0
    %3100 = vmatpush1.msra.mxu0 0.0
    %3101 = vmatprep.subr.mxu0 0.0
    %3102 = vmatpush1.msra.mxu0 0.0
    %3103 = vmatprep.mubr.f32.mxu0 0.0
    %3104 = vmatmul.mubr.f32.gmra.mrb[0].mxu0 %v2962
    %v3105 = vpop.f32.mrb[0].mxu0
    %v3106 = vadd.f32 0.0, %v3105
    %v3107 = vpop.f32.mrb[0].mxu0
    %3108 = vdwg.mxu0
    %v3109 = vadd.f32 %v2965, %v3035
    %v3110 = vxor.u32 %v3109, 2147483648
    %v3111 = vmul.f32 %v3110, 1.442695
    %v3112 = vpow.pop %v3111
    %v3113 = vadd.f32 %v3112, 1.0
    %v3114 = vrcp.pop %v3113
    %v3115 = vmul.f32 1.0, %v3114
    %v3116 = vadd.f32 %v2966, %v3037
    %v3117 = vxor.u32 %v3116, 2147483648
    %v3118 = vmul.f32 %v3117, 1.442695
    %v3119 = vpow.pop %v3118
    %v3120 = vadd.f32 %v3119, 1.0
    %v3121 = vrcp.pop %v3120
    %v3122 = vmul.f32 1.0, %v3121
    %v3123 = vadd.f32 %v3106, %v2292
    %v3124 = vmul.f32 %v3115, %v3123
    %v3125 = vadd.f32 %v2967, %v3124
    %v3126 = vtanh.pop %v3125
    %v3127 = vsub.f32 1.0, %v3122
    %v3128 = vmul.f32 %v3127, %v3126
    %v3129 = vmul.f32 %v3122, %v2962
    %v3130 = vadd.f32 %v3128, %v3129
    %s3131 = scalar_lea.vmem [#allocation3], 32
    %3132 = vst [vmem:[%s3131] sm:$0xff] %v3130
    %v3133 = vld [vmem:[%s1415] sm:$0xff]
    %v3134 = vld [vmem:[%s1415 + $0x8] sm:$0xff]
    %v3135 = vld [vmem:[%s1415 + $0x10] sm:$0xff]
    %3136 = vmatprep.subr.mxu0 %v1925
    %3137 = vmatpush1.msra.mxu0 %v1924
    %3138 = vmatprep.subr.mxu0 %v1928
    %3139 = vmatpush1.msra.mxu0 %v1927
    %3140 = vmatprep.subr.mxu0 %v1931
    %3141 = vmatpush1.msra.mxu0 %v1930
    %3142 = vmatprep.subr.mxu0 %v1934
    %3143 = vmatpush1.msra.mxu0 %v1933
    %3144 = vmatprep.subr.mxu0 %v1937
    %3145 = vmatpush1.msra.mxu0 %v1936
    %3146 = vmatprep.subr.mxu0 %v1940
    %3147 = vmatpush1.msra.mxu0 %v1939
    %3148 = vmatprep.subr.mxu0 %v1943
    %3149 = vmatpush1.msra.mxu0 %v1942
    %3150 = vmatprep.subr.mxu0 %v1946
    %3151 = vmatpush1.msra.mxu0 %v1945
    %3152 = vmatprep.subr.mxu0 %v1949
    %3153 = vmatpush1.msra.mxu0 %v1948
    %3154 = vmatprep.subr.mxu0 %v1952
    %3155 = vmatpush1.msra.mxu0 %v1951
    %3156 = vmatprep.subr.mxu0 %v1955
    %3157 = vmatpush1.msra.mxu0 %v1954
    %3158 = vmatprep.subr.mxu0 %v1958
    %3159 = vmatpush1.msra.mxu0 %v1957
    %3160 = vmatprep.subr.mxu0 %v1961
    %3161 = vmatpush1.msra.mxu0 %v1960
    %3162 = vmatprep.subr.mxu0 %v1964
    %3163 = vmatpush1.msra.mxu0 %v1963
    %3164 = vmatprep.subr.mxu0 %v1967
    %3165 = vmatpush1.msra.mxu0 %v1966
    %3166 = vmatprep.subr.mxu0 %v1970
    %3167 = vmatpush1.msra.mxu0 %v1969
    %3168 = vmatprep.subr.mxu0 0.0
    %3169 = vmatpush1.msra.mxu0 0.0
    %3170 = vmatprep.subr.mxu0 0.0
    %3171 = vmatpush1.msra.mxu0 0.0
    %3172 = vmatprep.subr.mxu0 0.0
    %3173 = vmatpush1.msra.mxu0 0.0
    %3174 = vmatprep.subr.mxu0 0.0
    %3175 = vmatpush1.msra.mxu0 0.0
    %3176 = vmatprep.subr.mxu0 0.0
    %3177 = vmatpush1.msra.mxu0 0.0
    %3178 = vmatprep.subr.mxu0 0.0
    %3179 = vmatpush1.msra.mxu0 0.0
    %3180 = vmatprep.subr.mxu0 0.0
    %3181 = vmatpush1.msra.mxu0 0.0
    %3182 = vmatprep.subr.mxu0 0.0
    %3183 = vmatpush1.msra.mxu0 0.0
    %3184 = vmatprep.subr.mxu0 0.0
    %3185 = vmatpush1.msra.mxu0 0.0
    %3186 = vmatprep.subr.mxu0 0.0
    %3187 = vmatpush1.msra.mxu0 0.0
    %3188 = vmatprep.subr.mxu0 0.0
    %3189 = vmatpush1.msra.mxu0 0.0
    %3190 = vmatprep.subr.mxu0 0.0
    %3191 = vmatpush1.msra.mxu0 0.0
    %3192 = vmatprep.subr.mxu0 0.0
    %3193 = vmatpush1.msra.mxu0 0.0
    %3194 = vmatprep.subr.mxu0 0.0
    %3195 = vmatpush1.msra.mxu0 0.0
    %3196 = vmatprep.subr.mxu0 0.0
    %3197 = vmatpush1.msra.mxu0 0.0
    %3198 = vmatprep.subr.mxu0 0.0
    %3199 = vmatpush1.msra.mxu0 0.0
    %3200 = vmatprep.mubr.f32.mxu0 0.0
    %3201 = vmatmul.mubr.f32.gmra.mrb[0].mxu0 %v3130
    %v3202 = vpop.f32.mrb[0].mxu0
    %v3203 = vadd.f32 0.0, %v3202
    %v3204 = vpop.f32.mrb[0].mxu0
    %v3205 = vadd.f32 0.0, %v3204
    %3206 = vdwg.mxu0
    %3207 = vmatprep.subr.mxu0 0.0
    %3208 = vmatpush1.msra.mxu0 %v1926
    %3209 = vmatprep.subr.mxu0 0.0
    %3210 = vmatpush1.msra.mxu0 %v1929
    %3211 = vmatprep.subr.mxu0 0.0
    %3212 = vmatpush1.msra.mxu0 %v1932
    %3213 = vmatprep.subr.mxu0 0.0
    %3214 = vmatpush1.msra.mxu0 %v1935
    %3215 = vmatprep.subr.mxu0 0.0
    %3216 = vmatpush1.msra.mxu0 %v1938
    %3217 = vmatprep.subr.mxu0 0.0
    %3218 = vmatpush1.msra.mxu0 %v1941
    %3219 = vmatprep.subr.mxu0 0.0
    %3220 = vmatpush1.msra.mxu0 %v1944
    %3221 = vmatprep.subr.mxu0 0.0
    %3222 = vmatpush1.msra.mxu0 %v1947
    %3223 = vmatprep.subr.mxu0 0.0
    %3224 = vmatpush1.msra.mxu0 %v1950
    %3225 = vmatprep.subr.mxu0 0.0
    %3226 = vmatpush1.msra.mxu0 %v1953
    %3227 = vmatprep.subr.mxu0 0.0
    %3228 = vmatpush1.msra.mxu0 %v1956
    %3229 = vmatprep.subr.mxu0 0.0
    %3230 = vmatpush1.msra.mxu0 %v1959
    %3231 = vmatprep.subr.mxu0 0.0
    %3232 = vmatpush1.msra.mxu0 %v1962
    %3233 = vmatprep.subr.mxu0 0.0
    %3234 = vmatpush1.msra.mxu0 %v1965
    %3235 = vmatprep.subr.mxu0 0.0
    %3236 = vmatpush1.msra.mxu0 %v1968
    %3237 = vmatprep.subr.mxu0 0.0
    %3238 = vmatpush1.msra.mxu0 %v1971
    %3239 = vmatprep.subr.mxu0 0.0
    %3240 = vmatpush1.msra.mxu0 0.0
    %3241 = vmatprep.subr.mxu0 0.0
    %3242 = vmatpush1.msra.mxu0 0.0
    %3243 = vmatprep.subr.mxu0 0.0
    %3244 = vmatpush1.msra.mxu0 0.0
    %3245 = vmatprep.subr.mxu0 0.0
    %3246 = vmatpush1.msra.mxu0 0.0
    %3247 = vmatprep.subr.mxu0 0.0
    %3248 = vmatpush1.msra.mxu0 0.0
    %3249 = vmatprep.subr.mxu0 0.0
    %3250 = vmatpush1.msra.mxu0 0.0
    %3251 = vmatprep.subr.mxu0 0.0
    %3252 = vmatpush1.msra.mxu0 0.0
    %3253 = vmatprep.subr.mxu0 0.0
    %3254 = vmatpush1.msra.mxu0 0.0
    %3255 = vmatprep.subr.mxu0 0.0
    %3256 = vmatpush1.msra.mxu0 0.0
    %3257 = vmatprep.subr.mxu0 0.0
    %3258 = vmatpush1.msra.mxu0 0.0
    %3259 = vmatprep.subr.mxu0 0.0
    %3260 = vmatpush1.msra.mxu0 0.0
    %3261 = vmatprep.subr.mxu0 0.0
    %3262 = vmatpush1.msra.mxu0 0.0
    %3263 = vmatprep.subr.mxu0 0.0
    %3264 = vmatpush1.msra.mxu0 0.0
    %3265 = vmatprep.subr.mxu0 0.0
    %3266 = vmatpush1.msra.mxu0 0.0
    %3267 = vmatprep.subr.mxu0 0.0
    %3268 = vmatpush1.msra.mxu0 0.0
    %3269 = vmatprep.subr.mxu0 0.0
    %3270 = vmatpush1.msra.mxu0 0.0
    %3271 = vmatprep.mubr.f32.mxu0 0.0
    %3272 = vmatmul.mubr.f32.gmra.mrb[0].mxu0 %v3130
    %v3273 = vpop.f32.mrb[0].mxu0
    %v3274 = vadd.f32 0.0, %v3273
    %v3275 = vpop.f32.mrb[0].mxu0
    %3276 = vdwg.mxu0
    %v3277 = vadd.f32 %v3133, %v3203
    %v3278 = vxor.u32 %v3277, 2147483648
    %v3279 = vmul.f32 %v3278, 1.442695
    %v3280 = vpow.pop %v3279
    %v3281 = vadd.f32 %v3280, 1.0
    %v3282 = vrcp.pop %v3281
    %v3283 = vmul.f32 1.0, %v3282
    %v3284 = vadd.f32 %v3134, %v3205
    %v3285 = vxor.u32 %v3284, 2147483648
    %v3286 = vmul.f32 %v3285, 1.442695
    %v3287 = vpow.pop %v3286
    %v3288 = vadd.f32 %v3287, 1.0
    %v3289 = vrcp.pop %v3288
    %v3290 = vmul.f32 1.0, %v3289
    %v3291 = vadd.f32 %v3274, %v2292
    %v3292 = vmul.f32 %v3283, %v3291
    %v3293 = vadd.f32 %v3135, %v3292
    %v3294 = vtanh.pop %v3293
    %v3295 = vsub.f32 1.0, %v3290
    %v3296 = vmul.f32 %v3295, %v3294
    %v3297 = vmul.f32 %v3290, %v3130
    %v3298 = vadd.f32 %v3296, %v3297
    %s3299 = scalar_lea.vmem [#allocation3], 40
    %3300 = vst [vmem:[%s3299] sm:$0xff] %v3298
    %v3301 = vld [vmem:[%s1584] sm:$0xff]
    %v3302 = vld [vmem:[%s1584 + $0x8] sm:$0xff]
    %v3303 = vld [vmem:[%s1584 + $0x10] sm:$0xff]
    %3304 = vmatprep.subr.mxu0 %v1925
    %3305 = vmatpush1.msra.mxu0 %v1924
    %3306 = vmatprep.subr.mxu0 %v1928
    %3307 = vmatpush1.msra.mxu0 %v1927
    %3308 = vmatprep.subr.mxu0 %v1931
    %3309 = vmatpush1.msra.mxu0 %v1930
    %3310 = vmatprep.subr.mxu0 %v1934
    %3311 = vmatpush1.msra.mxu0 %v1933
    %3312 = vmatprep.subr.mxu0 %v1937
    %3313 = vmatpush1.msra.mxu0 %v1936
    %3314 = vmatprep.subr.mxu0 %v1940
    %3315 = vmatpush1.msra.mxu0 %v1939
    %3316 = vmatprep.subr.mxu0 %v1943
    %3317 = vmatpush1.msra.mxu0 %v1942
    %3318 = vmatprep.subr.mxu0 %v1946
    %3319 = vmatpush1.msra.mxu0 %v1945
    %3320 = vmatprep.subr.mxu0 %v1949
    %3321 = vmatpush1.msra.mxu0 %v1948
    %3322 = vmatprep.subr.mxu0 %v1952
    %3323 = vmatpush1.msra.mxu0 %v1951
    %3324 = vmatprep.subr.mxu0 %v1955
    %3325 = vmatpush1.msra.mxu0 %v1954
    %3326 = vmatprep.subr.mxu0 %v1958
    %3327 = vmatpush1.msra.mxu0 %v1957
    %3328 = vmatprep.subr.mxu0 %v1961
    %3329 = vmatpush1.msra.mxu0 %v1960
    %3330 = vmatprep.subr.mxu0 %v1964
    %3331 = vmatpush1.msra.mxu0 %v1963
    %3332 = vmatprep.subr.mxu0 %v1967
    %3333 = vmatpush1.msra.mxu0 %v1966
    %3334 = vmatprep.subr.mxu0 %v1970
    %3335 = vmatpush1.msra.mxu0 %v1969
    %3336 = vmatprep.subr.mxu0 0.0
    %3337 = vmatpush1.msra.mxu0 0.0
    %3338 = vmatprep.subr.mxu0 0.0
    %3339 = vmatpush1.msra.mxu0 0.0
    %3340 = vmatprep.subr.mxu0 0.0
    %3341 = vmatpush1.msra.mxu0 0.0
    %3342 = vmatprep.subr.mxu0 0.0
    %3343 = vmatpush1.msra.mxu0 0.0
    %3344 = vmatprep.subr.mxu0 0.0
    %3345 = vmatpush1.msra.mxu0 0.0
    %3346 = vmatprep.subr.mxu0 0.0
    %3347 = vmatpush1.msra.mxu0 0.0
    %3348 = vmatprep.subr.mxu0 0.0
    %3349 = vmatpush1.msra.mxu0 0.0
    %3350 = vmatprep.subr.mxu0 0.0
    %3351 = vmatpush1.msra.mxu0 0.0
    %3352 = vmatprep.subr.mxu0 0.0
    %3353 = vmatpush1.msra.mxu0 0.0
    %3354 = vmatprep.subr.mxu0 0.0
    %3355 = vmatpush1.msra.mxu0 0.0
    %3356 = vmatprep.subr.mxu0 0.0
    %3357 = vmatpush1.msra.mxu0 0.0
    %3358 = vmatprep.subr.mxu0 0.0
    %3359 = vmatpush1.msra.mxu0 0.0
    %3360 = vmatprep.subr.mxu0 0.0
    %3361 = vmatpush1.msra.mxu0 0.0
    %3362 = vmatprep.subr.mxu0 0.0
    %3363 = vmatpush1.msra.mxu0 0.0
    %3364 = vmatprep.subr.mxu0 0.0
    %3365 = vmatpush1.msra.mxu0 0.0
    %3366 = vmatprep.subr.mxu0 0.0
    %3367 = vmatpush1.msra.mxu0 0.0
    %3368 = vmatprep.mubr.f32.mxu0 0.0
    %3369 = vmatmul.mubr.f32.gmra.mrb[0].mxu0 %v3298
    %v3370 = vpop.f32.mrb[0].mxu0
    %v3371 = vadd.f32 0.0, %v3370
    %v3372 = vpop.f32.mrb[0].mxu0
    %v3373 = vadd.f32 0.0, %v3372
    %3374 = vdwg.mxu0
    %3375 = vmatprep.subr.mxu0 0.0
    %3376 = vmatpush1.msra.mxu0 %v1926
    %3377 = vmatprep.subr.mxu0 0.0
    %3378 = vmatpush1.msra.mxu0 %v1929
    %3379 = vmatprep.subr.mxu0 0.0
    %3380 = vmatpush1.msra.mxu0 %v1932
    %3381 = vmatprep.subr.mxu0 0.0
    %3382 = vmatpush1.msra.mxu0 %v1935
    %3383 = vmatprep.subr.mxu0 0.0
    %3384 = vmatpush1.msra.mxu0 %v1938
    %3385 = vmatprep.subr.mxu0 0.0
    %3386 = vmatpush1.msra.mxu0 %v1941
    %3387 = vmatprep.subr.mxu0 0.0
    %3388 = vmatpush1.msra.mxu0 %v1944
    %3389 = vmatprep.subr.mxu0 0.0
    %3390 = vmatpush1.msra.mxu0 %v1947
    %3391 = vmatprep.subr.mxu0 0.0
    %3392 = vmatpush1.msra.mxu0 %v1950
    %3393 = vmatprep.subr.mxu0 0.0
    %3394 = vmatpush1.msra.mxu0 %v1953
    %3395 = vmatprep.subr.mxu0 0.0
    %3396 = vmatpush1.msra.mxu0 %v1956
    %3397 = vmatprep.subr.mxu0 0.0
    %3398 = vmatpush1.msra.mxu0 %v1959
    %3399 = vmatprep.subr.mxu0 0.0
    %3400 = vmatpush1.msra.mxu0 %v1962
    %3401 = vmatprep.subr.mxu0 0.0
    %3402 = vmatpush1.msra.mxu0 %v1965
    %3403 = vmatprep.subr.mxu0 0.0
    %3404 = vmatpush1.msra.mxu0 %v1968
    %3405 = vmatprep.subr.mxu0 0.0
    %3406 = vmatpush1.msra.mxu0 %v1971
    %3407 = vmatprep.subr.mxu0 0.0
    %3408 = vmatpush1.msra.mxu0 0.0
    %3409 = vmatprep.subr.mxu0 0.0
    %3410 = vmatpush1.msra.mxu0 0.0
    %3411 = vmatprep.subr.mxu0 0.0
    %3412 = vmatpush1.msra.mxu0 0.0
    %3413 = vmatprep.subr.mxu0 0.0
    %3414 = vmatpush1.msra.mxu0 0.0
    %3415 = vmatprep.subr.mxu0 0.0
    %3416 = vmatpush1.msra.mxu0 0.0
    %3417 = vmatprep.subr.mxu0 0.0
    %3418 = vmatpush1.msra.mxu0 0.0
    %3419 = vmatprep.subr.mxu0 0.0
    %3420 = vmatpush1.msra.mxu0 0.0
    %3421 = vmatprep.subr.mxu0 0.0
    %3422 = vmatpush1.msra.mxu0 0.0
    %3423 = vmatprep.subr.mxu0 0.0
    %3424 = vmatpush1.msra.mxu0 0.0
    %3425 = vmatprep.subr.mxu0 0.0
    %3426 = vmatpush1.msra.mxu0 0.0
    %3427 = vmatprep.subr.mxu0 0.0
    %3428 = vmatpush1.msra.mxu0 0.0
    %3429 = vmatprep.subr.mxu0 0.0
    %3430 = vmatpush1.msra.mxu0 0.0
    %3431 = vmatprep.subr.mxu0 0.0
    %3432 = vmatpush1.msra.mxu0 0.0
    %3433 = vmatprep.subr.mxu0 0.0
    %3434 = vmatpush1.msra.mxu0 0.0
    %3435 = vmatprep.subr.mxu0 0.0
    %3436 = vmatpush1.msra.mxu0 0.0
    %3437 = vmatprep.subr.mxu0 0.0
    %3438 = vmatpush1.msra.mxu0 0.0
    %3439 = vmatprep.mubr.f32.mxu0 0.0
    %3440 = vmatmul.mubr.f32.gmra.mrb[0].mxu0 %v3298
    %v3441 = vpop.f32.mrb[0].mxu0
    %v3442 = vadd.f32 0.0, %v3441
    %v3443 = vpop.f32.mrb[0].mxu0
    %3444 = vdwg.mxu0
    %v3445 = vadd.f32 %v3301, %v3371
    %v3446 = vxor.u32 %v3445, 2147483648
    %v3447 = vmul.f32 %v3446, 1.442695
    %v3448 = vpow.pop %v3447
    %v3449 = vadd.f32 %v3448, 1.0
    %v3450 = vrcp.pop %v3449
    %v3451 = vmul.f32 1.0, %v3450
    %v3452 = vadd.f32 %v3302, %v3373
    %v3453 = vxor.u32 %v3452, 2147483648
    %v3454 = vmul.f32 %v3453, 1.442695
    %v3455 = vpow.pop %v3454
    %v3456 = vadd.f32 %v3455, 1.0
    %v3457 = vrcp.pop %v3456
    %v3458 = vmul.f32 1.0, %v3457
    %v3459 = vadd.f32 %v3442, %v2292
    %v3460 = vmul.f32 %v3451, %v3459
    %v3461 = vadd.f32 %v3303, %v3460
    %v3462 = vtanh.pop %v3461
    %v3463 = vsub.f32 1.0, %v3458
    %v3464 = vmul.f32 %v3463, %v3462
    %v3465 = vmul.f32 %v3458, %v3298
    %v3466 = vadd.f32 %v3464, %v3465
    %s3467 = scalar_lea.vmem [#allocation3], 48
    %3468 = vst [vmem:[%s3467] sm:$0xff] %v3466
    %v3469 = vld [vmem:[%s1753] sm:$0xff]
    %v3470 = vld [vmem:[%s1753 + $0x8] sm:$0xff]
    %v3471 = vld [vmem:[%s1753 + $0x10] sm:$0xff]
    %3472 = vmatprep.subr.mxu0 %v1925
    %3473 = vmatpush1.msra.mxu0 %v1924
    %3474 = vmatprep.subr.mxu0 %v1928
    %3475 = vmatpush1.msra.mxu0 %v1927
    %3476 = vmatprep.subr.mxu0 %v1931
    %3477 = vmatpush1.msra.mxu0 %v1930
    %3478 = vmatprep.subr.mxu0 %v1934
    %3479 = vmatpush1.msra.mxu0 %v1933
    %3480 = vmatprep.subr.mxu0 %v1937
    %3481 = vmatpush1.msra.mxu0 %v1936
    %3482 = vmatprep.subr.mxu0 %v1940
    %3483 = vmatpush1.msra.mxu0 %v1939
    %3484 = vmatprep.subr.mxu0 %v1943
    %3485 = vmatpush1.msra.mxu0 %v1942
    %3486 = vmatprep.subr.mxu0 %v1946
    %3487 = vmatpush1.msra.mxu0 %v1945
    %3488 = vmatprep.subr.mxu0 %v1949
    %3489 = vmatpush1.msra.mxu0 %v1948
    %3490 = vmatprep.subr.mxu0 %v1952
    %3491 = vmatpush1.msra.mxu0 %v1951
    %3492 = vmatprep.subr.mxu0 %v1955
    %3493 = vmatpush1.msra.mxu0 %v1954
    %3494 = vmatprep.subr.mxu0 %v1958
    %3495 = vmatpush1.msra.mxu0 %v1957
    %3496 = vmatprep.subr.mxu0 %v1961
    %3497 = vmatpush1.msra.mxu0 %v1960
    %3498 = vmatprep.subr.mxu0 %v1964
    %3499 = vmatpush1.msra.mxu0 %v1963
    %3500 = vmatprep.subr.mxu0 %v1967
    %3501 = vmatpush1.msra.mxu0 %v1966
    %3502 = vmatprep.subr.mxu0 %v1970
    %3503 = vmatpush1.msra.mxu0 %v1969
    %3504 = vmatprep.subr.mxu0 0.0
    %3505 = vmatpush1.msra.mxu0 0.0
    %3506 = vmatprep.subr.mxu0 0.0
    %3507 = vmatpush1.msra.mxu0 0.0
    %3508 = vmatprep.subr.mxu0 0.0
    %3509 = vmatpush1.msra.mxu0 0.0
    %3510 = vmatprep.subr.mxu0 0.0
    %3511 = vmatpush1.msra.mxu0 0.0
    %3512 = vmatprep.subr.mxu0 0.0
    %3513 = vmatpush1.msra.mxu0 0.0
    %3514 = vmatprep.subr.mxu0 0.0
    %3515 = vmatpush1.msra.mxu0 0.0
    %3516 = vmatprep.subr.mxu0 0.0
    %3517 = vmatpush1.msra.mxu0 0.0
    %3518 = vmatprep.subr.mxu0 0.0
    %3519 = vmatpush1.msra.mxu0 0.0
    %3520 = vmatprep.subr.mxu0 0.0
    %3521 = vmatpush1.msra.mxu0 0.0
    %3522 = vmatprep.subr.mxu0 0.0
    %3523 = vmatpush1.msra.mxu0 0.0
    %3524 = vmatprep.subr.mxu0 0.0
    %3525 = vmatpush1.msra.mxu0 0.0
    %3526 = vmatprep.subr.mxu0 0.0
    %3527 = vmatpush1.msra.mxu0 0.0
    %3528 = vmatprep.subr.mxu0 0.0
    %3529 = vmatpush1.msra.mxu0 0.0
    %3530 = vmatprep.subr.mxu0 0.0
    %3531 = vmatpush1.msra.mxu0 0.0
    %3532 = vmatprep.subr.mxu0 0.0
    %3533 = vmatpush1.msra.mxu0 0.0
    %3534 = vmatprep.subr.mxu0 0.0
    %3535 = vmatpush1.msra.mxu0 0.0
    %3536 = vmatprep.mubr.f32.mxu0 0.0
    %3537 = vmatmul.mubr.f32.gmra.mrb[0].mxu0 %v3466
    %v3538 = vpop.f32.mrb[0].mxu0
    %v3539 = vadd.f32 0.0, %v3538
    %v3540 = vpop.f32.mrb[0].mxu0
    %v3541 = vadd.f32 0.0, %v3540
    %3542 = vdwg.mxu0
    %3543 = vmatprep.subr.mxu0 0.0
    %3544 = vmatpush1.msra.mxu0 %v1926
    %3545 = vmatprep.subr.mxu0 0.0
    %3546 = vmatpush1.msra.mxu0 %v1929
    %3547 = vmatprep.subr.mxu0 0.0
    %3548 = vmatpush1.msra.mxu0 %v1932
    %3549 = vmatprep.subr.mxu0 0.0
    %3550 = vmatpush1.msra.mxu0 %v1935
    %3551 = vmatprep.subr.mxu0 0.0
    %3552 = vmatpush1.msra.mxu0 %v1938
    %3553 = vmatprep.subr.mxu0 0.0
    %3554 = vmatpush1.msra.mxu0 %v1941
    %3555 = vmatprep.subr.mxu0 0.0
    %3556 = vmatpush1.msra.mxu0 %v1944
    %3557 = vmatprep.subr.mxu0 0.0
    %3558 = vmatpush1.msra.mxu0 %v1947
    %3559 = vmatprep.subr.mxu0 0.0
    %3560 = vmatpush1.msra.mxu0 %v1950
    %3561 = vmatprep.subr.mxu0 0.0
    %3562 = vmatpush1.msra.mxu0 %v1953
    %3563 = vmatprep.subr.mxu0 0.0
    %3564 = vmatpush1.msra.mxu0 %v1956
    %3565 = vmatprep.subr.mxu0 0.0
    %3566 = vmatpush1.msra.mxu0 %v1959
    %3567 = vmatprep.subr.mxu0 0.0
    %3568 = vmatpush1.msra.mxu0 %v1962
    %3569 = vmatprep.subr.mxu0 0.0
    %3570 = vmatpush1.msra.mxu0 %v1965
    %3571 = vmatprep.subr.mxu0 0.0
    %3572 = vmatpush1.msra.mxu0 %v1968
    %3573 = vmatprep.subr.mxu0 0.0
    %3574 = vmatpush1.msra.mxu0 %v1971
    %3575 = vmatprep.subr.mxu0 0.0
    %3576 = vmatpush1.msra.mxu0 0.0
    %3577 = vmatprep.subr.mxu0 0.0
    %3578 = vmatpush1.msra.mxu0 0.0
    %3579 = vmatprep.subr.mxu0 0.0
    %3580 = vmatpush1.msra.mxu0 0.0
    %3581 = vmatprep.subr.mxu0 0.0
    %3582 = vmatpush1.msra.mxu0 0.0
    %3583 = vmatprep.subr.mxu0 0.0
    %3584 = vmatpush1.msra.mxu0 0.0
    %3585 = vmatprep.subr.mxu0 0.0
    %3586 = vmatpush1.msra.mxu0 0.0
    %3587 = vmatprep.subr.mxu0 0.0
    %3588 = vmatpush1.msra.mxu0 0.0
    %3589 = vmatprep.subr.mxu0 0.0
    %3590 = vmatpush1.msra.mxu0 0.0
    %3591 = vmatprep.subr.mxu0 0.0
    %3592 = vmatpush1.msra.mxu0 0.0
    %3593 = vmatprep.subr.mxu0 0.0
    %3594 = vmatpush1.msra.mxu0 0.0
    %3595 = vmatprep.subr.mxu0 0.0
    %3596 = vmatpush1.msra.mxu0 0.0
    %3597 = vmatprep.subr.mxu0 0.0
    %3598 = vmatpush1.msra.mxu0 0.0
    %3599 = vmatprep.subr.mxu0 0.0
    %3600 = vmatpush1.msra.mxu0 0.0
    %3601 = vmatprep.subr.mxu0 0.0
    %3602 = vmatpush1.msra.mxu0 0.0
    %3603 = vmatprep.subr.mxu0 0.0
    %3604 = vmatpush1.msra.mxu0 0.0
    %3605 = vmatprep.subr.mxu0 0.0
    %3606 = vmatpush1.msra.mxu0 0.0
    %3607 = vmatprep.mubr.f32.mxu0 0.0
    %3608 = vmatmul.mubr.f32.gmra.mrb[0].mxu0 %v3466
    %v3609 = vpop.f32.mrb[0].mxu0
    %v3610 = vadd.f32 0.0, %v3609
    %v3611 = vpop.f32.mrb[0].mxu0
    %3612 = vdwg.mxu0
    %v3613 = vadd.f32 %v3469, %v3539
    %v3614 = vxor.u32 %v3613, 2147483648
    %v3615 = vmul.f32 %v3614, 1.442695
    %v3616 = vpow.pop %v3615
    %v3617 = vadd.f32 %v3616, 1.0
    %v3618 = vrcp.pop %v3617
    %v3619 = vmul.f32 1.0, %v3618
    %v3620 = vadd.f32 %v3470, %v3541
    %v3621 = vxor.u32 %v3620, 2147483648
    %v3622 = vmul.f32 %v3621, 1.442695
    %v3623 = vpow.pop %v3622
    %v3624 = vadd.f32 %v3623, 1.0
    %v3625 = vrcp.pop %v3624
    %v3626 = vmul.f32 1.0, %v3625
    %v3627 = vadd.f32 %v3610, %v2292
    %v3628 = vmul.f32 %v3619, %v3627
    %v3629 = vadd.f32 %v3471, %v3628
    %v3630 = vtanh.pop %v3629
    %v3631 = vsub.f32 1.0, %v3626
    %v3632 = vmul.f32 %v3631, %v3630
    %v3633 = vmul.f32 %v3626, %v3466
    %v3634 = vadd.f32 %v3632, %v3633
    %s3635 = scalar_lea.vmem [#allocation3], 56
    %3636 = vst [vmem:[%s3635] sm:$0xff] %v3634
    %v3637 = vld [vmem:[#allocation3] sm:$0xff]
    %v3638 = vld [vmem:[#allocation3 + $0x8] sm:$0xff]
    %v3639 = vld [vmem:[#allocation3 + $0x10] sm:$0xff]
    %v3640 = vld [vmem:[#allocation3 + $0x18] sm:$0xff]
    %v3641 = vld [vmem:[#allocation3 + $0x20] sm:$0xff]
    %v3642 = vld [vmem:[#allocation3 + $0x28] sm:$0xff]
    %v3643 = vld [vmem:[#allocation3 + $0x30] sm:$0xff]
    %v3644 = vld [vmem:[#allocation3 + $0x38] sm:$0xff]
    %v3645 = vld [vmem:[%s18] sm:$0xff]
    %v3646 = vld [vmem:[%s18 + $0x8] sm:$0xff]
    %v3647 = vld [vmem:[%s18 + $0x10] sm:$0xff]
    %v3648 = vld [vmem:[%s18 + $0x18] sm:$0xff]
    %v3649 = vld [vmem:[%s18 + $0x20] sm:$0xff]
    %v3650 = vld [vmem:[%s18 + $0x28] sm:$0xff]
    %v3651 = vld [vmem:[%s18 + $0x30] sm:$0xff]
    %v3652 = vld [vmem:[%s18 + $0x38] sm:$0xff]
    %v3653 = vld [vmem:[%s18 + $0x40] sm:$0xff]
    %v3654 = vld [vmem:[%s18 + $0x48] sm:$0xff]
    %v3655 = vld [vmem:[%s18 + $0x50] sm:$0xff]
    %v3656 = vld [vmem:[%s18 + $0x58] sm:$0xff]
    %v3657 = vld [vmem:[%s18 + $0x60] sm:$0xff]
    %v3658 = vld [vmem:[%s18 + $0x68] sm:$0xff]
    %v3659 = vld [vmem:[%s18 + $0x70] sm:$0xff]
    %v3660 = vld [vmem:[%s18 + $0x78] sm:$0xff]
    %v3661 = vld [vmem:[%s19] sm:$0x1]
    %v3663 = vlaneseq
    %v3664 = vshrl.u32 %v3663, 7
    %v3665 = vsub.s32 0, %v3664
    %v3666 = vrot.slane %v3661, %v3665
    %3668 = vmatprep.subr.mxu0 0.0
    %3669 = vmatpush1.msra.mxu0 %v3645
    %3670 = vmatprep.subr.mxu0 0.0
    %3671 = vmatpush1.msra.mxu0 %v3646
    %3672 = vmatprep.subr.mxu0 0.0
    %3673 = vmatpush1.msra.mxu0 %v3647
    %3674 = vmatprep.subr.mxu0 0.0
    %3675 = vmatpush1.msra.mxu0 %v3648
    %3676 = vmatprep.subr.mxu0 0.0
    %3677 = vmatpush1.msra.mxu0 %v3649
    %3678 = vmatprep.subr.mxu0 0.0
    %3679 = vmatpush1.msra.mxu0 %v3650
    %3680 = vmatprep.subr.mxu0 0.0
    %3681 = vmatpush1.msra.mxu0 %v3651
    %3682 = vmatprep.subr.mxu0 0.0
    %3683 = vmatpush1.msra.mxu0 %v3652
    %3684 = vmatprep.subr.mxu0 0.0
    %3685 = vmatpush1.msra.mxu0 %v3653
    %3686 = vmatprep.subr.mxu0 0.0
    %3687 = vmatpush1.msra.mxu0 %v3654
    %3688 = vmatprep.subr.mxu0 0.0
    %3689 = vmatpush1.msra.mxu0 %v3655
    %3690 = vmatprep.subr.mxu0 0.0
    %3691 = vmatpush1.msra.mxu0 %v3656
    %3692 = vmatprep.subr.mxu0 0.0
    %3693 = vmatpush1.msra.mxu0 %v3657
    %3694 = vmatprep.subr.mxu0 0.0
    %3695 = vmatpush1.msra.mxu0 %v3658
    %3696 = vmatprep.subr.mxu0 0.0
    %3697 = vmatpush1.msra.mxu0 %v3659
    %3698 = vmatprep.subr.mxu0 0.0
    %3699 = vmatpush1.msra.mxu0 %v3660
    %3700 = vmatprep.subr.mxu0 0.0
    %3701 = vmatpush1.msra.mxu0 0.0
    %3702 = vmatprep.subr.mxu0 0.0
    %3703 = vmatpush1.msra.mxu0 0.0
    %3704 = vmatprep.subr.mxu0 0.0
    %3705 = vmatpush1.msra.mxu0 0.0
    %3706 = vmatprep.subr.mxu0 0.0
    %3707 = vmatpush1.msra.mxu0 0.0
    %3708 = vmatprep.subr.mxu0 0.0
    %3709 = vmatpush1.msra.mxu0 0.0
    %3710 = vmatprep.subr.mxu0 0.0
    %3711 = vmatpush1.msra.mxu0 0.0
    %3712 = vmatprep.subr.mxu0 0.0
    %3713 = vmatpush1.msra.mxu0 0.0
    %3714 = vmatprep.subr.mxu0 0.0
    %3715 = vmatpush1.msra.mxu0 0.0
    %3716 = vmatprep.subr.mxu0 0.0
    %3717 = vmatpush1.msra.mxu0 0.0
    %3718 = vmatprep.subr.mxu0 0.0
    %3719 = vmatpush1.msra.mxu0 0.0
    %3720 = vmatprep.subr.mxu0 0.0
    %3721 = vmatpush1.msra.mxu0 0.0
    %3722 = vmatprep.subr.mxu0 0.0
    %3723 = vmatpush1.msra.mxu0 0.0
    %3724 = vmatprep.subr.mxu0 0.0
    %3725 = vmatpush1.msra.mxu0 0.0
    %3726 = vmatprep.subr.mxu0 0.0
    %3727 = vmatpush1.msra.mxu0 0.0
    %3728 = vmatprep.subr.mxu0 0.0
    %3729 = vmatpush1.msra.mxu0 0.0
    %3730 = vmatprep.subr.mxu0 0.0
    %3731 = vmatpush1.msra.mxu0 0.0
    %3732 = vmatprep.mubr.f32.mxu0 0.0
    %3733 = vmatmul.mubr.f32.gmra.mrb[0].mxu0 %v3637
    %v3734 = vpop.f32.mrb[0].mxu0
    %v3735 = vadd.f32 %v3666, %v3734
    %v3736 = vpop.f32.mrb[0].mxu0
    %3737 = vmatprep.mubr.f32.mxu0 0.0
    %3738 = vmatmul.mubr.f32.gmra.mrb[0].mxu0 %v3638
    %v3739 = vpop.f32.mrb[0].mxu0
    %v3740 = vadd.f32 %v3666, %v3739
    %v3741 = vpop.f32.mrb[0].mxu0
    %3742 = vmatprep.mubr.f32.mxu0 0.0
    %3743 = vmatmul.mubr.f32.gmra.mrb[0].mxu0 %v3639
    %v3744 = vpop.f32.mrb[0].mxu0
    %v3745 = vadd.f32 %v3666, %v3744
    %v3746 = vpop.f32.mrb[0].mxu0
    %3747 = vmatprep.mubr.f32.mxu0 0.0
    %3748 = vmatmul.mubr.f32.gmra.mrb[0].mxu0 %v3640
    %v3749 = vpop.f32.mrb[0].mxu0
    %v3750 = vadd.f32 %v3666, %v3749
    %v3751 = vpop.f32.mrb[0].mxu0
    %3752 = vmatprep.mubr.f32.mxu0 0.0
    %3753 = vmatmul.mubr.f32.gmra.mrb[0].mxu0 %v3641
    %v3754 = vpop.f32.mrb[0].mxu0
    %v3755 = vadd.f32 %v3666, %v3754
    %v3756 = vpop.f32.mrb[0].mxu0
    %3757 = vmatprep.mubr.f32.mxu0 0.0
    %3758 = vmatmul.mubr.f32.gmra.mrb[0].mxu0 %v3642
    %v3759 = vpop.f32.mrb[0].mxu0
    %v3760 = vadd.f32 %v3666, %v3759
    %v3761 = vpop.f32.mrb[0].mxu0
    %3762 = vmatprep.mubr.f32.mxu0 0.0
    %3763 = vmatmul.mubr.f32.gmra.mrb[0].mxu0 %v3643
    %v3764 = vpop.f32.mrb[0].mxu0
    %v3765 = vadd.f32 %v3666, %v3764
    %v3766 = vpop.f32.mrb[0].mxu0
    %3767 = vmatprep.mubr.f32.mxu0 0.0
    %3768 = vmatmul.mubr.f32.gmra.mrb[0].mxu0 %v3644
    %v3769 = vpop.f32.mrb[0].mxu0
    %v3770 = vadd.f32 %v3666, %v3769
    %v3771 = vpop.f32.mrb[0].mxu0
    %3772 = vdwg.mxu0
    %v3773 = vmax.f32 %v3735, %v3755
    %v3774 = vmax.f32 %v3740, %v3760
    %v3775 = vmax.f32 %v3745, %v3765
    %v3776 = vmax.f32 %v3750, %v3770
    %v3777 = vmax.f32 %v3773, %v3774
    %v3778 = vmax.f32 %v3775, %v3776
    %v3779 = vmax.f32 %v3777, %v3778
    %v3780 = vsub.f32 %v3735, %v3779
    %v3781 = vsub.f32 %v3740, %v3779
    %v3782 = vsub.f32 %v3745, %v3779
    %v3783 = vsub.f32 %v3750, %v3779
    %v3784 = vsub.f32 %v3755, %v3779
    %v3785 = vsub.f32 %v3760, %v3779
    %v3786 = vsub.f32 %v3765, %v3779
    %v3787 = vsub.f32 %v3770, %v3779
    %v3788 = vmul.f32 %v3780, 1.442695
    %v3789 = vpow.pop %v3788
    %v3790 = vmul.f32 %v3781, 1.442695
    %v3791 = vpow.pop %v3790
    %v3792 = vmul.f32 %v3782, 1.442695
    %v3793 = vpow.pop %v3792
    %v3794 = vmul.f32 %v3783, 1.442695
    %v3795 = vpow.pop %v3794
    %v3796 = vmul.f32 %v3784, 1.442695
    %v3797 = vpow.pop %v3796
    %v3798 = vmul.f32 %v3785, 1.442695
    %v3799 = vpow.pop %v3798
    %v3800 = vmul.f32 %v3786, 1.442695
    %v3801 = vpow.pop %v3800
    %v3802 = vmul.f32 %v3787, 1.442695
    %v3803 = vpow.pop %v3802
    %v3804 = vadd.f32 %v3789, %v3791
    %v3805 = vadd.f32 %v3804, %v3793
    %v3806 = vadd.f32 %v3805, %v3795
    %v3807 = vadd.f32 %v3806, %v3797
    %v3808 = vadd.f32 %v3807, %v3799
    %v3809 = vadd.f32 %v3808, %v3801
    %v3810 = vadd.f32 %v3809, %v3803
    %v3811 = vrcp.pop %v3810
    %v3812 = vmul.f32 %v3789, %v3811
    %v3813 = vmul.f32 %v3791, %v3811
    %v3814 = vmul.f32 %v3793, %v3811
    %v3815 = vmul.f32 %v3795, %v3811
    %v3816 = vmul.f32 %v3797, %v3811
    %v3817 = vmul.f32 %v3799, %v3811
    %v3818 = vmul.f32 %v3801, %v3811
    %v3819 = vmul.f32 %v3803, %v3811
    %v3820 = vmul.f32 %v3812, %v3637
    %v3821 = vmul.f32 %v3813, %v3638
    %v3822 = vmul.f32 %v3814, %v3639
    %v3823 = vmul.f32 %v3815, %v3640
    %v3824 = vmul.f32 %v3816, %v3641
    %v3825 = vmul.f32 %v3817, %v3642
    %v3826 = vmul.f32 %v3818, %v3643
    %v3827 = vmul.f32 %v3819, %v3644
    %3828 = vst [vmem:[#allocation2] sm:$0xff] %v3820
    %3829 = vst [vmem:[#allocation2 + $0x8] sm:$0xff] %v3821
    %3830 = vst [vmem:[#allocation2 + $0x10] sm:$0xff] %v3822
    %3831 = vst [vmem:[#allocation2 + $0x18] sm:$0xff] %v3823
    %3832 = vst [vmem:[#allocation2 + $0x20] sm:$0xff] %v3824
    %3833 = vst [vmem:[#allocation2 + $0x28] sm:$0xff] %v3825
    %3834 = vst [vmem:[#allocation2 + $0x30] sm:$0xff] %v3826
    %3835 = vst [vmem:[#allocation2 + $0x38] sm:$0xff] %v3827
    %v3836 = vld [vmem:[#allocation13] sm:$0xff]
    %v3837 = vld [vmem:[#allocation13 + $0x8] sm:$0xff]
    %v3838 = vld [vmem:[#allocation13 + $0x10] sm:$0xff]
    %v3839 = vld [vmem:[#allocation13 + $0x18] sm:$0xff]
    %v3840 = vld [vmem:[#allocation13 + $0x20] sm:$0xff]
    %v3841 = vld [vmem:[#allocation13 + $0x28] sm:$0xff]
    %v3842 = vld [vmem:[#allocation13 + $0x30] sm:$0xff]
    %v3843 = vld [vmem:[#allocation13 + $0x38] sm:$0xff]
    %v3844 = vld [vmem:[#allocation13 + $0x40] sm:$0xff]
    %v3845 = vld [vmem:[#allocation13 + $0x48] sm:$0xff]
    %v3846 = vld [vmem:[#allocation13 + $0x50] sm:$0xff]
    %v3847 = vld [vmem:[#allocation13 + $0x58] sm:$0xff]
    %v3848 = vld [vmem:[#allocation13 + $0x60] sm:$0xff]
    %v3849 = vld [vmem:[#allocation13 + $0x68] sm:$0xff]
    %v3850 = vld [vmem:[#allocation13 + $0x70] sm:$0xff]
    %v3851 = vld [vmem:[#allocation13 + $0x78] sm:$0xff]
    %v3852 = vld [vmem:[#allocation13 + $0x80] sm:$0xff]
    %v3853 = vld [vmem:[#allocation13 + $0x88] sm:$0xff]
    %v3854 = vld [vmem:[#allocation13 + $0x90] sm:$0xff]
    %v3855 = vld [vmem:[#allocation13 + $0x98] sm:$0xff]
    %v3856 = vld [vmem:[#allocation13 + $0xa0] sm:$0xff]
    %v3857 = vld [vmem:[#allocation13 + $0xa8] sm:$0xff]
    %v3858 = vld [vmem:[#allocation13 + $0xb0] sm:$0xff]
    %v3859 = vld [vmem:[#allocation13 + $0xb8] sm:$0xff]
    %v3860 = vld [vmem:[#allocation13 + $0xc0] sm:$0xff]
    %v3861 = vld [vmem:[#allocation13 + $0xc8] sm:$0xff]
    %v3862 = vld [vmem:[#allocation13 + $0xd0] sm:$0xff]
    %v3863 = vld [vmem:[#allocation13 + $0xd8] sm:$0xff]
    %v3864 = vld [vmem:[#allocation13 + $0xe0] sm:$0xff]
    %v3865 = vld [vmem:[#allocation13 + $0xe8] sm:$0xff]
    %v3866 = vld [vmem:[#allocation13 + $0xf0] sm:$0xff]
    %v3867 = vld [vmem:[#allocation13 + $0xf8] sm:$0xff]
    %v3868 = vld [vmem:[#allocation13 + $0x100] sm:$0xff]
    %v3869 = vld [vmem:[#allocation13 + $0x108] sm:$0xff]
    %v3870 = vld [vmem:[#allocation13 + $0x110] sm:$0xff]
    %v3871 = vld [vmem:[#allocation13 + $0x118] sm:$0xff]
    %v3872 = vld [vmem:[#allocation13 + $0x120] sm:$0xff]
    %v3873 = vld [vmem:[#allocation13 + $0x128] sm:$0xff]
    %v3874 = vld [vmem:[#allocation13 + $0x130] sm:$0xff]
    %v3875 = vld [vmem:[#allocation13 + $0x138] sm:$0xff]
    %v3876 = vld [vmem:[#allocation13 + $0x140] sm:$0xff]
    %v3877 = vld [vmem:[#allocation13 + $0x148] sm:$0xff]
    %v3878 = vld [vmem:[#allocation13 + $0x150] sm:$0xff]
    %v3879 = vld [vmem:[#allocation13 + $0x158] sm:$0xff]
    %v3880 = vld [vmem:[#allocation13 + $0x160] sm:$0xff]
    %v3881 = vld [vmem:[#allocation13 + $0x168] sm:$0xff]
    %v3882 = vld [vmem:[#allocation13 + $0x170] sm:$0xff]
    %v3883 = vld [vmem:[#allocation13 + $0x178] sm:$0xff]
    %v3884 = vld [vmem:[#allocation2] sm:$0xff]
    %v3885 = vld [vmem:[#allocation2 + $0x8] sm:$0xff]
    %v3886 = vld [vmem:[#allocation2 + $0x10] sm:$0xff]
    %v3887 = vld [vmem:[#allocation2 + $0x18] sm:$0xff]
    %v3888 = vld [vmem:[#allocation2 + $0x20] sm:$0xff]
    %v3889 = vld [vmem:[#allocation2 + $0x28] sm:$0xff]
    %v3890 = vld [vmem:[#allocation2 + $0x30] sm:$0xff]
    %v3891 = vld [vmem:[#allocation2 + $0x38] sm:$0xff]
    %v3892 = vld [vmem:[#allocation12] sm:$0xff]
    %v3893 = vld [vmem:[#allocation12 + $0x8] sm:$0xff]
    %v3894 = vld [vmem:[#allocation12 + $0x10] sm:$0xff]
    %v3895 = vld [vmem:[#allocation12 + $0x18] sm:$0xff]
    %v3896 = vld [vmem:[#allocation12 + $0x20] sm:$0xff]
    %v3897 = vld [vmem:[#allocation12 + $0x28] sm:$0xff]
    %v3898 = vld [vmem:[#allocation12 + $0x30] sm:$0xff]
    %v3899 = vld [vmem:[#allocation12 + $0x38] sm:$0xff]
    %v3900 = vld [vmem:[#allocation12 + $0x40] sm:$0xff]
    %v3901 = vld [vmem:[#allocation12 + $0x48] sm:$0xff]
    %v3902 = vld [vmem:[#allocation12 + $0x50] sm:$0xff]
    %v3903 = vld [vmem:[#allocation12 + $0x58] sm:$0xff]
    %v3904 = vld [vmem:[#allocation12 + $0x60] sm:$0xff]
    %v3905 = vld [vmem:[#allocation12 + $0x68] sm:$0xff]
    %v3906 = vld [vmem:[#allocation12 + $0x70] sm:$0xff]
    %v3907 = vld [vmem:[#allocation12 + $0x78] sm:$0xff]
    %v3908 = vld [vmem:[#allocation12 + $0x80] sm:$0xff]
    %v3909 = vld [vmem:[#allocation12 + $0x88] sm:$0xff]
    %v3910 = vld [vmem:[#allocation12 + $0x90] sm:$0xff]
    %v3911 = vld [vmem:[#allocation12 + $0x98] sm:$0xff]
    %v3912 = vld [vmem:[#allocation12 + $0xa0] sm:$0xff]
    %v3913 = vld [vmem:[#allocation12 + $0xa8] sm:$0xff]
    %v3914 = vld [vmem:[#allocation12 + $0xb0] sm:$0xff]
    %v3915 = vld [vmem:[#allocation12 + $0xb8] sm:$0xff]
    %v3916 = vld [vmem:[#allocation12 + $0xc0] sm:$0xff]
    %v3917 = vld [vmem:[#allocation12 + $0xc8] sm:$0xff]
    %v3918 = vld [vmem:[#allocation12 + $0xd0] sm:$0xff]
    %v3919 = vld [vmem:[#allocation12 + $0xd8] sm:$0xff]
    %v3920 = vld [vmem:[#allocation12 + $0xe0] sm:$0xff]
    %v3921 = vld [vmem:[#allocation12 + $0xe8] sm:$0xff]
    %v3922 = vld [vmem:[#allocation12 + $0xf0] sm:$0xff]
    %v3923 = vld [vmem:[#allocation12 + $0xf8] sm:$0xff]
    %v3924 = vld [vmem:[#allocation12 + $0x100] sm:$0xff]
    %v3925 = vld [vmem:[#allocation12 + $0x108] sm:$0xff]
    %v3926 = vld [vmem:[#allocation12 + $0x110] sm:$0xff]
    %v3927 = vld [vmem:[#allocation12 + $0x118] sm:$0xff]
    %v3928 = vld [vmem:[#allocation12 + $0x120] sm:$0xff]
    %v3929 = vld [vmem:[#allocation12 + $0x128] sm:$0xff]
    %v3930 = vld [vmem:[#allocation12 + $0x130] sm:$0xff]
    %v3931 = vld [vmem:[#allocation12 + $0x138] sm:$0xff]
    %v3932 = vld [vmem:[#allocation12 + $0x140] sm:$0xff]
    %v3933 = vld [vmem:[#allocation12 + $0x148] sm:$0xff]
    %v3934 = vld [vmem:[#allocation12 + $0x150] sm:$0xff]
    %v3935 = vld [vmem:[#allocation12 + $0x158] sm:$0xff]
    %v3936 = vld [vmem:[#allocation12 + $0x160] sm:$0xff]
    %v3937 = vld [vmem:[#allocation12 + $0x168] sm:$0xff]
    %v3938 = vld [vmem:[#allocation12 + $0x170] sm:$0xff]
    %v3939 = vld [vmem:[#allocation12 + $0x178] sm:$0xff]
    %v3940 = vld [vmem:[%s12] sm:$0x7]
    %v3942 = vlaneseq
    %v3943 = vshrl.u32 %v3942, 7
    %v3944 = vsub.s32 0, %v3943
    %v3945 = vrot.slane %v3940, %v3944
    %v3946 = vlaneseq
    %v3947 = vshrl.u32 %v3946, 7
    %v3948 = vsub.s32 1, %v3947
    %v3949 = vrot.slane %v3940, %v3948
    %v3950 = vlaneseq
    %v3951 = vshrl.u32 %v3950, 7
    %v3952 = vsub.s32 2, %v3951
    %v3953 = vrot.slane %v3940, %v3952
    %3957 = vmatprep.subr.mxu0 %v3893
    %3958 = vmatpush1.msra.mxu0 %v3892
    %3959 = vmatprep.subr.mxu0 %v3896
    %3960 = vmatpush1.msra.mxu0 %v3895
    %3961 = vmatprep.subr.mxu0 %v3899
    %3962 = vmatpush1.msra.mxu0 %v3898
    %3963 = vmatprep.subr.mxu0 %v3902
    %3964 = vmatpush1.msra.mxu0 %v3901
    %3965 = vmatprep.subr.mxu0 %v3905
    %3966 = vmatpush1.msra.mxu0 %v3904
    %3967 = vmatprep.subr.mxu0 %v3908
    %3968 = vmatpush1.msra.mxu0 %v3907
    %3969 = vmatprep.subr.mxu0 %v3911
    %3970 = vmatpush1.msra.mxu0 %v3910
    %3971 = vmatprep.subr.mxu0 %v3914
    %3972 = vmatpush1.msra.mxu0 %v3913
    %3973 = vmatprep.subr.mxu0 %v3917
    %3974 = vmatpush1.msra.mxu0 %v3916
    %3975 = vmatprep.subr.mxu0 %v3920
    %3976 = vmatpush1.msra.mxu0 %v3919
    %3977 = vmatprep.subr.mxu0 %v3923
    %3978 = vmatpush1.msra.mxu0 %v3922
    %3979 = vmatprep.subr.mxu0 %v3926
    %3980 = vmatpush1.msra.mxu0 %v3925
    %3981 = vmatprep.subr.mxu0 %v3929
    %3982 = vmatpush1.msra.mxu0 %v3928
    %3983 = vmatprep.subr.mxu0 %v3932
    %3984 = vmatpush1.msra.mxu0 %v3931
    %3985 = vmatprep.subr.mxu0 %v3935
    %3986 = vmatpush1.msra.mxu0 %v3934
    %3987 = vmatprep.subr.mxu0 %v3938
    %3988 = vmatpush1.msra.mxu0 %v3937
    %3989 = vmatprep.subr.mxu0 0.0
    %3990 = vmatpush1.msra.mxu0 0.0
    %3991 = vmatprep.subr.mxu0 0.0
    %3992 = vmatpush1.msra.mxu0 0.0
    %3993 = vmatprep.subr.mxu0 0.0
    %3994 = vmatpush1.msra.mxu0 0.0
    %3995 = vmatprep.subr.mxu0 0.0
    %3996 = vmatpush1.msra.mxu0 0.0
    %3997 = vmatprep.subr.mxu0 0.0
    %3998 = vmatpush1.msra.mxu0 0.0
    %3999 = vmatprep.subr.mxu0 0.0
    %4000 = vmatpush1.msra.mxu0 0.0
    %4001 = vmatprep.subr.mxu0 0.0
    %4002 = vmatpush1.msra.mxu0 0.0
    %4003 = vmatprep.subr.mxu0 0.0
    %4004 = vmatpush1.msra.mxu0 0.0
    %4005 = vmatprep.subr.mxu0 0.0
    %4006 = vmatpush1.msra.mxu0 0.0
    %4007 = vmatprep.subr.mxu0 0.0
    %4008 = vmatpush1.msra.mxu0 0.0
    %4009 = vmatprep.subr.mxu0 0.0
    %4010 = vmatpush1.msra.mxu0 0.0
    %4011 = vmatprep.subr.mxu0 0.0
    %4012 = vmatpush1.msra.mxu0 0.0
    %4013 = vmatprep.subr.mxu0 0.0
    %4014 = vmatpush1.msra.mxu0 0.0
    %4015 = vmatprep.subr.mxu0 0.0
    %4016 = vmatpush1.msra.mxu0 0.0
    %4017 = vmatprep.subr.mxu0 0.0
    %4018 = vmatpush1.msra.mxu0 0.0
    %4019 = vmatprep.subr.mxu0 0.0
    %4020 = vmatpush1.msra.mxu0 0.0
    %4021 = vmatprep.mubr.f32.mxu0 0.0
    %4022 = vmatmul.mubr.f32.gmra.mrb[0].mxu0 %v3884
    %v4023 = vpop.f32.mrb[0].mxu0
    %v4024 = vadd.f32 %v3945, %v4023
    %v4025 = vpop.f32.mrb[0].mxu0
    %v4026 = vadd.f32 %v3949, %v4025
    %4027 = vmatprep.mubr.f32.mxu0 0.0
    %4028 = vmatmul.mubr.f32.gmra.mrb[0].mxu0 %v3885
    %v4029 = vpop.f32.mrb[0].mxu0
    %v4030 = vadd.f32 %v3945, %v4029
    %v4031 = vpop.f32.mrb[0].mxu0
    %v4032 = vadd.f32 %v3949, %v4031
    %4033 = vmatprep.mubr.f32.mxu0 0.0
    %4034 = vmatmul.mubr.f32.gmra.mrb[0].mxu0 %v3886
    %v4035 = vpop.f32.mrb[0].mxu0
    %v4036 = vadd.f32 %v3945, %v4035
    %v4037 = vpop.f32.mrb[0].mxu0
    %v4038 = vadd.f32 %v3949, %v4037
    %4039 = vmatprep.mubr.f32.mxu0 0.0
    %4040 = vmatmul.mubr.f32.gmra.mrb[0].mxu0 %v3887
    %v4041 = vpop.f32.mrb[0].mxu0
    %v4042 = vadd.f32 %v3945, %v4041
    %v4043 = vpop.f32.mrb[0].mxu0
    %v4044 = vadd.f32 %v3949, %v4043
    %4045 = vmatprep.mubr.f32.mxu0 0.0
    %4046 = vmatmul.mubr.f32.gmra.mrb[0].mxu0 %v3888
    %v4047 = vpop.f32.mrb[0].mxu0
    %v4048 = vadd.f32 %v3945, %v4047
    %v4049 = vpop.f32.mrb[0].mxu0
    %v4050 = vadd.f32 %v3949, %v4049
    %4051 = vmatprep.mubr.f32.mxu0 0.0
    %4052 = vmatmul.mubr.f32.gmra.mrb[0].mxu0 %v3889
    %v4053 = vpop.f32.mrb[0].mxu0
    %v4054 = vadd.f32 %v3945, %v4053
    %v4055 = vpop.f32.mrb[0].mxu0
    %v4056 = vadd.f32 %v3949, %v4055
    %4057 = vmatprep.mubr.f32.mxu0 0.0
    %4058 = vmatmul.mubr.f32.gmra.mrb[0].mxu0 %v3890
    %v4059 = vpop.f32.mrb[0].mxu0
    %v4060 = vadd.f32 %v3945, %v4059
    %v4061 = vpop.f32.mrb[0].mxu0
    %v4062 = vadd.f32 %v3949, %v4061
    %4063 = vmatprep.mubr.f32.mxu0 0.0
    %4064 = vmatmul.mubr.f32.gmra.mrb[0].mxu0 %v3891
    %v4065 = vpop.f32.mrb[0].mxu0
    %v4066 = vadd.f32 %v3945, %v4065
    %v4067 = vpop.f32.mrb[0].mxu0
    %v4068 = vadd.f32 %v3949, %v4067
    %4069 = vdwg.mxu0
    %4070 = vmatprep.subr.mxu0 0.0
    %4071 = vmatpush1.msra.mxu0 %v3894
    %4072 = vmatprep.subr.mxu0 0.0
    %4073 = vmatpush1.msra.mxu0 %v3897
    %4074 = vmatprep.subr.mxu0 0.0
    %4075 = vmatpush1.msra.mxu0 %v3900
    %4076 = vmatprep.subr.mxu0 0.0
    %4077 = vmatpush1.msra.mxu0 %v3903
    %4078 = vmatprep.subr.mxu0 0.0
    %4079 = vmatpush1.msra.mxu0 %v3906
    %4080 = vmatprep.subr.mxu0 0.0
    %4081 = vmatpush1.msra.mxu0 %v3909
    %4082 = vmatprep.subr.mxu0 0.0
    %4083 = vmatpush1.msra.mxu0 %v3912
    %4084 = vmatprep.subr.mxu0 0.0
    %4085 = vmatpush1.msra.mxu0 %v3915
    %4086 = vmatprep.subr.mxu0 0.0
    %4087 = vmatpush1.msra.mxu0 %v3918
    %4088 = vmatprep.subr.mxu0 0.0
    %4089 = vmatpush1.msra.mxu0 %v3921
    %4090 = vmatprep.subr.mxu0 0.0
    %4091 = vmatpush1.msra.mxu0 %v3924
    %4092 = vmatprep.subr.mxu0 0.0
    %4093 = vmatpush1.msra.mxu0 %v3927
    %4094 = vmatprep.subr.mxu0 0.0
    %4095 = vmatpush1.msra.mxu0 %v3930
    %4096 = vmatprep.subr.mxu0 0.0
    %4097 = vmatpush1.msra.mxu0 %v3933
    %4098 = vmatprep.subr.mxu0 0.0
    %4099 = vmatpush1.msra.mxu0 %v3936
    %4100 = vmatprep.subr.mxu0 0.0
    %4101 = vmatpush1.msra.mxu0 %v3939
    %4102 = vmatprep.subr.mxu0 0.0
    %4103 = vmatpush1.msra.mxu0 0.0
    %4104 = vmatprep.subr.mxu0 0.0
    %4105 = vmatpush1.msra.mxu0 0.0
    %4106 = vmatprep.subr.mxu0 0.0
    %4107 = vmatpush1.msra.mxu0 0.0
    %4108 = vmatprep.subr.mxu0 0.0
    %4109 = vmatpush1.msra.mxu0 0.0
    %4110 = vmatprep.subr.mxu0 0.0
    %4111 = vmatpush1.msra.mxu0 0.0
    %4112 = vmatprep.subr.mxu0 0.0
    %4113 = vmatpush1.msra.mxu0 0.0
    %4114 = vmatprep.subr.mxu0 0.0
    %4115 = vmatpush1.msra.mxu0 0.0
    %4116 = vmatprep.subr.mxu0 0.0
    %4117 = vmatpush1.msra.mxu0 0.0
    %4118 = vmatprep.subr.mxu0 0.0
    %4119 = vmatpush1.msra.mxu0 0.0
    %4120 = vmatprep.subr.mxu0 0.0
    %4121 = vmatpush1.msra.mxu0 0.0
    %4122 = vmatprep.subr.mxu0 0.0
    %4123 = vmatpush1.msra.mxu0 0.0
    %4124 = vmatprep.subr.mxu0 0.0
    %4125 = vmatpush1.msra.mxu0 0.0
    %4126 = vmatprep.subr.mxu0 0.0
    %4127 = vmatpush1.msra.mxu0 0.0
    %4128 = vmatprep.subr.mxu0 0.0
    %4129 = vmatpush1.msra.mxu0 0.0
    %4130 = vmatprep.subr.mxu0 0.0
    %4131 = vmatpush1.msra.mxu0 0.0
    %4132 = vmatprep.subr.mxu0 0.0
    %4133 = vmatpush1.msra.mxu0 0.0
    %4134 = vmatprep.mubr.f32.mxu0 0.0
    %4135 = vmatmul.mubr.f32.gmra.mrb[0].mxu0 %v3884
    %v4136 = vpop.f32.mrb[0].mxu0
    %v4137 = vadd.f32 %v3953, %v4136
    %v4138 = vpop.f32.mrb[0].mxu0
    %4139 = vmatprep.mubr.f32.mxu0 0.0
    %4140 = vmatmul.mubr.f32.gmra.mrb[0].mxu0 %v3885
    %v4141 = vpop.f32.mrb[0].mxu0
    %v4142 = vadd.f32 %v3953, %v4141
    %v4143 = vpop.f32.mrb[0].mxu0
    %4144 = vmatprep.mubr.f32.mxu0 0.0
    %4145 = vmatmul.mubr.f32.gmra.mrb[0].mxu0 %v3886
    %v4146 = vpop.f32.mrb[0].mxu0
    %v4147 = vadd.f32 %v3953, %v4146
    %v4148 = vpop.f32.mrb[0].mxu0
    %4149 = vmatprep.mubr.f32.mxu0 0.0
    %4150 = vmatmul.mubr.f32.gmra.mrb[0].mxu0 %v3887
    %v4151 = vpop.f32.mrb[0].mxu0
    %v4152 = vadd.f32 %v3953, %v4151
    %v4153 = vpop.f32.mrb[0].mxu0
    %4154 = vmatprep.mubr.f32.mxu0 0.0
    %4155 = vmatmul.mubr.f32.gmra.mrb[0].mxu0 %v3888
    %v4156 = vpop.f32.mrb[0].mxu0
    %v4157 = vadd.f32 %v3953, %v4156
    %v4158 = vpop.f32.mrb[0].mxu0
    %4159 = vmatprep.mubr.f32.mxu0 0.0
    %4160 = vmatmul.mubr.f32.gmra.mrb[0].mxu0 %v3889
    %v4161 = vpop.f32.mrb[0].mxu0
    %v4162 = vadd.f32 %v3953, %v4161
    %v4163 = vpop.f32.mrb[0].mxu0
    %4164 = vmatprep.mubr.f32.mxu0 0.0
    %4165 = vmatmul.mubr.f32.gmra.mrb[0].mxu0 %v3890
    %v4166 = vpop.f32.mrb[0].mxu0
    %v4167 = vadd.f32 %v3953, %v4166
    %v4168 = vpop.f32.mrb[0].mxu0
    %4169 = vmatprep.mubr.f32.mxu0 0.0
    %4170 = vmatmul.mubr.f32.gmra.mrb[0].mxu0 %v3891
    %v4171 = vpop.f32.mrb[0].mxu0
    %v4172 = vadd.f32 %v3953, %v4171
    %v4173 = vpop.f32.mrb[0].mxu0
    %4174 = vdwg.mxu0
    %4175 = vst [vmem:[#allocation4] sm:$0xff] %v4024
    %4176 = vst [vmem:[#allocation4 + $0x8] sm:$0xff] %v4026
    %4177 = vst [vmem:[#allocation4 + $0x10] sm:$0xff] %v4137
    %4178 = vst [vmem:[#allocation4 + $0x18] sm:$0xff] %v4030
    %4179 = vst [vmem:[#allocation4 + $0x20] sm:$0xff] %v4032
    %4180 = vst [vmem:[#allocation4 + $0x28] sm:$0xff] %v4142
    %4181 = vst [vmem:[#allocation4 + $0x30] sm:$0xff] %v4036
    %4182 = vst [vmem:[#allocation4 + $0x38] sm:$0xff] %v4038
    %4183 = vst [vmem:[#allocation4 + $0x40] sm:$0xff] %v4147
    %4184 = vst [vmem:[#allocation4 + $0x48] sm:$0xff] %v4042
    %4185 = vst [vmem:[#allocation4 + $0x50] sm:$0xff] %v4044
    %4186 = vst [vmem:[#allocation4 + $0x58] sm:$0xff] %v4152
    %4187 = vst [vmem:[#allocation4 + $0x60] sm:$0xff] %v4048
    %4188 = vst [vmem:[#allocation4 + $0x68] sm:$0xff] %v4050
    %4189 = vst [vmem:[#allocation4 + $0x70] sm:$0xff] %v4157
    %4190 = vst [vmem:[#allocation4 + $0x78] sm:$0xff] %v4054
    %4191 = vst [vmem:[#allocation4 + $0x80] sm:$0xff] %v4056
    %4192 = vst [vmem:[#allocation4 + $0x88] sm:$0xff] %v4162
    %4193 = vst [vmem:[#allocation4 + $0x90] sm:$0xff] %v4060
    %4194 = vst [vmem:[#allocation4 + $0x98] sm:$0xff] %v4062
    %4195 = vst [vmem:[#allocation4 + $0xa0] sm:$0xff] %v4167
    %4196 = vst [vmem:[#allocation4 + $0xa8] sm:$0xff] %v4066
    %4197 = vst [vmem:[#allocation4 + $0xb0] sm:$0xff] %v4068
    %4198 = vst [vmem:[#allocation4 + $0xb8] sm:$0xff] %v4172
    %v4199 = vld [vmem:[%s13] sm:$0x1]
    %v4201 = vlaneseq
    %v4202 = vshrl.u32 %v4201, 7
    %v4203 = vsub.s32 0, %v4202
    %v4204 = vrot.slane %v4199, %v4203
    %v4206 = vld [vmem:[#allocation4] sm:$0xff]
    %v4207 = vld [vmem:[#allocation4 + $0x8] sm:$0xff]
    %v4208 = vld [vmem:[#allocation4 + $0x10] sm:$0xff]
    %4209 = vmatprep.subr.mxu0 %v3837
    %4210 = vmatpush1.msra.mxu0 %v3836
    %4211 = vmatprep.subr.mxu0 %v3840
    %4212 = vmatpush1.msra.mxu0 %v3839
    %4213 = vmatprep.subr.mxu0 %v3843
    %4214 = vmatpush1.msra.mxu0 %v3842
    %4215 = vmatprep.subr.mxu0 %v3846
    %4216 = vmatpush1.msra.mxu0 %v3845
    %4217 = vmatprep.subr.mxu0 %v3849
    %4218 = vmatpush1.msra.mxu0 %v3848
    %4219 = vmatprep.subr.mxu0 %v3852
    %4220 = vmatpush1.msra.mxu0 %v3851
    %4221 = vmatprep.subr.mxu0 %v3855
    %4222 = vmatpush1.msra.mxu0 %v3854
    %4223 = vmatprep.subr.mxu0 %v3858
    %4224 = vmatpush1.msra.mxu0 %v3857
    %4225 = vmatprep.subr.mxu0 %v3861
    %4226 = vmatpush1.msra.mxu0 %v3860
    %4227 = vmatprep.subr.mxu0 %v3864
    %4228 = vmatpush1.msra.mxu0 %v3863
    %4229 = vmatprep.subr.mxu0 %v3867
    %4230 = vmatpush1.msra.mxu0 %v3866
    %4231 = vmatprep.subr.mxu0 %v3870
    %4232 = vmatpush1.msra.mxu0 %v3869
    %4233 = vmatprep.subr.mxu0 %v3873
    %4234 = vmatpush1.msra.mxu0 %v3872
    %4235 = vmatprep.subr.mxu0 %v3876
    %4236 = vmatpush1.msra.mxu0 %v3875
    %4237 = vmatprep.subr.mxu0 %v3879
    %4238 = vmatpush1.msra.mxu0 %v3878
    %4239 = vmatprep.subr.mxu0 %v3882
    %4240 = vmatpush1.msra.mxu0 %v3881
    %4241 = vmatprep.subr.mxu0 0.0
    %4242 = vmatpush1.msra.mxu0 0.0
    %4243 = vmatprep.subr.mxu0 0.0
    %4244 = vmatpush1.msra.mxu0 0.0
    %4245 = vmatprep.subr.mxu0 0.0
    %4246 = vmatpush1.msra.mxu0 0.0
    %4247 = vmatprep.subr.mxu0 0.0
    %4248 = vmatpush1.msra.mxu0 0.0
    %4249 = vmatprep.subr.mxu0 0.0
    %4250 = vmatpush1.msra.mxu0 0.0
    %4251 = vmatprep.subr.mxu0 0.0
    %4252 = vmatpush1.msra.mxu0 0.0
    %4253 = vmatprep.subr.mxu0 0.0
    %4254 = vmatpush1.msra.mxu0 0.0
    %4255 = vmatprep.subr.mxu0 0.0
    %4256 = vmatpush1.msra.mxu0 0.0
    %4257 = vmatprep.subr.mxu0 0.0
    %4258 = vmatpush1.msra.mxu0 0.0
    %4259 = vmatprep.subr.mxu0 0.0
    %4260 = vmatpush1.msra.mxu0 0.0
    %4261 = vmatprep.subr.mxu0 0.0
    %4262 = vmatpush1.msra.mxu0 0.0
    %4263 = vmatprep.subr.mxu0 0.0
    %4264 = vmatpush1.msra.mxu0 0.0
    %4265 = vmatprep.subr.mxu0 0.0
    %4266 = vmatpush1.msra.mxu0 0.0
    %4267 = vmatprep.subr.mxu0 0.0
    %4268 = vmatpush1.msra.mxu0 0.0
    %4269 = vmatprep.subr.mxu0 0.0
    %4270 = vmatpush1.msra.mxu0 0.0
    %4271 = vmatprep.subr.mxu0 0.0
    %4272 = vmatpush1.msra.mxu0 0.0
    %4273 = vmatprep.mubr.f32.mxu0 0.0
    %4274 = vmatmul.mubr.f32.gmra.mrb[0].mxu0 %v1919
    %v4275 = vpop.f32.mrb[0].mxu0
    %v4276 = vadd.f32 0.0, %v4275
    %v4277 = vpop.f32.mrb[0].mxu0
    %v4278 = vadd.f32 0.0, %v4277
    %4279 = vdwg.mxu0
    %4280 = vmatprep.subr.mxu0 0.0
    %4281 = vmatpush1.msra.mxu0 %v3838
    %4282 = vmatprep.subr.mxu0 0.0
    %4283 = vmatpush1.msra.mxu0 %v3841
    %4284 = vmatprep.subr.mxu0 0.0
    %4285 = vmatpush1.msra.mxu0 %v3844
    %4286 = vmatprep.subr.mxu0 0.0
    %4287 = vmatpush1.msra.mxu0 %v3847
    %4288 = vmatprep.subr.mxu0 0.0
    %4289 = vmatpush1.msra.mxu0 %v3850
    %4290 = vmatprep.subr.mxu0 0.0
    %4291 = vmatpush1.msra.mxu0 %v3853
    %4292 = vmatprep.subr.mxu0 0.0
    %4293 = vmatpush1.msra.mxu0 %v3856
    %4294 = vmatprep.subr.mxu0 0.0
    %4295 = vmatpush1.msra.mxu0 %v3859
    %4296 = vmatprep.subr.mxu0 0.0
    %4297 = vmatpush1.msra.mxu0 %v3862
    %4298 = vmatprep.subr.mxu0 0.0
    %4299 = vmatpush1.msra.mxu0 %v3865
    %4300 = vmatprep.subr.mxu0 0.0
    %4301 = vmatpush1.msra.mxu0 %v3868
    %4302 = vmatprep.subr.mxu0 0.0
    %4303 = vmatpush1.msra.mxu0 %v3871
    %4304 = vmatprep.subr.mxu0 0.0
    %4305 = vmatpush1.msra.mxu0 %v3874
    %4306 = vmatprep.subr.mxu0 0.0
    %4307 = vmatpush1.msra.mxu0 %v3877
    %4308 = vmatprep.subr.mxu0 0.0
    %4309 = vmatpush1.msra.mxu0 %v3880
    %4310 = vmatprep.subr.mxu0 0.0
    %4311 = vmatpush1.msra.mxu0 %v3883
    %4312 = vmatprep.subr.mxu0 0.0
    %4313 = vmatpush1.msra.mxu0 0.0
    %4314 = vmatprep.subr.mxu0 0.0
    %4315 = vmatpush1.msra.mxu0 0.0
    %4316 = vmatprep.subr.mxu0 0.0
    %4317 = vmatpush1.msra.mxu0 0.0
    %4318 = vmatprep.subr.mxu0 0.0
    %4319 = vmatpush1.msra.mxu0 0.0
    %4320 = vmatprep.subr.mxu0 0.0
    %4321 = vmatpush1.msra.mxu0 0.0
    %4322 = vmatprep.subr.mxu0 0.0
    %4323 = vmatpush1.msra.mxu0 0.0
    %4324 = vmatprep.subr.mxu0 0.0
    %4325 = vmatpush1.msra.mxu0 0.0
    %4326 = vmatprep.subr.mxu0 0.0
    %4327 = vmatpush1.msra.mxu0 0.0
    %4328 = vmatprep.subr.mxu0 0.0
    %4329 = vmatpush1.msra.mxu0 0.0
    %4330 = vmatprep.subr.mxu0 0.0
    %4331 = vmatpush1.msra.mxu0 0.0
    %4332 = vmatprep.subr.mxu0 0.0
    %4333 = vmatpush1.msra.mxu0 0.0
    %4334 = vmatprep.subr.mxu0 0.0
    %4335 = vmatpush1.msra.mxu0 0.0
    %4336 = vmatprep.subr.mxu0 0.0
    %4337 = vmatpush1.msra.mxu0 0.0
    %4338 = vmatprep.subr.mxu0 0.0
    %4339 = vmatpush1.msra.mxu0 0.0
    %4340 = vmatprep.subr.mxu0 0.0
    %4341 = vmatpush1.msra.mxu0 0.0
    %4342 = vmatprep.subr.mxu0 0.0
    %4343 = vmatpush1.msra.mxu0 0.0
    %4344 = vmatprep.mubr.f32.mxu0 0.0
    %4345 = vmatmul.mubr.f32.gmra.mrb[0].mxu0 %v1919
    %v4346 = vpop.f32.mrb[0].mxu0
    %v4347 = vadd.f32 0.0, %v4346
    %v4348 = vpop.f32.mrb[0].mxu0
    %4349 = vdwg.mxu0
    %v4350 = vadd.f32 %v4206, %v4276
    %v4351 = vxor.u32 %v4350, 2147483648
    %v4352 = vmul.f32 %v4351, 1.442695
    %v4353 = vpow.pop %v4352
    %v4354 = vadd.f32 %v4353, 1.0
    %v4355 = vrcp.pop %v4354
    %v4356 = vmul.f32 1.0, %v4355
    %v4357 = vadd.f32 %v4207, %v4278
    %v4358 = vxor.u32 %v4357, 2147483648
    %v4359 = vmul.f32 %v4358, 1.442695
    %v4360 = vpow.pop %v4359
    %v4361 = vadd.f32 %v4360, 1.0
    %v4362 = vrcp.pop %v4361
    %v4363 = vmul.f32 1.0, %v4362
    %v4364 = vadd.f32 %v4347, %v4204
    %v4365 = vmul.f32 %v4356, %v4364
    %v4366 = vadd.f32 %v4208, %v4365
    %v4367 = vtanh.pop %v4366
    %v4368 = vsub.f32 1.0, %v4363
    %v4369 = vmul.f32 %v4368, %v4367
    %v4370 = vmul.f32 %v4363, %v1919
    %v4371 = vadd.f32 %v4369, %v4370
    %4372 = vst [vmem:[#allocation3] sm:$0xff] %v4371
    %v4373 = vld [vmem:[%s739] sm:$0xff]
    %v4374 = vld [vmem:[%s739 + $0x8] sm:$0xff]
    %v4375 = vld [vmem:[%s739 + $0x10] sm:$0xff]
    %4376 = vmatprep.subr.mxu0 %v3837
    %4377 = vmatpush1.msra.mxu0 %v3836
    %4378 = vmatprep.subr.mxu0 %v3840
    %4379 = vmatpush1.msra.mxu0 %v3839
    %4380 = vmatprep.subr.mxu0 %v3843
    %4381 = vmatpush1.msra.mxu0 %v3842
    %4382 = vmatprep.subr.mxu0 %v3846
    %4383 = vmatpush1.msra.mxu0 %v3845
    %4384 = vmatprep.subr.mxu0 %v3849
    %4385 = vmatpush1.msra.mxu0 %v3848
    %4386 = vmatprep.subr.mxu0 %v3852
    %4387 = vmatpush1.msra.mxu0 %v3851
    %4388 = vmatprep.subr.mxu0 %v3855
    %4389 = vmatpush1.msra.mxu0 %v3854
    %4390 = vmatprep.subr.mxu0 %v3858
    %4391 = vmatpush1.msra.mxu0 %v3857
    %4392 = vmatprep.subr.mxu0 %v3861
    %4393 = vmatpush1.msra.mxu0 %v3860
    %4394 = vmatprep.subr.mxu0 %v3864
    %4395 = vmatpush1.msra.mxu0 %v3863
    %4396 = vmatprep.subr.mxu0 %v3867
    %4397 = vmatpush1.msra.mxu0 %v3866
    %4398 = vmatprep.subr.mxu0 %v3870
    %4399 = vmatpush1.msra.mxu0 %v3869
    %4400 = vmatprep.subr.mxu0 %v3873
    %4401 = vmatpush1.msra.mxu0 %v3872
    %4402 = vmatprep.subr.mxu0 %v3876
    %4403 = vmatpush1.msra.mxu0 %v3875
    %4404 = vmatprep.subr.mxu0 %v3879
    %4405 = vmatpush1.msra.mxu0 %v3878
    %4406 = vmatprep.subr.mxu0 %v3882
    %4407 = vmatpush1.msra.mxu0 %v3881
    %4408 = vmatprep.subr.mxu0 0.0
    %4409 = vmatpush1.msra.mxu0 0.0
    %4410 = vmatprep.subr.mxu0 0.0
    %4411 = vmatpush1.msra.mxu0 0.0
    %4412 = vmatprep.subr.mxu0 0.0
    %4413 = vmatpush1.msra.mxu0 0.0
    %4414 = vmatprep.subr.mxu0 0.0
    %4415 = vmatpush1.msra.mxu0 0.0
    %4416 = vmatprep.subr.mxu0 0.0
    %4417 = vmatpush1.msra.mxu0 0.0
    %4418 = vmatprep.subr.mxu0 0.0
    %4419 = vmatpush1.msra.mxu0 0.0
    %4420 = vmatprep.subr.mxu0 0.0
    %4421 = vmatpush1.msra.mxu0 0.0
    %4422 = vmatprep.subr.mxu0 0.0
    %4423 = vmatpush1.msra.mxu0 0.0
    %4424 = vmatprep.subr.mxu0 0.0
    %4425 = vmatpush1.msra.mxu0 0.0
    %4426 = vmatprep.subr.mxu0 0.0
    %4427 = vmatpush1.msra.mxu0 0.0
    %4428 = vmatprep.subr.mxu0 0.0
    %4429 = vmatpush1.msra.mxu0 0.0
    %4430 = vmatprep.subr.mxu0 0.0
    %4431 = vmatpush1.msra.mxu0 0.0
    %4432 = vmatprep.subr.mxu0 0.0
    %4433 = vmatpush1.msra.mxu0 0.0
    %4434 = vmatprep.subr.mxu0 0.0
    %4435 = vmatpush1.msra.mxu0 0.0
    %4436 = vmatprep.subr.mxu0 0.0
    %4437 = vmatpush1.msra.mxu0 0.0
    %4438 = vmatprep.subr.mxu0 0.0
    %4439 = vmatpush1.msra.mxu0 0.0
    %4440 = vmatprep.mubr.f32.mxu0 0.0
    %4441 = vmatmul.mubr.f32.gmra.mrb[0].mxu0 %v4371
    %v4442 = vpop.f32.mrb[0].mxu0
    %v4443 = vadd.f32 0.0, %v4442
    %v4444 = vpop.f32.mrb[0].mxu0
    %v4445 = vadd.f32 0.0, %v4444
    %4446 = vdwg.mxu0
    %4447 = vmatprep.subr.mxu0 0.0
    %4448 = vmatpush1.msra.mxu0 %v3838
    %4449 = vmatprep.subr.mxu0 0.0
    %4450 = vmatpush1.msra.mxu0 %v3841
    %4451 = vmatprep.subr.mxu0 0.0
    %4452 = vmatpush1.msra.mxu0 %v3844
    %4453 = vmatprep.subr.mxu0 0.0
    %4454 = vmatpush1.msra.mxu0 %v3847
    %4455 = vmatprep.subr.mxu0 0.0
    %4456 = vmatpush1.msra.mxu0 %v3850
    %4457 = vmatprep.subr.mxu0 0.0
    %4458 = vmatpush1.msra.mxu0 %v3853
    %4459 = vmatprep.subr.mxu0 0.0
    %4460 = vmatpush1.msra.mxu0 %v3856
    %4461 = vmatprep.subr.mxu0 0.0
    %4462 = vmatpush1.msra.mxu0 %v3859
    %4463 = vmatprep.subr.mxu0 0.0
    %4464 = vmatpush1.msra.mxu0 %v3862
    %4465 = vmatprep.subr.mxu0 0.0
    %4466 = vmatpush1.msra.mxu0 %v3865
    %4467 = vmatprep.subr.mxu0 0.0
    %4468 = vmatpush1.msra.mxu0 %v3868
    %4469 = vmatprep.subr.mxu0 0.0
    %4470 = vmatpush1.msra.mxu0 %v3871
    %4471 = vmatprep.subr.mxu0 0.0
    %4472 = vmatpush1.msra.mxu0 %v3874
    %4473 = vmatprep.subr.mxu0 0.0
    %4474 = vmatpush1.msra.mxu0 %v3877
    %4475 = vmatprep.subr.mxu0 0.0
    %4476 = vmatpush1.msra.mxu0 %v3880
    %4477 = vmatprep.subr.mxu0 0.0
    %4478 = vmatpush1.msra.mxu0 %v3883
    %4479 = vmatprep.subr.mxu0 0.0
    %4480 = vmatpush1.msra.mxu0 0.0
    %4481 = vmatprep.subr.mxu0 0.0
    %4482 = vmatpush1.msra.mxu0 0.0
    %4483 = vmatprep.subr.mxu0 0.0
    %4484 = vmatpush1.msra.mxu0 0.0
    %4485 = vmatprep.subr.mxu0 0.0
    %4486 = vmatpush1.msra.mxu0 0.0
    %4487 = vmatprep.subr.mxu0 0.0
    %4488 = vmatpush1.msra.mxu0 0.0
    %4489 = vmatprep.subr.mxu0 0.0
    %4490 = vmatpush1.msra.mxu0 0.0
    %4491 = vmatprep.subr.mxu0 0.0
    %4492 = vmatpush1.msra.mxu0 0.0
    %4493 = vmatprep.subr.mxu0 0.0
    %4494 = vmatpush1.msra.mxu0 0.0
    %4495 = vmatprep.subr.mxu0 0.0
    %4496 = vmatpush1.msra.mxu0 0.0
    %4497 = vmatprep.subr.mxu0 0.0
    %4498 = vmatpush1.msra.mxu0 0.0
    %4499 = vmatprep.subr.mxu0 0.0
    %4500 = vmatpush1.msra.mxu0 0.0
    %4501 = vmatprep.subr.mxu0 0.0
    %4502 = vmatpush1.msra.mxu0 0.0
    %4503 = vmatprep.subr.mxu0 0.0
    %4504 = vmatpush1.msra.mxu0 0.0
    %4505 = vmatprep.subr.mxu0 0.0
    %4506 = vmatpush1.msra.mxu0 0.0
    %4507 = vmatprep.subr.mxu0 0.0
    %4508 = vmatpush1.msra.mxu0 0.0
    %4509 = vmatprep.subr.mxu0 0.0
    %4510 = vmatpush1.msra.mxu0 0.0
    %4511 = vmatprep.mubr.f32.mxu0 0.0
    %4512 = vmatmul.mubr.f32.gmra.mrb[0].mxu0 %v4371
    %v4513 = vpop.f32.mrb[0].mxu0
    %v4514 = vadd.f32 0.0, %v4513
    %v4515 = vpop.f32.mrb[0].mxu0
    %4516 = vdwg.mxu0
    %v4517 = vadd.f32 %v4373, %v4443
    %v4518 = vxor.u32 %v4517, 2147483648
    %v4519 = vmul.f32 %v4518, 1.442695
    %v4520 = vpow.pop %v4519
    %v4521 = vadd.f32 %v4520, 1.0
    %v4522 = vrcp.pop %v4521
    %v4523 = vmul.f32 1.0, %v4522
    %v4524 = vadd.f32 %v4374, %v4445
    %v4525 = vxor.u32 %v4524, 2147483648
    %v4526 = vmul.f32 %v4525, 1.442695
    %v4527 = vpow.pop %v4526
    %v4528 = vadd.f32 %v4527, 1.0
    %v4529 = vrcp.pop %v4528
    %v4530 = vmul.f32 1.0, %v4529
    %v4531 = vadd.f32 %v4514, %v4204
    %v4532 = vmul.f32 %v4523, %v4531
    %v4533 = vadd.f32 %v4375, %v4532
    %v4534 = vtanh.pop %v4533
    %v4535 = vsub.f32 1.0, %v4530
    %v4536 = vmul.f32 %v4535, %v4534
    %v4537 = vmul.f32 %v4530, %v4371
    %v4538 = vadd.f32 %v4536, %v4537
    %4539 = vst [vmem:[%s2627] sm:$0xff] %v4538
    %v4540 = vld [vmem:[%s908] sm:$0xff]
    %v4541 = vld [vmem:[%s908 + $0x8] sm:$0xff]
    %v4542 = vld [vmem:[%s908 + $0x10] sm:$0xff]
    %4543 = vmatprep.subr.mxu0 %v3837
    %4544 = vmatpush1.msra.mxu0 %v3836
    %4545 = vmatprep.subr.mxu0 %v3840
    %4546 = vmatpush1.msra.mxu0 %v3839
    %4547 = vmatprep.subr.mxu0 %v3843
    %4548 = vmatpush1.msra.mxu0 %v3842
    %4549 = vmatprep.subr.mxu0 %v3846
    %4550 = vmatpush1.msra.mxu0 %v3845
    %4551 = vmatprep.subr.mxu0 %v3849
    %4552 = vmatpush1.msra.mxu0 %v3848
    %4553 = vmatprep.subr.mxu0 %v3852
    %4554 = vmatpush1.msra.mxu0 %v3851
    %4555 = vmatprep.subr.mxu0 %v3855
    %4556 = vmatpush1.msra.mxu0 %v3854
    %4557 = vmatprep.subr.mxu0 %v3858
    %4558 = vmatpush1.msra.mxu0 %v3857
    %4559 = vmatprep.subr.mxu0 %v3861
    %4560 = vmatpush1.msra.mxu0 %v3860
    %4561 = vmatprep.subr.mxu0 %v3864
    %4562 = vmatpush1.msra.mxu0 %v3863
    %4563 = vmatprep.subr.mxu0 %v3867
    %4564 = vmatpush1.msra.mxu0 %v3866
    %4565 = vmatprep.subr.mxu0 %v3870
    %4566 = vmatpush1.msra.mxu0 %v3869
    %4567 = vmatprep.subr.mxu0 %v3873
    %4568 = vmatpush1.msra.mxu0 %v3872
    %4569 = vmatprep.subr.mxu0 %v3876
    %4570 = vmatpush1.msra.mxu0 %v3875
    %4571 = vmatprep.subr.mxu0 %v3879
    %4572 = vmatpush1.msra.mxu0 %v3878
    %4573 = vmatprep.subr.mxu0 %v3882
    %4574 = vmatpush1.msra.mxu0 %v3881
    %4575 = vmatprep.subr.mxu0 0.0
    %4576 = vmatpush1.msra.mxu0 0.0
    %4577 = vmatprep.subr.mxu0 0.0
    %4578 = vmatpush1.msra.mxu0 0.0
    %4579 = vmatprep.subr.mxu0 0.0
    %4580 = vmatpush1.msra.mxu0 0.0
    %4581 = vmatprep.subr.mxu0 0.0
    %4582 = vmatpush1.msra.mxu0 0.0
    %4583 = vmatprep.subr.mxu0 0.0
    %4584 = vmatpush1.msra.mxu0 0.0
    %4585 = vmatprep.subr.mxu0 0.0
    %4586 = vmatpush1.msra.mxu0 0.0
    %4587 = vmatprep.subr.mxu0 0.0
    %4588 = vmatpush1.msra.mxu0 0.0
    %4589 = vmatprep.subr.mxu0 0.0
    %4590 = vmatpush1.msra.mxu0 0.0
    %4591 = vmatprep.subr.mxu0 0.0
    %4592 = vmatpush1.msra.mxu0 0.0
    %4593 = vmatprep.subr.mxu0 0.0
    %4594 = vmatpush1.msra.mxu0 0.0
    %4595 = vmatprep.subr.mxu0 0.0
    %4596 = vmatpush1.msra.mxu0 0.0
    %4597 = vmatprep.subr.mxu0 0.0
    %4598 = vmatpush1.msra.mxu0 0.0
    %4599 = vmatprep.subr.mxu0 0.0
    %4600 = vmatpush1.msra.mxu0 0.0
    %4601 = vmatprep.subr.mxu0 0.0
    %4602 = vmatpush1.msra.mxu0 0.0
    %4603 = vmatprep.subr.mxu0 0.0
    %4604 = vmatpush1.msra.mxu0 0.0
    %4605 = vmatprep.subr.mxu0 0.0
    %4606 = vmatpush1.msra.mxu0 0.0
    %4607 = vmatprep.mubr.f32.mxu0 0.0
    %4608 = vmatmul.mubr.f32.gmra.mrb[0].mxu0 %v4538
    %v4609 = vpop.f32.mrb[0].mxu0
    %v4610 = vadd.f32 0.0, %v4609
    %v4611 = vpop.f32.mrb[0].mxu0
    %v4612 = vadd.f32 0.0, %v4611
    %4613 = vdwg.mxu0
    %4614 = vmatprep.subr.mxu0 0.0
    %4615 = vmatpush1.msra.mxu0 %v3838
    %4616 = vmatprep.subr.mxu0 0.0
    %4617 = vmatpush1.msra.mxu0 %v3841
    %4618 = vmatprep.subr.mxu0 0.0
    %4619 = vmatpush1.msra.mxu0 %v3844
    %4620 = vmatprep.subr.mxu0 0.0
    %4621 = vmatpush1.msra.mxu0 %v3847
    %4622 = vmatprep.subr.mxu0 0.0
    %4623 = vmatpush1.msra.mxu0 %v3850
    %4624 = vmatprep.subr.mxu0 0.0
    %4625 = vmatpush1.msra.mxu0 %v3853
    %4626 = vmatprep.subr.mxu0 0.0
    %4627 = vmatpush1.msra.mxu0 %v3856
    %4628 = vmatprep.subr.mxu0 0.0
    %4629 = vmatpush1.msra.mxu0 %v3859
    %4630 = vmatprep.subr.mxu0 0.0
    %4631 = vmatpush1.msra.mxu0 %v3862
    %4632 = vmatprep.subr.mxu0 0.0
    %4633 = vmatpush1.msra.mxu0 %v3865
    %4634 = vmatprep.subr.mxu0 0.0
    %4635 = vmatpush1.msra.mxu0 %v3868
    %4636 = vmatprep.subr.mxu0 0.0
    %4637 = vmatpush1.msra.mxu0 %v3871
    %4638 = vmatprep.subr.mxu0 0.0
    %4639 = vmatpush1.msra.mxu0 %v3874
    %4640 = vmatprep.subr.mxu0 0.0
    %4641 = vmatpush1.msra.mxu0 %v3877
    %4642 = vmatprep.subr.mxu0 0.0
    %4643 = vmatpush1.msra.mxu0 %v3880
    %4644 = vmatprep.subr.mxu0 0.0
    %4645 = vmatpush1.msra.mxu0 %v3883
    %4646 = vmatprep.subr.mxu0 0.0
    %4647 = vmatpush1.msra.mxu0 0.0
    %4648 = vmatprep.subr.mxu0 0.0
    %4649 = vmatpush1.msra.mxu0 0.0
    %4650 = vmatprep.subr.mxu0 0.0
    %4651 = vmatpush1.msra.mxu0 0.0
    %4652 = vmatprep.subr.mxu0 0.0
    %4653 = vmatpush1.msra.mxu0 0.0
    %4654 = vmatprep.subr.mxu0 0.0
    %4655 = vmatpush1.msra.mxu0 0.0
    %4656 = vmatprep.subr.mxu0 0.0
    %4657 = vmatpush1.msra.mxu0 0.0
    %4658 = vmatprep.subr.mxu0 0.0
    %4659 = vmatpush1.msra.mxu0 0.0
    %4660 = vmatprep.subr.mxu0 0.0
    %4661 = vmatpush1.msra.mxu0 0.0
    %4662 = vmatprep.subr.mxu0 0.0
    %4663 = vmatpush1.msra.mxu0 0.0
    %4664 = vmatprep.subr.mxu0 0.0
    %4665 = vmatpush1.msra.mxu0 0.0
    %4666 = vmatprep.subr.mxu0 0.0
    %4667 = vmatpush1.msra.mxu0 0.0
    %4668 = vmatprep.subr.mxu0 0.0
    %4669 = vmatpush1.msra.mxu0 0.0
    %4670 = vmatprep.subr.mxu0 0.0
    %4671 = vmatpush1.msra.mxu0 0.0
    %4672 = vmatprep.subr.mxu0 0.0
    %4673 = vmatpush1.msra.mxu0 0.0
    %4674 = vmatprep.subr.mxu0 0.0
    %4675 = vmatpush1.msra.mxu0 0.0
    %4676 = vmatprep.subr.mxu0 0.0
    %4677 = vmatpush1.msra.mxu0 0.0
    %4678 = vmatprep.mubr.f32.mxu0 0.0
    %4679 = vmatmul.mubr.f32.gmra.mrb[0].mxu0 %v4538
    %v4680 = vpop.f32.mrb[0].mxu0
    %v4681 = vadd.f32 0.0, %v4680
    %v4682 = vpop.f32.mrb[0].mxu0
    %4683 = vdwg.mxu0
    %v4684 = vadd.f32 %v4540, %v4610
    %v4685 = vxor.u32 %v4684, 2147483648
    %v4686 = vmul.f32 %v4685, 1.442695
    %v4687 = vpow.pop %v4686
    %v4688 = vadd.f32 %v4687, 1.0
    %v4689 = vrcp.pop %v4688
    %v4690 = vmul.f32 1.0, %v4689
    %v4691 = vadd.f32 %v4541, %v4612
    %v4692 = vxor.u32 %v4691, 2147483648
    %v4693 = vmul.f32 %v4692, 1.442695
    %v4694 = vpow.pop %v4693
    %v4695 = vadd.f32 %v4694, 1.0
    %v4696 = vrcp.pop %v4695
    %v4697 = vmul.f32 1.0, %v4696
    %v4698 = vadd.f32 %v4681, %v4204
    %v4699 = vmul.f32 %v4690, %v4698
    %v4700 = vadd.f32 %v4542, %v4699
    %v4701 = vtanh.pop %v4700
    %v4702 = vsub.f32 1.0, %v4697
    %v4703 = vmul.f32 %v4702, %v4701
    %v4704 = vmul.f32 %v4697, %v4538
    %v4705 = vadd.f32 %v4703, %v4704
    %4706 = vst [vmem:[%s2795] sm:$0xff] %v4705
    %v4707 = vld [vmem:[%s1077] sm:$0xff]
    %v4708 = vld [vmem:[%s1077 + $0x8] sm:$0xff]
    %v4709 = vld [vmem:[%s1077 + $0x10] sm:$0xff]
    %4710 = vmatprep.subr.mxu0 %v3837
    %4711 = vmatpush1.msra.mxu0 %v3836
    %4712 = vmatprep.subr.mxu0 %v3840
    %4713 = vmatpush1.msra.mxu0 %v3839
    %4714 = vmatprep.subr.mxu0 %v3843
    %4715 = vmatpush1.msra.mxu0 %v3842
    %4716 = vmatprep.subr.mxu0 %v3846
    %4717 = vmatpush1.msra.mxu0 %v3845
    %4718 = vmatprep.subr.mxu0 %v3849
    %4719 = vmatpush1.msra.mxu0 %v3848
    %4720 = vmatprep.subr.mxu0 %v3852
    %4721 = vmatpush1.msra.mxu0 %v3851
    %4722 = vmatprep.subr.mxu0 %v3855
    %4723 = vmatpush1.msra.mxu0 %v3854
    %4724 = vmatprep.subr.mxu0 %v3858
    %4725 = vmatpush1.msra.mxu0 %v3857
    %4726 = vmatprep.subr.mxu0 %v3861
    %4727 = vmatpush1.msra.mxu0 %v3860
    %4728 = vmatprep.subr.mxu0 %v3864
    %4729 = vmatpush1.msra.mxu0 %v3863
    %4730 = vmatprep.subr.mxu0 %v3867
    %4731 = vmatpush1.msra.mxu0 %v3866
    %4732 = vmatprep.subr.mxu0 %v3870
    %4733 = vmatpush1.msra.mxu0 %v3869
    %4734 = vmatprep.subr.mxu0 %v3873
    %4735 = vmatpush1.msra.mxu0 %v3872
    %4736 = vmatprep.subr.mxu0 %v3876
    %4737 = vmatpush1.msra.mxu0 %v3875
    %4738 = vmatprep.subr.mxu0 %v3879
    %4739 = vmatpush1.msra.mxu0 %v3878
    %4740 = vmatprep.subr.mxu0 %v3882
    %4741 = vmatpush1.msra.mxu0 %v3881
    %4742 = vmatprep.subr.mxu0 0.0
    %4743 = vmatpush1.msra.mxu0 0.0
    %4744 = vmatprep.subr.mxu0 0.0
    %4745 = vmatpush1.msra.mxu0 0.0
    %4746 = vmatprep.subr.mxu0 0.0
    %4747 = vmatpush1.msra.mxu0 0.0
    %4748 = vmatprep.subr.mxu0 0.0
    %4749 = vmatpush1.msra.mxu0 0.0
    %4750 = vmatprep.subr.mxu0 0.0
    %4751 = vmatpush1.msra.mxu0 0.0
    %4752 = vmatprep.subr.mxu0 0.0
    %4753 = vmatpush1.msra.mxu0 0.0
    %4754 = vmatprep.subr.mxu0 0.0
    %4755 = vmatpush1.msra.mxu0 0.0
    %4756 = vmatprep.subr.mxu0 0.0
    %4757 = vmatpush1.msra.mxu0 0.0
    %4758 = vmatprep.subr.mxu0 0.0
    %4759 = vmatpush1.msra.mxu0 0.0
    %4760 = vmatprep.subr.mxu0 0.0
    %4761 = vmatpush1.msra.mxu0 0.0
    %4762 = vmatprep.subr.mxu0 0.0
    %4763 = vmatpush1.msra.mxu0 0.0
    %4764 = vmatprep.subr.mxu0 0.0
    %4765 = vmatpush1.msra.mxu0 0.0
    %4766 = vmatprep.subr.mxu0 0.0
    %4767 = vmatpush1.msra.mxu0 0.0
    %4768 = vmatprep.subr.mxu0 0.0
    %4769 = vmatpush1.msra.mxu0 0.0
    %4770 = vmatprep.subr.mxu0 0.0
    %4771 = vmatpush1.msra.mxu0 0.0
    %4772 = vmatprep.subr.mxu0 0.0
    %4773 = vmatpush1.msra.mxu0 0.0
    %4774 = vmatprep.mubr.f32.mxu0 0.0
    %4775 = vmatmul.mubr.f32.gmra.mrb[0].mxu0 %v4705
    %v4776 = vpop.f32.mrb[0].mxu0
    %v4777 = vadd.f32 0.0, %v4776
    %v4778 = vpop.f32.mrb[0].mxu0
    %v4779 = vadd.f32 0.0, %v4778
    %4780 = vdwg.mxu0
    %4781 = vmatprep.subr.mxu0 0.0
    %4782 = vmatpush1.msra.mxu0 %v3838
    %4783 = vmatprep.subr.mxu0 0.0
    %4784 = vmatpush1.msra.mxu0 %v3841
    %4785 = vmatprep.subr.mxu0 0.0
    %4786 = vmatpush1.msra.mxu0 %v3844
    %4787 = vmatprep.subr.mxu0 0.0
    %4788 = vmatpush1.msra.mxu0 %v3847
    %4789 = vmatprep.subr.mxu0 0.0
    %4790 = vmatpush1.msra.mxu0 %v3850
    %4791 = vmatprep.subr.mxu0 0.0
    %4792 = vmatpush1.msra.mxu0 %v3853
    %4793 = vmatprep.subr.mxu0 0.0
    %4794 = vmatpush1.msra.mxu0 %v3856
    %4795 = vmatprep.subr.mxu0 0.0
    %4796 = vmatpush1.msra.mxu0 %v3859
    %4797 = vmatprep.subr.mxu0 0.0
    %4798 = vmatpush1.msra.mxu0 %v3862
    %4799 = vmatprep.subr.mxu0 0.0
    %4800 = vmatpush1.msra.mxu0 %v3865
    %4801 = vmatprep.subr.mxu0 0.0
    %4802 = vmatpush1.msra.mxu0 %v3868
    %4803 = vmatprep.subr.mxu0 0.0
    %4804 = vmatpush1.msra.mxu0 %v3871
    %4805 = vmatprep.subr.mxu0 0.0
    %4806 = vmatpush1.msra.mxu0 %v3874
    %4807 = vmatprep.subr.mxu0 0.0
    %4808 = vmatpush1.msra.mxu0 %v3877
    %4809 = vmatprep.subr.mxu0 0.0
    %4810 = vmatpush1.msra.mxu0 %v3880
    %4811 = vmatprep.subr.mxu0 0.0
    %4812 = vmatpush1.msra.mxu0 %v3883
    %4813 = vmatprep.subr.mxu0 0.0
    %4814 = vmatpush1.msra.mxu0 0.0
    %4815 = vmatprep.subr.mxu0 0.0
    %4816 = vmatpush1.msra.mxu0 0.0
    %4817 = vmatprep.subr.mxu0 0.0
    %4818 = vmatpush1.msra.mxu0 0.0
    %4819 = vmatprep.subr.mxu0 0.0
    %4820 = vmatpush1.msra.mxu0 0.0
    %4821 = vmatprep.subr.mxu0 0.0
    %4822 = vmatpush1.msra.mxu0 0.0
    %4823 = vmatprep.subr.mxu0 0.0
    %4824 = vmatpush1.msra.mxu0 0.0
    %4825 = vmatprep.subr.mxu0 0.0
    %4826 = vmatpush1.msra.mxu0 0.0
    %4827 = vmatprep.subr.mxu0 0.0
    %4828 = vmatpush1.msra.mxu0 0.0
    %4829 = vmatprep.subr.mxu0 0.0
    %4830 = vmatpush1.msra.mxu0 0.0
    %4831 = vmatprep.subr.mxu0 0.0
    %4832 = vmatpush1.msra.mxu0 0.0
    %4833 = vmatprep.subr.mxu0 0.0
    %4834 = vmatpush1.msra.mxu0 0.0
    %4835 = vmatprep.subr.mxu0 0.0
    %4836 = vmatpush1.msra.mxu0 0.0
    %4837 = vmatprep.subr.mxu0 0.0
    %4838 = vmatpush1.msra.mxu0 0.0
    %4839 = vmatprep.subr.mxu0 0.0
    %4840 = vmatpush1.msra.mxu0 0.0
    %4841 = vmatprep.subr.mxu0 0.0
    %4842 = vmatpush1.msra.mxu0 0.0
    %4843 = vmatprep.subr.mxu0 0.0
    %4844 = vmatpush1.msra.mxu0 0.0
    %4845 = vmatprep.mubr.f32.mxu0 0.0
    %4846 = vmatmul.mubr.f32.gmra.mrb[0].mxu0 %v4705
    %v4847 = vpop.f32.mrb[0].mxu0
    %v4848 = vadd.f32 0.0, %v4847
    %v4849 = vpop.f32.mrb[0].mxu0
    %4850 = vdwg.mxu0
    %v4851 = vadd.f32 %v4707, %v4777
    %v4852 = vxor.u32 %v4851, 2147483648
    %v4853 = vmul.f32 %v4852, 1.442695
    %v4854 = vpow.pop %v4853
    %v4855 = vadd.f32 %v4854, 1.0
    %v4856 = vrcp.pop %v4855
    %v4857 = vmul.f32 1.0, %v4856
    %v4858 = vadd.f32 %v4708, %v4779
    %v4859 = vxor.u32 %v4858, 2147483648
    %v4860 = vmul.f32 %v4859, 1.442695
    %v4861 = vpow.pop %v4860
    %v4862 = vadd.f32 %v4861, 1.0
    %v4863 = vrcp.pop %v4862
    %v4864 = vmul.f32 1.0, %v4863
    %v4865 = vadd.f32 %v4848, %v4204
    %v4866 = vmul.f32 %v4857, %v4865
    %v4867 = vadd.f32 %v4709, %v4866
    %v4868 = vtanh.pop %v4867
    %v4869 = vsub.f32 1.0, %v4864
    %v4870 = vmul.f32 %v4869, %v4868
    %v4871 = vmul.f32 %v4864, %v4705
    %v4872 = vadd.f32 %v4870, %v4871
    %4873 = vst [vmem:[%s2963] sm:$0xff] %v4872
    %v4874 = vld [vmem:[%s1246] sm:$0xff]
    %v4875 = vld [vmem:[%s1246 + $0x8] sm:$0xff]
    %v4876 = vld [vmem:[%s1246 + $0x10] sm:$0xff]
    %4877 = vmatprep.subr.mxu0 %v3837
    %4878 = vmatpush1.msra.mxu0 %v3836
    %4879 = vmatprep.subr.mxu0 %v3840
    %4880 = vmatpush1.msra.mxu0 %v3839
    %4881 = vmatprep.subr.mxu0 %v3843
    %4882 = vmatpush1.msra.mxu0 %v3842
    %4883 = vmatprep.subr.mxu0 %v3846
    %4884 = vmatpush1.msra.mxu0 %v3845
    %4885 = vmatprep.subr.mxu0 %v3849
    %4886 = vmatpush1.msra.mxu0 %v3848
    %4887 = vmatprep.subr.mxu0 %v3852
    %4888 = vmatpush1.msra.mxu0 %v3851
    %4889 = vmatprep.subr.mxu0 %v3855
    %4890 = vmatpush1.msra.mxu0 %v3854
    %4891 = vmatprep.subr.mxu0 %v3858
    %4892 = vmatpush1.msra.mxu0 %v3857
    %4893 = vmatprep.subr.mxu0 %v3861
    %4894 = vmatpush1.msra.mxu0 %v3860
    %4895 = vmatprep.subr.mxu0 %v3864
    %4896 = vmatpush1.msra.mxu0 %v3863
    %4897 = vmatprep.subr.mxu0 %v3867
    %4898 = vmatpush1.msra.mxu0 %v3866
    %4899 = vmatprep.subr.mxu0 %v3870
    %4900 = vmatpush1.msra.mxu0 %v3869
    %4901 = vmatprep.subr.mxu0 %v3873
    %4902 = vmatpush1.msra.mxu0 %v3872
    %4903 = vmatprep.subr.mxu0 %v3876
    %4904 = vmatpush1.msra.mxu0 %v3875
    %4905 = vmatprep.subr.mxu0 %v3879
    %4906 = vmatpush1.msra.mxu0 %v3878
    %4907 = vmatprep.subr.mxu0 %v3882
    %4908 = vmatpush1.msra.mxu0 %v3881
    %4909 = vmatprep.subr.mxu0 0.0
    %4910 = vmatpush1.msra.mxu0 0.0
    %4911 = vmatprep.subr.mxu0 0.0
    %4912 = vmatpush1.msra.mxu0 0.0
    %4913 = vmatprep.subr.mxu0 0.0
    %4914 = vmatpush1.msra.mxu0 0.0
    %4915 = vmatprep.subr.mxu0 0.0
    %4916 = vmatpush1.msra.mxu0 0.0
    %4917 = vmatprep.subr.mxu0 0.0
    %4918 = vmatpush1.msra.mxu0 0.0
    %4919 = vmatprep.subr.mxu0 0.0
    %4920 = vmatpush1.msra.mxu0 0.0
    %4921 = vmatprep.subr.mxu0 0.0
    %4922 = vmatpush1.msra.mxu0 0.0
    %4923 = vmatprep.subr.mxu0 0.0
    %4924 = vmatpush1.msra.mxu0 0.0
    %4925 = vmatprep.subr.mxu0 0.0
    %4926 = vmatpush1.msra.mxu0 0.0
    %4927 = vmatprep.subr.mxu0 0.0
    %4928 = vmatpush1.msra.mxu0 0.0
    %4929 = vmatprep.subr.mxu0 0.0
    %4930 = vmatpush1.msra.mxu0 0.0
    %4931 = vmatprep.subr.mxu0 0.0
    %4932 = vmatpush1.msra.mxu0 0.0
    %4933 = vmatprep.subr.mxu0 0.0
    %4934 = vmatpush1.msra.mxu0 0.0
    %4935 = vmatprep.subr.mxu0 0.0
    %4936 = vmatpush1.msra.mxu0 0.0
    %4937 = vmatprep.subr.mxu0 0.0
    %4938 = vmatpush1.msra.mxu0 0.0
    %4939 = vmatprep.subr.mxu0 0.0
    %4940 = vmatpush1.msra.mxu0 0.0
    %4941 = vmatprep.mubr.f32.mxu0 0.0
    %4942 = vmatmul.mubr.f32.gmra.mrb[0].mxu0 %v4872
    %v4943 = vpop.f32.mrb[0].mxu0
    %v4944 = vadd.f32 0.0, %v4943
    %v4945 = vpop.f32.mrb[0].mxu0
    %v4946 = vadd.f32 0.0, %v4945
    %4947 = vdwg.mxu0
    %4948 = vmatprep.subr.mxu0 0.0
    %4949 = vmatpush1.msra.mxu0 %v3838
    %4950 = vmatprep.subr.mxu0 0.0
    %4951 = vmatpush1.msra.mxu0 %v3841
    %4952 = vmatprep.subr.mxu0 0.0
    %4953 = vmatpush1.msra.mxu0 %v3844
    %4954 = vmatprep.subr.mxu0 0.0
    %4955 = vmatpush1.msra.mxu0 %v3847
    %4956 = vmatprep.subr.mxu0 0.0
    %4957 = vmatpush1.msra.mxu0 %v3850
    %4958 = vmatprep.subr.mxu0 0.0
    %4959 = vmatpush1.msra.mxu0 %v3853
    %4960 = vmatprep.subr.mxu0 0.0
    %4961 = vmatpush1.msra.mxu0 %v3856
    %4962 = vmatprep.subr.mxu0 0.0
    %4963 = vmatpush1.msra.mxu0 %v3859
    %4964 = vmatprep.subr.mxu0 0.0
    %4965 = vmatpush1.msra.mxu0 %v3862
    %4966 = vmatprep.subr.mxu0 0.0
    %4967 = vmatpush1.msra.mxu0 %v3865
    %4968 = vmatprep.subr.mxu0 0.0
    %4969 = vmatpush1.msra.mxu0 %v3868
    %4970 = vmatprep.subr.mxu0 0.0
    %4971 = vmatpush1.msra.mxu0 %v3871
    %4972 = vmatprep.subr.mxu0 0.0
    %4973 = vmatpush1.msra.mxu0 %v3874
    %4974 = vmatprep.subr.mxu0 0.0
    %4975 = vmatpush1.msra.mxu0 %v3877
    %4976 = vmatprep.subr.mxu0 0.0
    %4977 = vmatpush1.msra.mxu0 %v3880
    %4978 = vmatprep.subr.mxu0 0.0
    %4979 = vmatpush1.msra.mxu0 %v3883
    %4980 = vmatprep.subr.mxu0 0.0
    %4981 = vmatpush1.msra.mxu0 0.0
    %4982 = vmatprep.subr.mxu0 0.0
    %4983 = vmatpush1.msra.mxu0 0.0
    %4984 = vmatprep.subr.mxu0 0.0
    %4985 = vmatpush1.msra.mxu0 0.0
    %4986 = vmatprep.subr.mxu0 0.0
    %4987 = vmatpush1.msra.mxu0 0.0
    %4988 = vmatprep.subr.mxu0 0.0
    %4989 = vmatpush1.msra.mxu0 0.0
    %4990 = vmatprep.subr.mxu0 0.0
    %4991 = vmatpush1.msra.mxu0 0.0
    %4992 = vmatprep.subr.mxu0 0.0
    %4993 = vmatpush1.msra.mxu0 0.0
    %4994 = vmatprep.subr.mxu0 0.0
    %4995 = vmatpush1.msra.mxu0 0.0
    %4996 = vmatprep.subr.mxu0 0.0
    %4997 = vmatpush1.msra.mxu0 0.0
    %4998 = vmatprep.subr.mxu0 0.0
    %4999 = vmatpush1.msra.mxu0 0.0
    %5000 = vmatprep.subr.mxu0 0.0
    %5001 = vmatpush1.msra.mxu0 0.0
    %5002 = vmatprep.subr.mxu0 0.0
    %5003 = vmatpush1.msra.mxu0 0.0
    %5004 = vmatprep.subr.mxu0 0.0
    %5005 = vmatpush1.msra.mxu0 0.0
    %5006 = vmatprep.subr.mxu0 0.0
    %5007 = vmatpush1.msra.mxu0 0.0
    %5008 = vmatprep.subr.mxu0 0.0
    %5009 = vmatpush1.msra.mxu0 0.0
    %5010 = vmatprep.subr.mxu0 0.0
    %5011 = vmatpush1.msra.mxu0 0.0
    %5012 = vmatprep.mubr.f32.mxu0 0.0
    %5013 = vmatmul.mubr.f32.gmra.mrb[0].mxu0 %v4872
    %v5014 = vpop.f32.mrb[0].mxu0
    %v5015 = vadd.f32 0.0, %v5014
    %v5016 = vpop.f32.mrb[0].mxu0
    %5017 = vdwg.mxu0
    %v5018 = vadd.f32 %v4874, %v4944
    %v5019 = vxor.u32 %v5018, 2147483648
    %v5020 = vmul.f32 %v5019, 1.442695
    %v5021 = vpow.pop %v5020
    %v5022 = vadd.f32 %v5021, 1.0
    %v5023 = vrcp.pop %v5022
    %v5024 = vmul.f32 1.0, %v5023
    %v5025 = vadd.f32 %v4875, %v4946
    %v5026 = vxor.u32 %v5025, 2147483648
    %v5027 = vmul.f32 %v5026, 1.442695
    %v5028 = vpow.pop %v5027
    %v5029 = vadd.f32 %v5028, 1.0
    %v5030 = vrcp.pop %v5029
    %v5031 = vmul.f32 1.0, %v5030
    %v5032 = vadd.f32 %v5015, %v4204
    %v5033 = vmul.f32 %v5024, %v5032
    %v5034 = vadd.f32 %v4876, %v5033
    %v5035 = vtanh.pop %v5034
    %v5036 = vsub.f32 1.0, %v5031
    %v5037 = vmul.f32 %v5036, %v5035
    %v5038 = vmul.f32 %v5031, %v4872
    %v5039 = vadd.f32 %v5037, %v5038
    %5040 = vst [vmem:[%s3131] sm:$0xff] %v5039
    %v5041 = vld [vmem:[%s1415] sm:$0xff]
    %v5042 = vld [vmem:[%s1415 + $0x8] sm:$0xff]
    %v5043 = vld [vmem:[%s1415 + $0x10] sm:$0xff]
    %5044 = vmatprep.subr.mxu0 %v3837
    %5045 = vmatpush1.msra.mxu0 %v3836
    %5046 = vmatprep.subr.mxu0 %v3840
    %5047 = vmatpush1.msra.mxu0 %v3839
    %5048 = vmatprep.subr.mxu0 %v3843
    %5049 = vmatpush1.msra.mxu0 %v3842
    %5050 = vmatprep.subr.mxu0 %v3846
    %5051 = vmatpush1.msra.mxu0 %v3845
    %5052 = vmatprep.subr.mxu0 %v3849
    %5053 = vmatpush1.msra.mxu0 %v3848
    %5054 = vmatprep.subr.mxu0 %v3852
    %5055 = vmatpush1.msra.mxu0 %v3851
    %5056 = vmatprep.subr.mxu0 %v3855
    %5057 = vmatpush1.msra.mxu0 %v3854
    %5058 = vmatprep.subr.mxu0 %v3858
    %5059 = vmatpush1.msra.mxu0 %v3857
    %5060 = vmatprep.subr.mxu0 %v3861
    %5061 = vmatpush1.msra.mxu0 %v3860
    %5062 = vmatprep.subr.mxu0 %v3864
    %5063 = vmatpush1.msra.mxu0 %v3863
    %5064 = vmatprep.subr.mxu0 %v3867
    %5065 = vmatpush1.msra.mxu0 %v3866
    %5066 = vmatprep.subr.mxu0 %v3870
    %5067 = vmatpush1.msra.mxu0 %v3869
    %5068 = vmatprep.subr.mxu0 %v3873
    %5069 = vmatpush1.msra.mxu0 %v3872
    %5070 = vmatprep.subr.mxu0 %v3876
    %5071 = vmatpush1.msra.mxu0 %v3875
    %5072 = vmatprep.subr.mxu0 %v3879
    %5073 = vmatpush1.msra.mxu0 %v3878
    %5074 = vmatprep.subr.mxu0 %v3882
    %5075 = vmatpush1.msra.mxu0 %v3881
    %5076 = vmatprep.subr.mxu0 0.0
    %5077 = vmatpush1.msra.mxu0 0.0
    %5078 = vmatprep.subr.mxu0 0.0
    %5079 = vmatpush1.msra.mxu0 0.0
    %5080 = vmatprep.subr.mxu0 0.0
    %5081 = vmatpush1.msra.mxu0 0.0
    %5082 = vmatprep.subr.mxu0 0.0
    %5083 = vmatpush1.msra.mxu0 0.0
    %5084 = vmatprep.subr.mxu0 0.0
    %5085 = vmatpush1.msra.mxu0 0.0
    %5086 = vmatprep.subr.mxu0 0.0
    %5087 = vmatpush1.msra.mxu0 0.0
    %5088 = vmatprep.subr.mxu0 0.0
    %5089 = vmatpush1.msra.mxu0 0.0
    %5090 = vmatprep.subr.mxu0 0.0
    %5091 = vmatpush1.msra.mxu0 0.0
    %5092 = vmatprep.subr.mxu0 0.0
    %5093 = vmatpush1.msra.mxu0 0.0
    %5094 = vmatprep.subr.mxu0 0.0
    %5095 = vmatpush1.msra.mxu0 0.0
    %5096 = vmatprep.subr.mxu0 0.0
    %5097 = vmatpush1.msra.mxu0 0.0
    %5098 = vmatprep.subr.mxu0 0.0
    %5099 = vmatpush1.msra.mxu0 0.0
    %5100 = vmatprep.subr.mxu0 0.0
    %5101 = vmatpush1.msra.mxu0 0.0
    %5102 = vmatprep.subr.mxu0 0.0
    %5103 = vmatpush1.msra.mxu0 0.0
    %5104 = vmatprep.subr.mxu0 0.0
    %5105 = vmatpush1.msra.mxu0 0.0
    %5106 = vmatprep.subr.mxu0 0.0
    %5107 = vmatpush1.msra.mxu0 0.0
    %5108 = vmatprep.mubr.f32.mxu0 0.0
    %5109 = vmatmul.mubr.f32.gmra.mrb[0].mxu0 %v5039
    %v5110 = vpop.f32.mrb[0].mxu0
    %v5111 = vadd.f32 0.0, %v5110
    %v5112 = vpop.f32.mrb[0].mxu0
    %v5113 = vadd.f32 0.0, %v5112
    %5114 = vdwg.mxu0
    %5115 = vmatprep.subr.mxu0 0.0
    %5116 = vmatpush1.msra.mxu0 %v3838
    %5117 = vmatprep.subr.mxu0 0.0
    %5118 = vmatpush1.msra.mxu0 %v3841
    %5119 = vmatprep.subr.mxu0 0.0
    %5120 = vmatpush1.msra.mxu0 %v3844
    %5121 = vmatprep.subr.mxu0 0.0
    %5122 = vmatpush1.msra.mxu0 %v3847
    %5123 = vmatprep.subr.mxu0 0.0
    %5124 = vmatpush1.msra.mxu0 %v3850
    %5125 = vmatprep.subr.mxu0 0.0
    %5126 = vmatpush1.msra.mxu0 %v3853
    %5127 = vmatprep.subr.mxu0 0.0
    %5128 = vmatpush1.msra.mxu0 %v3856
    %5129 = vmatprep.subr.mxu0 0.0
    %5130 = vmatpush1.msra.mxu0 %v3859
    %5131 = vmatprep.subr.mxu0 0.0
    %5132 = vmatpush1.msra.mxu0 %v3862
    %5133 = vmatprep.subr.mxu0 0.0
    %5134 = vmatpush1.msra.mxu0 %v3865
    %5135 = vmatprep.subr.mxu0 0.0
    %5136 = vmatpush1.msra.mxu0 %v3868
    %5137 = vmatprep.subr.mxu0 0.0
    %5138 = vmatpush1.msra.mxu0 %v3871
    %5139 = vmatprep.subr.mxu0 0.0
    %5140 = vmatpush1.msra.mxu0 %v3874
    %5141 = vmatprep.subr.mxu0 0.0
    %5142 = vmatpush1.msra.mxu0 %v3877
    %5143 = vmatprep.subr.mxu0 0.0
    %5144 = vmatpush1.msra.mxu0 %v3880
    %5145 = vmatprep.subr.mxu0 0.0
    %5146 = vmatpush1.msra.mxu0 %v3883
    %5147 = vmatprep.subr.mxu0 0.0
    %5148 = vmatpush1.msra.mxu0 0.0
    %5149 = vmatprep.subr.mxu0 0.0
    %5150 = vmatpush1.msra.mxu0 0.0
    %5151 = vmatprep.subr.mxu0 0.0
    %5152 = vmatpush1.msra.mxu0 0.0
    %5153 = vmatprep.subr.mxu0 0.0
    %5154 = vmatpush1.msra.mxu0 0.0
    %5155 = vmatprep.subr.mxu0 0.0
    %5156 = vmatpush1.msra.mxu0 0.0
    %5157 = vmatprep.subr.mxu0 0.0
    %5158 = vmatpush1.msra.mxu0 0.0
    %5159 = vmatprep.subr.mxu0 0.0
    %5160 = vmatpush1.msra.mxu0 0.0
    %5161 = vmatprep.subr.mxu0 0.0
    %5162 = vmatpush1.msra.mxu0 0.0
    %5163 = vmatprep.subr.mxu0 0.0
    %5164 = vmatpush1.msra.mxu0 0.0
    %5165 = vmatprep.subr.mxu0 0.0
    %5166 = vmatpush1.msra.mxu0 0.0
    %5167 = vmatprep.subr.mxu0 0.0
    %5168 = vmatpush1.msra.mxu0 0.0
    %5169 = vmatprep.subr.mxu0 0.0
    %5170 = vmatpush1.msra.mxu0 0.0
    %5171 = vmatprep.subr.mxu0 0.0
    %5172 = vmatpush1.msra.mxu0 0.0
    %5173 = vmatprep.subr.mxu0 0.0
    %5174 = vmatpush1.msra.mxu0 0.0
    %5175 = vmatprep.subr.mxu0 0.0
    %5176 = vmatpush1.msra.mxu0 0.0
    %5177 = vmatprep.subr.mxu0 0.0
    %5178 = vmatpush1.msra.mxu0 0.0
    %5179 = vmatprep.mubr.f32.mxu0 0.0
    %5180 = vmatmul.mubr.f32.gmra.mrb[0].mxu0 %v5039
    %v5181 = vpop.f32.mrb[0].mxu0
    %v5182 = vadd.f32 0.0, %v5181
    %v5183 = vpop.f32.mrb[0].mxu0
    %5184 = vdwg.mxu0
    %v5185 = vadd.f32 %v5041, %v5111
    %v5186 = vxor.u32 %v5185, 2147483648
    %v5187 = vmul.f32 %v5186, 1.442695
    %v5188 = vpow.pop %v5187
    %v5189 = vadd.f32 %v5188, 1.0
    %v5190 = vrcp.pop %v5189
    %v5191 = vmul.f32 1.0, %v5190
    %v5192 = vadd.f32 %v5042, %v5113
    %v5193 = vxor.u32 %v5192, 2147483648
    %v5194 = vmul.f32 %v5193, 1.442695
    %v5195 = vpow.pop %v5194
    %v5196 = vadd.f32 %v5195, 1.0
    %v5197 = vrcp.pop %v5196
    %v5198 = vmul.f32 1.0, %v5197
    %v5199 = vadd.f32 %v5182, %v4204
    %v5200 = vmul.f32 %v5191, %v5199
    %v5201 = vadd.f32 %v5043, %v5200
    %v5202 = vtanh.pop %v5201
    %v5203 = vsub.f32 1.0, %v5198
    %v5204 = vmul.f32 %v5203, %v5202
    %v5205 = vmul.f32 %v5198, %v5039
    %v5206 = vadd.f32 %v5204, %v5205
    %5207 = vst [vmem:[%s3299] sm:$0xff] %v5206
    %v5208 = vld [vmem:[%s1584] sm:$0xff]
    %v5209 = vld [vmem:[%s1584 + $0x8] sm:$0xff]
    %v5210 = vld [vmem:[%s1584 + $0x10] sm:$0xff]
    %5211 = vmatprep.subr.mxu0 %v3837
    %5212 = vmatpush1.msra.mxu0 %v3836
    %5213 = vmatprep.subr.mxu0 %v3840
    %5214 = vmatpush1.msra.mxu0 %v3839
    %5215 = vmatprep.subr.mxu0 %v3843
    %5216 = vmatpush1.msra.mxu0 %v3842
    %5217 = vmatprep.subr.mxu0 %v3846
    %5218 = vmatpush1.msra.mxu0 %v3845
    %5219 = vmatprep.subr.mxu0 %v3849
    %5220 = vmatpush1.msra.mxu0 %v3848
    %5221 = vmatprep.subr.mxu0 %v3852
    %5222 = vmatpush1.msra.mxu0 %v3851
    %5223 = vmatprep.subr.mxu0 %v3855
    %5224 = vmatpush1.msra.mxu0 %v3854
    %5225 = vmatprep.subr.mxu0 %v3858
    %5226 = vmatpush1.msra.mxu0 %v3857
    %5227 = vmatprep.subr.mxu0 %v3861
    %5228 = vmatpush1.msra.mxu0 %v3860
    %5229 = vmatprep.subr.mxu0 %v3864
    %5230 = vmatpush1.msra.mxu0 %v3863
    %5231 = vmatprep.subr.mxu0 %v3867
    %5232 = vmatpush1.msra.mxu0 %v3866
    %5233 = vmatprep.subr.mxu0 %v3870
    %5234 = vmatpush1.msra.mxu0 %v3869
    %5235 = vmatprep.subr.mxu0 %v3873
    %5236 = vmatpush1.msra.mxu0 %v3872
    %5237 = vmatprep.subr.mxu0 %v3876
    %5238 = vmatpush1.msra.mxu0 %v3875
    %5239 = vmatprep.subr.mxu0 %v3879
    %5240 = vmatpush1.msra.mxu0 %v3878
    %5241 = vmatprep.subr.mxu0 %v3882
    %5242 = vmatpush1.msra.mxu0 %v3881
    %5243 = vmatprep.subr.mxu0 0.0
    %5244 = vmatpush1.msra.mxu0 0.0
    %5245 = vmatprep.subr.mxu0 0.0
    %5246 = vmatpush1.msra.mxu0 0.0
    %5247 = vmatprep.subr.mxu0 0.0
    %5248 = vmatpush1.msra.mxu0 0.0
    %5249 = vmatprep.subr.mxu0 0.0
    %5250 = vmatpush1.msra.mxu0 0.0
    %5251 = vmatprep.subr.mxu0 0.0
    %5252 = vmatpush1.msra.mxu0 0.0
    %5253 = vmatprep.subr.mxu0 0.0
    %5254 = vmatpush1.msra.mxu0 0.0
    %5255 = vmatprep.subr.mxu0 0.0
    %5256 = vmatpush1.msra.mxu0 0.0
    %5257 = vmatprep.subr.mxu0 0.0
    %5258 = vmatpush1.msra.mxu0 0.0
    %5259 = vmatprep.subr.mxu0 0.0
    %5260 = vmatpush1.msra.mxu0 0.0
    %5261 = vmatprep.subr.mxu0 0.0
    %5262 = vmatpush1.msra.mxu0 0.0
    %5263 = vmatprep.subr.mxu0 0.0
    %5264 = vmatpush1.msra.mxu0 0.0
    %5265 = vmatprep.subr.mxu0 0.0
    %5266 = vmatpush1.msra.mxu0 0.0
    %5267 = vmatprep.subr.mxu0 0.0
    %5268 = vmatpush1.msra.mxu0 0.0
    %5269 = vmatprep.subr.mxu0 0.0
    %5270 = vmatpush1.msra.mxu0 0.0
    %5271 = vmatprep.subr.mxu0 0.0
    %5272 = vmatpush1.msra.mxu0 0.0
    %5273 = vmatprep.subr.mxu0 0.0
    %5274 = vmatpush1.msra.mxu0 0.0
    %5275 = vmatprep.mubr.f32.mxu0 0.0
    %5276 = vmatmul.mubr.f32.gmra.mrb[0].mxu0 %v5206
    %v5277 = vpop.f32.mrb[0].mxu0
    %v5278 = vadd.f32 0.0, %v5277
    %v5279 = vpop.f32.mrb[0].mxu0
    %v5280 = vadd.f32 0.0, %v5279
    %5281 = vdwg.mxu0
    %5282 = vmatprep.subr.mxu0 0.0
    %5283 = vmatpush1.msra.mxu0 %v3838
    %5284 = vmatprep.subr.mxu0 0.0
    %5285 = vmatpush1.msra.mxu0 %v3841
    %5286 = vmatprep.subr.mxu0 0.0
    %5287 = vmatpush1.msra.mxu0 %v3844
    %5288 = vmatprep.subr.mxu0 0.0
    %5289 = vmatpush1.msra.mxu0 %v3847
    %5290 = vmatprep.subr.mxu0 0.0
    %5291 = vmatpush1.msra.mxu0 %v3850
    %5292 = vmatprep.subr.mxu0 0.0
    %5293 = vmatpush1.msra.mxu0 %v3853
    %5294 = vmatprep.subr.mxu0 0.0
    %5295 = vmatpush1.msra.mxu0 %v3856
    %5296 = vmatprep.subr.mxu0 0.0
    %5297 = vmatpush1.msra.mxu0 %v3859
    %5298 = vmatprep.subr.mxu0 0.0
    %5299 = vmatpush1.msra.mxu0 %v3862
    %5300 = vmatprep.subr.mxu0 0.0
    %5301 = vmatpush1.msra.mxu0 %v3865
    %5302 = vmatprep.subr.mxu0 0.0
    %5303 = vmatpush1.msra.mxu0 %v3868
    %5304 = vmatprep.subr.mxu0 0.0
    %5305 = vmatpush1.msra.mxu0 %v3871
    %5306 = vmatprep.subr.mxu0 0.0
    %5307 = vmatpush1.msra.mxu0 %v3874
    %5308 = vmatprep.subr.mxu0 0.0
    %5309 = vmatpush1.msra.mxu0 %v3877
    %5310 = vmatprep.subr.mxu0 0.0
    %5311 = vmatpush1.msra.mxu0 %v3880
    %5312 = vmatprep.subr.mxu0 0.0
    %5313 = vmatpush1.msra.mxu0 %v3883
    %5314 = vmatprep.subr.mxu0 0.0
    %5315 = vmatpush1.msra.mxu0 0.0
    %5316 = vmatprep.subr.mxu0 0.0
    %5317 = vmatpush1.msra.mxu0 0.0
    %5318 = vmatprep.subr.mxu0 0.0
    %5319 = vmatpush1.msra.mxu0 0.0
    %5320 = vmatprep.subr.mxu0 0.0
    %5321 = vmatpush1.msra.mxu0 0.0
    %5322 = vmatprep.subr.mxu0 0.0
    %5323 = vmatpush1.msra.mxu0 0.0
    %5324 = vmatprep.subr.mxu0 0.0
    %5325 = vmatpush1.msra.mxu0 0.0
    %5326 = vmatprep.subr.mxu0 0.0
    %5327 = vmatpush1.msra.mxu0 0.0
    %5328 = vmatprep.subr.mxu0 0.0
    %5329 = vmatpush1.msra.mxu0 0.0
    %5330 = vmatprep.subr.mxu0 0.0
    %5331 = vmatpush1.msra.mxu0 0.0
    %5332 = vmatprep.subr.mxu0 0.0
    %5333 = vmatpush1.msra.mxu0 0.0
    %5334 = vmatprep.subr.mxu0 0.0
    %5335 = vmatpush1.msra.mxu0 0.0
    %5336 = vmatprep.subr.mxu0 0.0
    %5337 = vmatpush1.msra.mxu0 0.0
    %5338 = vmatprep.subr.mxu0 0.0
    %5339 = vmatpush1.msra.mxu0 0.0
    %5340 = vmatprep.subr.mxu0 0.0
    %5341 = vmatpush1.msra.mxu0 0.0
    %5342 = vmatprep.subr.mxu0 0.0
    %5343 = vmatpush1.msra.mxu0 0.0
    %5344 = vmatprep.subr.mxu0 0.0
    %5345 = vmatpush1.msra.mxu0 0.0
    %5346 = vmatprep.mubr.f32.mxu0 0.0
    %5347 = vmatmul.mubr.f32.gmra.mrb[0].mxu0 %v5206
    %v5348 = vpop.f32.mrb[0].mxu0
    %v5349 = vadd.f32 0.0, %v5348
    %v5350 = vpop.f32.mrb[0].mxu0
    %5351 = vdwg.mxu0
    %v5352 = vadd.f32 %v5208, %v5278
    %v5353 = vxor.u32 %v5352, 2147483648
    %v5354 = vmul.f32 %v5353, 1.442695
    %v5355 = vpow.pop %v5354
    %v5356 = vadd.f32 %v5355, 1.0
    %v5357 = vrcp.pop %v5356
    %v5358 = vmul.f32 1.0, %v5357
    %v5359 = vadd.f32 %v5209, %v5280
    %v5360 = vxor.u32 %v5359, 2147483648
    %v5361 = vmul.f32 %v5360, 1.442695
    %v5362 = vpow.pop %v5361
    %v5363 = vadd.f32 %v5362, 1.0
    %v5364 = vrcp.pop %v5363
    %v5365 = vmul.f32 1.0, %v5364
    %v5366 = vadd.f32 %v5349, %v4204
    %v5367 = vmul.f32 %v5358, %v5366
    %v5368 = vadd.f32 %v5210, %v5367
    %v5369 = vtanh.pop %v5368
    %v5370 = vsub.f32 1.0, %v5365
    %v5371 = vmul.f32 %v5370, %v5369
    %v5372 = vmul.f32 %v5365, %v5206
    %v5373 = vadd.f32 %v5371, %v5372
    %5374 = vst [vmem:[%s3467] sm:$0xff] %v5373
    %v5375 = vld [vmem:[%s1753] sm:$0xff]
    %v5376 = vld [vmem:[%s1753 + $0x8] sm:$0xff]
    %v5377 = vld [vmem:[%s1753 + $0x10] sm:$0xff]
    %5378 = vmatprep.subr.mxu0 %v3837
    %5379 = vmatpush1.msra.mxu0 %v3836
    %5380 = vmatprep.subr.mxu0 %v3840
    %5381 = vmatpush1.msra.mxu0 %v3839
    %5382 = vmatprep.subr.mxu0 %v3843
    %5383 = vmatpush1.msra.mxu0 %v3842
    %5384 = vmatprep.subr.mxu0 %v3846
    %5385 = vmatpush1.msra.mxu0 %v3845
    %5386 = vmatprep.subr.mxu0 %v3849
    %5387 = vmatpush1.msra.mxu0 %v3848
    %5388 = vmatprep.subr.mxu0 %v3852
    %5389 = vmatpush1.msra.mxu0 %v3851
    %5390 = vmatprep.subr.mxu0 %v3855
    %5391 = vmatpush1.msra.mxu0 %v3854
    %5392 = vmatprep.subr.mxu0 %v3858
    %5393 = vmatpush1.msra.mxu0 %v3857
    %5394 = vmatprep.subr.mxu0 %v3861
    %5395 = vmatpush1.msra.mxu0 %v3860
    %5396 = vmatprep.subr.mxu0 %v3864
    %5397 = vmatpush1.msra.mxu0 %v3863
    %5398 = vmatprep.subr.mxu0 %v3867
    %5399 = vmatpush1.msra.mxu0 %v3866
    %5400 = vmatprep.subr.mxu0 %v3870
    %5401 = vmatpush1.msra.mxu0 %v3869
    %5402 = vmatprep.subr.mxu0 %v3873
    %5403 = vmatpush1.msra.mxu0 %v3872
    %5404 = vmatprep.subr.mxu0 %v3876
    %5405 = vmatpush1.msra.mxu0 %v3875
    %5406 = vmatprep.subr.mxu0 %v3879
    %5407 = vmatpush1.msra.mxu0 %v3878
    %5408 = vmatprep.subr.mxu0 %v3882
    %5409 = vmatpush1.msra.mxu0 %v3881
    %5410 = vmatprep.subr.mxu0 0.0
    %5411 = vmatpush1.msra.mxu0 0.0
    %5412 = vmatprep.subr.mxu0 0.0
    %5413 = vmatpush1.msra.mxu0 0.0
    %5414 = vmatprep.subr.mxu0 0.0
    %5415 = vmatpush1.msra.mxu0 0.0
    %5416 = vmatprep.subr.mxu0 0.0
    %5417 = vmatpush1.msra.mxu0 0.0
    %5418 = vmatprep.subr.mxu0 0.0
    %5419 = vmatpush1.msra.mxu0 0.0
    %5420 = vmatprep.subr.mxu0 0.0
    %5421 = vmatpush1.msra.mxu0 0.0
    %5422 = vmatprep.subr.mxu0 0.0
    %5423 = vmatpush1.msra.mxu0 0.0
    %5424 = vmatprep.subr.mxu0 0.0
    %5425 = vmatpush1.msra.mxu0 0.0
    %5426 = vmatprep.subr.mxu0 0.0
    %5427 = vmatpush1.msra.mxu0 0.0
    %5428 = vmatprep.subr.mxu0 0.0
    %5429 = vmatpush1.msra.mxu0 0.0
    %5430 = vmatprep.subr.mxu0 0.0
    %5431 = vmatpush1.msra.mxu0 0.0
    %5432 = vmatprep.subr.mxu0 0.0
    %5433 = vmatpush1.msra.mxu0 0.0
    %5434 = vmatprep.subr.mxu0 0.0
    %5435 = vmatpush1.msra.mxu0 0.0
    %5436 = vmatprep.subr.mxu0 0.0
    %5437 = vmatpush1.msra.mxu0 0.0
    %5438 = vmatprep.subr.mxu0 0.0
    %5439 = vmatpush1.msra.mxu0 0.0
    %5440 = vmatprep.subr.mxu0 0.0
    %5441 = vmatpush1.msra.mxu0 0.0
    %5442 = vmatprep.mubr.f32.mxu0 0.0
    %5443 = vmatmul.mubr.f32.gmra.mrb[0].mxu0 %v5373
    %v5444 = vpop.f32.mrb[0].mxu0
    %v5445 = vadd.f32 0.0, %v5444
    %v5446 = vpop.f32.mrb[0].mxu0
    %v5447 = vadd.f32 0.0, %v5446
    %5448 = vdwg.mxu0
    %5449 = vmatprep.subr.mxu0 0.0
    %5450 = vmatpush1.msra.mxu0 %v3838
    %5451 = vmatprep.subr.mxu0 0.0
    %5452 = vmatpush1.msra.mxu0 %v3841
    %5453 = vmatprep.subr.mxu0 0.0
    %5454 = vmatpush1.msra.mxu0 %v3844
    %5455 = vmatprep.subr.mxu0 0.0
    %5456 = vmatpush1.msra.mxu0 %v3847
    %5457 = vmatprep.subr.mxu0 0.0
    %5458 = vmatpush1.msra.mxu0 %v3850
    %5459 = vmatprep.subr.mxu0 0.0
    %5460 = vmatpush1.msra.mxu0 %v3853
    %5461 = vmatprep.subr.mxu0 0.0
    %5462 = vmatpush1.msra.mxu0 %v3856
    %5463 = vmatprep.subr.mxu0 0.0
    %5464 = vmatpush1.msra.mxu0 %v3859
    %5465 = vmatprep.subr.mxu0 0.0
    %5466 = vmatpush1.msra.mxu0 %v3862
    %5467 = vmatprep.subr.mxu0 0.0
    %5468 = vmatpush1.msra.mxu0 %v3865
    %5469 = vmatprep.subr.mxu0 0.0
    %5470 = vmatpush1.msra.mxu0 %v3868
    %5471 = vmatprep.subr.mxu0 0.0
    %5472 = vmatpush1.msra.mxu0 %v3871
    %5473 = vmatprep.subr.mxu0 0.0
    %5474 = vmatpush1.msra.mxu0 %v3874
    %5475 = vmatprep.subr.mxu0 0.0
    %5476 = vmatpush1.msra.mxu0 %v3877
    %5477 = vmatprep.subr.mxu0 0.0
    %5478 = vmatpush1.msra.mxu0 %v3880
    %5479 = vmatprep.subr.mxu0 0.0
    %5480 = vmatpush1.msra.mxu0 %v3883
    %5481 = vmatprep.subr.mxu0 0.0
    %5482 = vmatpush1.msra.mxu0 0.0
    %5483 = vmatprep.subr.mxu0 0.0
    %5484 = vmatpush1.msra.mxu0 0.0
    %5485 = vmatprep.subr.mxu0 0.0
    %5486 = vmatpush1.msra.mxu0 0.0
    %5487 = vmatprep.subr.mxu0 0.0
    %5488 = vmatpush1.msra.mxu0 0.0
    %5489 = vmatprep.subr.mxu0 0.0
    %5490 = vmatpush1.msra.mxu0 0.0
    %5491 = vmatprep.subr.mxu0 0.0
    %5492 = vmatpush1.msra.mxu0 0.0
    %5493 = vmatprep.subr.mxu0 0.0
    %5494 = vmatpush1.msra.mxu0 0.0
    %5495 = vmatprep.subr.mxu0 0.0
    %5496 = vmatpush1.msra.mxu0 0.0
    %5497 = vmatprep.subr.mxu0 0.0
    %5498 = vmatpush1.msra.mxu0 0.0
    %5499 = vmatprep.subr.mxu0 0.0
    %5500 = vmatpush1.msra.mxu0 0.0
    %5501 = vmatprep.subr.mxu0 0.0
    %5502 = vmatpush1.msra.mxu0 0.0
    %5503 = vmatprep.subr.mxu0 0.0
    %5504 = vmatpush1.msra.mxu0 0.0
    %5505 = vmatprep.subr.mxu0 0.0
    %5506 = vmatpush1.msra.mxu0 0.0
    %5507 = vmatprep.subr.mxu0 0.0
    %5508 = vmatpush1.msra.mxu0 0.0
    %5509 = vmatprep.subr.mxu0 0.0
    %5510 = vmatpush1.msra.mxu0 0.0
    %5511 = vmatprep.subr.mxu0 0.0
    %5512 = vmatpush1.msra.mxu0 0.0
    %5513 = vmatprep.mubr.f32.mxu0 0.0
    %5514 = vmatmul.mubr.f32.gmra.mrb[0].mxu0 %v5373
    %v5515 = vpop.f32.mrb[0].mxu0
    %v5516 = vadd.f32 0.0, %v5515
    %v5517 = vpop.f32.mrb[0].mxu0
    %5518 = vdwg.mxu0
    %v5519 = vadd.f32 %v5375, %v5445
    %v5520 = vxor.u32 %v5519, 2147483648
    %v5521 = vmul.f32 %v5520, 1.442695
    %v5522 = vpow.pop %v5521
    %v5523 = vadd.f32 %v5522, 1.0
    %v5524 = vrcp.pop %v5523
    %v5525 = vmul.f32 1.0, %v5524
    %v5526 = vadd.f32 %v5376, %v5447
    %v5527 = vxor.u32 %v5526, 2147483648
    %v5528 = vmul.f32 %v5527, 1.442695
    %v5529 = vpow.pop %v5528
    %v5530 = vadd.f32 %v5529, 1.0
    %v5531 = vrcp.pop %v5530
    %v5532 = vmul.f32 1.0, %v5531
    %v5533 = vadd.f32 %v5516, %v4204
    %v5534 = vmul.f32 %v5525, %v5533
    %v5535 = vadd.f32 %v5377, %v5534
    %v5536 = vtanh.pop %v5535
    %v5537 = vsub.f32 1.0, %v5532
    %v5538 = vmul.f32 %v5537, %v5536
    %v5539 = vmul.f32 %v5532, %v5373
    %v5540 = vadd.f32 %v5538, %v5539
    %5541 = vst [vmem:[%s3635] sm:$0xff] %v5540
    %v5542 = vld [vmem:[#allocation16] sm:$0xff]
    %v5543 = vld [vmem:[#allocation16 + $0x8] sm:$0xff]
    %v5544 = vld [vmem:[#allocation16 + $0x10] sm:$0xff]
    %v5545 = vld [vmem:[#allocation16 + $0x18] sm:$0xff]
    %v5546 = vld [vmem:[#allocation16 + $0x20] sm:$0xff]
    %v5547 = vld [vmem:[#allocation16 + $0x28] sm:$0xff]
    %v5548 = vld [vmem:[#allocation16 + $0x30] sm:$0xff]
    %v5549 = vld [vmem:[#allocation16 + $0x38] sm:$0xff]
    %v5550 = vld [vmem:[#allocation16 + $0x40] sm:$0xff]
    %v5551 = vld [vmem:[#allocation16 + $0x48] sm:$0xff]
    %v5552 = vld [vmem:[#allocation16 + $0x50] sm:$0xff]
    %v5553 = vld [vmem:[#allocation16 + $0x58] sm:$0xff]
    %v5554 = vld [vmem:[#allocation16 + $0x60] sm:$0xff]
    %v5555 = vld [vmem:[#allocation16 + $0x68] sm:$0xff]
    %v5556 = vld [vmem:[#allocation16 + $0x70] sm:$0xff]
    %v5557 = vld [vmem:[#allocation16 + $0x78] sm:$0xff]
    %v5558 = vld [vmem:[#allocation16 + $0x80] sm:$0xff]
    %v5559 = vld [vmem:[#allocation16 + $0x88] sm:$0xff]
    %v5560 = vld [vmem:[#allocation16 + $0x90] sm:$0xff]
    %v5561 = vld [vmem:[#allocation16 + $0x98] sm:$0xff]
    %v5562 = vld [vmem:[#allocation16 + $0xa0] sm:$0xff]
    %v5563 = vld [vmem:[#allocation16 + $0xa8] sm:$0xff]
    %v5564 = vld [vmem:[#allocation16 + $0xb0] sm:$0xff]
    %v5565 = vld [vmem:[#allocation16 + $0xb8] sm:$0xff]
    %v5566 = vld [vmem:[#allocation16 + $0xc0] sm:$0xff]
    %v5567 = vld [vmem:[#allocation16 + $0xc8] sm:$0xff]
    %v5568 = vld [vmem:[#allocation16 + $0xd0] sm:$0xff]
    %v5569 = vld [vmem:[#allocation16 + $0xd8] sm:$0xff]
    %v5570 = vld [vmem:[#allocation16 + $0xe0] sm:$0xff]
    %v5571 = vld [vmem:[#allocation16 + $0xe8] sm:$0xff]
    %v5572 = vld [vmem:[#allocation16 + $0xf0] sm:$0xff]
    %v5573 = vld [vmem:[#allocation16 + $0xf8] sm:$0xff]
    %v5574 = vld [vmem:[#allocation16 + $0x100] sm:$0xff]
    %v5575 = vld [vmem:[#allocation16 + $0x108] sm:$0xff]
    %v5576 = vld [vmem:[#allocation16 + $0x110] sm:$0xff]
    %v5577 = vld [vmem:[#allocation16 + $0x118] sm:$0xff]
    %v5578 = vld [vmem:[#allocation16 + $0x120] sm:$0xff]
    %v5579 = vld [vmem:[#allocation16 + $0x128] sm:$0xff]
    %v5580 = vld [vmem:[#allocation16 + $0x130] sm:$0xff]
    %v5581 = vld [vmem:[#allocation16 + $0x138] sm:$0xff]
    %v5582 = vld [vmem:[#allocation16 + $0x140] sm:$0xff]
    %v5583 = vld [vmem:[#allocation16 + $0x148] sm:$0xff]
    %v5584 = vld [vmem:[#allocation16 + $0x150] sm:$0xff]
    %v5585 = vld [vmem:[#allocation16 + $0x158] sm:$0xff]
    %v5586 = vld [vmem:[#allocation16 + $0x160] sm:$0xff]
    %v5587 = vld [vmem:[#allocation16 + $0x168] sm:$0xff]
    %v5588 = vld [vmem:[#allocation16 + $0x170] sm:$0xff]
    %v5589 = vld [vmem:[#allocation16 + $0x178] sm:$0xff]
    %v5590 = vld [vmem:[#allocation3] sm:$0xff]
    %v5591 = vld [vmem:[#allocation3 + $0x8] sm:$0xff]
    %v5592 = vld [vmem:[#allocation3 + $0x10] sm:$0xff]
    %v5593 = vld [vmem:[#allocation3 + $0x18] sm:$0xff]
    %v5594 = vld [vmem:[#allocation3 + $0x20] sm:$0xff]
    %v5595 = vld [vmem:[#allocation3 + $0x28] sm:$0xff]
    %v5596 = vld [vmem:[#allocation3 + $0x30] sm:$0xff]
    %v5597 = vld [vmem:[#allocation3 + $0x38] sm:$0xff]
    %v5598 = vld [vmem:[#allocation15] sm:$0xff]
    %v5599 = vld [vmem:[#allocation15 + $0x8] sm:$0xff]
    %v5600 = vld [vmem:[#allocation15 + $0x10] sm:$0xff]
    %v5601 = vld [vmem:[#allocation15 + $0x18] sm:$0xff]
    %v5602 = vld [vmem:[#allocation15 + $0x20] sm:$0xff]
    %v5603 = vld [vmem:[#allocation15 + $0x28] sm:$0xff]
    %v5604 = vld [vmem:[#allocation15 + $0x30] sm:$0xff]
    %v5605 = vld [vmem:[#allocation15 + $0x38] sm:$0xff]
    %v5606 = vld [vmem:[#allocation15 + $0x40] sm:$0xff]
    %v5607 = vld [vmem:[#allocation15 + $0x48] sm:$0xff]
    %v5608 = vld [vmem:[#allocation15 + $0x50] sm:$0xff]
    %v5609 = vld [vmem:[#allocation15 + $0x58] sm:$0xff]
    %v5610 = vld [vmem:[#allocation15 + $0x60] sm:$0xff]
    %v5611 = vld [vmem:[#allocation15 + $0x68] sm:$0xff]
    %v5612 = vld [vmem:[#allocation15 + $0x70] sm:$0xff]
    %v5613 = vld [vmem:[#allocation15 + $0x78] sm:$0xff]
    %v5614 = vld [vmem:[#allocation15 + $0x80] sm:$0xff]
    %v5615 = vld [vmem:[#allocation15 + $0x88] sm:$0xff]
    %v5616 = vld [vmem:[#allocation15 + $0x90] sm:$0xff]
    %v5617 = vld [vmem:[#allocation15 + $0x98] sm:$0xff]
    %v5618 = vld [vmem:[#allocation15 + $0xa0] sm:$0xff]
    %v5619 = vld [vmem:[#allocation15 + $0xa8] sm:$0xff]
    %v5620 = vld [vmem:[#allocation15 + $0xb0] sm:$0xff]
    %v5621 = vld [vmem:[#allocation15 + $0xb8] sm:$0xff]
    %v5622 = vld [vmem:[#allocation15 + $0xc0] sm:$0xff]
    %v5623 = vld [vmem:[#allocation15 + $0xc8] sm:$0xff]
    %v5624 = vld [vmem:[#allocation15 + $0xd0] sm:$0xff]
    %v5625 = vld [vmem:[#allocation15 + $0xd8] sm:$0xff]
    %v5626 = vld [vmem:[#allocation15 + $0xe0] sm:$0xff]
    %v5627 = vld [vmem:[#allocation15 + $0xe8] sm:$0xff]
    %v5628 = vld [vmem:[#allocation15 + $0xf0] sm:$0xff]
    %v5629 = vld [vmem:[#allocation15 + $0xf8] sm:$0xff]
    %v5630 = vld [vmem:[#allocation15 + $0x100] sm:$0xff]
    %v5631 = vld [vmem:[#allocation15 + $0x108] sm:$0xff]
    %v5632 = vld [vmem:[#allocation15 + $0x110] sm:$0xff]
    %v5633 = vld [vmem:[#allocation15 + $0x118] sm:$0xff]
    %v5634 = vld [vmem:[#allocation15 + $0x120] sm:$0xff]
    %v5635 = vld [vmem:[#allocation15 + $0x128] sm:$0xff]
    %v5636 = vld [vmem:[#allocation15 + $0x130] sm:$0xff]
    %v5637 = vld [vmem:[#allocation15 + $0x138] sm:$0xff]
    %v5638 = vld [vmem:[#allocation15 + $0x140] sm:$0xff]
    %v5639 = vld [vmem:[#allocation15 + $0x148] sm:$0xff]
    %v5640 = vld [vmem:[#allocation15 + $0x150] sm:$0xff]
    %v5641 = vld [vmem:[#allocation15 + $0x158] sm:$0xff]
    %v5642 = vld [vmem:[#allocation15 + $0x160] sm:$0xff]
    %v5643 = vld [vmem:[#allocation15 + $0x168] sm:$0xff]
    %v5644 = vld [vmem:[#allocation15 + $0x170] sm:$0xff]
    %v5645 = vld [vmem:[#allocation15 + $0x178] sm:$0xff]
    %v5646 = vld [vmem:[%s16] sm:$0x7]
    %v5648 = vlaneseq
    %v5649 = vshrl.u32 %v5648, 7
    %v5650 = vsub.s32 0, %v5649
    %v5651 = vrot.slane %v5646, %v5650
    %v5652 = vlaneseq
    %v5653 = vshrl.u32 %v5652, 7
    %v5654 = vsub.s32 1, %v5653
    %v5655 = vrot.slane %v5646, %v5654
    %v5656 = vlaneseq
    %v5657 = vshrl.u32 %v5656, 7
    %v5658 = vsub.s32 2, %v5657
    %v5659 = vrot.slane %v5646, %v5658
    %5663 = vmatprep.subr.mxu0 %v5599
    %5664 = vmatpush1.msra.mxu0 %v5598
    %5665 = vmatprep.subr.mxu0 %v5602
    %5666 = vmatpush1.msra.mxu0 %v5601
    %5667 = vmatprep.subr.mxu0 %v5605
    %5668 = vmatpush1.msra.mxu0 %v5604
    %5669 = vmatprep.subr.mxu0 %v5608
    %5670 = vmatpush1.msra.mxu0 %v5607
    %5671 = vmatprep.subr.mxu0 %v5611
    %5672 = vmatpush1.msra.mxu0 %v5610
    %5673 = vmatprep.subr.mxu0 %v5614
    %5674 = vmatpush1.msra.mxu0 %v5613
    %5675 = vmatprep.subr.mxu0 %v5617
    %5676 = vmatpush1.msra.mxu0 %v5616
    %5677 = vmatprep.subr.mxu0 %v5620
    %5678 = vmatpush1.msra.mxu0 %v5619
    %5679 = vmatprep.subr.mxu0 %v5623
    %5680 = vmatpush1.msra.mxu0 %v5622
    %5681 = vmatprep.subr.mxu0 %v5626
    %5682 = vmatpush1.msra.mxu0 %v5625
    %5683 = vmatprep.subr.mxu0 %v5629
    %5684 = vmatpush1.msra.mxu0 %v5628
    %5685 = vmatprep.subr.mxu0 %v5632
    %5686 = vmatpush1.msra.mxu0 %v5631
    %5687 = vmatprep.subr.mxu0 %v5635
    %5688 = vmatpush1.msra.mxu0 %v5634
    %5689 = vmatprep.subr.mxu0 %v5638
    %5690 = vmatpush1.msra.mxu0 %v5637
    %5691 = vmatprep.subr.mxu0 %v5641
    %5692 = vmatpush1.msra.mxu0 %v5640
    %5693 = vmatprep.subr.mxu0 %v5644
    %5694 = vmatpush1.msra.mxu0 %v5643
    %5695 = vmatprep.subr.mxu0 0.0
    %5696 = vmatpush1.msra.mxu0 0.0
    %5697 = vmatprep.subr.mxu0 0.0
    %5698 = vmatpush1.msra.mxu0 0.0
    %5699 = vmatprep.subr.mxu0 0.0
    %5700 = vmatpush1.msra.mxu0 0.0
    %5701 = vmatprep.subr.mxu0 0.0
    %5702 = vmatpush1.msra.mxu0 0.0
    %5703 = vmatprep.subr.mxu0 0.0
    %5704 = vmatpush1.msra.mxu0 0.0
    %5705 = vmatprep.subr.mxu0 0.0
    %5706 = vmatpush1.msra.mxu0 0.0
    %5707 = vmatprep.subr.mxu0 0.0
    %5708 = vmatpush1.msra.mxu0 0.0
    %5709 = vmatprep.subr.mxu0 0.0
    %5710 = vmatpush1.msra.mxu0 0.0
    %5711 = vmatprep.subr.mxu0 0.0
    %5712 = vmatpush1.msra.mxu0 0.0
    %5713 = vmatprep.subr.mxu0 0.0
    %5714 = vmatpush1.msra.mxu0 0.0
    %5715 = vmatprep.subr.mxu0 0.0
    %5716 = vmatpush1.msra.mxu0 0.0
    %5717 = vmatprep.subr.mxu0 0.0
    %5718 = vmatpush1.msra.mxu0 0.0
    %5719 = vmatprep.subr.mxu0 0.0
    %5720 = vmatpush1.msra.mxu0 0.0
    %5721 = vmatprep.subr.mxu0 0.0
    %5722 = vmatpush1.msra.mxu0 0.0
    %5723 = vmatprep.subr.mxu0 0.0
    %5724 = vmatpush1.msra.mxu0 0.0
    %5725 = vmatprep.subr.mxu0 0.0
    %5726 = vmatpush1.msra.mxu0 0.0
    %5727 = vmatprep.mubr.f32.mxu0 0.0
    %5728 = vmatmul.mubr.f32.gmra.mrb[0].mxu0 %v5590
    %v5729 = vpop.f32.mrb[0].mxu0
    %v5730 = vadd.f32 %v5651, %v5729
    %v5731 = vpop.f32.mrb[0].mxu0
    %v5732 = vadd.f32 %v5655, %v5731
    %5733 = vmatprep.mubr.f32.mxu0 0.0
    %5734 = vmatmul.mubr.f32.gmra.mrb[0].mxu0 %v5591
    %v5735 = vpop.f32.mrb[0].mxu0
    %v5736 = vadd.f32 %v5651, %v5735
    %v5737 = vpop.f32.mrb[0].mxu0
    %v5738 = vadd.f32 %v5655, %v5737
    %5739 = vmatprep.mubr.f32.mxu0 0.0
    %5740 = vmatmul.mubr.f32.gmra.mrb[0].mxu0 %v5592
    %v5741 = vpop.f32.mrb[0].mxu0
    %v5742 = vadd.f32 %v5651, %v5741
    %v5743 = vpop.f32.mrb[0].mxu0
    %v5744 = vadd.f32 %v5655, %v5743
    %5745 = vmatprep.mubr.f32.mxu0 0.0
    %5746 = vmatmul.mubr.f32.gmra.mrb[0].mxu0 %v5593
    %v5747 = vpop.f32.mrb[0].mxu0
    %v5748 = vadd.f32 %v5651, %v5747
    %v5749 = vpop.f32.mrb[0].mxu0
    %v5750 = vadd.f32 %v5655, %v5749
    %5751 = vmatprep.mubr.f32.mxu0 0.0
    %5752 = vmatmul.mubr.f32.gmra.mrb[0].mxu0 %v5594
    %v5753 = vpop.f32.mrb[0].mxu0
    %v5754 = vadd.f32 %v5651, %v5753
    %v5755 = vpop.f32.mrb[0].mxu0
    %v5756 = vadd.f32 %v5655, %v5755
    %5757 = vmatprep.mubr.f32.mxu0 0.0
    %5758 = vmatmul.mubr.f32.gmra.mrb[0].mxu0 %v5595
    %v5759 = vpop.f32.mrb[0].mxu0
    %v5760 = vadd.f32 %v5651, %v5759
    %v5761 = vpop.f32.mrb[0].mxu0
    %v5762 = vadd.f32 %v5655, %v5761
    %5763 = vmatprep.mubr.f32.mxu0 0.0
    %5764 = vmatmul.mubr.f32.gmra.mrb[0].mxu0 %v5596
    %v5765 = vpop.f32.mrb[0].mxu0
    %v5766 = vadd.f32 %v5651, %v5765
    %v5767 = vpop.f32.mrb[0].mxu0
    %v5768 = vadd.f32 %v5655, %v5767
    %5769 = vmatprep.mubr.f32.mxu0 0.0
    %5770 = vmatmul.mubr.f32.gmra.mrb[0].mxu0 %v5597
    %v5771 = vpop.f32.mrb[0].mxu0
    %v5772 = vadd.f32 %v5651, %v5771
    %v5773 = vpop.f32.mrb[0].mxu0
    %v5774 = vadd.f32 %v5655, %v5773
    %5775 = vdwg.mxu0
    %5776 = vmatprep.subr.mxu0 0.0
    %5777 = vmatpush1.msra.mxu0 %v5600
    %5778 = vmatprep.subr.mxu0 0.0
    %5779 = vmatpush1.msra.mxu0 %v5603
    %5780 = vmatprep.subr.mxu0 0.0
    %5781 = vmatpush1.msra.mxu0 %v5606
    %5782 = vmatprep.subr.mxu0 0.0
    %5783 = vmatpush1.msra.mxu0 %v5609
    %5784 = vmatprep.subr.mxu0 0.0
    %5785 = vmatpush1.msra.mxu0 %v5612
    %5786 = vmatprep.subr.mxu0 0.0
    %5787 = vmatpush1.msra.mxu0 %v5615
    %5788 = vmatprep.subr.mxu0 0.0
    %5789 = vmatpush1.msra.mxu0 %v5618
    %5790 = vmatprep.subr.mxu0 0.0
    %5791 = vmatpush1.msra.mxu0 %v5621
    %5792 = vmatprep.subr.mxu0 0.0
    %5793 = vmatpush1.msra.mxu0 %v5624
    %5794 = vmatprep.subr.mxu0 0.0
    %5795 = vmatpush1.msra.mxu0 %v5627
    %5796 = vmatprep.subr.mxu0 0.0
    %5797 = vmatpush1.msra.mxu0 %v5630
    %5798 = vmatprep.subr.mxu0 0.0
    %5799 = vmatpush1.msra.mxu0 %v5633
    %5800 = vmatprep.subr.mxu0 0.0
    %5801 = vmatpush1.msra.mxu0 %v5636
    %5802 = vmatprep.subr.mxu0 0.0
    %5803 = vmatpush1.msra.mxu0 %v5639
    %5804 = vmatprep.subr.mxu0 0.0
    %5805 = vmatpush1.msra.mxu0 %v5642
    %5806 = vmatprep.subr.mxu0 0.0
    %5807 = vmatpush1.msra.mxu0 %v5645
    %5808 = vmatprep.subr.mxu0 0.0
    %5809 = vmatpush1.msra.mxu0 0.0
    %5810 = vmatprep.subr.mxu0 0.0
    %5811 = vmatpush1.msra.mxu0 0.0
    %5812 = vmatprep.subr.mxu0 0.0
    %5813 = vmatpush1.msra.mxu0 0.0
    %5814 = vmatprep.subr.mxu0 0.0
    %5815 = vmatpush1.msra.mxu0 0.0
    %5816 = vmatprep.subr.mxu0 0.0
    %5817 = vmatpush1.msra.mxu0 0.0
    %5818 = vmatprep.subr.mxu0 0.0
    %5819 = vmatpush1.msra.mxu0 0.0
    %5820 = vmatprep.subr.mxu0 0.0
    %5821 = vmatpush1.msra.mxu0 0.0
    %5822 = vmatprep.subr.mxu0 0.0
    %5823 = vmatpush1.msra.mxu0 0.0
    %5824 = vmatprep.subr.mxu0 0.0
    %5825 = vmatpush1.msra.mxu0 0.0
    %5826 = vmatprep.subr.mxu0 0.0
    %5827 = vmatpush1.msra.mxu0 0.0
    %5828 = vmatprep.subr.mxu0 0.0
    %5829 = vmatpush1.msra.mxu0 0.0
    %5830 = vmatprep.subr.mxu0 0.0
    %5831 = vmatpush1.msra.mxu0 0.0
    %5832 = vmatprep.subr.mxu0 0.0
    %5833 = vmatpush1.msra.mxu0 0.0
    %5834 = vmatprep.subr.mxu0 0.0
    %5835 = vmatpush1.msra.mxu0 0.0
    %5836 = vmatprep.subr.mxu0 0.0
    %5837 = vmatpush1.msra.mxu0 0.0
    %5838 = vmatprep.subr.mxu0 0.0
    %5839 = vmatpush1.msra.mxu0 0.0
    %5840 = vmatprep.mubr.f32.mxu0 0.0
    %5841 = vmatmul.mubr.f32.gmra.mrb[0].mxu0 %v5590
    %v5842 = vpop.f32.mrb[0].mxu0
    %v5843 = vadd.f32 %v5659, %v5842
    %v5844 = vpop.f32.mrb[0].mxu0
    %5845 = vmatprep.mubr.f32.mxu0 0.0
    %5846 = vmatmul.mubr.f32.gmra.mrb[0].mxu0 %v5591
    %v5847 = vpop.f32.mrb[0].mxu0
    %v5848 = vadd.f32 %v5659, %v5847
    %v5849 = vpop.f32.mrb[0].mxu0
    %5850 = vmatprep.mubr.f32.mxu0 0.0
    %5851 = vmatmul.mubr.f32.gmra.mrb[0].mxu0 %v5592
    %v5852 = vpop.f32.mrb[0].mxu0
    %v5853 = vadd.f32 %v5659, %v5852
    %v5854 = vpop.f32.mrb[0].mxu0
    %5855 = vmatprep.mubr.f32.mxu0 0.0
    %5856 = vmatmul.mubr.f32.gmra.mrb[0].mxu0 %v5593
    %v5857 = vpop.f32.mrb[0].mxu0
    %v5858 = vadd.f32 %v5659, %v5857
    %v5859 = vpop.f32.mrb[0].mxu0
    %5860 = vmatprep.mubr.f32.mxu0 0.0
    %5861 = vmatmul.mubr.f32.gmra.mrb[0].mxu0 %v5594
    %v5862 = vpop.f32.mrb[0].mxu0
    %v5863 = vadd.f32 %v5659, %v5862
    %v5864 = vpop.f32.mrb[0].mxu0
    %5865 = vmatprep.mubr.f32.mxu0 0.0
    %5866 = vmatmul.mubr.f32.gmra.mrb[0].mxu0 %v5595
    %v5867 = vpop.f32.mrb[0].mxu0
    %v5868 = vadd.f32 %v5659, %v5867
    %v5869 = vpop.f32.mrb[0].mxu0
    %5870 = vmatprep.mubr.f32.mxu0 0.0
    %5871 = vmatmul.mubr.f32.gmra.mrb[0].mxu0 %v5596
    %v5872 = vpop.f32.mrb[0].mxu0
    %v5873 = vadd.f32 %v5659, %v5872
    %v5874 = vpop.f32.mrb[0].mxu0
    %5875 = vmatprep.mubr.f32.mxu0 0.0
    %5876 = vmatmul.mubr.f32.gmra.mrb[0].mxu0 %v5597
    %v5877 = vpop.f32.mrb[0].mxu0
    %v5878 = vadd.f32 %v5659, %v5877
    %v5879 = vpop.f32.mrb[0].mxu0
    %5880 = vdwg.mxu0
    %5881 = vst [vmem:[#allocation4] sm:$0xff] %v5730
    %5882 = vst [vmem:[#allocation4 + $0x8] sm:$0xff] %v5732
    %5883 = vst [vmem:[#allocation4 + $0x10] sm:$0xff] %v5843
    %5884 = vst [vmem:[#allocation4 + $0x18] sm:$0xff] %v5736
    %5885 = vst [vmem:[#allocation4 + $0x20] sm:$0xff] %v5738
    %5886 = vst [vmem:[#allocation4 + $0x28] sm:$0xff] %v5848
    %5887 = vst [vmem:[#allocation4 + $0x30] sm:$0xff] %v5742
    %5888 = vst [vmem:[#allocation4 + $0x38] sm:$0xff] %v5744
    %5889 = vst [vmem:[#allocation4 + $0x40] sm:$0xff] %v5853
    %5890 = vst [vmem:[#allocation4 + $0x48] sm:$0xff] %v5748
    %5891 = vst [vmem:[#allocation4 + $0x50] sm:$0xff] %v5750
    %5892 = vst [vmem:[#allocation4 + $0x58] sm:$0xff] %v5858
    %5893 = vst [vmem:[#allocation4 + $0x60] sm:$0xff] %v5754
    %5894 = vst [vmem:[#allocation4 + $0x68] sm:$0xff] %v5756
    %5895 = vst [vmem:[#allocation4 + $0x70] sm:$0xff] %v5863
    %5896 = vst [vmem:[#allocation4 + $0x78] sm:$0xff] %v5760
    %5897 = vst [vmem:[#allocation4 + $0x80] sm:$0xff] %v5762
    %5898 = vst [vmem:[#allocation4 + $0x88] sm:$0xff] %v5868
    %5899 = vst [vmem:[#allocation4 + $0x90] sm:$0xff] %v5766
    %5900 = vst [vmem:[#allocation4 + $0x98] sm:$0xff] %v5768
    %5901 = vst [vmem:[#allocation4 + $0xa0] sm:$0xff] %v5873
    %5902 = vst [vmem:[#allocation4 + $0xa8] sm:$0xff] %v5772
    %5903 = vst [vmem:[#allocation4 + $0xb0] sm:$0xff] %v5774
    %5904 = vst [vmem:[#allocation4 + $0xb8] sm:$0xff] %v5878
    %v5905 = vld [vmem:[%s17] sm:$0x1]
    %v5907 = vlaneseq
    %v5908 = vshrl.u32 %v5907, 7
    %v5909 = vsub.s32 0, %v5908
    %v5910 = vrot.slane %v5905, %v5909
    %v5912 = vld [vmem:[#allocation4] sm:$0xff]
    %v5913 = vld [vmem:[#allocation4 + $0x8] sm:$0xff]
    %v5914 = vld [vmem:[#allocation4 + $0x10] sm:$0xff]
    %5915 = vmatprep.subr.mxu0 %v5543
    %5916 = vmatpush1.msra.mxu0 %v5542
    %5917 = vmatprep.subr.mxu0 %v5546
    %5918 = vmatpush1.msra.mxu0 %v5545
    %5919 = vmatprep.subr.mxu0 %v5549
    %5920 = vmatpush1.msra.mxu0 %v5548
    %5921 = vmatprep.subr.mxu0 %v5552
    %5922 = vmatpush1.msra.mxu0 %v5551
    %5923 = vmatprep.subr.mxu0 %v5555
    %5924 = vmatpush1.msra.mxu0 %v5554
    %5925 = vmatprep.subr.mxu0 %v5558
    %5926 = vmatpush1.msra.mxu0 %v5557
    %5927 = vmatprep.subr.mxu0 %v5561
    %5928 = vmatpush1.msra.mxu0 %v5560
    %5929 = vmatprep.subr.mxu0 %v5564
    %5930 = vmatpush1.msra.mxu0 %v5563
    %5931 = vmatprep.subr.mxu0 %v5567
    %5932 = vmatpush1.msra.mxu0 %v5566
    %5933 = vmatprep.subr.mxu0 %v5570
    %5934 = vmatpush1.msra.mxu0 %v5569
    %5935 = vmatprep.subr.mxu0 %v5573
    %5936 = vmatpush1.msra.mxu0 %v5572
    %5937 = vmatprep.subr.mxu0 %v5576
    %5938 = vmatpush1.msra.mxu0 %v5575
    %5939 = vmatprep.subr.mxu0 %v5579
    %5940 = vmatpush1.msra.mxu0 %v5578
    %5941 = vmatprep.subr.mxu0 %v5582
    %5942 = vmatpush1.msra.mxu0 %v5581
    %5943 = vmatprep.subr.mxu0 %v5585
    %5944 = vmatpush1.msra.mxu0 %v5584
    %5945 = vmatprep.subr.mxu0 %v5588
    %5946 = vmatpush1.msra.mxu0 %v5587
    %5947 = vmatprep.subr.mxu0 0.0
    %5948 = vmatpush1.msra.mxu0 0.0
    %5949 = vmatprep.subr.mxu0 0.0
    %5950 = vmatpush1.msra.mxu0 0.0
    %5951 = vmatprep.subr.mxu0 0.0
    %5952 = vmatpush1.msra.mxu0 0.0
    %5953 = vmatprep.subr.mxu0 0.0
    %5954 = vmatpush1.msra.mxu0 0.0
    %5955 = vmatprep.subr.mxu0 0.0
    %5956 = vmatpush1.msra.mxu0 0.0
    %5957 = vmatprep.subr.mxu0 0.0
    %5958 = vmatpush1.msra.mxu0 0.0
    %5959 = vmatprep.subr.mxu0 0.0
    %5960 = vmatpush1.msra.mxu0 0.0
    %5961 = vmatprep.subr.mxu0 0.0
    %5962 = vmatpush1.msra.mxu0 0.0
    %5963 = vmatprep.subr.mxu0 0.0
    %5964 = vmatpush1.msra.mxu0 0.0
    %5965 = vmatprep.subr.mxu0 0.0
    %5966 = vmatpush1.msra.mxu0 0.0
    %5967 = vmatprep.subr.mxu0 0.0
    %5968 = vmatpush1.msra.mxu0 0.0
    %5969 = vmatprep.subr.mxu0 0.0
    %5970 = vmatpush1.msra.mxu0 0.0
    %5971 = vmatprep.subr.mxu0 0.0
    %5972 = vmatpush1.msra.mxu0 0.0
    %5973 = vmatprep.subr.mxu0 0.0
    %5974 = vmatpush1.msra.mxu0 0.0
    %5975 = vmatprep.subr.mxu0 0.0
    %5976 = vmatpush1.msra.mxu0 0.0
    %5977 = vmatprep.subr.mxu0 0.0
    %5978 = vmatpush1.msra.mxu0 0.0
    %5979 = vmatprep.mubr.f32.mxu0 0.0
    %5980 = vmatmul.mubr.f32.gmra.mrb[0].mxu0 %v3634
    %v5981 = vpop.f32.mrb[0].mxu0
    %v5982 = vadd.f32 0.0, %v5981
    %v5983 = vpop.f32.mrb[0].mxu0
    %v5984 = vadd.f32 0.0, %v5983
    %5985 = vdwg.mxu0
    %5986 = vmatprep.subr.mxu0 0.0
    %5987 = vmatpush1.msra.mxu0 %v5544
    %5988 = vmatprep.subr.mxu0 0.0
    %5989 = vmatpush1.msra.mxu0 %v5547
    %5990 = vmatprep.subr.mxu0 0.0
    %5991 = vmatpush1.msra.mxu0 %v5550
    %5992 = vmatprep.subr.mxu0 0.0
    %5993 = vmatpush1.msra.mxu0 %v5553
    %5994 = vmatprep.subr.mxu0 0.0
    %5995 = vmatpush1.msra.mxu0 %v5556
    %5996 = vmatprep.subr.mxu0 0.0
    %5997 = vmatpush1.msra.mxu0 %v5559
    %5998 = vmatprep.subr.mxu0 0.0
    %5999 = vmatpush1.msra.mxu0 %v5562
    %6000 = vmatprep.subr.mxu0 0.0
    %6001 = vmatpush1.msra.mxu0 %v5565
    %6002 = vmatprep.subr.mxu0 0.0
    %6003 = vmatpush1.msra.mxu0 %v5568
    %6004 = vmatprep.subr.mxu0 0.0
    %6005 = vmatpush1.msra.mxu0 %v5571
    %6006 = vmatprep.subr.mxu0 0.0
    %6007 = vmatpush1.msra.mxu0 %v5574
    %6008 = vmatprep.subr.mxu0 0.0
    %6009 = vmatpush1.msra.mxu0 %v5577
    %6010 = vmatprep.subr.mxu0 0.0
    %6011 = vmatpush1.msra.mxu0 %v5580
    %6012 = vmatprep.subr.mxu0 0.0
    %6013 = vmatpush1.msra.mxu0 %v5583
    %6014 = vmatprep.subr.mxu0 0.0
    %6015 = vmatpush1.msra.mxu0 %v5586
    %6016 = vmatprep.subr.mxu0 0.0
    %6017 = vmatpush1.msra.mxu0 %v5589
    %6018 = vmatprep.subr.mxu0 0.0
    %6019 = vmatpush1.msra.mxu0 0.0
    %6020 = vmatprep.subr.mxu0 0.0
    %6021 = vmatpush1.msra.mxu0 0.0
    %6022 = vmatprep.subr.mxu0 0.0
    %6023 = vmatpush1.msra.mxu0 0.0
    %6024 = vmatprep.subr.mxu0 0.0
    %6025 = vmatpush1.msra.mxu0 0.0
    %6026 = vmatprep.subr.mxu0 0.0
    %6027 = vmatpush1.msra.mxu0 0.0
    %6028 = vmatprep.subr.mxu0 0.0
    %6029 = vmatpush1.msra.mxu0 0.0
    %6030 = vmatprep.subr.mxu0 0.0
    %6031 = vmatpush1.msra.mxu0 0.0
    %6032 = vmatprep.subr.mxu0 0.0
    %6033 = vmatpush1.msra.mxu0 0.0
    %6034 = vmatprep.subr.mxu0 0.0
    %6035 = vmatpush1.msra.mxu0 0.0
    %6036 = vmatprep.subr.mxu0 0.0
    %6037 = vmatpush1.msra.mxu0 0.0
    %6038 = vmatprep.subr.mxu0 0.0
    %6039 = vmatpush1.msra.mxu0 0.0
    %6040 = vmatprep.subr.mxu0 0.0
    %6041 = vmatpush1.msra.mxu0 0.0
    %6042 = vmatprep.subr.mxu0 0.0
    %6043 = vmatpush1.msra.mxu0 0.0
    %6044 = vmatprep.subr.mxu0 0.0
    %6045 = vmatpush1.msra.mxu0 0.0
    %6046 = vmatprep.subr.mxu0 0.0
    %6047 = vmatpush1.msra.mxu0 0.0
    %6048 = vmatprep.subr.mxu0 0.0
    %6049 = vmatpush1.msra.mxu0 0.0
    %6050 = vmatprep.mubr.f32.mxu0 0.0
    %6051 = vmatmul.mubr.f32.gmra.mrb[0].mxu0 %v3634
    %v6052 = vpop.f32.mrb[0].mxu0
    %v6053 = vadd.f32 0.0, %v6052
    %v6054 = vpop.f32.mrb[0].mxu0
    %6055 = vdwg.mxu0
    %v6056 = vadd.f32 %v5912, %v5982
    %v6057 = vxor.u32 %v6056, 2147483648
    %v6058 = vmul.f32 %v6057, 1.442695
    %v6059 = vpow.pop %v6058
    %v6060 = vadd.f32 %v6059, 1.0
    %v6061 = vrcp.pop %v6060
    %v6062 = vmul.f32 1.0, %v6061
    %v6063 = vadd.f32 %v5913, %v5984
    %v6064 = vxor.u32 %v6063, 2147483648
    %v6065 = vmul.f32 %v6064, 1.442695
    %v6066 = vpow.pop %v6065
    %v6067 = vadd.f32 %v6066, 1.0
    %v6068 = vrcp.pop %v6067
    %v6069 = vmul.f32 1.0, %v6068
    %v6070 = vadd.f32 %v6053, %v5910
    %v6071 = vmul.f32 %v6062, %v6070
    %v6072 = vadd.f32 %v5914, %v6071
    %v6073 = vtanh.pop %v6072
    %v6074 = vsub.f32 1.0, %v6069
    %v6075 = vmul.f32 %v6074, %v6073
    %v6076 = vmul.f32 %v6069, %v3634
    %v6077 = vadd.f32 %v6075, %v6076
    %6078 = vst [vmem:[#allocation2] sm:$0xff] %v6077
    %v6079 = vld [vmem:[%s739] sm:$0xff]
    %v6080 = vld [vmem:[%s739 + $0x8] sm:$0xff]
    %v6081 = vld [vmem:[%s739 + $0x10] sm:$0xff]
    %6082 = vmatprep.subr.mxu0 %v5543
    %6083 = vmatpush1.msra.mxu0 %v5542
    %6084 = vmatprep.subr.mxu0 %v5546
    %6085 = vmatpush1.msra.mxu0 %v5545
    %6086 = vmatprep.subr.mxu0 %v5549
    %6087 = vmatpush1.msra.mxu0 %v5548
    %6088 = vmatprep.subr.mxu0 %v5552
    %6089 = vmatpush1.msra.mxu0 %v5551
    %6090 = vmatprep.subr.mxu0 %v5555
    %6091 = vmatpush1.msra.mxu0 %v5554
    %6092 = vmatprep.subr.mxu0 %v5558
    %6093 = vmatpush1.msra.mxu0 %v5557
    %6094 = vmatprep.subr.mxu0 %v5561
    %6095 = vmatpush1.msra.mxu0 %v5560
    %6096 = vmatprep.subr.mxu0 %v5564
    %6097 = vmatpush1.msra.mxu0 %v5563
    %6098 = vmatprep.subr.mxu0 %v5567
    %6099 = vmatpush1.msra.mxu0 %v5566
    %6100 = vmatprep.subr.mxu0 %v5570
    %6101 = vmatpush1.msra.mxu0 %v5569
    %6102 = vmatprep.subr.mxu0 %v5573
    %6103 = vmatpush1.msra.mxu0 %v5572
    %6104 = vmatprep.subr.mxu0 %v5576
    %6105 = vmatpush1.msra.mxu0 %v5575
    %6106 = vmatprep.subr.mxu0 %v5579
    %6107 = vmatpush1.msra.mxu0 %v5578
    %6108 = vmatprep.subr.mxu0 %v5582
    %6109 = vmatpush1.msra.mxu0 %v5581
    %6110 = vmatprep.subr.mxu0 %v5585
    %6111 = vmatpush1.msra.mxu0 %v5584
    %6112 = vmatprep.subr.mxu0 %v5588
    %6113 = vmatpush1.msra.mxu0 %v5587
    %6114 = vmatprep.subr.mxu0 0.0
    %6115 = vmatpush1.msra.mxu0 0.0
    %6116 = vmatprep.subr.mxu0 0.0
    %6117 = vmatpush1.msra.mxu0 0.0
    %6118 = vmatprep.subr.mxu0 0.0
    %6119 = vmatpush1.msra.mxu0 0.0
    %6120 = vmatprep.subr.mxu0 0.0
    %6121 = vmatpush1.msra.mxu0 0.0
    %6122 = vmatprep.subr.mxu0 0.0
    %6123 = vmatpush1.msra.mxu0 0.0
    %6124 = vmatprep.subr.mxu0 0.0
    %6125 = vmatpush1.msra.mxu0 0.0
    %6126 = vmatprep.subr.mxu0 0.0
    %6127 = vmatpush1.msra.mxu0 0.0
    %6128 = vmatprep.subr.mxu0 0.0
    %6129 = vmatpush1.msra.mxu0 0.0
    %6130 = vmatprep.subr.mxu0 0.0
    %6131 = vmatpush1.msra.mxu0 0.0
    %6132 = vmatprep.subr.mxu0 0.0
    %6133 = vmatpush1.msra.mxu0 0.0
    %6134 = vmatprep.subr.mxu0 0.0
    %6135 = vmatpush1.msra.mxu0 0.0
    %6136 = vmatprep.subr.mxu0 0.0
    %6137 = vmatpush1.msra.mxu0 0.0
    %6138 = vmatprep.subr.mxu0 0.0
    %6139 = vmatpush1.msra.mxu0 0.0
    %6140 = vmatprep.subr.mxu0 0.0
    %6141 = vmatpush1.msra.mxu0 0.0
    %6142 = vmatprep.subr.mxu0 0.0
    %6143 = vmatpush1.msra.mxu0 0.0
    %6144 = vmatprep.subr.mxu0 0.0
    %6145 = vmatpush1.msra.mxu0 0.0
    %6146 = vmatprep.mubr.f32.mxu0 0.0
    %6147 = vmatmul.mubr.f32.gmra.mrb[0].mxu0 %v6077
    %v6148 = vpop.f32.mrb[0].mxu0
    %v6149 = vadd.f32 0.0, %v6148
    %v6150 = vpop.f32.mrb[0].mxu0
    %v6151 = vadd.f32 0.0, %v6150
    %6152 = vdwg.mxu0
    %6153 = vmatprep.subr.mxu0 0.0
    %6154 = vmatpush1.msra.mxu0 %v5544
    %6155 = vmatprep.subr.mxu0 0.0
    %6156 = vmatpush1.msra.mxu0 %v5547
    %6157 = vmatprep.subr.mxu0 0.0
    %6158 = vmatpush1.msra.mxu0 %v5550
    %6159 = vmatprep.subr.mxu0 0.0
    %6160 = vmatpush1.msra.mxu0 %v5553
    %6161 = vmatprep.subr.mxu0 0.0
    %6162 = vmatpush1.msra.mxu0 %v5556
    %6163 = vmatprep.subr.mxu0 0.0
    %6164 = vmatpush1.msra.mxu0 %v5559
    %6165 = vmatprep.subr.mxu0 0.0
    %6166 = vmatpush1.msra.mxu0 %v5562
    %6167 = vmatprep.subr.mxu0 0.0
    %6168 = vmatpush1.msra.mxu0 %v5565
    %6169 = vmatprep.subr.mxu0 0.0
    %6170 = vmatpush1.msra.mxu0 %v5568
    %6171 = vmatprep.subr.mxu0 0.0
    %6172 = vmatpush1.msra.mxu0 %v5571
    %6173 = vmatprep.subr.mxu0 0.0
    %6174 = vmatpush1.msra.mxu0 %v5574
    %6175 = vmatprep.subr.mxu0 0.0
    %6176 = vmatpush1.msra.mxu0 %v5577
    %6177 = vmatprep.subr.mxu0 0.0
    %6178 = vmatpush1.msra.mxu0 %v5580
    %6179 = vmatprep.subr.mxu0 0.0
    %6180 = vmatpush1.msra.mxu0 %v5583
    %6181 = vmatprep.subr.mxu0 0.0
    %6182 = vmatpush1.msra.mxu0 %v5586
    %6183 = vmatprep.subr.mxu0 0.0
    %6184 = vmatpush1.msra.mxu0 %v5589
    %6185 = vmatprep.subr.mxu0 0.0
    %6186 = vmatpush1.msra.mxu0 0.0
    %6187 = vmatprep.subr.mxu0 0.0
    %6188 = vmatpush1.msra.mxu0 0.0
    %6189 = vmatprep.subr.mxu0 0.0
    %6190 = vmatpush1.msra.mxu0 0.0
    %6191 = vmatprep.subr.mxu0 0.0
    %6192 = vmatpush1.msra.mxu0 0.0
    %6193 = vmatprep.subr.mxu0 0.0
    %6194 = vmatpush1.msra.mxu0 0.0
    %6195 = vmatprep.subr.mxu0 0.0
    %6196 = vmatpush1.msra.mxu0 0.0
    %6197 = vmatprep.subr.mxu0 0.0
    %6198 = vmatpush1.msra.mxu0 0.0
    %6199 = vmatprep.subr.mxu0 0.0
    %6200 = vmatpush1.msra.mxu0 0.0
    %6201 = vmatprep.subr.mxu0 0.0
    %6202 = vmatpush1.msra.mxu0 0.0
    %6203 = vmatprep.subr.mxu0 0.0
    %6204 = vmatpush1.msra.mxu0 0.0
    %6205 = vmatprep.subr.mxu0 0.0
    %6206 = vmatpush1.msra.mxu0 0.0
    %6207 = vmatprep.subr.mxu0 0.0
    %6208 = vmatpush1.msra.mxu0 0.0
    %6209 = vmatprep.subr.mxu0 0.0
    %6210 = vmatpush1.msra.mxu0 0.0
    %6211 = vmatprep.subr.mxu0 0.0
    %6212 = vmatpush1.msra.mxu0 0.0
    %6213 = vmatprep.subr.mxu0 0.0
    %6214 = vmatpush1.msra.mxu0 0.0
    %6215 = vmatprep.subr.mxu0 0.0
    %6216 = vmatpush1.msra.mxu0 0.0
    %6217 = vmatprep.mubr.f32.mxu0 0.0
    %6218 = vmatmul.mubr.f32.gmra.mrb[0].mxu0 %v6077
    %v6219 = vpop.f32.mrb[0].mxu0
    %v6220 = vadd.f32 0.0, %v6219
    %v6221 = vpop.f32.mrb[0].mxu0
    %6222 = vdwg.mxu0
    %v6223 = vadd.f32 %v6079, %v6149
    %v6224 = vxor.u32 %v6223, 2147483648
    %v6225 = vmul.f32 %v6224, 1.442695
    %v6226 = vpow.pop %v6225
    %v6227 = vadd.f32 %v6226, 1.0
    %v6228 = vrcp.pop %v6227
    %v6229 = vmul.f32 1.0, %v6228
    %v6230 = vadd.f32 %v6080, %v6151
    %v6231 = vxor.u32 %v6230, 2147483648
    %v6232 = vmul.f32 %v6231, 1.442695
    %v6233 = vpow.pop %v6232
    %v6234 = vadd.f32 %v6233, 1.0
    %v6235 = vrcp.pop %v6234
    %v6236 = vmul.f32 1.0, %v6235
    %v6237 = vadd.f32 %v6220, %v5910
    %v6238 = vmul.f32 %v6229, %v6237
    %v6239 = vadd.f32 %v6081, %v6238
    %v6240 = vtanh.pop %v6239
    %v6241 = vsub.f32 1.0, %v6236
    %v6242 = vmul.f32 %v6241, %v6240
    %v6243 = vmul.f32 %v6236, %v6077
    %v6244 = vadd.f32 %v6242, %v6243
    %6245 = vst [vmem:[%s906] sm:$0xff] %v6244
    %v6246 = vld [vmem:[%s908] sm:$0xff]
    %v6247 = vld [vmem:[%s908 + $0x8] sm:$0xff]
    %v6248 = vld [vmem:[%s908 + $0x10] sm:$0xff]
    %6249 = vmatprep.subr.mxu0 %v5543
    %6250 = vmatpush1.msra.mxu0 %v5542
    %6251 = vmatprep.subr.mxu0 %v5546
    %6252 = vmatpush1.msra.mxu0 %v5545
    %6253 = vmatprep.subr.mxu0 %v5549
    %6254 = vmatpush1.msra.mxu0 %v5548
    %6255 = vmatprep.subr.mxu0 %v5552
    %6256 = vmatpush1.msra.mxu0 %v5551
    %6257 = vmatprep.subr.mxu0 %v5555
    %6258 = vmatpush1.msra.mxu0 %v5554
    %6259 = vmatprep.subr.mxu0 %v5558
    %6260 = vmatpush1.msra.mxu0 %v5557
    %6261 = vmatprep.subr.mxu0 %v5561
    %6262 = vmatpush1.msra.mxu0 %v5560
    %6263 = vmatprep.subr.mxu0 %v5564
    %6264 = vmatpush1.msra.mxu0 %v5563
    %6265 = vmatprep.subr.mxu0 %v5567
    %6266 = vmatpush1.msra.mxu0 %v5566
    %6267 = vmatprep.subr.mxu0 %v5570
    %6268 = vmatpush1.msra.mxu0 %v5569
    %6269 = vmatprep.subr.mxu0 %v5573
    %6270 = vmatpush1.msra.mxu0 %v5572
    %6271 = vmatprep.subr.mxu0 %v5576
    %6272 = vmatpush1.msra.mxu0 %v5575
    %6273 = vmatprep.subr.mxu0 %v5579
    %6274 = vmatpush1.msra.mxu0 %v5578
    %6275 = vmatprep.subr.mxu0 %v5582
    %6276 = vmatpush1.msra.mxu0 %v5581
    %6277 = vmatprep.subr.mxu0 %v5585
    %6278 = vmatpush1.msra.mxu0 %v5584
    %6279 = vmatprep.subr.mxu0 %v5588
    %6280 = vmatpush1.msra.mxu0 %v5587
    %6281 = vmatprep.subr.mxu0 0.0
    %6282 = vmatpush1.msra.mxu0 0.0
    %6283 = vmatprep.subr.mxu0 0.0
    %6284 = vmatpush1.msra.mxu0 0.0
    %6285 = vmatprep.subr.mxu0 0.0
    %6286 = vmatpush1.msra.mxu0 0.0
    %6287 = vmatprep.subr.mxu0 0.0
    %6288 = vmatpush1.msra.mxu0 0.0
    %6289 = vmatprep.subr.mxu0 0.0
    %6290 = vmatpush1.msra.mxu0 0.0
    %6291 = vmatprep.subr.mxu0 0.0
    %6292 = vmatpush1.msra.mxu0 0.0
    %6293 = vmatprep.subr.mxu0 0.0
    %6294 = vmatpush1.msra.mxu0 0.0
    %6295 = vmatprep.subr.mxu0 0.0
    %6296 = vmatpush1.msra.mxu0 0.0
    %6297 = vmatprep.subr.mxu0 0.0
    %6298 = vmatpush1.msra.mxu0 0.0
    %6299 = vmatprep.subr.mxu0 0.0
    %6300 = vmatpush1.msra.mxu0 0.0
    %6301 = vmatprep.subr.mxu0 0.0
    %6302 = vmatpush1.msra.mxu0 0.0
    %6303 = vmatprep.subr.mxu0 0.0
    %6304 = vmatpush1.msra.mxu0 0.0
    %6305 = vmatprep.subr.mxu0 0.0
    %6306 = vmatpush1.msra.mxu0 0.0
    %6307 = vmatprep.subr.mxu0 0.0
    %6308 = vmatpush1.msra.mxu0 0.0
    %6309 = vmatprep.subr.mxu0 0.0
    %6310 = vmatpush1.msra.mxu0 0.0
    %6311 = vmatprep.subr.mxu0 0.0
    %6312 = vmatpush1.msra.mxu0 0.0
    %6313 = vmatprep.mubr.f32.mxu0 0.0
    %6314 = vmatmul.mubr.f32.gmra.mrb[0].mxu0 %v6244
    %v6315 = vpop.f32.mrb[0].mxu0
    %v6316 = vadd.f32 0.0, %v6315
    %v6317 = vpop.f32.mrb[0].mxu0
    %v6318 = vadd.f32 0.0, %v6317
    %6319 = vdwg.mxu0
    %6320 = vmatprep.subr.mxu0 0.0
    %6321 = vmatpush1.msra.mxu0 %v5544
    %6322 = vmatprep.subr.mxu0 0.0
    %6323 = vmatpush1.msra.mxu0 %v5547
    %6324 = vmatprep.subr.mxu0 0.0
    %6325 = vmatpush1.msra.mxu0 %v5550
    %6326 = vmatprep.subr.mxu0 0.0
    %6327 = vmatpush1.msra.mxu0 %v5553
    %6328 = vmatprep.subr.mxu0 0.0
    %6329 = vmatpush1.msra.mxu0 %v5556
    %6330 = vmatprep.subr.mxu0 0.0
    %6331 = vmatpush1.msra.mxu0 %v5559
    %6332 = vmatprep.subr.mxu0 0.0
    %6333 = vmatpush1.msra.mxu0 %v5562
    %6334 = vmatprep.subr.mxu0 0.0
    %6335 = vmatpush1.msra.mxu0 %v5565
    %6336 = vmatprep.subr.mxu0 0.0
    %6337 = vmatpush1.msra.mxu0 %v5568
    %6338 = vmatprep.subr.mxu0 0.0
    %6339 = vmatpush1.msra.mxu0 %v5571
    %6340 = vmatprep.subr.mxu0 0.0
    %6341 = vmatpush1.msra.mxu0 %v5574
    %6342 = vmatprep.subr.mxu0 0.0
    %6343 = vmatpush1.msra.mxu0 %v5577
    %6344 = vmatprep.subr.mxu0 0.0
    %6345 = vmatpush1.msra.mxu0 %v5580
    %6346 = vmatprep.subr.mxu0 0.0
    %6347 = vmatpush1.msra.mxu0 %v5583
    %6348 = vmatprep.subr.mxu0 0.0
    %6349 = vmatpush1.msra.mxu0 %v5586
    %6350 = vmatprep.subr.mxu0 0.0
    %6351 = vmatpush1.msra.mxu0 %v5589
    %6352 = vmatprep.subr.mxu0 0.0
    %6353 = vmatpush1.msra.mxu0 0.0
    %6354 = vmatprep.subr.mxu0 0.0
    %6355 = vmatpush1.msra.mxu0 0.0
    %6356 = vmatprep.subr.mxu0 0.0
    %6357 = vmatpush1.msra.mxu0 0.0
    %6358 = vmatprep.subr.mxu0 0.0
    %6359 = vmatpush1.msra.mxu0 0.0
    %6360 = vmatprep.subr.mxu0 0.0
    %6361 = vmatpush1.msra.mxu0 0.0
    %6362 = vmatprep.subr.mxu0 0.0
    %6363 = vmatpush1.msra.mxu0 0.0
    %6364 = vmatprep.subr.mxu0 0.0
    %6365 = vmatpush1.msra.mxu0 0.0
    %6366 = vmatprep.subr.mxu0 0.0
    %6367 = vmatpush1.msra.mxu0 0.0
    %6368 = vmatprep.subr.mxu0 0.0
    %6369 = vmatpush1.msra.mxu0 0.0
    %6370 = vmatprep.subr.mxu0 0.0
    %6371 = vmatpush1.msra.mxu0 0.0
    %6372 = vmatprep.subr.mxu0 0.0
    %6373 = vmatpush1.msra.mxu0 0.0
    %6374 = vmatprep.subr.mxu0 0.0
    %6375 = vmatpush1.msra.mxu0 0.0
    %6376 = vmatprep.subr.mxu0 0.0
    %6377 = vmatpush1.msra.mxu0 0.0
    %6378 = vmatprep.subr.mxu0 0.0
    %6379 = vmatpush1.msra.mxu0 0.0
    %6380 = vmatprep.subr.mxu0 0.0
    %6381 = vmatpush1.msra.mxu0 0.0
    %6382 = vmatprep.subr.mxu0 0.0
    %6383 = vmatpush1.msra.mxu0 0.0
    %6384 = vmatprep.mubr.f32.mxu0 0.0
    %6385 = vmatmul.mubr.f32.gmra.mrb[0].mxu0 %v6244
    %v6386 = vpop.f32.mrb[0].mxu0
    %v6387 = vadd.f32 0.0, %v6386
    %v6388 = vpop.f32.mrb[0].mxu0
    %6389 = vdwg.mxu0
    %v6390 = vadd.f32 %v6246, %v6316
    %v6391 = vxor.u32 %v6390, 2147483648
    %v6392 = vmul.f32 %v6391, 1.442695
    %v6393 = vpow.pop %v6392
    %v6394 = vadd.f32 %v6393, 1.0
    %v6395 = vrcp.pop %v6394
    %v6396 = vmul.f32 1.0, %v6395
    %v6397 = vadd.f32 %v6247, %v6318
    %v6398 = vxor.u32 %v6397, 2147483648
    %v6399 = vmul.f32 %v6398, 1.442695
    %v6400 = vpow.pop %v6399
    %v6401 = vadd.f32 %v6400, 1.0
    %v6402 = vrcp.pop %v6401
    %v6403 = vmul.f32 1.0, %v6402
    %v6404 = vadd.f32 %v6387, %v5910
    %v6405 = vmul.f32 %v6396, %v6404
    %v6406 = vadd.f32 %v6248, %v6405
    %v6407 = vtanh.pop %v6406
    %v6408 = vsub.f32 1.0, %v6403
    %v6409 = vmul.f32 %v6408, %v6407
    %v6410 = vmul.f32 %v6403, %v6244
    %v6411 = vadd.f32 %v6409, %v6410
    %6412 = vst [vmem:[%s1075] sm:$0xff] %v6411
    %v6413 = vld [vmem:[%s1077] sm:$0xff]
    %v6414 = vld [vmem:[%s1077 + $0x8] sm:$0xff]
    %v6415 = vld [vmem:[%s1077 + $0x10] sm:$0xff]
    %6416 = vmatprep.subr.mxu0 %v5543
    %6417 = vmatpush1.msra.mxu0 %v5542
    %6418 = vmatprep.subr.mxu0 %v5546
    %6419 = vmatpush1.msra.mxu0 %v5545
    %6420 = vmatprep.subr.mxu0 %v5549
    %6421 = vmatpush1.msra.mxu0 %v5548
    %6422 = vmatprep.subr.mxu0 %v5552
    %6423 = vmatpush1.msra.mxu0 %v5551
    %6424 = vmatprep.subr.mxu0 %v5555
    %6425 = vmatpush1.msra.mxu0 %v5554
    %6426 = vmatprep.subr.mxu0 %v5558
    %6427 = vmatpush1.msra.mxu0 %v5557
    %6428 = vmatprep.subr.mxu0 %v5561
    %6429 = vmatpush1.msra.mxu0 %v5560
    %6430 = vmatprep.subr.mxu0 %v5564
    %6431 = vmatpush1.msra.mxu0 %v5563
    %6432 = vmatprep.subr.mxu0 %v5567
    %6433 = vmatpush1.msra.mxu0 %v5566
    %6434 = vmatprep.subr.mxu0 %v5570
    %6435 = vmatpush1.msra.mxu0 %v5569
    %6436 = vmatprep.subr.mxu0 %v5573
    %6437 = vmatpush1.msra.mxu0 %v5572
    %6438 = vmatprep.subr.mxu0 %v5576
    %6439 = vmatpush1.msra.mxu0 %v5575
    %6440 = vmatprep.subr.mxu0 %v5579
    %6441 = vmatpush1.msra.mxu0 %v5578
    %6442 = vmatprep.subr.mxu0 %v5582
    %6443 = vmatpush1.msra.mxu0 %v5581
    %6444 = vmatprep.subr.mxu0 %v5585
    %6445 = vmatpush1.msra.mxu0 %v5584
    %6446 = vmatprep.subr.mxu0 %v5588
    %6447 = vmatpush1.msra.mxu0 %v5587
    %6448 = vmatprep.subr.mxu0 0.0
    %6449 = vmatpush1.msra.mxu0 0.0
    %6450 = vmatprep.subr.mxu0 0.0
    %6451 = vmatpush1.msra.mxu0 0.0
    %6452 = vmatprep.subr.mxu0 0.0
    %6453 = vmatpush1.msra.mxu0 0.0
    %6454 = vmatprep.subr.mxu0 0.0
    %6455 = vmatpush1.msra.mxu0 0.0
    %6456 = vmatprep.subr.mxu0 0.0
    %6457 = vmatpush1.msra.mxu0 0.0
    %6458 = vmatprep.subr.mxu0 0.0
    %6459 = vmatpush1.msra.mxu0 0.0
    %6460 = vmatprep.subr.mxu0 0.0
    %6461 = vmatpush1.msra.mxu0 0.0
    %6462 = vmatprep.subr.mxu0 0.0
    %6463 = vmatpush1.msra.mxu0 0.0
    %6464 = vmatprep.subr.mxu0 0.0
    %6465 = vmatpush1.msra.mxu0 0.0
    %6466 = vmatprep.subr.mxu0 0.0
    %6467 = vmatpush1.msra.mxu0 0.0
    %6468 = vmatprep.subr.mxu0 0.0
    %6469 = vmatpush1.msra.mxu0 0.0
    %6470 = vmatprep.subr.mxu0 0.0
    %6471 = vmatpush1.msra.mxu0 0.0
    %6472 = vmatprep.subr.mxu0 0.0
    %6473 = vmatpush1.msra.mxu0 0.0
    %6474 = vmatprep.subr.mxu0 0.0
    %6475 = vmatpush1.msra.mxu0 0.0
    %6476 = vmatprep.subr.mxu0 0.0
    %6477 = vmatpush1.msra.mxu0 0.0
    %6478 = vmatprep.subr.mxu0 0.0
    %6479 = vmatpush1.msra.mxu0 0.0
    %6480 = vmatprep.mubr.f32.mxu0 0.0
    %6481 = vmatmul.mubr.f32.gmra.mrb[0].mxu0 %v6411
    %v6482 = vpop.f32.mrb[0].mxu0
    %v6483 = vadd.f32 0.0, %v6482
    %v6484 = vpop.f32.mrb[0].mxu0
    %v6485 = vadd.f32 0.0, %v6484
    %6486 = vdwg.mxu0
    %6487 = vmatprep.subr.mxu0 0.0
    %6488 = vmatpush1.msra.mxu0 %v5544
    %6489 = vmatprep.subr.mxu0 0.0
    %6490 = vmatpush1.msra.mxu0 %v5547
    %6491 = vmatprep.subr.mxu0 0.0
    %6492 = vmatpush1.msra.mxu0 %v5550
    %6493 = vmatprep.subr.mxu0 0.0
    %6494 = vmatpush1.msra.mxu0 %v5553
    %6495 = vmatprep.subr.mxu0 0.0
    %6496 = vmatpush1.msra.mxu0 %v5556
    %6497 = vmatprep.subr.mxu0 0.0
    %6498 = vmatpush1.msra.mxu0 %v5559
    %6499 = vmatprep.subr.mxu0 0.0
    %6500 = vmatpush1.msra.mxu0 %v5562
    %6501 = vmatprep.subr.mxu0 0.0
    %6502 = vmatpush1.msra.mxu0 %v5565
    %6503 = vmatprep.subr.mxu0 0.0
    %6504 = vmatpush1.msra.mxu0 %v5568
    %6505 = vmatprep.subr.mxu0 0.0
    %6506 = vmatpush1.msra.mxu0 %v5571
    %6507 = vmatprep.subr.mxu0 0.0
    %6508 = vmatpush1.msra.mxu0 %v5574
    %6509 = vmatprep.subr.mxu0 0.0
    %6510 = vmatpush1.msra.mxu0 %v5577
    %6511 = vmatprep.subr.mxu0 0.0
    %6512 = vmatpush1.msra.mxu0 %v5580
    %6513 = vmatprep.subr.mxu0 0.0
    %6514 = vmatpush1.msra.mxu0 %v5583
    %6515 = vmatprep.subr.mxu0 0.0
    %6516 = vmatpush1.msra.mxu0 %v5586
    %6517 = vmatprep.subr.mxu0 0.0
    %6518 = vmatpush1.msra.mxu0 %v5589
    %6519 = vmatprep.subr.mxu0 0.0
    %6520 = vmatpush1.msra.mxu0 0.0
    %6521 = vmatprep.subr.mxu0 0.0
    %6522 = vmatpush1.msra.mxu0 0.0
    %6523 = vmatprep.subr.mxu0 0.0
    %6524 = vmatpush1.msra.mxu0 0.0
    %6525 = vmatprep.subr.mxu0 0.0
    %6526 = vmatpush1.msra.mxu0 0.0
    %6527 = vmatprep.subr.mxu0 0.0
    %6528 = vmatpush1.msra.mxu0 0.0
    %6529 = vmatprep.subr.mxu0 0.0
    %6530 = vmatpush1.msra.mxu0 0.0
    %6531 = vmatprep.subr.mxu0 0.0
    %6532 = vmatpush1.msra.mxu0 0.0
    %6533 = vmatprep.subr.mxu0 0.0
    %6534 = vmatpush1.msra.mxu0 0.0
    %6535 = vmatprep.subr.mxu0 0.0
    %6536 = vmatpush1.msra.mxu0 0.0
    %6537 = vmatprep.subr.mxu0 0.0
    %6538 = vmatpush1.msra.mxu0 0.0
    %6539 = vmatprep.subr.mxu0 0.0
    %6540 = vmatpush1.msra.mxu0 0.0
    %6541 = vmatprep.subr.mxu0 0.0
    %6542 = vmatpush1.msra.mxu0 0.0
    %6543 = vmatprep.subr.mxu0 0.0
    %6544 = vmatpush1.msra.mxu0 0.0
    %6545 = vmatprep.subr.mxu0 0.0
    %6546 = vmatpush1.msra.mxu0 0.0
    %6547 = vmatprep.subr.mxu0 0.0
    %6548 = vmatpush1.msra.mxu0 0.0
    %6549 = vmatprep.subr.mxu0 0.0
    %6550 = vmatpush1.msra.mxu0 0.0
    %6551 = vmatprep.mubr.f32.mxu0 0.0
    %6552 = vmatmul.mubr.f32.gmra.mrb[0].mxu0 %v6411
    %v6553 = vpop.f32.mrb[0].mxu0
    %v6554 = vadd.f32 0.0, %v6553
    %v6555 = vpop.f32.mrb[0].mxu0
    %6556 = vdwg.mxu0
    %v6557 = vadd.f32 %v6413, %v6483
    %v6558 = vxor.u32 %v6557, 2147483648
    %v6559 = vmul.f32 %v6558, 1.442695
    %v6560 = vpow.pop %v6559
    %v6561 = vadd.f32 %v6560, 1.0
    %v6562 = vrcp.pop %v6561
    %v6563 = vmul.f32 1.0, %v6562
    %v6564 = vadd.f32 %v6414, %v6485
    %v6565 = vxor.u32 %v6564, 2147483648
    %v6566 = vmul.f32 %v6565, 1.442695
    %v6567 = vpow.pop %v6566
    %v6568 = vadd.f32 %v6567, 1.0
    %v6569 = vrcp.pop %v6568
    %v6570 = vmul.f32 1.0, %v6569
    %v6571 = vadd.f32 %v6554, %v5910
    %v6572 = vmul.f32 %v6563, %v6571
    %v6573 = vadd.f32 %v6415, %v6572
    %v6574 = vtanh.pop %v6573
    %v6575 = vsub.f32 1.0, %v6570
    %v6576 = vmul.f32 %v6575, %v6574
    %v6577 = vmul.f32 %v6570, %v6411
    %v6578 = vadd.f32 %v6576, %v6577
    %6579 = vst [vmem:[%s1244] sm:$0xff] %v6578
    %v6580 = vld [vmem:[%s1246] sm:$0xff]
    %v6581 = vld [vmem:[%s1246 + $0x8] sm:$0xff]
    %v6582 = vld [vmem:[%s1246 + $0x10] sm:$0xff]
    %6583 = vmatprep.subr.mxu0 %v5543
    %6584 = vmatpush1.msra.mxu0 %v5542
    %6585 = vmatprep.subr.mxu0 %v5546
    %6586 = vmatpush1.msra.mxu0 %v5545
    %6587 = vmatprep.subr.mxu0 %v5549
    %6588 = vmatpush1.msra.mxu0 %v5548
    %6589 = vmatprep.subr.mxu0 %v5552
    %6590 = vmatpush1.msra.mxu0 %v5551
    %6591 = vmatprep.subr.mxu0 %v5555
    %6592 = vmatpush1.msra.mxu0 %v5554
    %6593 = vmatprep.subr.mxu0 %v5558
    %6594 = vmatpush1.msra.mxu0 %v5557
    %6595 = vmatprep.subr.mxu0 %v5561
    %6596 = vmatpush1.msra.mxu0 %v5560
    %6597 = vmatprep.subr.mxu0 %v5564
    %6598 = vmatpush1.msra.mxu0 %v5563
    %6599 = vmatprep.subr.mxu0 %v5567
    %6600 = vmatpush1.msra.mxu0 %v5566
    %6601 = vmatprep.subr.mxu0 %v5570
    %6602 = vmatpush1.msra.mxu0 %v5569
    %6603 = vmatprep.subr.mxu0 %v5573
    %6604 = vmatpush1.msra.mxu0 %v5572
    %6605 = vmatprep.subr.mxu0 %v5576
    %6606 = vmatpush1.msra.mxu0 %v5575
    %6607 = vmatprep.subr.mxu0 %v5579
    %6608 = vmatpush1.msra.mxu0 %v5578
    %6609 = vmatprep.subr.mxu0 %v5582
    %6610 = vmatpush1.msra.mxu0 %v5581
    %6611 = vmatprep.subr.mxu0 %v5585
    %6612 = vmatpush1.msra.mxu0 %v5584
    %6613 = vmatprep.subr.mxu0 %v5588
    %6614 = vmatpush1.msra.mxu0 %v5587
    %6615 = vmatprep.subr.mxu0 0.0
    %6616 = vmatpush1.msra.mxu0 0.0
    %6617 = vmatprep.subr.mxu0 0.0
    %6618 = vmatpush1.msra.mxu0 0.0
    %6619 = vmatprep.subr.mxu0 0.0
    %6620 = vmatpush1.msra.mxu0 0.0
    %6621 = vmatprep.subr.mxu0 0.0
    %6622 = vmatpush1.msra.mxu0 0.0
    %6623 = vmatprep.subr.mxu0 0.0
    %6624 = vmatpush1.msra.mxu0 0.0
    %6625 = vmatprep.subr.mxu0 0.0
    %6626 = vmatpush1.msra.mxu0 0.0
    %6627 = vmatprep.subr.mxu0 0.0
    %6628 = vmatpush1.msra.mxu0 0.0
    %6629 = vmatprep.subr.mxu0 0.0
    %6630 = vmatpush1.msra.mxu0 0.0
    %6631 = vmatprep.subr.mxu0 0.0
    %6632 = vmatpush1.msra.mxu0 0.0
    %6633 = vmatprep.subr.mxu0 0.0
    %6634 = vmatpush1.msra.mxu0 0.0
    %6635 = vmatprep.subr.mxu0 0.0
    %6636 = vmatpush1.msra.mxu0 0.0
    %6637 = vmatprep.subr.mxu0 0.0
    %6638 = vmatpush1.msra.mxu0 0.0
    %6639 = vmatprep.subr.mxu0 0.0
    %6640 = vmatpush1.msra.mxu0 0.0
    %6641 = vmatprep.subr.mxu0 0.0
    %6642 = vmatpush1.msra.mxu0 0.0
    %6643 = vmatprep.subr.mxu0 0.0
    %6644 = vmatpush1.msra.mxu0 0.0
    %6645 = vmatprep.subr.mxu0 0.0
    %6646 = vmatpush1.msra.mxu0 0.0
    %6647 = vmatprep.mubr.f32.mxu0 0.0
    %6648 = vmatmul.mubr.f32.gmra.mrb[0].mxu0 %v6578
    %v6649 = vpop.f32.mrb[0].mxu0
    %v6650 = vadd.f32 0.0, %v6649
    %v6651 = vpop.f32.mrb[0].mxu0
    %v6652 = vadd.f32 0.0, %v6651
    %6653 = vdwg.mxu0
    %6654 = vmatprep.subr.mxu0 0.0
    %6655 = vmatpush1.msra.mxu0 %v5544
    %6656 = vmatprep.subr.mxu0 0.0
    %6657 = vmatpush1.msra.mxu0 %v5547
    %6658 = vmatprep.subr.mxu0 0.0
    %6659 = vmatpush1.msra.mxu0 %v5550
    %6660 = vmatprep.subr.mxu0 0.0
    %6661 = vmatpush1.msra.mxu0 %v5553
    %6662 = vmatprep.subr.mxu0 0.0
    %6663 = vmatpush1.msra.mxu0 %v5556
    %6664 = vmatprep.subr.mxu0 0.0
    %6665 = vmatpush1.msra.mxu0 %v5559
    %6666 = vmatprep.subr.mxu0 0.0
    %6667 = vmatpush1.msra.mxu0 %v5562
    %6668 = vmatprep.subr.mxu0 0.0
    %6669 = vmatpush1.msra.mxu0 %v5565
    %6670 = vmatprep.subr.mxu0 0.0
    %6671 = vmatpush1.msra.mxu0 %v5568
    %6672 = vmatprep.subr.mxu0 0.0
    %6673 = vmatpush1.msra.mxu0 %v5571
    %6674 = vmatprep.subr.mxu0 0.0
    %6675 = vmatpush1.msra.mxu0 %v5574
    %6676 = vmatprep.subr.mxu0 0.0
    %6677 = vmatpush1.msra.mxu0 %v5577
    %6678 = vmatprep.subr.mxu0 0.0
    %6679 = vmatpush1.msra.mxu0 %v5580
    %6680 = vmatprep.subr.mxu0 0.0
    %6681 = vmatpush1.msra.mxu0 %v5583
    %6682 = vmatprep.subr.mxu0 0.0
    %6683 = vmatpush1.msra.mxu0 %v5586
    %6684 = vmatprep.subr.mxu0 0.0
    %6685 = vmatpush1.msra.mxu0 %v5589
    %6686 = vmatprep.subr.mxu0 0.0
    %6687 = vmatpush1.msra.mxu0 0.0
    %6688 = vmatprep.subr.mxu0 0.0
    %6689 = vmatpush1.msra.mxu0 0.0
    %6690 = vmatprep.subr.mxu0 0.0
    %6691 = vmatpush1.msra.mxu0 0.0
    %6692 = vmatprep.subr.mxu0 0.0
    %6693 = vmatpush1.msra.mxu0 0.0
    %6694 = vmatprep.subr.mxu0 0.0
    %6695 = vmatpush1.msra.mxu0 0.0
    %6696 = vmatprep.subr.mxu0 0.0
    %6697 = vmatpush1.msra.mxu0 0.0
    %6698 = vmatprep.subr.mxu0 0.0
    %6699 = vmatpush1.msra.mxu0 0.0
    %6700 = vmatprep.subr.mxu0 0.0
    %6701 = vmatpush1.msra.mxu0 0.0
    %6702 = vmatprep.subr.mxu0 0.0
    %6703 = vmatpush1.msra.mxu0 0.0
    %6704 = vmatprep.subr.mxu0 0.0
    %6705 = vmatpush1.msra.mxu0 0.0
    %6706 = vmatprep.subr.mxu0 0.0
    %6707 = vmatpush1.msra.mxu0 0.0
    %6708 = vmatprep.subr.mxu0 0.0
    %6709 = vmatpush1.msra.mxu0 0.0
    %6710 = vmatprep.subr.mxu0 0.0
    %6711 = vmatpush1.msra.mxu0 0.0
    %6712 = vmatprep.subr.mxu0 0.0
    %6713 = vmatpush1.msra.mxu0 0.0
    %6714 = vmatprep.subr.mxu0 0.0
    %6715 = vmatpush1.msra.mxu0 0.0
    %6716 = vmatprep.subr.mxu0 0.0
    %6717 = vmatpush1.msra.mxu0 0.0
    %6718 = vmatprep.mubr.f32.mxu0 0.0
    %6719 = vmatmul.mubr.f32.gmra.mrb[0].mxu0 %v6578
    %v6720 = vpop.f32.mrb[0].mxu0
    %v6721 = vadd.f32 0.0, %v6720
    %v6722 = vpop.f32.mrb[0].mxu0
    %6723 = vdwg.mxu0
    %v6724 = vadd.f32 %v6580, %v6650
    %v6725 = vxor.u32 %v6724, 2147483648
    %v6726 = vmul.f32 %v6725, 1.442695
    %v6727 = vpow.pop %v6726
    %v6728 = vadd.f32 %v6727, 1.0
    %v6729 = vrcp.pop %v6728
    %v6730 = vmul.f32 1.0, %v6729
    %v6731 = vadd.f32 %v6581, %v6652
    %v6732 = vxor.u32 %v6731, 2147483648
    %v6733 = vmul.f32 %v6732, 1.442695
    %v6734 = vpow.pop %v6733
    %v6735 = vadd.f32 %v6734, 1.0
    %v6736 = vrcp.pop %v6735
    %v6737 = vmul.f32 1.0, %v6736
    %v6738 = vadd.f32 %v6721, %v5910
    %v6739 = vmul.f32 %v6730, %v6738
    %v6740 = vadd.f32 %v6582, %v6739
    %v6741 = vtanh.pop %v6740
    %v6742 = vsub.f32 1.0, %v6737
    %v6743 = vmul.f32 %v6742, %v6741
    %v6744 = vmul.f32 %v6737, %v6578
    %v6745 = vadd.f32 %v6743, %v6744
    %6746 = vst [vmem:[%s1413] sm:$0xff] %v6745
    %v6747 = vld [vmem:[%s1415] sm:$0xff]
    %v6748 = vld [vmem:[%s1415 + $0x8] sm:$0xff]
    %v6749 = vld [vmem:[%s1415 + $0x10] sm:$0xff]
    %6750 = vmatprep.subr.mxu0 %v5543
    %6751 = vmatpush1.msra.mxu0 %v5542
    %6752 = vmatprep.subr.mxu0 %v5546
    %6753 = vmatpush1.msra.mxu0 %v5545
    %6754 = vmatprep.subr.mxu0 %v5549
    %6755 = vmatpush1.msra.mxu0 %v5548
    %6756 = vmatprep.subr.mxu0 %v5552
    %6757 = vmatpush1.msra.mxu0 %v5551
    %6758 = vmatprep.subr.mxu0 %v5555
    %6759 = vmatpush1.msra.mxu0 %v5554
    %6760 = vmatprep.subr.mxu0 %v5558
    %6761 = vmatpush1.msra.mxu0 %v5557
    %6762 = vmatprep.subr.mxu0 %v5561
    %6763 = vmatpush1.msra.mxu0 %v5560
    %6764 = vmatprep.subr.mxu0 %v5564
    %6765 = vmatpush1.msra.mxu0 %v5563
    %6766 = vmatprep.subr.mxu0 %v5567
    %6767 = vmatpush1.msra.mxu0 %v5566
    %6768 = vmatprep.subr.mxu0 %v5570
    %6769 = vmatpush1.msra.mxu0 %v5569
    %6770 = vmatprep.subr.mxu0 %v5573
    %6771 = vmatpush1.msra.mxu0 %v5572
    %6772 = vmatprep.subr.mxu0 %v5576
    %6773 = vmatpush1.msra.mxu0 %v5575
    %6774 = vmatprep.subr.mxu0 %v5579
    %6775 = vmatpush1.msra.mxu0 %v5578
    %6776 = vmatprep.subr.mxu0 %v5582
    %6777 = vmatpush1.msra.mxu0 %v5581
    %6778 = vmatprep.subr.mxu0 %v5585
    %6779 = vmatpush1.msra.mxu0 %v5584
    %6780 = vmatprep.subr.mxu0 %v5588
    %6781 = vmatpush1.msra.mxu0 %v5587
    %6782 = vmatprep.subr.mxu0 0.0
    %6783 = vmatpush1.msra.mxu0 0.0
    %6784 = vmatprep.subr.mxu0 0.0
    %6785 = vmatpush1.msra.mxu0 0.0
    %6786 = vmatprep.subr.mxu0 0.0
    %6787 = vmatpush1.msra.mxu0 0.0
    %6788 = vmatprep.subr.mxu0 0.0
    %6789 = vmatpush1.msra.mxu0 0.0
    %6790 = vmatprep.subr.mxu0 0.0
    %6791 = vmatpush1.msra.mxu0 0.0
    %6792 = vmatprep.subr.mxu0 0.0
    %6793 = vmatpush1.msra.mxu0 0.0
    %6794 = vmatprep.subr.mxu0 0.0
    %6795 = vmatpush1.msra.mxu0 0.0
    %6796 = vmatprep.subr.mxu0 0.0
    %6797 = vmatpush1.msra.mxu0 0.0
    %6798 = vmatprep.subr.mxu0 0.0
    %6799 = vmatpush1.msra.mxu0 0.0
    %6800 = vmatprep.subr.mxu0 0.0
    %6801 = vmatpush1.msra.mxu0 0.0
    %6802 = vmatprep.subr.mxu0 0.0
    %6803 = vmatpush1.msra.mxu0 0.0
    %6804 = vmatprep.subr.mxu0 0.0
    %6805 = vmatpush1.msra.mxu0 0.0
    %6806 = vmatprep.subr.mxu0 0.0
    %6807 = vmatpush1.msra.mxu0 0.0
    %6808 = vmatprep.subr.mxu0 0.0
    %6809 = vmatpush1.msra.mxu0 0.0
    %6810 = vmatprep.subr.mxu0 0.0
    %6811 = vmatpush1.msra.mxu0 0.0
    %6812 = vmatprep.subr.mxu0 0.0
    %6813 = vmatpush1.msra.mxu0 0.0
    %6814 = vmatprep.mubr.f32.mxu0 0.0
    %6815 = vmatmul.mubr.f32.gmra.mrb[0].mxu0 %v6745
    %v6816 = vpop.f32.mrb[0].mxu0
    %v6817 = vadd.f32 0.0, %v6816
    %v6818 = vpop.f32.mrb[0].mxu0
    %v6819 = vadd.f32 0.0, %v6818
    %6820 = vdwg.mxu0
    %6821 = vmatprep.subr.mxu0 0.0
    %6822 = vmatpush1.msra.mxu0 %v5544
    %6823 = vmatprep.subr.mxu0 0.0
    %6824 = vmatpush1.msra.mxu0 %v5547
    %6825 = vmatprep.subr.mxu0 0.0
    %6826 = vmatpush1.msra.mxu0 %v5550
    %6827 = vmatprep.subr.mxu0 0.0
    %6828 = vmatpush1.msra.mxu0 %v5553
    %6829 = vmatprep.subr.mxu0 0.0
    %6830 = vmatpush1.msra.mxu0 %v5556
    %6831 = vmatprep.subr.mxu0 0.0
    %6832 = vmatpush1.msra.mxu0 %v5559
    %6833 = vmatprep.subr.mxu0 0.0
    %6834 = vmatpush1.msra.mxu0 %v5562
    %6835 = vmatprep.subr.mxu0 0.0
    %6836 = vmatpush1.msra.mxu0 %v5565
    %6837 = vmatprep.subr.mxu0 0.0
    %6838 = vmatpush1.msra.mxu0 %v5568
    %6839 = vmatprep.subr.mxu0 0.0
    %6840 = vmatpush1.msra.mxu0 %v5571
    %6841 = vmatprep.subr.mxu0 0.0
    %6842 = vmatpush1.msra.mxu0 %v5574
    %6843 = vmatprep.subr.mxu0 0.0
    %6844 = vmatpush1.msra.mxu0 %v5577
    %6845 = vmatprep.subr.mxu0 0.0
    %6846 = vmatpush1.msra.mxu0 %v5580
    %6847 = vmatprep.subr.mxu0 0.0
    %6848 = vmatpush1.msra.mxu0 %v5583
    %6849 = vmatprep.subr.mxu0 0.0
    %6850 = vmatpush1.msra.mxu0 %v5586
    %6851 = vmatprep.subr.mxu0 0.0
    %6852 = vmatpush1.msra.mxu0 %v5589
    %6853 = vmatprep.subr.mxu0 0.0
    %6854 = vmatpush1.msra.mxu0 0.0
    %6855 = vmatprep.subr.mxu0 0.0
    %6856 = vmatpush1.msra.mxu0 0.0
    %6857 = vmatprep.subr.mxu0 0.0
    %6858 = vmatpush1.msra.mxu0 0.0
    %6859 = vmatprep.subr.mxu0 0.0
    %6860 = vmatpush1.msra.mxu0 0.0
    %6861 = vmatprep.subr.mxu0 0.0
    %6862 = vmatpush1.msra.mxu0 0.0
    %6863 = vmatprep.subr.mxu0 0.0
    %6864 = vmatpush1.msra.mxu0 0.0
    %6865 = vmatprep.subr.mxu0 0.0
    %6866 = vmatpush1.msra.mxu0 0.0
    %6867 = vmatprep.subr.mxu0 0.0
    %6868 = vmatpush1.msra.mxu0 0.0
    %6869 = vmatprep.subr.mxu0 0.0
    %6870 = vmatpush1.msra.mxu0 0.0
    %6871 = vmatprep.subr.mxu0 0.0
    %6872 = vmatpush1.msra.mxu0 0.0
    %6873 = vmatprep.subr.mxu0 0.0
    %6874 = vmatpush1.msra.mxu0 0.0
    %6875 = vmatprep.subr.mxu0 0.0
    %6876 = vmatpush1.msra.mxu0 0.0
    %6877 = vmatprep.subr.mxu0 0.0
    %6878 = vmatpush1.msra.mxu0 0.0
    %6879 = vmatprep.subr.mxu0 0.0
    %6880 = vmatpush1.msra.mxu0 0.0
    %6881 = vmatprep.subr.mxu0 0.0
    %6882 = vmatpush1.msra.mxu0 0.0
    %6883 = vmatprep.subr.mxu0 0.0
    %6884 = vmatpush1.msra.mxu0 0.0
    %6885 = vmatprep.mubr.f32.mxu0 0.0
    %6886 = vmatmul.mubr.f32.gmra.mrb[0].mxu0 %v6745
    %v6887 = vpop.f32.mrb[0].mxu0
    %v6888 = vadd.f32 0.0, %v6887
    %v6889 = vpop.f32.mrb[0].mxu0
    %6890 = vdwg.mxu0
    %v6891 = vadd.f32 %v6747, %v6817
    %v6892 = vxor.u32 %v6891, 2147483648
    %v6893 = vmul.f32 %v6892, 1.442695
    %v6894 = vpow.pop %v6893
    %v6895 = vadd.f32 %v6894, 1.0
    %v6896 = vrcp.pop %v6895
    %v6897 = vmul.f32 1.0, %v6896
    %v6898 = vadd.f32 %v6748, %v6819
    %v6899 = vxor.u32 %v6898, 2147483648
    %v6900 = vmul.f32 %v6899, 1.442695
    %v6901 = vpow.pop %v6900
    %v6902 = vadd.f32 %v6901, 1.0
    %v6903 = vrcp.pop %v6902
    %v6904 = vmul.f32 1.0, %v6903
    %v6905 = vadd.f32 %v6888, %v5910
    %v6906 = vmul.f32 %v6897, %v6905
    %v6907 = vadd.f32 %v6749, %v6906
    %v6908 = vtanh.pop %v6907
    %v6909 = vsub.f32 1.0, %v6904
    %v6910 = vmul.f32 %v6909, %v6908
    %v6911 = vmul.f32 %v6904, %v6745
    %v6912 = vadd.f32 %v6910, %v6911
    %6913 = vst [vmem:[%s1582] sm:$0xff] %v6912
    %v6914 = vld [vmem:[%s1584] sm:$0xff]
    %v6915 = vld [vmem:[%s1584 + $0x8] sm:$0xff]
    %v6916 = vld [vmem:[%s1584 + $0x10] sm:$0xff]
    %6917 = vmatprep.subr.mxu0 %v5543
    %6918 = vmatpush1.msra.mxu0 %v5542
    %6919 = vmatprep.subr.mxu0 %v5546
    %6920 = vmatpush1.msra.mxu0 %v5545
    %6921 = vmatprep.subr.mxu0 %v5549
    %6922 = vmatpush1.msra.mxu0 %v5548
    %6923 = vmatprep.subr.mxu0 %v5552
    %6924 = vmatpush1.msra.mxu0 %v5551
    %6925 = vmatprep.subr.mxu0 %v5555
    %6926 = vmatpush1.msra.mxu0 %v5554
    %6927 = vmatprep.subr.mxu0 %v5558
    %6928 = vmatpush1.msra.mxu0 %v5557
    %6929 = vmatprep.subr.mxu0 %v5561
    %6930 = vmatpush1.msra.mxu0 %v5560
    %6931 = vmatprep.subr.mxu0 %v5564
    %6932 = vmatpush1.msra.mxu0 %v5563
    %6933 = vmatprep.subr.mxu0 %v5567
    %6934 = vmatpush1.msra.mxu0 %v5566
    %6935 = vmatprep.subr.mxu0 %v5570
    %6936 = vmatpush1.msra.mxu0 %v5569
    %6937 = vmatprep.subr.mxu0 %v5573
    %6938 = vmatpush1.msra.mxu0 %v5572
    %6939 = vmatprep.subr.mxu0 %v5576
    %6940 = vmatpush1.msra.mxu0 %v5575
    %6941 = vmatprep.subr.mxu0 %v5579
    %6942 = vmatpush1.msra.mxu0 %v5578
    %6943 = vmatprep.subr.mxu0 %v5582
    %6944 = vmatpush1.msra.mxu0 %v5581
    %6945 = vmatprep.subr.mxu0 %v5585
    %6946 = vmatpush1.msra.mxu0 %v5584
    %6947 = vmatprep.subr.mxu0 %v5588
    %6948 = vmatpush1.msra.mxu0 %v5587
    %6949 = vmatprep.subr.mxu0 0.0
    %6950 = vmatpush1.msra.mxu0 0.0
    %6951 = vmatprep.subr.mxu0 0.0
    %6952 = vmatpush1.msra.mxu0 0.0
    %6953 = vmatprep.subr.mxu0 0.0
    %6954 = vmatpush1.msra.mxu0 0.0
    %6955 = vmatprep.subr.mxu0 0.0
    %6956 = vmatpush1.msra.mxu0 0.0
    %6957 = vmatprep.subr.mxu0 0.0
    %6958 = vmatpush1.msra.mxu0 0.0
    %6959 = vmatprep.subr.mxu0 0.0
    %6960 = vmatpush1.msra.mxu0 0.0
    %6961 = vmatprep.subr.mxu0 0.0
    %6962 = vmatpush1.msra.mxu0 0.0
    %6963 = vmatprep.subr.mxu0 0.0
    %6964 = vmatpush1.msra.mxu0 0.0
    %6965 = vmatprep.subr.mxu0 0.0
    %6966 = vmatpush1.msra.mxu0 0.0
    %6967 = vmatprep.subr.mxu0 0.0
    %6968 = vmatpush1.msra.mxu0 0.0
    %6969 = vmatprep.subr.mxu0 0.0
    %6970 = vmatpush1.msra.mxu0 0.0
    %6971 = vmatprep.subr.mxu0 0.0
    %6972 = vmatpush1.msra.mxu0 0.0
    %6973 = vmatprep.subr.mxu0 0.0
    %6974 = vmatpush1.msra.mxu0 0.0
    %6975 = vmatprep.subr.mxu0 0.0
    %6976 = vmatpush1.msra.mxu0 0.0
    %6977 = vmatprep.subr.mxu0 0.0
    %6978 = vmatpush1.msra.mxu0 0.0
    %6979 = vmatprep.subr.mxu0 0.0
    %6980 = vmatpush1.msra.mxu0 0.0
    %6981 = vmatprep.mubr.f32.mxu0 0.0
    %6982 = vmatmul.mubr.f32.gmra.mrb[0].mxu0 %v6912
    %v6983 = vpop.f32.mrb[0].mxu0
    %v6984 = vadd.f32 0.0, %v6983
    %v6985 = vpop.f32.mrb[0].mxu0
    %v6986 = vadd.f32 0.0, %v6985
    %6987 = vdwg.mxu0
    %6988 = vmatprep.subr.mxu0 0.0
    %6989 = vmatpush1.msra.mxu0 %v5544
    %6990 = vmatprep.subr.mxu0 0.0
    %6991 = vmatpush1.msra.mxu0 %v5547
    %6992 = vmatprep.subr.mxu0 0.0
    %6993 = vmatpush1.msra.mxu0 %v5550
    %6994 = vmatprep.subr.mxu0 0.0
    %6995 = vmatpush1.msra.mxu0 %v5553
    %6996 = vmatprep.subr.mxu0 0.0
    %6997 = vmatpush1.msra.mxu0 %v5556
    %6998 = vmatprep.subr.mxu0 0.0
    %6999 = vmatpush1.msra.mxu0 %v5559
    %7000 = vmatprep.subr.mxu0 0.0
    %7001 = vmatpush1.msra.mxu0 %v5562
    %7002 = vmatprep.subr.mxu0 0.0
    %7003 = vmatpush1.msra.mxu0 %v5565
    %7004 = vmatprep.subr.mxu0 0.0
    %7005 = vmatpush1.msra.mxu0 %v5568
    %7006 = vmatprep.subr.mxu0 0.0
    %7007 = vmatpush1.msra.mxu0 %v5571
    %7008 = vmatprep.subr.mxu0 0.0
    %7009 = vmatpush1.msra.mxu0 %v5574
    %7010 = vmatprep.subr.mxu0 0.0
    %7011 = vmatpush1.msra.mxu0 %v5577
    %7012 = vmatprep.subr.mxu0 0.0
    %7013 = vmatpush1.msra.mxu0 %v5580
    %7014 = vmatprep.subr.mxu0 0.0
    %7015 = vmatpush1.msra.mxu0 %v5583
    %7016 = vmatprep.subr.mxu0 0.0
    %7017 = vmatpush1.msra.mxu0 %v5586
    %7018 = vmatprep.subr.mxu0 0.0
    %7019 = vmatpush1.msra.mxu0 %v5589
    %7020 = vmatprep.subr.mxu0 0.0
    %7021 = vmatpush1.msra.mxu0 0.0
    %7022 = vmatprep.subr.mxu0 0.0
    %7023 = vmatpush1.msra.mxu0 0.0
    %7024 = vmatprep.subr.mxu0 0.0
    %7025 = vmatpush1.msra.mxu0 0.0
    %7026 = vmatprep.subr.mxu0 0.0
    %7027 = vmatpush1.msra.mxu0 0.0
    %7028 = vmatprep.subr.mxu0 0.0
    %7029 = vmatpush1.msra.mxu0 0.0
    %7030 = vmatprep.subr.mxu0 0.0
    %7031 = vmatpush1.msra.mxu0 0.0
    %7032 = vmatprep.subr.mxu0 0.0
    %7033 = vmatpush1.msra.mxu0 0.0
    %7034 = vmatprep.subr.mxu0 0.0
    %7035 = vmatpush1.msra.mxu0 0.0
    %7036 = vmatprep.subr.mxu0 0.0
    %7037 = vmatpush1.msra.mxu0 0.0
    %7038 = vmatprep.subr.mxu0 0.0
    %7039 = vmatpush1.msra.mxu0 0.0
    %7040 = vmatprep.subr.mxu0 0.0
    %7041 = vmatpush1.msra.mxu0 0.0
    %7042 = vmatprep.subr.mxu0 0.0
    %7043 = vmatpush1.msra.mxu0 0.0
    %7044 = vmatprep.subr.mxu0 0.0
    %7045 = vmatpush1.msra.mxu0 0.0
    %7046 = vmatprep.subr.mxu0 0.0
    %7047 = vmatpush1.msra.mxu0 0.0
    %7048 = vmatprep.subr.mxu0 0.0
    %7049 = vmatpush1.msra.mxu0 0.0
    %7050 = vmatprep.subr.mxu0 0.0
    %7051 = vmatpush1.msra.mxu0 0.0
    %7052 = vmatprep.mubr.f32.mxu0 0.0
    %7053 = vmatmul.mubr.f32.gmra.mrb[0].mxu0 %v6912
    %v7054 = vpop.f32.mrb[0].mxu0
    %v7055 = vadd.f32 0.0, %v7054
    %v7056 = vpop.f32.mrb[0].mxu0
    %7057 = vdwg.mxu0
    %v7058 = vadd.f32 %v6914, %v6984
    %v7059 = vxor.u32 %v7058, 2147483648
    %v7060 = vmul.f32 %v7059, 1.442695
    %v7061 = vpow.pop %v7060
    %v7062 = vadd.f32 %v7061, 1.0
    %v7063 = vrcp.pop %v7062
    %v7064 = vmul.f32 1.0, %v7063
    %v7065 = vadd.f32 %v6915, %v6986
    %v7066 = vxor.u32 %v7065, 2147483648
    %v7067 = vmul.f32 %v7066, 1.442695
    %v7068 = vpow.pop %v7067
    %v7069 = vadd.f32 %v7068, 1.0
    %v7070 = vrcp.pop %v7069
    %v7071 = vmul.f32 1.0, %v7070
    %v7072 = vadd.f32 %v7055, %v5910
    %v7073 = vmul.f32 %v7064, %v7072
    %v7074 = vadd.f32 %v6916, %v7073
    %v7075 = vtanh.pop %v7074
    %v7076 = vsub.f32 1.0, %v7071
    %v7077 = vmul.f32 %v7076, %v7075
    %v7078 = vmul.f32 %v7071, %v6912
    %v7079 = vadd.f32 %v7077, %v7078
    %7080 = vst [vmem:[%s1751] sm:$0xff] %v7079
    %v7081 = vld [vmem:[%s1753] sm:$0xff]
    %v7082 = vld [vmem:[%s1753 + $0x8] sm:$0xff]
    %v7083 = vld [vmem:[%s1753 + $0x10] sm:$0xff]
    %7084 = vmatprep.subr.mxu0 %v5543
    %7085 = vmatpush1.msra.mxu0 %v5542
    %7086 = vmatprep.subr.mxu0 %v5546
    %7087 = vmatpush1.msra.mxu0 %v5545
    %7088 = vmatprep.subr.mxu0 %v5549
    %7089 = vmatpush1.msra.mxu0 %v5548
    %7090 = vmatprep.subr.mxu0 %v5552
    %7091 = vmatpush1.msra.mxu0 %v5551
    %7092 = vmatprep.subr.mxu0 %v5555
    %7093 = vmatpush1.msra.mxu0 %v5554
    %7094 = vmatprep.subr.mxu0 %v5558
    %7095 = vmatpush1.msra.mxu0 %v5557
    %7096 = vmatprep.subr.mxu0 %v5561
    %7097 = vmatpush1.msra.mxu0 %v5560
    %7098 = vmatprep.subr.mxu0 %v5564
    %7099 = vmatpush1.msra.mxu0 %v5563
    %7100 = vmatprep.subr.mxu0 %v5567
    %7101 = vmatpush1.msra.mxu0 %v5566
    %7102 = vmatprep.subr.mxu0 %v5570
    %7103 = vmatpush1.msra.mxu0 %v5569
    %7104 = vmatprep.subr.mxu0 %v5573
    %7105 = vmatpush1.msra.mxu0 %v5572
    %7106 = vmatprep.subr.mxu0 %v5576
    %7107 = vmatpush1.msra.mxu0 %v5575
    %7108 = vmatprep.subr.mxu0 %v5579
    %7109 = vmatpush1.msra.mxu0 %v5578
    %7110 = vmatprep.subr.mxu0 %v5582
    %7111 = vmatpush1.msra.mxu0 %v5581
    %7112 = vmatprep.subr.mxu0 %v5585
    %7113 = vmatpush1.msra.mxu0 %v5584
    %7114 = vmatprep.subr.mxu0 %v5588
    %7115 = vmatpush1.msra.mxu0 %v5587
    %7116 = vmatprep.subr.mxu0 0.0
    %7117 = vmatpush1.msra.mxu0 0.0
    %7118 = vmatprep.subr.mxu0 0.0
    %7119 = vmatpush1.msra.mxu0 0.0
    %7120 = vmatprep.subr.mxu0 0.0
    %7121 = vmatpush1.msra.mxu0 0.0
    %7122 = vmatprep.subr.mxu0 0.0
    %7123 = vmatpush1.msra.mxu0 0.0
    %7124 = vmatprep.subr.mxu0 0.0
    %7125 = vmatpush1.msra.mxu0 0.0
    %7126 = vmatprep.subr.mxu0 0.0
    %7127 = vmatpush1.msra.mxu0 0.0
    %7128 = vmatprep.subr.mxu0 0.0
    %7129 = vmatpush1.msra.mxu0 0.0
    %7130 = vmatprep.subr.mxu0 0.0
    %7131 = vmatpush1.msra.mxu0 0.0
    %7132 = vmatprep.subr.mxu0 0.0
    %7133 = vmatpush1.msra.mxu0 0.0
    %7134 = vmatprep.subr.mxu0 0.0
    %7135 = vmatpush1.msra.mxu0 0.0
    %7136 = vmatprep.subr.mxu0 0.0
    %7137 = vmatpush1.msra.mxu0 0.0
    %7138 = vmatprep.subr.mxu0 0.0
    %7139 = vmatpush1.msra.mxu0 0.0
    %7140 = vmatprep.subr.mxu0 0.0
    %7141 = vmatpush1.msra.mxu0 0.0
    %7142 = vmatprep.subr.mxu0 0.0
    %7143 = vmatpush1.msra.mxu0 0.0
    %7144 = vmatprep.subr.mxu0 0.0
    %7145 = vmatpush1.msra.mxu0 0.0
    %7146 = vmatprep.subr.mxu0 0.0
    %7147 = vmatpush1.msra.mxu0 0.0
    %7148 = vmatprep.mubr.f32.mxu0 0.0
    %7149 = vmatmul.mubr.f32.gmra.mrb[0].mxu0 %v7079
    %v7150 = vpop.f32.mrb[0].mxu0
    %v7151 = vadd.f32 0.0, %v7150
    %v7152 = vpop.f32.mrb[0].mxu0
    %v7153 = vadd.f32 0.0, %v7152
    %7154 = vdwg.mxu0
    %7155 = vmatprep.subr.mxu0 0.0
    %7156 = vmatpush1.msra.mxu0 %v5544
    %7157 = vmatprep.subr.mxu0 0.0
    %7158 = vmatpush1.msra.mxu0 %v5547
    %7159 = vmatprep.subr.mxu0 0.0
    %7160 = vmatpush1.msra.mxu0 %v5550
    %7161 = vmatprep.subr.mxu0 0.0
    %7162 = vmatpush1.msra.mxu0 %v5553
    %7163 = vmatprep.subr.mxu0 0.0
    %7164 = vmatpush1.msra.mxu0 %v5556
    %7165 = vmatprep.subr.mxu0 0.0
    %7166 = vmatpush1.msra.mxu0 %v5559
    %7167 = vmatprep.subr.mxu0 0.0
    %7168 = vmatpush1.msra.mxu0 %v5562
    %7169 = vmatprep.subr.mxu0 0.0
    %7170 = vmatpush1.msra.mxu0 %v5565
    %7171 = vmatprep.subr.mxu0 0.0
    %7172 = vmatpush1.msra.mxu0 %v5568
    %7173 = vmatprep.subr.mxu0 0.0
    %7174 = vmatpush1.msra.mxu0 %v5571
    %7175 = vmatprep.subr.mxu0 0.0
    %7176 = vmatpush1.msra.mxu0 %v5574
    %7177 = vmatprep.subr.mxu0 0.0
    %7178 = vmatpush1.msra.mxu0 %v5577
    %7179 = vmatprep.subr.mxu0 0.0
    %7180 = vmatpush1.msra.mxu0 %v5580
    %7181 = vmatprep.subr.mxu0 0.0
    %7182 = vmatpush1.msra.mxu0 %v5583
    %7183 = vmatprep.subr.mxu0 0.0
    %7184 = vmatpush1.msra.mxu0 %v5586
    %7185 = vmatprep.subr.mxu0 0.0
    %7186 = vmatpush1.msra.mxu0 %v5589
    %7187 = vmatprep.subr.mxu0 0.0
    %7188 = vmatpush1.msra.mxu0 0.0
    %7189 = vmatprep.subr.mxu0 0.0
    %7190 = vmatpush1.msra.mxu0 0.0
    %7191 = vmatprep.subr.mxu0 0.0
    %7192 = vmatpush1.msra.mxu0 0.0
    %7193 = vmatprep.subr.mxu0 0.0
    %7194 = vmatpush1.msra.mxu0 0.0
    %7195 = vmatprep.subr.mxu0 0.0
    %7196 = vmatpush1.msra.mxu0 0.0
    %7197 = vmatprep.subr.mxu0 0.0
    %7198 = vmatpush1.msra.mxu0 0.0
    %7199 = vmatprep.subr.mxu0 0.0
    %7200 = vmatpush1.msra.mxu0 0.0
    %7201 = vmatprep.subr.mxu0 0.0
    %7202 = vmatpush1.msra.mxu0 0.0
    %7203 = vmatprep.subr.mxu0 0.0
    %7204 = vmatpush1.msra.mxu0 0.0
    %7205 = vmatprep.subr.mxu0 0.0
    %7206 = vmatpush1.msra.mxu0 0.0
    %7207 = vmatprep.subr.mxu0 0.0
    %7208 = vmatpush1.msra.mxu0 0.0
    %7209 = vmatprep.subr.mxu0 0.0
    %7210 = vmatpush1.msra.mxu0 0.0
    %7211 = vmatprep.subr.mxu0 0.0
    %7212 = vmatpush1.msra.mxu0 0.0
    %7213 = vmatprep.subr.mxu0 0.0
    %7214 = vmatpush1.msra.mxu0 0.0
    %7215 = vmatprep.subr.mxu0 0.0
    %7216 = vmatpush1.msra.mxu0 0.0
    %7217 = vmatprep.subr.mxu0 0.0
    %7218 = vmatpush1.msra.mxu0 0.0
    %7219 = vmatprep.mubr.f32.mxu0 0.0
    %7220 = vmatmul.mubr.f32.gmra.mrb[0].mxu0 %v7079
    %v7221 = vpop.f32.mrb[0].mxu0
    %v7222 = vadd.f32 0.0, %v7221
    %v7223 = vpop.f32.mrb[0].mxu0
    %7224 = vdwg.mxu0
    %v7225 = vadd.f32 %v7081, %v7151
    %v7226 = vxor.u32 %v7225, 2147483648
    %v7227 = vmul.f32 %v7226, 1.442695
    %v7228 = vpow.pop %v7227
    %v7229 = vadd.f32 %v7228, 1.0
    %v7230 = vrcp.pop %v7229
    %v7231 = vmul.f32 1.0, %v7230
    %v7232 = vadd.f32 %v7082, %v7153
    %v7233 = vxor.u32 %v7232, 2147483648
    %v7234 = vmul.f32 %v7233, 1.442695
    %v7235 = vpow.pop %v7234
    %v7236 = vadd.f32 %v7235, 1.0
    %v7237 = vrcp.pop %v7236
    %v7238 = vmul.f32 1.0, %v7237
    %v7239 = vadd.f32 %v7222, %v5910
    %v7240 = vmul.f32 %v7231, %v7239
    %v7241 = vadd.f32 %v7083, %v7240
    %v7242 = vtanh.pop %v7241
    %v7243 = vsub.f32 1.0, %v7238
    %v7244 = vmul.f32 %v7243, %v7242
    %v7245 = vmul.f32 %v7238, %v7079
    %v7246 = vadd.f32 %v7244, %v7245
    %7247 = vst [vmem:[%s1920] sm:$0xff] %v7246
    %v7248 = vld [vmem:[#allocation2] sm:$0xff]
    %v7249 = vld [vmem:[#allocation2 + $0x8] sm:$0xff]
    %v7250 = vld [vmem:[#allocation2 + $0x10] sm:$0xff]
    %v7251 = vld [vmem:[#allocation2 + $0x18] sm:$0xff]
    %v7252 = vld [vmem:[#allocation2 + $0x20] sm:$0xff]
    %v7253 = vld [vmem:[#allocation2 + $0x28] sm:$0xff]
    %v7254 = vld [vmem:[#allocation2 + $0x30] sm:$0xff]
    %v7255 = vld [vmem:[#allocation2 + $0x38] sm:$0xff]
    %v7256 = vld [vmem:[%s20] sm:$0xff]
    %v7257 = vld [vmem:[%s20 + $0x8] sm:$0xff]
    %v7258 = vld [vmem:[%s20 + $0x10] sm:$0xff]
    %v7259 = vld [vmem:[%s20 + $0x18] sm:$0xff]
    %v7260 = vld [vmem:[%s20 + $0x20] sm:$0xff]
    %v7261 = vld [vmem:[%s20 + $0x28] sm:$0xff]
    %v7262 = vld [vmem:[%s20 + $0x30] sm:$0xff]
    %v7263 = vld [vmem:[%s20 + $0x38] sm:$0xff]
    %v7264 = vld [vmem:[%s20 + $0x40] sm:$0xff]
    %v7265 = vld [vmem:[%s20 + $0x48] sm:$0xff]
    %v7266 = vld [vmem:[%s20 + $0x50] sm:$0xff]
    %v7267 = vld [vmem:[%s20 + $0x58] sm:$0xff]
    %v7268 = vld [vmem:[%s20 + $0x60] sm:$0xff]
    %v7269 = vld [vmem:[%s20 + $0x68] sm:$0xff]
    %v7270 = vld [vmem:[%s20 + $0x70] sm:$0xff]
    %v7271 = vld [vmem:[%s20 + $0x78] sm:$0xff]
    %v7272 = vld [vmem:[%s21] sm:$0x1]
    %v7274 = vlaneseq
    %v7275 = vshrl.u32 %v7274, 7
    %v7276 = vsub.s32 0, %v7275
    %v7277 = vrot.slane %v7272, %v7276
    %7279 = vmatprep.subr.mxu0 0.0
    %7280 = vmatpush1.msra.mxu0 %v7256
    %7281 = vmatprep.subr.mxu0 0.0
    %7282 = vmatpush1.msra.mxu0 %v7257
    %7283 = vmatprep.subr.mxu0 0.0
    %7284 = vmatpush1.msra.mxu0 %v7258
    %7285 = vmatprep.subr.mxu0 0.0
    %7286 = vmatpush1.msra.mxu0 %v7259
    %7287 = vmatprep.subr.mxu0 0.0
    %7288 = vmatpush1.msra.mxu0 %v7260
    %7289 = vmatprep.subr.mxu0 0.0
    %7290 = vmatpush1.msra.mxu0 %v7261
    %7291 = vmatprep.subr.mxu0 0.0
    %7292 = vmatpush1.msra.mxu0 %v7262
    %7293 = vmatprep.subr.mxu0 0.0
    %7294 = vmatpush1.msra.mxu0 %v7263
    %7295 = vmatprep.subr.mxu0 0.0
    %7296 = vmatpush1.msra.mxu0 %v7264
    %7297 = vmatprep.subr.mxu0 0.0
    %7298 = vmatpush1.msra.mxu0 %v7265
    %7299 = vmatprep.subr.mxu0 0.0
    %7300 = vmatpush1.msra.mxu0 %v7266
    %7301 = vmatprep.subr.mxu0 0.0
    %7302 = vmatpush1.msra.mxu0 %v7267
    %7303 = vmatprep.subr.mxu0 0.0
    %7304 = vmatpush1.msra.mxu0 %v7268
    %7305 = vmatprep.subr.mxu0 0.0
    %7306 = vmatpush1.msra.mxu0 %v7269
    %7307 = vmatprep.subr.mxu0 0.0
    %7308 = vmatpush1.msra.mxu0 %v7270
    %7309 = vmatprep.subr.mxu0 0.0
    %7310 = vmatpush1.msra.mxu0 %v7271
    %7311 = vmatprep.subr.mxu0 0.0
    %7312 = vmatpush1.msra.mxu0 0.0
    %7313 = vmatprep.subr.mxu0 0.0
    %7314 = vmatpush1.msra.mxu0 0.0
    %7315 = vmatprep.subr.mxu0 0.0
    %7316 = vmatpush1.msra.mxu0 0.0
    %7317 = vmatprep.subr.mxu0 0.0
    %7318 = vmatpush1.msra.mxu0 0.0
    %7319 = vmatprep.subr.mxu0 0.0
    %7320 = vmatpush1.msra.mxu0 0.0
    %7321 = vmatprep.subr.mxu0 0.0
    %7322 = vmatpush1.msra.mxu0 0.0
    %7323 = vmatprep.subr.mxu0 0.0
    %7324 = vmatpush1.msra.mxu0 0.0
    %7325 = vmatprep.subr.mxu0 0.0
    %7326 = vmatpush1.msra.mxu0 0.0
    %7327 = vmatprep.subr.mxu0 0.0
    %7328 = vmatpush1.msra.mxu0 0.0
    %7329 = vmatprep.subr.mxu0 0.0
    %7330 = vmatpush1.msra.mxu0 0.0
    %7331 = vmatprep.subr.mxu0 0.0
    %7332 = vmatpush1.msra.mxu0 0.0
    %7333 = vmatprep.subr.mxu0 0.0
    %7334 = vmatpush1.msra.mxu0 0.0
    %7335 = vmatprep.subr.mxu0 0.0
    %7336 = vmatpush1.msra.mxu0 0.0
    %7337 = vmatprep.subr.mxu0 0.0
    %7338 = vmatpush1.msra.mxu0 0.0
    %7339 = vmatprep.subr.mxu0 0.0
    %7340 = vmatpush1.msra.mxu0 0.0
    %7341 = vmatprep.subr.mxu0 0.0
    %7342 = vmatpush1.msra.mxu0 0.0
    %7343 = vmatprep.mubr.f32.mxu0 0.0
    %7344 = vmatmul.mubr.f32.gmra.mrb[0].mxu0 %v7248
    %v7345 = vpop.f32.mrb[0].mxu0
    %v7346 = vadd.f32 %v7277, %v7345
    %v7347 = vpop.f32.mrb[0].mxu0
    %7348 = vmatprep.mubr.f32.mxu0 0.0
    %7349 = vmatmul.mubr.f32.gmra.mrb[0].mxu0 %v7249
    %v7350 = vpop.f32.mrb[0].mxu0
    %v7351 = vadd.f32 %v7277, %v7350
    %v7352 = vpop.f32.mrb[0].mxu0
    %7353 = vmatprep.mubr.f32.mxu0 0.0
    %7354 = vmatmul.mubr.f32.gmra.mrb[0].mxu0 %v7250
    %v7355 = vpop.f32.mrb[0].mxu0
    %v7356 = vadd.f32 %v7277, %v7355
    %v7357 = vpop.f32.mrb[0].mxu0
    %7358 = vmatprep.mubr.f32.mxu0 0.0
    %7359 = vmatmul.mubr.f32.gmra.mrb[0].mxu0 %v7251
    %v7360 = vpop.f32.mrb[0].mxu0
    %v7361 = vadd.f32 %v7277, %v7360
    %v7362 = vpop.f32.mrb[0].mxu0
    %7363 = vmatprep.mubr.f32.mxu0 0.0
    %7364 = vmatmul.mubr.f32.gmra.mrb[0].mxu0 %v7252
    %v7365 = vpop.f32.mrb[0].mxu0
    %v7366 = vadd.f32 %v7277, %v7365
    %v7367 = vpop.f32.mrb[0].mxu0
    %7368 = vmatprep.mubr.f32.mxu0 0.0
    %7369 = vmatmul.mubr.f32.gmra.mrb[0].mxu0 %v7253
    %v7370 = vpop.f32.mrb[0].mxu0
    %v7371 = vadd.f32 %v7277, %v7370
    %v7372 = vpop.f32.mrb[0].mxu0
    %7373 = vmatprep.mubr.f32.mxu0 0.0
    %7374 = vmatmul.mubr.f32.gmra.mrb[0].mxu0 %v7254
    %v7375 = vpop.f32.mrb[0].mxu0
    %v7376 = vadd.f32 %v7277, %v7375
    %v7377 = vpop.f32.mrb[0].mxu0
    %7378 = vmatprep.mubr.f32.mxu0 0.0
    %7379 = vmatmul.mubr.f32.gmra.mrb[0].mxu0 %v7255
    %v7380 = vpop.f32.mrb[0].mxu0
    %v7381 = vadd.f32 %v7277, %v7380
    %v7382 = vpop.f32.mrb[0].mxu0
    %7383 = vdwg.mxu0
    %v7384 = vmax.f32 %v7346, 0.0
    %v7385 = vmax.f32 %v7351, 0.0
    %v7386 = vmax.f32 %v7356, 0.0
    %v7387 = vmax.f32 %v7361, 0.0
    %v7388 = vmax.f32 %v7366, 0.0
    %v7389 = vmax.f32 %v7371, 0.0
    %v7390 = vmax.f32 %v7376, 0.0
    %v7391 = vmax.f32 %v7381, 0.0
    %v7392 = vld [vmem:[#allocation18] sm:$0xff]
    %v7393 = vld [vmem:[#allocation18 + $0x8] sm:$0xff]
    %v7394 = vld [vmem:[#allocation18 + $0x10] sm:$0xff]
    %v7395 = vld [vmem:[#allocation18 + $0x18] sm:$0xff]
    %v7396 = vld [vmem:[#allocation18 + $0x20] sm:$0xff]
    %v7397 = vld [vmem:[#allocation18 + $0x28] sm:$0xff]
    %v7398 = vld [vmem:[#allocation18 + $0x30] sm:$0xff]
    %v7399 = vld [vmem:[#allocation18 + $0x38] sm:$0xff]
    %v7400 = vld [vmem:[#allocation18 + $0x40] sm:$0xff]
    %v7401 = vld [vmem:[#allocation18 + $0x48] sm:$0xff]
    %v7402 = vld [vmem:[#allocation18 + $0x50] sm:$0xff]
    %v7403 = vld [vmem:[#allocation18 + $0x58] sm:$0xff]
    %v7404 = vld [vmem:[#allocation18 + $0x60] sm:$0xff]
    %v7405 = vld [vmem:[#allocation18 + $0x68] sm:$0xff]
    %v7406 = vld [vmem:[#allocation18 + $0x70] sm:$0xff]
    %v7407 = vld [vmem:[#allocation18 + $0x78] sm:$0xff]
    %v7408 = vld [vmem:[%s23] sm:$0x1]
    %v7410 = vlaneseq
    %v7411 = vshrl.u32 %v7410, 7
    %v7412 = vsub.s32 0, %v7411
    %v7413 = vrot.slane %v7408, %v7412
    %7415 = vmatprep.subr.mxu0 0.0
    %7416 = vmatpush1.msra.mxu0 %v7392
    %7417 = vmatprep.subr.mxu0 0.0
    %7418 = vmatpush1.msra.mxu0 %v7393
    %7419 = vmatprep.subr.mxu0 0.0
    %7420 = vmatpush1.msra.mxu0 %v7394
    %7421 = vmatprep.subr.mxu0 0.0
    %7422 = vmatpush1.msra.mxu0 %v7395
    %7423 = vmatprep.subr.mxu0 0.0
    %7424 = vmatpush1.msra.mxu0 %v7396
    %7425 = vmatprep.subr.mxu0 0.0
    %7426 = vmatpush1.msra.mxu0 %v7397
    %7427 = vmatprep.subr.mxu0 0.0
    %7428 = vmatpush1.msra.mxu0 %v7398
    %7429 = vmatprep.subr.mxu0 0.0
    %7430 = vmatpush1.msra.mxu0 %v7399
    %7431 = vmatprep.subr.mxu0 0.0
    %7432 = vmatpush1.msra.mxu0 %v7400
    %7433 = vmatprep.subr.mxu0 0.0
    %7434 = vmatpush1.msra.mxu0 %v7401
    %7435 = vmatprep.subr.mxu0 0.0
    %7436 = vmatpush1.msra.mxu0 %v7402
    %7437 = vmatprep.subr.mxu0 0.0
    %7438 = vmatpush1.msra.mxu0 %v7403
    %7439 = vmatprep.subr.mxu0 0.0
    %7440 = vmatpush1.msra.mxu0 %v7404
    %7441 = vmatprep.subr.mxu0 0.0
    %7442 = vmatpush1.msra.mxu0 %v7405
    %7443 = vmatprep.subr.mxu0 0.0
    %7444 = vmatpush1.msra.mxu0 %v7406
    %7445 = vmatprep.subr.mxu0 0.0
    %7446 = vmatpush1.msra.mxu0 %v7407
    %7447 = vmatprep.subr.mxu0 0.0
    %7448 = vmatpush1.msra.mxu0 0.0
    %7449 = vmatprep.subr.mxu0 0.0
    %7450 = vmatpush1.msra.mxu0 0.0
    %7451 = vmatprep.subr.mxu0 0.0
    %7452 = vmatpush1.msra.mxu0 0.0
    %7453 = vmatprep.subr.mxu0 0.0
    %7454 = vmatpush1.msra.mxu0 0.0
    %7455 = vmatprep.subr.mxu0 0.0
    %7456 = vmatpush1.msra.mxu0 0.0
    %7457 = vmatprep.subr.mxu0 0.0
    %7458 = vmatpush1.msra.mxu0 0.0
    %7459 = vmatprep.subr.mxu0 0.0
    %7460 = vmatpush1.msra.mxu0 0.0
    %7461 = vmatprep.subr.mxu0 0.0
    %7462 = vmatpush1.msra.mxu0 0.0
    %7463 = vmatprep.subr.mxu0 0.0
    %7464 = vmatpush1.msra.mxu0 0.0
    %7465 = vmatprep.subr.mxu0 0.0
    %7466 = vmatpush1.msra.mxu0 0.0
    %7467 = vmatprep.subr.mxu0 0.0
    %7468 = vmatpush1.msra.mxu0 0.0
    %7469 = vmatprep.subr.mxu0 0.0
    %7470 = vmatpush1.msra.mxu0 0.0
    %7471 = vmatprep.subr.mxu0 0.0
    %7472 = vmatpush1.msra.mxu0 0.0
    %7473 = vmatprep.subr.mxu0 0.0
    %7474 = vmatpush1.msra.mxu0 0.0
    %7475 = vmatprep.subr.mxu0 0.0
    %7476 = vmatpush1.msra.mxu0 0.0
    %7477 = vmatprep.subr.mxu0 0.0
    %7478 = vmatpush1.msra.mxu0 0.0
    %7479 = vmatprep.mubr.f32.mxu0 0.0
    %7480 = vmatmul.mubr.f32.gmra.mrb[0].mxu0 %v7384
    %v7481 = vpop.f32.mrb[0].mxu0
    %v7482 = vadd.f32 %v7413, %v7481
    %v7483 = vpop.f32.mrb[0].mxu0
    %7484 = vmatprep.mubr.f32.mxu0 0.0
    %7485 = vmatmul.mubr.f32.gmra.mrb[0].mxu0 %v7385
    %v7486 = vpop.f32.mrb[0].mxu0
    %v7487 = vadd.f32 %v7413, %v7486
    %v7488 = vpop.f32.mrb[0].mxu0
    %7489 = vmatprep.mubr.f32.mxu0 0.0
    %7490 = vmatmul.mubr.f32.gmra.mrb[0].mxu0 %v7386
    %v7491 = vpop.f32.mrb[0].mxu0
    %v7492 = vadd.f32 %v7413, %v7491
    %v7493 = vpop.f32.mrb[0].mxu0
    %7494 = vmatprep.mubr.f32.mxu0 0.0
    %7495 = vmatmul.mubr.f32.gmra.mrb[0].mxu0 %v7387
    %v7496 = vpop.f32.mrb[0].mxu0
    %v7497 = vadd.f32 %v7413, %v7496
    %v7498 = vpop.f32.mrb[0].mxu0
    %7499 = vmatprep.mubr.f32.mxu0 0.0
    %7500 = vmatmul.mubr.f32.gmra.mrb[0].mxu0 %v7388
    %v7501 = vpop.f32.mrb[0].mxu0
    %v7502 = vadd.f32 %v7413, %v7501
    %v7503 = vpop.f32.mrb[0].mxu0
    %7504 = vmatprep.mubr.f32.mxu0 0.0
    %7505 = vmatmul.mubr.f32.gmra.mrb[0].mxu0 %v7389
    %v7506 = vpop.f32.mrb[0].mxu0
    %v7507 = vadd.f32 %v7413, %v7506
    %v7508 = vpop.f32.mrb[0].mxu0
    %7509 = vmatprep.mubr.f32.mxu0 0.0
    %7510 = vmatmul.mubr.f32.gmra.mrb[0].mxu0 %v7390
    %v7511 = vpop.f32.mrb[0].mxu0
    %v7512 = vadd.f32 %v7413, %v7511
    %v7513 = vpop.f32.mrb[0].mxu0
    %7514 = vmatprep.mubr.f32.mxu0 0.0
    %7515 = vmatmul.mubr.f32.gmra.mrb[0].mxu0 %v7391
    %v7516 = vpop.f32.mrb[0].mxu0
    %v7517 = vadd.f32 %v7413, %v7516
    %v7518 = vpop.f32.mrb[0].mxu0
    %7519 = vdwg.mxu0
    %7520 = vst [vmem:[%s24] sm:$0xff] %v7482
    %7521 = vst [vmem:[%s24 + $0x8] sm:$0xff] %v7487
    %7522 = vst [vmem:[%s24 + $0x10] sm:$0xff] %v7492
    %7523 = vst [vmem:[%s24 + $0x18] sm:$0xff] %v7497
    %7524 = vst [vmem:[%s24 + $0x20] sm:$0xff] %v7502
    %7525 = vst [vmem:[%s24 + $0x28] sm:$0xff] %v7507
    %7526 = vst [vmem:[%s24 + $0x30] sm:$0xff] %v7512
    %7527 = vst [vmem:[%s24 + $0x38] sm:$0xff] %v7517
    %7528 = vst [vmem:[%s25] sm:$0xff] %v5540
    %s7529 = scalar_lea.vmem %s25, 8
    %7530 = vst [vmem:[%s7529] sm:$0xff] %v7246
    // Predicated region
    $region134: #{forward.1} parent=1 // pred_check
      _
    $region135: #{forward.1} parent=1 // pred_check_branch
      %7532 = sbr.rel (0) target = $region137
    $region136: #{forward.1} parent=1 // pred_region
      _
    $region137: #{forward.1} parent=1 // pred_fallthru
      _
    // Predicated region
    $region138: #{forward.1} parent=1 // pred_check
      _
    $region139: #{forward.1} parent=1 // pred_check_branch
      %7534 = sbr.rel (0) target = $region141
    $region140: #{forward.1} parent=1 // pred_region
      _
    $region141: #{forward.1} parent=1 // pred_fallthru
      _
    // Predicated region
    $region142: #{forward.1} parent=1 // pred_check
      _
    $region143: #{forward.1} parent=1 // pred_check_branch
      %7536 = sbr.rel (0) target = $region145
    $region144: #{forward.1} parent=1 // pred_region
      _
    $region145: #{forward.1} parent=1 // pred_fallthru
      _
    // Predicated region
    $region146: #{forward.1} parent=1 // pred_check
      _
    $region147: #{forward.1} parent=1 // pred_check_branch
      %7538 = sbr.rel (0) target = $region149
    $region148: #{forward.1} parent=1 // pred_region
      _
    $region149: #{forward.1} parent=1 // pred_fallthru
      _
    %7539 = vsyncpa [#allocation6], 1
    %7540 = vsyncpa [#allocation8], 1
    %7541 = vsyncpa [#allocation11], 1
    %7542 = vsyncpa [#allocation14], 1
    %7543 = vsyncpa [#allocation17], 1

</llo_original>
